<compile_context>
chip_gen: v7x
topology: tpu7x:2x2x1
jax: 0.10.0
libtpu: 0.0.40
codegen_flags: <defaults>
</compile_context>

<pallas_src>
import jax
import jax.numpy as jnp
from jax.experimental import pallas as pl
from jax.experimental.pallas import tpu as pltpu


# ------------------------------ Pallas kernels ------------------------------ #
def _fused_kernel(x_ref, pw_ref, uh_ref, uw_ref, w1_ref, b1_ref, w2_ref, b2_ref,
                  o_ref):
    """Single-pass SE layer for one (n, depth-tile) slab (z_reduction == 1).

    x_ref/o_ref: (1, C, dt, H, W).  pw: [W, Wp] mean-pool, uh: [H, Hp] /
    uw: [Wp, W] align_corners=True linear-interp operators, w*/b*: BN-folded
    1x1x1 convs.  Each depth slice is processed with whole-(C, H, W)
    channel-batched matmuls; the only static loops are over the depth tile
    (<= 8) and the Hp pooled rows (H / spatial_reduction), and every iteration
    ends in full-slab work, so there are no lane-sparse per-row stores.
    """
    C, dt, H, W = x_ref.shape[1], x_ref.shape[2], x_ref.shape[3], x_ref.shape[4]
    Wp = pw_ref.shape[1]
    Hp = uh_ref.shape[1]
    srh = H // Hp
    f32 = jnp.float32
    pw = pw_ref[...]
    uh = uh_ref[...]
    uw = uw_ref[...]
    w1 = w1_ref[...]
    b1 = b1_ref[...]
    w2 = w2_ref[...]
    b2 = b2_ref[...]
    for d in range(dt):                      # static, small depth tile
        x_d = x_ref[0, :, d].astype(f32)                               # (C, H, W)
        x2 = x_d.reshape(C * H, W)
        # --- AvgPool over W as one channel-batched matmul --------------------
        xw = jnp.dot(x2, pw, preferred_element_type=f32)               # (C*H, Wp)
        xw3 = xw.reshape(C, H, Wp)
        # --- gate MLP + H-upsample, one pooled row (hp) at a time ------------
        y_h = jnp.zeros((C, H, Wp), f32)
        for hp in range(Hp):                 # static, Hp = H / spatial_reduction
            # AvgPool over this pooled row's H window.
            p_hp = jnp.mean(xw3[:, hp * srh:(hp + 1) * srh, :], axis=1)  # (C, Wp)
            # Conv1x1 + BN (folded) + ELU (alpha=1, branch/overflow free).
            t = jnp.dot(w1, p_hp, preferred_element_type=f32) + b1       # (Cr, Wp)
            t = jnp.maximum(t, 0.0) + (jnp.exp(jnp.minimum(t, 0.0)) - 1.0)
            # Conv1x1 + BN (folded) + exact sigmoid.
            t = jnp.dot(w2, t, preferred_element_type=f32) + b2          # (C, Wp)
            g_hp = 1.0 / (1.0 + jnp.exp(-t))
            # Linear H-upsample: y_h[c, h, :] += UH[h, hp] * g_hp[c, :].
            y_h = y_h + uh[:, hp:hp + 1][None, :, :] * g_hp[:, None, :]
        # --- W-upsample + z = x * (1 + y), one whole (C, H, W) slab store ----
        y = jnp.dot(y_h.reshape(C * H, Wp), uw, preferred_element_type=f32)
        o_ref[0, :, d] = (x2 * (1.0 + y)).reshape(C, H, W).astype(o_ref.dtype)


def _pool_kernel(x_ref, pw_ref, o_ref):
    """Separable AvgPool3d((zr, sr, sr)) for one (n, channel-block, depth-tile).

    x_ref: (1, cb, dpt*zr, H, W) -> o_ref: (1, cb, dpt, Hp, Wp) (float32).
    z window: static slice sum; H window: reshape + mean; W window: tiny matmul.
    """
    cb, H, W = x_ref.shape[1], x_ref.shape[3], x_ref.shape[4]
    dpt, Hp, Wp = o_ref.shape[2], o_ref.shape[3], o_ref.shape[4]
    zr = x_ref.shape[2] // dpt
    srh = H // Hp
    f32 = jnp.float32
    pw = pw_ref[...]
    for dp in range(dpt):                    # static, small depth tile
        acc = x_ref[0, :, dp * zr].astype(f32)                         # (cb, H, W)
        for k in range(1, zr):
            acc = acc + x_ref[0, :, dp * zr + k].astype(f32)
        acc = acc * (1.0 / float(zr))
        ph = jnp.mean(acc.reshape(cb * Hp, srh, W), axis=1)            # (cb*Hp, W)
        pooled = jnp.dot(ph, pw, preferred_element_type=f32)           # (cb*Hp, Wp)
        o_ref[0, :, dp] = pooled.reshape(cb, Hp, Wp).astype(o_ref.dtype)


def _gate_kernel(p_ref, w1_ref, b1_ref, w2_ref, b2_ref, g_ref):
    """Conv1x1(BN folded)+ELU -> Conv1x1(BN folded)+sigmoid on pooled features.

    p_ref: (1, C, spt) -> g_ref: (1, C, spt).  Spatial axis is lane-dense.
    """
    f32 = jnp.float32
    p = p_ref[0].astype(f32)                                           # (C, spt)
    y = jnp.dot(w1_ref[...], p, preferred_element_type=f32) + b1_ref[...]
    y = jnp.maximum(y, 0.0) + (jnp.exp(jnp.minimum(y, 0.0)) - 1.0)     # ELU
    y = jnp.dot(w2_ref[...], y, preferred_element_type=f32) + b2_ref[...]
    g_ref[0] = (1.0 / (1.0 + jnp.exp(-y))).astype(g_ref.dtype)         # exact sigmoid


def _apply_kernel(x_ref, g_ref, uhb_ref, uw_ref, o_ref):
    """z = x * (1 + upsample(gate)) for one (n, channel-block, depth-tile) slab.

    x_ref/o_ref: (1, cb, dt, H, W); g_ref: (1, cb, dt, Hp, Wp);
    uhb: [cb*H, cb*Hp] block-diagonal kron(I_cb, UH); uw: [Wp, W].
    Each depth slice = 2 channel-batched matmuls + one whole-slab store.
    """
    cb, dt, H, W = x_ref.shape[1], x_ref.shape[2], x_ref.shape[3], x_ref.shape[4]
    Hp, Wp = g_ref.shape[3], g_ref.shape[4]
    f32 = jnp.float32
    uhb = uhb_ref[...]
    uw = uw_ref[...]
    for d in range(dt):                      # static, small depth tile
        g = g_ref[0, :, d].astype(f32).reshape(cb * Hp, Wp)
        yh = jnp.dot(uhb, g, preferred_element_type=f32)               # (cb*H, Wp)
        y = jnp.dot(yh, uw, preferred_element_type=f32)                # (cb*H, W)
        x_d = x_ref[0, :, d].astype(f32).reshape(cb * H, W)
        o_ref[0, :, d] = (x_d * (1.0 + y)).reshape(cb, H, W).astype(o_ref.dtype)


# ------------------------------ small operators ----------------------------- #
def build_pool_matrix(out_size, k, dtype=jnp.float32):
    """[out_size, out_size*k]; left-multiplication mean-pools windows of k."""
    idx = jnp.arange(out_size * k) // k
    return (jax.nn.one_hot(idx, out_size, dtype=dtype) / float(k)).T


def build_upsample_matrix(out_size, in_size, dtype=jnp.float32):
    """[out_size, in_size]; linear interpolation with align_corners=True."""
    if in_size == 1:
        return jnp.ones((out_size, 1), dtype)
    if out_size == 1:
        return jax.nn.one_hot(jnp.zeros((1,), jnp.int32), in_size, dtype=dtype)
    coords = jnp.arange(out_size, dtype=jnp.float32) * (in_size - 1) / (out_size - 1)
    i0 = jnp.clip(jnp.floor(coords).astype(jnp.int32), 0, in_size - 1)
    i1 = jnp.minimum(i0 + 1, in_size - 1)
    frac = coords - i0.astype(jnp.float32)
    oh0 = jax.nn.one_hot(i0, in_size, dtype=dtype)
    oh1 = jax.nn.one_hot(i1, in_size, dtype=dtype)
    return (1.0 - frac)[:, None] * oh0 + frac[:, None] * oh1


def _largest_divisor_leq(n, cap):
    cap = max(1, min(n, int(cap)))
    for d in range(cap, 0, -1):
        if n % d == 0:
            return d
    return 1


def _pick_sp_tile(sp, c, budget_bytes):
    """Spatial tile for the gate kernel: divides Sp, lane-aligned, VMEM-bounded."""
    cap = max(128, budget_bytes // (16 * max(1, c)))   # ~2 bufs x (in+out) x C x spt x 4B
    if sp <= cap:
        return sp
    for t in range(cap - cap % 128, 0, -128):
        if sp % t == 0:
            return t
    # No lane-aligned divisor under the cap: a partial block's last dim must be a
    # multiple of 128, so fall back to the full (still small) spatial axis.
    return sp


def _vmem_budgets():
    """(vmem_limit_bytes, per-step tile budget) derived from physical VMEM."""
    try:
        phys = int(pltpu.get_tpu_info().vmem_capacity_bytes)
    except Exception:            # conservative default: v7x has 64 MiB per TensorCore
        phys = 64 * 1024 * 1024
    vmem_limit = (phys * 3) // 4          # raise above the 16/32 MiB scoped default
    tile_budget = vmem_limit // 2         # headroom for double buffering + temporaries
    return vmem_limit, tile_budget


# ------------------------------- glue (JAX) -------------------------------- #
def se_layer(x, w1, b1, s1, t1, w2, b2, s2, t2,
             spatial_reduction=4, z_reduction=1):
    N, C, D, H, W = x.shape
    sr, zr = spatial_reduction, z_reduction
    if D % zr or H % sr or W % sr:
        raise ValueError("D/H/W must be divisible by the pooling factors")
    Dp, Hp, Wp = D // zr, H // sr, W // sr
    Sp = Dp * Hp * Wp
    Cr = w1.shape[0]
    f32 = jnp.float32
    esize = jnp.dtype(x.dtype).itemsize

    # ---- fold BatchNorm (eval) into the 1x1x1 conv weights / biases ----
    w1f = (s1[:, None] * w1).astype(f32)                      # [Cr, C]
    b1f = (s1 * b1 + t1).astype(f32)[:, None]                 # [Cr, 1]
    w2f = (s2[:, None] * w2).astype(f32)                      # [C, Cr]
    b2f = (s2 * b2 + t2).astype(f32)[:, None]                 # [C, 1]

    # ---- tiny separable per-axis pool / upsample operators ----
    pw = build_pool_matrix(Wp, sr).T.astype(f32)              # [W, Wp]
    uh = build_upsample_matrix(H, Hp).astype(f32)             # [H, Hp]
    uw = build_upsample_matrix(W, Wp).T.astype(f32)           # [Wp, W]

    vmem_limit, tile_budget = _vmem_budgets()
    xbytes = N * C * D * H * W * esize

    def cparams(k):
        return pltpu.CompilerParams(dimension_semantics=("parallel",) * k,
                                    vmem_limit_bytes=vmem_limit)

    # ---------------- fused single-pass path (2x HBM traffic) ----------------
    if zr == 1:
        slab = C * H * W * esize              # one depth slice of the x block
        temps = 3 * C * H * W * 4             # in-kernel f32 temporaries (1 slice)
        dt_max = (tile_budget - temps) // (4 * slab) if tile_budget > temps else 0
        if dt_max >= 1:
            target = max(1, (4 * 1024 * 1024) // slab)   # aim >= ~4 MiB of x / step
            dt = _largest_divisor_leq(D, min(int(dt_max), 8, target))
            # keep >= 2 grid steps so both v7x TensorCores get work
            if N * (D // dt) < 2 and D >= 2:
                dt = _largest_divisor_leq(D, D // 2)
            ce = pl.CostEstimate(flops=int(6 * N * C * D * H * W),
                                 transcendentals=int(2 * N * C * Dp * Hp * Wp),
                                 bytes_accessed=int(2 * xbytes))
            return pl.pallas_call(
                _fused_kernel,
                out_shape=jax.ShapeDtypeStruct((N, C, D, H, W), x.dtype),
                grid_spec=pltpu.PrefetchScalarGridSpec(
                    num_scalar_prefetch=0,
                    grid=(N, D // dt),
                    in_specs=[
                        pl.BlockSpec((1, C, dt, H, W), lambda n, d: (n, 0, d, 0, 0)),
                        pl.BlockSpec((W, Wp), lambda n, d: (0, 0)),
                        pl.BlockSpec((H, Hp), lambda n, d: (0, 0)),
                        pl.BlockSpec((Wp, W), lambda n, d: (0, 0)),
                        pl.BlockSpec((Cr, C), lambda n, d: (0, 0)),
                        pl.BlockSpec((Cr, 1), lambda n, d: (0, 0)),
                        pl.BlockSpec((C, Cr), lambda n, d: (0, 0)),
                        pl.BlockSpec((C, 1), lambda n, d: (0, 0)),
                    ],
                    out_specs=pl.BlockSpec((1, C, dt, H, W),
                                           lambda n, d: (n, 0, d, 0, 0)),
                ),
                compiler_params=cparams(2),
                cost_estimate=ce,
            )(x, pw, uh, uw, w1f, b1f, w2f, b2f)

    # --------------------------- fallback: 3 kernels --------------------------
    # (z_reduction > 1, or the fused (C, H, W) working set does not fit VMEM.)
    cb = _largest_divisor_leq(C, 16)     # channel block: keeps kron(I_cb, UH) small

    # kernel 1: separable AvgPool3d (streams x once)
    pslab = max(1, cb * zr * H * W * esize)
    dpt = _largest_divisor_leq(Dp, max(1, min(8, (tile_budget // 3) // pslab)))
    pooled = pl.pallas_call(
        _pool_kernel,
        out_shape=jax.ShapeDtypeStruct((N, C, Dp, Hp, Wp), f32),
        grid_spec=pltpu.PrefetchScalarGridSpec(
            num_scalar_prefetch=0,
            grid=(N, C // cb, Dp // dpt),
            in_specs=[
                pl.BlockSpec((1, cb, dpt * zr, H, W),
                             lambda n, c, d: (n, c, d, 0, 0)),
                pl.BlockSpec((W, Wp), lambda n, c, d: (0, 0)),
            ],
            out_specs=pl.BlockSpec((1, cb, dpt, Hp, Wp),
                                   lambda n, c, d: (n, c, d, 0, 0)),
        ),
        compiler_params=cparams(3),
        cost_estimate=pl.CostEstimate(flops=int(3 * N * C * D * H * W),
                                      transcendentals=0,
                                      bytes_accessed=int(xbytes + N * C * Sp * 4)),
    )(x, pw)

    # kernel 2: conv/BN/ELU + conv/BN/sigmoid on the tiny pooled tensor
    spt = _pick_sp_tile(Sp, C, tile_budget)
    gate = pl.pallas_call(
        _gate_kernel,
        out_shape=jax.ShapeDtypeStruct((N, C, Sp), f32),
        grid_spec=pltpu.PrefetchScalarGridSpec(
            num_scalar_prefetch=0,
            grid=(N, Sp // spt),
            in_specs=[
                pl.BlockSpec((1, C, spt), lambda n, s: (n, 0, s)),
                pl.BlockSpec((Cr, C), lambda n, s: (0, 0)),
                pl.BlockSpec((Cr, 1), lambda n, s: (0, 0)),
                pl.BlockSpec((C, Cr), lambda n, s: (0, 0)),
                pl.BlockSpec((C, 1), lambda n, s: (0, 0)),
            ],
            out_specs=pl.BlockSpec((1, C, spt), lambda n, s: (n, 0, s)),
        ),
        compiler_params=cparams(2),
    )(pooled.reshape(N, C, Sp), w1f, b1f, w2f, b2f)

    gate = gate.reshape(N, C, Dp, Hp, Wp)                     # free metadata reshape
    if zr > 1:
        # TODO(synk): the depth (z) linear upsample of the small gate is done in
        # plain JAX; it could be fused into the apply kernel with scalar-prefetch
        # index maps if z_reduction > 1 were performance relevant.
        uz = build_upsample_matrix(D, Dp).astype(f32)         # [D, Dp]
        gate = jnp.einsum('dk,nckhw->ncdhw', uz, gate)

    # kernel 3: separable trilinear upsample + z = x * (1 + y) (streams x once)
    uhb = jnp.kron(jnp.eye(cb, dtype=f32), uh)                # [cb*H, cb*Hp]
    aslab = max(1, cb * H * W * esize)
    avail = max(0, tile_budget - cb * cb * H * Hp * 4)
    dt = _largest_divisor_leq(D, max(1, min(8, avail // (5 * aslab))))
    out = pl.pallas_call(
        _apply_kernel,
        out_shape=jax.ShapeDtypeStruct((N, C, D, H, W), x.dtype),
        grid_spec=pltpu.PrefetchScalarGridSpec(
            num_scalar_prefetch=0,
            grid=(N, C // cb, D // dt),
            in_specs=[
                pl.BlockSpec((1, cb, dt, H, W), lambda n, c, d: (n, c, d, 0, 0)),
                pl.BlockSpec((1, cb, dt, Hp, Wp), lambda n, c, d: (n, c, d, 0, 0)),
                pl.BlockSpec((cb * H, cb * Hp), lambda n, c, d: (0, 0)),
                pl.BlockSpec((Wp, W), lambda n, c, d: (0, 0)),
            ],
            out_specs=pl.BlockSpec((1, cb, dt, H, W),
                                   lambda n, c, d: (n, c, d, 0, 0)),
        ),
        compiler_params=cparams(3),
        cost_estimate=pl.CostEstimate(
            flops=int(4 * N * C * D * H * W),
            transcendentals=0,
            bytes_accessed=int(2 * xbytes + N * C * D * Hp * Wp * 4)),
    )(x, gate, uhb, uw)
    return out


# ----------------------------- pure-JAX reference -------------------------- #
def se_layer_reference(x, w1, b1, s1, t1, w2, b2, s2, t2,
                       spatial_reduction=4, z_reduction=1):
    N, C, D, H, W = x.shape
    Dp, Hp, Wp = D // z_reduction, H // spatial_reduction, W // spatial_reduction
    xp = x.reshape(N, C, Dp, z_reduction, Hp, spatial_reduction,
                   Wp, spatial_reduction).mean(axis=(3, 5, 7))
    y = jnp.einsum('rc,ncdpq->nrdpq', w1, xp) + b1[None, :, None, None, None]
    y = y * s1[None, :, None, None, None] + t1[None, :, None, None, None]
    y = jnp.where(y > 0, y, jnp.exp(y) - 1.0)
    y = jnp.einsum('cr,nrdpq->ncdpq', w2, y) + b2[None, :, None, None, None]
    y = y * s2[None, :, None, None, None] + t2[None, :, None, None, None]
    y = 1.0 / (1.0 + jnp.exp(-y))
    UZ = build_upsample_matrix(D, Dp)
    UH = build_upsample_matrix(H, Hp)
    UW = build_upsample_matrix(W, Wp)
    y = jnp.einsum('ncdpq,ed->ncepq', y, UZ)
    y = jnp.einsum('ncepq,hp->ncehq', y, UH)
    y = jnp.einsum('ncehq,wq->ncehw', y, UW)
    return x + y * x


# ---------------------------------- main ----------------------------------- #
if __name__ == "__main__":
    N, C, D, H, W = 2, 8, 4, 16, 16
    channel_reduction = 4
    Cr = C // channel_reduction
    eps = 1e-5

    key = jax.random.PRNGKey(0)
    ks = jax.random.split(key, 13)
    x = jax.random.normal(ks[0], (N, C, D, H, W), jnp.float32)

    # Conv3d(C -> Cr, 1) / Conv3d(Cr -> C, 1) weights + biases
    w1 = 0.3 * jax.random.normal(ks[1], (Cr, C), jnp.float32)
    b1 = 0.1 * jax.random.normal(ks[2], (Cr,), jnp.float32)
    w2 = 0.3 * jax.random.normal(ks[3], (C, Cr), jnp.float32)
    b2 = 0.1 * jax.random.normal(ks[4], (C,), jnp.float32)

    # BatchNorm (eval) parameters folded into per-channel scale/shift
    g1 = 1.0 + 0.1 * jax.random.normal(ks[5], (Cr,), jnp.float32)
    be1 = 0.1 * jax.random.normal(ks[6], (Cr,), jnp.float32)
    m1 = 0.1 * jax.random.normal(ks[7], (Cr,), jnp.float32)
    v1 = 0.5 + jnp.abs(jax.random.normal(ks[8], (Cr,), jnp.float32))
    g2 = 1.0 + 0.1 * jax.random.normal(ks[9], (C,), jnp.float32)
    be2 = 0.1 * jax.random.normal(ks[10], (C,), jnp.float32)
    m2 = 0.1 * jax.random.normal(ks[11], (C,), jnp.float32)
    v2 = 0.5 + jnp.abs(jax.random.normal(ks[12], (C,), jnp.float32))

    s1 = g1 / jnp.sqrt(v1 + eps); t1 = be1 - m1 * s1
    s2 = g2 / jnp.sqrt(v2 + eps); t2 = be2 - m2 * s2
    params = (w1, b1, s1, t1, w2, b2, s2, t2)

    # 1) fused single-pass path (z_reduction == 1), f32 streaming
    out = jax.block_until_ready(
        se_layer(x, *params, spatial_reduction=4, z_reduction=1))
    ref = se_layer_reference(x, *params, spatial_reduction=4, z_reduction=1)
    assert out.shape == x.shape and out.dtype == x.dtype
    assert jnp.allclose(out, ref, atol=1e-2, rtol=1e-2), "fused f32 mismatch"

    # 2) fused path streaming bf16 activations (internal compute stays f32)
    xb = x.astype(jnp.bfloat16)
    outb = jax.block_until_ready(
        se_layer(xb, *params, spatial_reduction=4, z_reduction=1))
    refb = se_layer_reference(xb.astype(jnp.float32), *params,
                              spatial_reduction=4, z_reduction=1)
    assert outb.dtype == jnp.bfloat16
    assert jnp.allclose(outb.astype(jnp.float32), refb,
                        atol=5e-2, rtol=5e-2), "fused bf16 mismatch"

    # 3) fallback 3-kernel path (z_reduction > 1 exercises depth pool/upsample)
    out2 = jax.block_until_ready(
        se_layer(x, *params, spatial_reduction=2, z_reduction=2))
    ref2 = se_layer_reference(x, *params, spatial_reduction=2, z_reduction=2)
    assert jnp.allclose(out2, ref2, atol=1e-2, rtol=1e-2), "fallback mismatch"

    print("KERNEL_OK")
</pallas_src>

<mosaic_0001>
module attributes {stable_mosaic.version = 11 : i64} {
  func.func @_fused_kernel(%arg0: i32, %arg1: i32, %arg2: memref<1x8x4x16x16xf32, #tpu.memory_space<vmem>>, %arg3: memref<16x4xf32, #tpu.memory_space<vmem>>, %arg4: memref<16x4xf32, #tpu.memory_space<vmem>>, %arg5: memref<4x16xf32, #tpu.memory_space<vmem>>, %arg6: memref<2x8xf32, #tpu.memory_space<vmem>>, %arg7: memref<2x1xf32, #tpu.memory_space<vmem>>, %arg8: memref<8x2xf32, #tpu.memory_space<vmem>>, %arg9: memref<8x1xf32, #tpu.memory_space<vmem>>, %arg10: memref<1x8x4x16x16xf32, #tpu.memory_space<vmem>>) attributes {dimension_semantics = [#tpu.dimension_semantics<parallel>, #tpu.dimension_semantics<parallel>], iteration_bounds = array<i64: 2, 1>, scalar_prefetch = 0 : i64, scratch_operands = 0 : i64, tpu.core_type = #tpu.core_type<tc>, window_params = [{transform_indices = @transform_0, window_bounds = array<i64: 1, 8, 4, 16, 16>}, {pipeline_mode = #tpu.pipeline_mode<synchronous>, transform_indices = @transform_1, window_bounds = array<i64: 16, 4>}, {pipeline_mode = #tpu.pipeline_mode<synchronous>, transform_indices = @transform_2, window_bounds = array<i64: 16, 4>}, {pipeline_mode = #tpu.pipeline_mode<synchronous>, transform_indices = @transform_3, window_bounds = array<i64: 4, 16>}, {pipeline_mode = #tpu.pipeline_mode<synchronous>, transform_indices = @transform_4, window_bounds = array<i64: 2, 8>}, {pipeline_mode = #tpu.pipeline_mode<synchronous>, transform_indices = @transform_5, window_bounds = array<i64: 2, 1>}, {pipeline_mode = #tpu.pipeline_mode<synchronous>, transform_indices = @transform_6, window_bounds = array<i64: 8, 2>}, {pipeline_mode = #tpu.pipeline_mode<synchronous>, transform_indices = @transform_7, window_bounds = array<i64: 8, 1>}, {transform_indices = @transform_8, window_bounds = array<i64: 1, 8, 4, 16, 16>}]} {
    %c0 = arith.constant 0 : index
    %c0_0 = arith.constant 0 : index
    %0 = vector.load %arg3[%c0, %c0_0] : memref<16x4xf32, #tpu.memory_space<vmem>>, vector<16x4xf32>
    %c0_1 = arith.constant 0 : index
    %c0_2 = arith.constant 0 : index
    %1 = vector.load %arg4[%c0_1, %c0_2] : memref<16x4xf32, #tpu.memory_space<vmem>>, vector<16x4xf32>
    %c0_3 = arith.constant 0 : index
    %c0_4 = arith.constant 0 : index
    %2 = vector.load %arg5[%c0_3, %c0_4] : memref<4x16xf32, #tpu.memory_space<vmem>>, vector<4x16xf32>
    %c0_5 = arith.constant 0 : index
    %c0_6 = arith.constant 0 : index
    %3 = vector.load %arg6[%c0_5, %c0_6] : memref<2x8xf32, #tpu.memory_space<vmem>>, vector<2x8xf32>
    %c0_7 = arith.constant 0 : index
    %c0_8 = arith.constant 0 : index
    %4 = vector.load %arg7[%c0_7, %c0_8] : memref<2x1xf32, #tpu.memory_space<vmem>>, vector<2x1xf32>
    %c0_9 = arith.constant 0 : index
    %c0_10 = arith.constant 0 : index
    %5 = vector.load %arg8[%c0_9, %c0_10] : memref<8x2xf32, #tpu.memory_space<vmem>>, vector<8x2xf32>
    %c0_11 = arith.constant 0 : index
    %c0_12 = arith.constant 0 : index
    %6 = vector.load %arg9[%c0_11, %c0_12] : memref<8x1xf32, #tpu.memory_space<vmem>>, vector<8x1xf32>
    %c0_13 = arith.constant 0 : index
    %c0_14 = arith.constant 0 : index
    %c0_15 = arith.constant 0 : index
    %c0_16 = arith.constant 0 : index
    %c0_17 = arith.constant 0 : index
    %7 = vector.load %arg2[%c0_13, %c0_14, %c0_15, %c0_16, %c0_17] : memref<1x8x4x16x16xf32, #tpu.memory_space<vmem>>, vector<1x8x1x16x16xf32>
    %8 = vector.shape_cast %7 : vector<1x8x1x16x16xf32> to vector<8x16x16xf32>
    %9 = vector.shape_cast %8 : vector<8x16x16xf32> to vector<128x16xf32>
    %cst = arith.constant dense<0.000000e+00> : vector<128x4xf32>
    %10 = tpu.matmul %9, %0, %cst {dimension_numbers = #tpu.dot_dimension_numbers<[1], [0], [0], [1], [0, 0, 1, 1], [], []>} : vector<128x16xf32>, vector<16x4xf32>, vector<128x4xf32> -> vector<128x4xf32>
    %11 = vector.shape_cast %10 : vector<128x4xf32> to vector<8x16x4xf32>
    %cst_18 = arith.constant 0.000000e+00 : f32
    %12 = vector.broadcast %cst_18 : f32 to vector<8x16x4xf32>
    %13 = vector.extract_strided_slice %11 {offsets = [0, 0, 0], sizes = [8, 4, 4], strides = [1, 1, 1]} : vector<8x16x4xf32> to vector<8x4x4xf32>
    %cst_19 = arith.constant dense<0.000000e+00> : vector<8x4xf32>
    %14 = vector.multi_reduction <add>, %13, %cst_19 [1] : vector<8x4x4xf32> to vector<8x4xf32>
    %cst_20 = arith.constant 4.000000e+00 : f32
    %15 = vector.broadcast %cst_20 : f32 to vector<8x4xf32>
    %16 = arith.divf %14, %15 : vector<8x4xf32>
    %cst_21 = arith.constant dense<0.000000e+00> : vector<2x4xf32>
    %17 = tpu.matmul %3, %16, %cst_21 {dimension_numbers = #tpu.dot_dimension_numbers<[1], [0], [0], [1], [0, 0, 1, 1], [], []>} : vector<2x8xf32>, vector<8x4xf32>, vector<2x4xf32> -> vector<2x4xf32>
    %18 = vector.broadcast %4 : vector<2x1xf32> to vector<2x4xf32>
    %19 = arith.addf %17, %18 : vector<2x4xf32>
    %cst_22 = arith.constant 0.000000e+00 : f32
    %20 = vector.broadcast %cst_22 : f32 to vector<2x4xf32>
    %21 = arith.maximumf %19, %20 : vector<2x4xf32>
    %cst_23 = arith.constant 0.000000e+00 : f32
    %22 = vector.broadcast %cst_23 : f32 to vector<2x4xf32>
    %23 = arith.minimumf %19, %22 : vector<2x4xf32>
    %24 = math.exp %23 : vector<2x4xf32>
    %cst_24 = arith.constant 1.000000e+00 : f32
    %25 = vector.broadcast %cst_24 : f32 to vector<2x4xf32>
    %26 = arith.subf %24, %25 : vector<2x4xf32>
    %27 = arith.addf %21, %26 : vector<2x4xf32>
    %cst_25 = arith.constant dense<0.000000e+00> : vector<8x4xf32>
    %28 = tpu.matmul %5, %27, %cst_25 {dimension_numbers = #tpu.dot_dimension_numbers<[1], [0], [0], [1], [0, 0, 1, 1], [], []>} : vector<8x2xf32>, vector<2x4xf32>, vector<8x4xf32> -> vector<8x4xf32>
    %29 = vector.broadcast %6 : vector<8x1xf32> to vector<8x4xf32>
    %30 = arith.addf %28, %29 : vector<8x4xf32>
    %cst_26 = arith.constant 0.000000e+00 : f32
    %31 = vector.broadcast %cst_26 : f32 to vector<8x4xf32>
    %32 = arith.subf %31, %30 : vector<8x4xf32>
    %33 = math.exp %32 : vector<8x4xf32>
    %cst_27 = arith.constant 1.000000e+00 : f32
    %34 = vector.broadcast %cst_27 : f32 to vector<8x4xf32>
    %35 = arith.addf %34, %33 : vector<8x4xf32>
    %cst_28 = arith.constant 1.000000e+00 : f32
    %36 = vector.broadcast %cst_28 : f32 to vector<8x4xf32>
    %37 = arith.divf %36, %35 : vector<8x4xf32>
    %38 = vector.extract_strided_slice %1 {offsets = [0, 0], sizes = [16, 1], strides = [1, 1]} : vector<16x4xf32> to vector<16x1xf32>
    %39 = vector.shape_cast %38 : vector<16x1xf32> to vector<1x16x1xf32>
    %40 = vector.shape_cast %37 : vector<8x4xf32> to vector<8x1x4xf32>
    %41 = vector.broadcast %39 : vector<1x16x1xf32> to vector<8x16x4xf32>
    %42 = vector.broadcast %40 : vector<8x1x4xf32> to vector<8x16x4xf32>
    %43 = arith.mulf %41, %42 : vector<8x16x4xf32>
    %44 = arith.addf %12, %43 : vector<8x16x4xf32>
    %45 = vector.extract_strided_slice %11 {offsets = [0, 4, 0], sizes = [8, 4, 4], strides = [1, 1, 1]} : vector<8x16x4xf32> to vector<8x4x4xf32>
    %cst_29 = arith.constant dense<0.000000e+00> : vector<8x4xf32>
    %46 = vector.multi_reduction <add>, %45, %cst_29 [1] : vector<8x4x4xf32> to vector<8x4xf32>
    %cst_30 = arith.constant 4.000000e+00 : f32
    %47 = vector.broadcast %cst_30 : f32 to vector<8x4xf32>
    %48 = arith.divf %46, %47 : vector<8x4xf32>
    %cst_31 = arith.constant dense<0.000000e+00> : vector<2x4xf32>
    %49 = tpu.matmul %3, %48, %cst_31 {dimension_numbers = #tpu.dot_dimension_numbers<[1], [0], [0], [1], [0, 0, 1, 1], [], []>} : vector<2x8xf32>, vector<8x4xf32>, vector<2x4xf32> -> vector<2x4xf32>
    %50 = vector.broadcast %4 : vector<2x1xf32> to vector<2x4xf32>
    %51 = arith.addf %49, %50 : vector<2x4xf32>
    %cst_32 = arith.constant 0.000000e+00 : f32
    %52 = vector.broadcast %cst_32 : f32 to vector<2x4xf32>
    %53 = arith.maximumf %51, %52 : vector<2x4xf32>
    %cst_33 = arith.constant 0.000000e+00 : f32
    %54 = vector.broadcast %cst_33 : f32 to vector<2x4xf32>
    %55 = arith.minimumf %51, %54 : vector<2x4xf32>
    %56 = math.exp %55 : vector<2x4xf32>
    %cst_34 = arith.constant 1.000000e+00 : f32
    %57 = vector.broadcast %cst_34 : f32 to vector<2x4xf32>
    %58 = arith.subf %56, %57 : vector<2x4xf32>
    %59 = arith.addf %53, %58 : vector<2x4xf32>
    %cst_35 = arith.constant dense<0.000000e+00> : vector<8x4xf32>
    %60 = tpu.matmul %5, %59, %cst_35 {dimension_numbers = #tpu.dot_dimension_numbers<[1], [0], [0], [1], [0, 0, 1, 1], [], []>} : vector<8x2xf32>, vector<2x4xf32>, vector<8x4xf32> -> vector<8x4xf32>
    %61 = vector.broadcast %6 : vector<8x1xf32> to vector<8x4xf32>
    %62 = arith.addf %60, %61 : vector<8x4xf32>
    %cst_36 = arith.constant 0.000000e+00 : f32
    %63 = vector.broadcast %cst_36 : f32 to vector<8x4xf32>
    %64 = arith.subf %63, %62 : vector<8x4xf32>
    %65 = math.exp %64 : vector<8x4xf32>
    %cst_37 = arith.constant 1.000000e+00 : f32
    %66 = vector.broadcast %cst_37 : f32 to vector<8x4xf32>
    %67 = arith.addf %66, %65 : vector<8x4xf32>
    %cst_38 = arith.constant 1.000000e+00 : f32
    %68 = vector.broadcast %cst_38 : f32 to vector<8x4xf32>
    %69 = arith.divf %68, %67 : vector<8x4xf32>
    %70 = vector.extract_strided_slice %1 {offsets = [0, 1], sizes = [16, 1], strides = [1, 1]} : vector<16x4xf32> to vector<16x1xf32>
    %71 = vector.shape_cast %70 : vector<16x1xf32> to vector<1x16x1xf32>
    %72 = vector.shape_cast %69 : vector<8x4xf32> to vector<8x1x4xf32>
    %73 = vector.broadcast %71 : vector<1x16x1xf32> to vector<8x16x4xf32>
    %74 = vector.broadcast %72 : vector<8x1x4xf32> to vector<8x16x4xf32>
    %75 = arith.mulf %73, %74 : vector<8x16x4xf32>
    %76 = arith.addf %44, %75 : vector<8x16x4xf32>
    %77 = vector.extract_strided_slice %11 {offsets = [0, 8, 0], sizes = [8, 4, 4], strides = [1, 1, 1]} : vector<8x16x4xf32> to vector<8x4x4xf32>
    %cst_39 = arith.constant dense<0.000000e+00> : vector<8x4xf32>
    %78 = vector.multi_reduction <add>, %77, %cst_39 [1] : vector<8x4x4xf32> to vector<8x4xf32>
    %cst_40 = arith.constant 4.000000e+00 : f32
    %79 = vector.broadcast %cst_40 : f32 to vector<8x4xf32>
    %80 = arith.divf %78, %79 : vector<8x4xf32>
    %cst_41 = arith.constant dense<0.000000e+00> : vector<2x4xf32>
    %81 = tpu.matmul %3, %80, %cst_41 {dimension_numbers = #tpu.dot_dimension_numbers<[1], [0], [0], [1], [0, 0, 1, 1], [], []>} : vector<2x8xf32>, vector<8x4xf32>, vector<2x4xf32> -> vector<2x4xf32>
    %82 = vector.broadcast %4 : vector<2x1xf32> to vector<2x4xf32>
    %83 = arith.addf %81, %82 : vector<2x4xf32>
    %cst_42 = arith.constant 0.000000e+00 : f32
    %84 = vector.broadcast %cst_42 : f32 to vector<2x4xf32>
    %85 = arith.maximumf %83, %84 : vector<2x4xf32>
    %cst_43 = arith.constant 0.000000e+00 : f32
    %86 = vector.broadcast %cst_43 : f32 to vector<2x4xf32>
    %87 = arith.minimumf %83, %86 : vector<2x4xf32>
    %88 = math.exp %87 : vector<2x4xf32>
    %cst_44 = arith.constant 1.000000e+00 : f32
    %89 = vector.broadcast %cst_44 : f32 to vector<2x4xf32>
    %90 = arith.subf %88, %89 : vector<2x4xf32>
    %91 = arith.addf %85, %90 : vector<2x4xf32>
    %cst_45 = arith.constant dense<0.000000e+00> : vector<8x4xf32>
    %92 = tpu.matmul %5, %91, %cst_45 {dimension_numbers = #tpu.dot_dimension_numbers<[1], [0], [0], [1], [0, 0, 1, 1], [], []>} : vector<8x2xf32>, vector<2x4xf32>, vector<8x4xf32> -> vector<8x4xf32>
    %93 = vector.broadcast %6 : vector<8x1xf32> to vector<8x4xf32>
    %94 = arith.addf %92, %93 : vector<8x4xf32>
    %cst_46 = arith.constant 0.000000e+00 : f32
    %95 = vector.broadcast %cst_46 : f32 to vector<8x4xf32>
    %96 = arith.subf %95, %94 : vector<8x4xf32>
    %97 = math.exp %96 : vector<8x4xf32>
    %cst_47 = arith.constant 1.000000e+00 : f32
    %98 = vector.broadcast %cst_47 : f32 to vector<8x4xf32>
    %99 = arith.addf %98, %97 : vector<8x4xf32>
    %cst_48 = arith.constant 1.000000e+00 : f32
    %100 = vector.broadcast %cst_48 : f32 to vector<8x4xf32>
    %101 = arith.divf %100, %99 : vector<8x4xf32>
    %102 = vector.extract_strided_slice %1 {offsets = [0, 2], sizes = [16, 1], strides = [1, 1]} : vector<16x4xf32> to vector<16x1xf32>
    %103 = vector.shape_cast %102 : vector<16x1xf32> to vector<1x16x1xf32>
    %104 = vector.shape_cast %101 : vector<8x4xf32> to vector<8x1x4xf32>
    %105 = vector.broadcast %103 : vector<1x16x1xf32> to vector<8x16x4xf32>
    %106 = vector.broadcast %104 : vector<8x1x4xf32> to vector<8x16x4xf32>
    %107 = arith.mulf %105, %106 : vector<8x16x4xf32>
    %108 = arith.addf %76, %107 : vector<8x16x4xf32>
    %109 = vector.extract_strided_slice %11 {offsets = [0, 12, 0], sizes = [8, 4, 4], strides = [1, 1, 1]} : vector<8x16x4xf32> to vector<8x4x4xf32>
    %cst_49 = arith.constant dense<0.000000e+00> : vector<8x4xf32>
    %110 = vector.multi_reduction <add>, %109, %cst_49 [1] : vector<8x4x4xf32> to vector<8x4xf32>
    %cst_50 = arith.constant 4.000000e+00 : f32
    %111 = vector.broadcast %cst_50 : f32 to vector<8x4xf32>
    %112 = arith.divf %110, %111 : vector<8x4xf32>
    %cst_51 = arith.constant dense<0.000000e+00> : vector<2x4xf32>
    %113 = tpu.matmul %3, %112, %cst_51 {dimension_numbers = #tpu.dot_dimension_numbers<[1], [0], [0], [1], [0, 0, 1, 1], [], []>} : vector<2x8xf32>, vector<8x4xf32>, vector<2x4xf32> -> vector<2x4xf32>
    %114 = vector.broadcast %4 : vector<2x1xf32> to vector<2x4xf32>
    %115 = arith.addf %113, %114 : vector<2x4xf32>
    %cst_52 = arith.constant 0.000000e+00 : f32
    %116 = vector.broadcast %cst_52 : f32 to vector<2x4xf32>
    %117 = arith.maximumf %115, %116 : vector<2x4xf32>
    %cst_53 = arith.constant 0.000000e+00 : f32
    %118 = vector.broadcast %cst_53 : f32 to vector<2x4xf32>
    %119 = arith.minimumf %115, %118 : vector<2x4xf32>
    %120 = math.exp %119 : vector<2x4xf32>
    %cst_54 = arith.constant 1.000000e+00 : f32
    %121 = vector.broadcast %cst_54 : f32 to vector<2x4xf32>
    %122 = arith.subf %120, %121 : vector<2x4xf32>
    %123 = arith.addf %117, %122 : vector<2x4xf32>
    %cst_55 = arith.constant dense<0.000000e+00> : vector<8x4xf32>
    %124 = tpu.matmul %5, %123, %cst_55 {dimension_numbers = #tpu.dot_dimension_numbers<[1], [0], [0], [1], [0, 0, 1, 1], [], []>} : vector<8x2xf32>, vector<2x4xf32>, vector<8x4xf32> -> vector<8x4xf32>
    %125 = vector.broadcast %6 : vector<8x1xf32> to vector<8x4xf32>
    %126 = arith.addf %124, %125 : vector<8x4xf32>
    %cst_56 = arith.constant 0.000000e+00 : f32
    %127 = vector.broadcast %cst_56 : f32 to vector<8x4xf32>
    %128 = arith.subf %127, %126 : vector<8x4xf32>
    %129 = math.exp %128 : vector<8x4xf32>
    %cst_57 = arith.constant 1.000000e+00 : f32
    %130 = vector.broadcast %cst_57 : f32 to vector<8x4xf32>
    %131 = arith.addf %130, %129 : vector<8x4xf32>
    %cst_58 = arith.constant 1.000000e+00 : f32
    %132 = vector.broadcast %cst_58 : f32 to vector<8x4xf32>
    %133 = arith.divf %132, %131 : vector<8x4xf32>
    %134 = vector.extract_strided_slice %1 {offsets = [0, 3], sizes = [16, 1], strides = [1, 1]} : vector<16x4xf32> to vector<16x1xf32>
    %135 = vector.shape_cast %134 : vector<16x1xf32> to vector<1x16x1xf32>
    %136 = vector.shape_cast %133 : vector<8x4xf32> to vector<8x1x4xf32>
    %137 = vector.broadcast %135 : vector<1x16x1xf32> to vector<8x16x4xf32>
    %138 = vector.broadcast %136 : vector<8x1x4xf32> to vector<8x16x4xf32>
    %139 = arith.mulf %137, %138 : vector<8x16x4xf32>
    %140 = arith.addf %108, %139 : vector<8x16x4xf32>
    %141 = vector.shape_cast %140 : vector<8x16x4xf32> to vector<128x4xf32>
    %cst_59 = arith.constant dense<0.000000e+00> : vector<128x16xf32>
    %142 = tpu.matmul %141, %2, %cst_59 {dimension_numbers = #tpu.dot_dimension_numbers<[1], [0], [0], [1], [0, 0, 1, 1], [], []>} : vector<128x4xf32>, vector<4x16xf32>, vector<128x16xf32> -> vector<128x16xf32>
    %cst_60 = arith.constant 1.000000e+00 : f32
    %143 = vector.broadcast %cst_60 : f32 to vector<128x16xf32>
    %144 = arith.addf %143, %142 : vector<128x16xf32>
    %145 = arith.mulf %9, %144 : vector<128x16xf32>
    %146 = vector.shape_cast %145 : vector<128x16xf32> to vector<8x16x16xf32>
    %c0_61 = arith.constant 0 : index
    %c0_62 = arith.constant 0 : index
    %c0_63 = arith.constant 0 : index
    %c0_64 = arith.constant 0 : index
    %c0_65 = arith.constant 0 : index
    %147 = vector.load %arg10[%c0_61, %c0_62, %c0_63, %c0_64, %c0_65] : memref<1x8x4x16x16xf32, #tpu.memory_space<vmem>>, vector<1x8x1x16x16xf32>
    %148 = vector.shape_cast %147 : vector<1x8x1x16x16xf32> to vector<8x16x16xf32>
    %149 = vector.shape_cast %146 : vector<8x16x16xf32> to vector<1x8x1x16x16xf32>
    tpu.vector_store %arg10[%c0_61, %c0_62, %c0_63, %c0_64, %c0_65], %149 {strides = array<i32>} : memref<1x8x4x16x16xf32, #tpu.memory_space<vmem>>, vector<1x8x1x16x16xf32>,
    %c0_66 = arith.constant 0 : index
    %c0_67 = arith.constant 0 : index
    %c1 = arith.constant 1 : index
    %c0_68 = arith.constant 0 : index
    %c0_69 = arith.constant 0 : index
    %150 = vector.load %arg2[%c0_66, %c0_67, %c1, %c0_68, %c0_69] : memref<1x8x4x16x16xf32, #tpu.memory_space<vmem>>, vector<1x8x1x16x16xf32>
    %151 = vector.shape_cast %150 : vector<1x8x1x16x16xf32> to vector<8x16x16xf32>
    %152 = vector.shape_cast %151 : vector<8x16x16xf32> to vector<128x16xf32>
    %cst_70 = arith.constant dense<0.000000e+00> : vector<128x4xf32>
    %153 = tpu.matmul %152, %0, %cst_70 {dimension_numbers = #tpu.dot_dimension_numbers<[1], [0], [0], [1], [0, 0, 1, 1], [], []>} : vector<128x16xf32>, vector<16x4xf32>, vector<128x4xf32> -> vector<128x4xf32>
    %154 = vector.shape_cast %153 : vector<128x4xf32> to vector<8x16x4xf32>
    %cst_71 = arith.constant 0.000000e+00 : f32
    %155 = vector.broadcast %cst_71 : f32 to vector<8x16x4xf32>
    %156 = vector.extract_strided_slice %154 {offsets = [0, 0, 0], sizes = [8, 4, 4], strides = [1, 1, 1]} : vector<8x16x4xf32> to vector<8x4x4xf32>
    %cst_72 = arith.constant dense<0.000000e+00> : vector<8x4xf32>
    %157 = vector.multi_reduction <add>, %156, %cst_72 [1] : vector<8x4x4xf32> to vector<8x4xf32>
    %cst_73 = arith.constant 4.000000e+00 : f32
    %158 = vector.broadcast %cst_73 : f32 to vector<8x4xf32>
    %159 = arith.divf %157, %158 : vector<8x4xf32>
    %cst_74 = arith.constant dense<0.000000e+00> : vector<2x4xf32>
    %160 = tpu.matmul %3, %159, %cst_74 {dimension_numbers = #tpu.dot_dimension_numbers<[1], [0], [0], [1], [0, 0, 1, 1], [], []>} : vector<2x8xf32>, vector<8x4xf32>, vector<2x4xf32> -> vector<2x4xf32>
    %161 = vector.broadcast %4 : vector<2x1xf32> to vector<2x4xf32>
    %162 = arith.addf %160, %161 : vector<2x4xf32>
    %cst_75 = arith.constant 0.000000e+00 : f32
    %163 = vector.broadcast %cst_75 : f32 to vector<2x4xf32>
    %164 = arith.maximumf %162, %163 : vector<2x4xf32>
    %cst_76 = arith.constant 0.000000e+00 : f32
    %165 = vector.broadcast %cst_76 : f32 to vector<2x4xf32>
    %166 = arith.minimumf %162, %165 : vector<2x4xf32>
    %167 = math.exp %166 : vector<2x4xf32>
    %cst_77 = arith.constant 1.000000e+00 : f32
    %168 = vector.broadcast %cst_77 : f32 to vector<2x4xf32>
    %169 = arith.subf %167, %168 : vector<2x4xf32>
    %170 = arith.addf %164, %169 : vector<2x4xf32>
    %cst_78 = arith.constant dense<0.000000e+00> : vector<8x4xf32>
    %171 = tpu.matmul %5, %170, %cst_78 {dimension_numbers = #tpu.dot_dimension_numbers<[1], [0], [0], [1], [0, 0, 1, 1], [], []>} : vector<8x2xf32>, vector<2x4xf32>, vector<8x4xf32> -> vector<8x4xf32>
    %172 = vector.broadcast %6 : vector<8x1xf32> to vector<8x4xf32>
    %173 = arith.addf %171, %172 : vector<8x4xf32>
    %cst_79 = arith.constant 0.000000e+00 : f32
    %174 = vector.broadcast %cst_79 : f32 to vector<8x4xf32>
    %175 = arith.subf %174, %173 : vector<8x4xf32>
    %176 = math.exp %175 : vector<8x4xf32>
    %cst_80 = arith.constant 1.000000e+00 : f32
    %177 = vector.broadcast %cst_80 : f32 to vector<8x4xf32>
    %178 = arith.addf %177, %176 : vector<8x4xf32>
    %cst_81 = arith.constant 1.000000e+00 : f32
    %179 = vector.broadcast %cst_81 : f32 to vector<8x4xf32>
    %180 = arith.divf %179, %178 : vector<8x4xf32>
    %181 = vector.extract_strided_slice %1 {offsets = [0, 0], sizes = [16, 1], strides = [1, 1]} : vector<16x4xf32> to vector<16x1xf32>
    %182 = vector.shape_cast %181 : vector<16x1xf32> to vector<1x16x1xf32>
    %183 = vector.shape_cast %180 : vector<8x4xf32> to vector<8x1x4xf32>
    %184 = vector.broadcast %182 : vector<1x16x1xf32> to vector<8x16x4xf32>
    %185 = vector.broadcast %183 : vector<8x1x4xf32> to vector<8x16x4xf32>
    %186 = arith.mulf %184, %185 : vector<8x16x4xf32>
    %187 = arith.addf %155, %186 : vector<8x16x4xf32>
    %188 = vector.extract_strided_slice %154 {offsets = [0, 4, 0], sizes = [8, 4, 4], strides = [1, 1, 1]} : vector<8x16x4xf32> to vector<8x4x4xf32>
    %cst_82 = arith.constant dense<0.000000e+00> : vector<8x4xf32>
    %189 = vector.multi_reduction <add>, %188, %cst_82 [1] : vector<8x4x4xf32> to vector<8x4xf32>
    %cst_83 = arith.constant 4.000000e+00 : f32
    %190 = vector.broadcast %cst_83 : f32 to vector<8x4xf32>
    %191 = arith.divf %189, %190 : vector<8x4xf32>
    %cst_84 = arith.constant dense<0.000000e+00> : vector<2x4xf32>
    %192 = tpu.matmul %3, %191, %cst_84 {dimension_numbers = #tpu.dot_dimension_numbers<[1], [0], [0], [1], [0, 0, 1, 1], [], []>} : vector<2x8xf32>, vector<8x4xf32>, vector<2x4xf32> -> vector<2x4xf32>
    %193 = vector.broadcast %4 : vector<2x1xf32> to vector<2x4xf32>
    %194 = arith.addf %192, %193 : vector<2x4xf32>
    %cst_85 = arith.constant 0.000000e+00 : f32
    %195 = vector.broadcast %cst_85 : f32 to vector<2x4xf32>
    %196 = arith.maximumf %194, %195 : vector<2x4xf32>
    %cst_86 = arith.constant 0.000000e+00 : f32
    %197 = vector.broadcast %cst_86 : f32 to vector<2x4xf32>
    %198 = arith.minimumf %194, %197 : vector<2x4xf32>
    %199 = math.exp %198 : vector<2x4xf32>
    %cst_87 = arith.constant 1.000000e+00 : f32
    %200 = vector.broadcast %cst_87 : f32 to vector<2x4xf32>
    %201 = arith.subf %199, %200 : vector<2x4xf32>
    %202 = arith.addf %196, %201 : vector<2x4xf32>
    %cst_88 = arith.constant dense<0.000000e+00> : vector<8x4xf32>
    %203 = tpu.matmul %5, %202, %cst_88 {dimension_numbers = #tpu.dot_dimension_numbers<[1], [0], [0], [1], [0, 0, 1, 1], [], []>} : vector<8x2xf32>, vector<2x4xf32>, vector<8x4xf32> -> vector<8x4xf32>
    %204 = vector.broadcast %6 : vector<8x1xf32> to vector<8x4xf32>
    %205 = arith.addf %203, %204 : vector<8x4xf32>
    %cst_89 = arith.constant 0.000000e+00 : f32
    %206 = vector.broadcast %cst_89 : f32 to vector<8x4xf32>
    %207 = arith.subf %206, %205 : vector<8x4xf32>
    %208 = math.exp %207 : vector<8x4xf32>
    %cst_90 = arith.constant 1.000000e+00 : f32
    %209 = vector.broadcast %cst_90 : f32 to vector<8x4xf32>
    %210 = arith.addf %209, %208 : vector<8x4xf32>
    %cst_91 = arith.constant 1.000000e+00 : f32
    %211 = vector.broadcast %cst_91 : f32 to vector<8x4xf32>
    %212 = arith.divf %211, %210 : vector<8x4xf32>
    %213 = vector.extract_strided_slice %1 {offsets = [0, 1], sizes = [16, 1], strides = [1, 1]} : vector<16x4xf32> to vector<16x1xf32>
    %214 = vector.shape_cast %213 : vector<16x1xf32> to vector<1x16x1xf32>
    %215 = vector.shape_cast %212 : vector<8x4xf32> to vector<8x1x4xf32>
    %216 = vector.broadcast %214 : vector<1x16x1xf32> to vector<8x16x4xf32>
    %217 = vector.broadcast %215 : vector<8x1x4xf32> to vector<8x16x4xf32>
    %218 = arith.mulf %216, %217 : vector<8x16x4xf32>
    %219 = arith.addf %187, %218 : vector<8x16x4xf32>
    %220 = vector.extract_strided_slice %154 {offsets = [0, 8, 0], sizes = [8, 4, 4], strides = [1, 1, 1]} : vector<8x16x4xf32> to vector<8x4x4xf32>
    %cst_92 = arith.constant dense<0.000000e+00> : vector<8x4xf32>
    %221 = vector.multi_reduction <add>, %220, %cst_92 [1] : vector<8x4x4xf32> to vector<8x4xf32>
    %cst_93 = arith.constant 4.000000e+00 : f32
    %222 = vector.broadcast %cst_93 : f32 to vector<8x4xf32>
    %223 = arith.divf %221, %222 : vector<8x4xf32>
    %cst_94 = arith.constant dense<0.000000e+00> : vector<2x4xf32>
    %224 = tpu.matmul %3, %223, %cst_94 {dimension_numbers = #tpu.dot_dimension_numbers<[1], [0], [0], [1], [0, 0, 1, 1], [], []>} : vector<2x8xf32>, vector<8x4xf32>, vector<2x4xf32> -> vector<2x4xf32>
    %225 = vector.broadcast %4 : vector<2x1xf32> to vector<2x4xf32>
    %226 = arith.addf %224, %225 : vector<2x4xf32>
    %cst_95 = arith.constant 0.000000e+00 : f32
    %227 = vector.broadcast %cst_95 : f32 to vector<2x4xf32>
    %228 = arith.maximumf %226, %227 : vector<2x4xf32>
    %cst_96 = arith.constant 0.000000e+00 : f32
    %229 = vector.broadcast %cst_96 : f32 to vector<2x4xf32>
    %230 = arith.minimumf %226, %229 : vector<2x4xf32>
    %231 = math.exp %230 : vector<2x4xf32>
    %cst_97 = arith.constant 1.000000e+00 : f32
    %232 = vector.broadcast %cst_97 : f32 to vector<2x4xf32>
    %233 = arith.subf %231, %232 : vector<2x4xf32>
    %234 = arith.addf %228, %233 : vector<2x4xf32>
    %cst_98 = arith.constant dense<0.000000e+00> : vector<8x4xf32>
    %235 = tpu.matmul %5, %234, %cst_98 {dimension_numbers = #tpu.dot_dimension_numbers<[1], [0], [0], [1], [0, 0, 1, 1], [], []>} : vector<8x2xf32>, vector<2x4xf32>, vector<8x4xf32> -> vector<8x4xf32>
    %236 = vector.broadcast %6 : vector<8x1xf32> to vector<8x4xf32>
    %237 = arith.addf %235, %236 : vector<8x4xf32>
    %cst_99 = arith.constant 0.000000e+00 : f32
    %238 = vector.broadcast %cst_99 : f32 to vector<8x4xf32>
    %239 = arith.subf %238, %237 : vector<8x4xf32>
    %240 = math.exp %239 : vector<8x4xf32>
    %cst_100 = arith.constant 1.000000e+00 : f32
    %241 = vector.broadcast %cst_100 : f32 to vector<8x4xf32>
    %242 = arith.addf %241, %240 : vector<8x4xf32>
    %cst_101 = arith.constant 1.000000e+00 : f32
    %243 = vector.broadcast %cst_101 : f32 to vector<8x4xf32>
    %244 = arith.divf %243, %242 : vector<8x4xf32>
    %245 = vector.extract_strided_slice %1 {offsets = [0, 2], sizes = [16, 1], strides = [1, 1]} : vector<16x4xf32> to vector<16x1xf32>
    %246 = vector.shape_cast %245 : vector<16x1xf32> to vector<1x16x1xf32>
    %247 = vector.shape_cast %244 : vector<8x4xf32> to vector<8x1x4xf32>
    %248 = vector.broadcast %246 : vector<1x16x1xf32> to vector<8x16x4xf32>
    %249 = vector.broadcast %247 : vector<8x1x4xf32> to vector<8x16x4xf32>
    %250 = arith.mulf %248, %249 : vector<8x16x4xf32>
    %251 = arith.addf %219, %250 : vector<8x16x4xf32>
    %252 = vector.extract_strided_slice %154 {offsets = [0, 12, 0], sizes = [8, 4, 4], strides = [1, 1, 1]} : vector<8x16x4xf32> to vector<8x4x4xf32>
    %cst_102 = arith.constant dense<0.000000e+00> : vector<8x4xf32>
    %253 = vector.multi_reduction <add>, %252, %cst_102 [1] : vector<8x4x4xf32> to vector<8x4xf32>
    %cst_103 = arith.constant 4.000000e+00 : f32
    %254 = vector.broadcast %cst_103 : f32 to vector<8x4xf32>
    %255 = arith.divf %253, %254 : vector<8x4xf32>
    %cst_104 = arith.constant dense<0.000000e+00> : vector<2x4xf32>
    %256 = tpu.matmul %3, %255, %cst_104 {dimension_numbers = #tpu.dot_dimension_numbers<[1], [0], [0], [1], [0, 0, 1, 1], [], []>} : vector<2x8xf32>, vector<8x4xf32>, vector<2x4xf32> -> vector<2x4xf32>
    %257 = vector.broadcast %4 : vector<2x1xf32> to vector<2x4xf32>
    %258 = arith.addf %256, %257 : vector<2x4xf32>
    %cst_105 = arith.constant 0.000000e+00 : f32
    %259 = vector.broadcast %cst_105 : f32 to vector<2x4xf32>
    %260 = arith.maximumf %258, %259 : vector<2x4xf32>
    %cst_106 = arith.constant 0.000000e+00 : f32
    %261 = vector.broadcast %cst_106 : f32 to vector<2x4xf32>
    %262 = arith.minimumf %258, %261 : vector<2x4xf32>
    %263 = math.exp %262 : vector<2x4xf32>
    %cst_107 = arith.constant 1.000000e+00 : f32
    %264 = vector.broadcast %cst_107 : f32 to vector<2x4xf32>
    %265 = arith.subf %263, %264 : vector<2x4xf32>
    %266 = arith.addf %260, %265 : vector<2x4xf32>
    %cst_108 = arith.constant dense<0.000000e+00> : vector<8x4xf32>
    %267 = tpu.matmul %5, %266, %cst_108 {dimension_numbers = #tpu.dot_dimension_numbers<[1], [0], [0], [1], [0, 0, 1, 1], [], []>} : vector<8x2xf32>, vector<2x4xf32>, vector<8x4xf32> -> vector<8x4xf32>
    %268 = vector.broadcast %6 : vector<8x1xf32> to vector<8x4xf32>
    %269 = arith.addf %267, %268 : vector<8x4xf32>
    %cst_109 = arith.constant 0.000000e+00 : f32
    %270 = vector.broadcast %cst_109 : f32 to vector<8x4xf32>
    %271 = arith.subf %270, %269 : vector<8x4xf32>
    %272 = math.exp %271 : vector<8x4xf32>
    %cst_110 = arith.constant 1.000000e+00 : f32
    %273 = vector.broadcast %cst_110 : f32 to vector<8x4xf32>
    %274 = arith.addf %273, %272 : vector<8x4xf32>
    %cst_111 = arith.constant 1.000000e+00 : f32
    %275 = vector.broadcast %cst_111 : f32 to vector<8x4xf32>
    %276 = arith.divf %275, %274 : vector<8x4xf32>
    %277 = vector.extract_strided_slice %1 {offsets = [0, 3], sizes = [16, 1], strides = [1, 1]} : vector<16x4xf32> to vector<16x1xf32>
    %278 = vector.shape_cast %277 : vector<16x1xf32> to vector<1x16x1xf32>
    %279 = vector.shape_cast %276 : vector<8x4xf32> to vector<8x1x4xf32>
    %280 = vector.broadcast %278 : vector<1x16x1xf32> to vector<8x16x4xf32>
    %281 = vector.broadcast %279 : vector<8x1x4xf32> to vector<8x16x4xf32>
    %282 = arith.mulf %280, %281 : vector<8x16x4xf32>
    %283 = arith.addf %251, %282 : vector<8x16x4xf32>
    %284 = vector.shape_cast %283 : vector<8x16x4xf32> to vector<128x4xf32>
    %cst_112 = arith.constant dense<0.000000e+00> : vector<128x16xf32>
    %285 = tpu.matmul %284, %2, %cst_112 {dimension_numbers = #tpu.dot_dimension_numbers<[1], [0], [0], [1], [0, 0, 1, 1], [], []>} : vector<128x4xf32>, vector<4x16xf32>, vector<128x16xf32> -> vector<128x16xf32>
    %cst_113 = arith.constant 1.000000e+00 : f32
    %286 = vector.broadcast %cst_113 : f32 to vector<128x16xf32>
    %287 = arith.addf %286, %285 : vector<128x16xf32>
    %288 = arith.mulf %152, %287 : vector<128x16xf32>
    %289 = vector.shape_cast %288 : vector<128x16xf32> to vector<8x16x16xf32>
    %c0_114 = arith.constant 0 : index
    %c0_115 = arith.constant 0 : index
    %c1_116 = arith.constant 1 : index
    %c0_117 = arith.constant 0 : index
    %c0_118 = arith.constant 0 : index
    %290 = vector.load %arg10[%c0_114, %c0_115, %c1_116, %c0_117, %c0_118] : memref<1x8x4x16x16xf32, #tpu.memory_space<vmem>>, vector<1x8x1x16x16xf32>
    %291 = vector.shape_cast %290 : vector<1x8x1x16x16xf32> to vector<8x16x16xf32>
    %292 = vector.shape_cast %289 : vector<8x16x16xf32> to vector<1x8x1x16x16xf32>
    tpu.vector_store %arg10[%c0_114, %c0_115, %c1_116, %c0_117, %c0_118], %292 {strides = array<i32>} : memref<1x8x4x16x16xf32, #tpu.memory_space<vmem>>, vector<1x8x1x16x16xf32>,
    %c0_119 = arith.constant 0 : index
    %c0_120 = arith.constant 0 : index
    %c2 = arith.constant 2 : index
    %c0_121 = arith.constant 0 : index
    %c0_122 = arith.constant 0 : index
    %293 = vector.load %arg2[%c0_119, %c0_120, %c2, %c0_121, %c0_122] : memref<1x8x4x16x16xf32, #tpu.memory_space<vmem>>, vector<1x8x1x16x16xf32>
    %294 = vector.shape_cast %293 : vector<1x8x1x16x16xf32> to vector<8x16x16xf32>
    %295 = vector.shape_cast %294 : vector<8x16x16xf32> to vector<128x16xf32>
    %cst_123 = arith.constant dense<0.000000e+00> : vector<128x4xf32>
    %296 = tpu.matmul %295, %0, %cst_123 {dimension_numbers = #tpu.dot_dimension_numbers<[1], [0], [0], [1], [0, 0, 1, 1], [], []>} : vector<128x16xf32>, vector<16x4xf32>, vector<128x4xf32> -> vector<128x4xf32>
    %297 = vector.shape_cast %296 : vector<128x4xf32> to vector<8x16x4xf32>
    %cst_124 = arith.constant 0.000000e+00 : f32
    %298 = vector.broadcast %cst_124 : f32 to vector<8x16x4xf32>
    %299 = vector.extract_strided_slice %297 {offsets = [0, 0, 0], sizes = [8, 4, 4], strides = [1, 1, 1]} : vector<8x16x4xf32> to vector<8x4x4xf32>
    %cst_125 = arith.constant dense<0.000000e+00> : vector<8x4xf32>
    %300 = vector.multi_reduction <add>, %299, %cst_125 [1] : vector<8x4x4xf32> to vector<8x4xf32>
    %cst_126 = arith.constant 4.000000e+00 : f32
    %301 = vector.broadcast %cst_126 : f32 to vector<8x4xf32>
    %302 = arith.divf %300, %301 : vector<8x4xf32>
    %cst_127 = arith.constant dense<0.000000e+00> : vector<2x4xf32>
    %303 = tpu.matmul %3, %302, %cst_127 {dimension_numbers = #tpu.dot_dimension_numbers<[1], [0], [0], [1], [0, 0, 1, 1], [], []>} : vector<2x8xf32>, vector<8x4xf32>, vector<2x4xf32> -> vector<2x4xf32>
    %304 = vector.broadcast %4 : vector<2x1xf32> to vector<2x4xf32>
    %305 = arith.addf %303, %304 : vector<2x4xf32>
    %cst_128 = arith.constant 0.000000e+00 : f32
    %306 = vector.broadcast %cst_128 : f32 to vector<2x4xf32>
    %307 = arith.maximumf %305, %306 : vector<2x4xf32>
    %cst_129 = arith.constant 0.000000e+00 : f32
    %308 = vector.broadcast %cst_129 : f32 to vector<2x4xf32>
    %309 = arith.minimumf %305, %308 : vector<2x4xf32>
    %310 = math.exp %309 : vector<2x4xf32>
    %cst_130 = arith.constant 1.000000e+00 : f32
    %311 = vector.broadcast %cst_130 : f32 to vector<2x4xf32>
    %312 = arith.subf %310, %311 : vector<2x4xf32>
    %313 = arith.addf %307, %312 : vector<2x4xf32>
    %cst_131 = arith.constant dense<0.000000e+00> : vector<8x4xf32>
    %314 = tpu.matmul %5, %313, %cst_131 {dimension_numbers = #tpu.dot_dimension_numbers<[1], [0], [0], [1], [0, 0, 1, 1], [], []>} : vector<8x2xf32>, vector<2x4xf32>, vector<8x4xf32> -> vector<8x4xf32>
    %315 = vector.broadcast %6 : vector<8x1xf32> to vector<8x4xf32>
    %316 = arith.addf %314, %315 : vector<8x4xf32>
    %cst_132 = arith.constant 0.000000e+00 : f32
    %317 = vector.broadcast %cst_132 : f32 to vector<8x4xf32>
    %318 = arith.subf %317, %316 : vector<8x4xf32>
    %319 = math.exp %318 : vector<8x4xf32>
    %cst_133 = arith.constant 1.000000e+00 : f32
    %320 = vector.broadcast %cst_133 : f32 to vector<8x4xf32>
    %321 = arith.addf %320, %319 : vector<8x4xf32>
    %cst_134 = arith.constant 1.000000e+00 : f32
    %322 = vector.broadcast %cst_134 : f32 to vector<8x4xf32>
    %323 = arith.divf %322, %321 : vector<8x4xf32>
    %324 = vector.extract_strided_slice %1 {offsets = [0, 0], sizes = [16, 1], strides = [1, 1]} : vector<16x4xf32> to vector<16x1xf32>
    %325 = vector.shape_cast %324 : vector<16x1xf32> to vector<1x16x1xf32>
    %326 = vector.shape_cast %323 : vector<8x4xf32> to vector<8x1x4xf32>
    %327 = vector.broadcast %325 : vector<1x16x1xf32> to vector<8x16x4xf32>
    %328 = vector.broadcast %326 : vector<8x1x4xf32> to vector<8x16x4xf32>
    %329 = arith.mulf %327, %328 : vector<8x16x4xf32>
    %330 = arith.addf %298, %329 : vector<8x16x4xf32>
    %331 = vector.extract_strided_slice %297 {offsets = [0, 4, 0], sizes = [8, 4, 4], strides = [1, 1, 1]} : vector<8x16x4xf32> to vector<8x4x4xf32>
    %cst_135 = arith.constant dense<0.000000e+00> : vector<8x4xf32>
    %332 = vector.multi_reduction <add>, %331, %cst_135 [1] : vector<8x4x4xf32> to vector<8x4xf32>
    %cst_136 = arith.constant 4.000000e+00 : f32
    %333 = vector.broadcast %cst_136 : f32 to vector<8x4xf32>
    %334 = arith.divf %332, %333 : vector<8x4xf32>
    %cst_137 = arith.constant dense<0.000000e+00> : vector<2x4xf32>
    %335 = tpu.matmul %3, %334, %cst_137 {dimension_numbers = #tpu.dot_dimension_numbers<[1], [0], [0], [1], [0, 0, 1, 1], [], []>} : vector<2x8xf32>, vector<8x4xf32>, vector<2x4xf32> -> vector<2x4xf32>
    %336 = vector.broadcast %4 : vector<2x1xf32> to vector<2x4xf32>
    %337 = arith.addf %335, %336 : vector<2x4xf32>
    %cst_138 = arith.constant 0.000000e+00 : f32
    %338 = vector.broadcast %cst_138 : f32 to vector<2x4xf32>
    %339 = arith.maximumf %337, %338 : vector<2x4xf32>
    %cst_139 = arith.constant 0.000000e+00 : f32
    %340 = vector.broadcast %cst_139 : f32 to vector<2x4xf32>
    %341 = arith.minimumf %337, %340 : vector<2x4xf32>
    %342 = math.exp %341 : vector<2x4xf32>
    %cst_140 = arith.constant 1.000000e+00 : f32
    %343 = vector.broadcast %cst_140 : f32 to vector<2x4xf32>
    %344 = arith.subf %342, %343 : vector<2x4xf32>
    %345 = arith.addf %339, %344 : vector<2x4xf32>
    %cst_141 = arith.constant dense<0.000000e+00> : vector<8x4xf32>
    %346 = tpu.matmul %5, %345, %cst_141 {dimension_numbers = #tpu.dot_dimension_numbers<[1], [0], [0], [1], [0, 0, 1, 1], [], []>} : vector<8x2xf32>, vector<2x4xf32>, vector<8x4xf32> -> vector<8x4xf32>
    %347 = vector.broadcast %6 : vector<8x1xf32> to vector<8x4xf32>
    %348 = arith.addf %346, %347 : vector<8x4xf32>
    %cst_142 = arith.constant 0.000000e+00 : f32
    %349 = vector.broadcast %cst_142 : f32 to vector<8x4xf32>
    %350 = arith.subf %349, %348 : vector<8x4xf32>
    %351 = math.exp %350 : vector<8x4xf32>
    %cst_143 = arith.constant 1.000000e+00 : f32
    %352 = vector.broadcast %cst_143 : f32 to vector<8x4xf32>
    %353 = arith.addf %352, %351 : vector<8x4xf32>
    %cst_144 = arith.constant 1.000000e+00 : f32
    %354 = vector.broadcast %cst_144 : f32 to vector<8x4xf32>
    %355 = arith.divf %354, %353 : vector<8x4xf32>
    %356 = vector.extract_strided_slice %1 {offsets = [0, 1], sizes = [16, 1], strides = [1, 1]} : vector<16x4xf32> to vector<16x1xf32>
    %357 = vector.shape_cast %356 : vector<16x1xf32> to vector<1x16x1xf32>
    %358 = vector.shape_cast %355 : vector<8x4xf32> to vector<8x1x4xf32>
    %359 = vector.broadcast %357 : vector<1x16x1xf32> to vector<8x16x4xf32>
    %360 = vector.broadcast %358 : vector<8x1x4xf32> to vector<8x16x4xf32>
    %361 = arith.mulf %359, %360 : vector<8x16x4xf32>
    %362 = arith.addf %330, %361 : vector<8x16x4xf32>
    %363 = vector.extract_strided_slice %297 {offsets = [0, 8, 0], sizes = [8, 4, 4], strides = [1, 1, 1]} : vector<8x16x4xf32> to vector<8x4x4xf32>
    %cst_145 = arith.constant dense<0.000000e+00> : vector<8x4xf32>
    %364 = vector.multi_reduction <add>, %363, %cst_145 [1] : vector<8x4x4xf32> to vector<8x4xf32>
    %cst_146 = arith.constant 4.000000e+00 : f32
    %365 = vector.broadcast %cst_146 : f32 to vector<8x4xf32>
    %366 = arith.divf %364, %365 : vector<8x4xf32>
    %cst_147 = arith.constant dense<0.000000e+00> : vector<2x4xf32>
    %367 = tpu.matmul %3, %366, %cst_147 {dimension_numbers = #tpu.dot_dimension_numbers<[1], [0], [0], [1], [0, 0, 1, 1], [], []>} : vector<2x8xf32>, vector<8x4xf32>, vector<2x4xf32> -> vector<2x4xf32>
    %368 = vector.broadcast %4 : vector<2x1xf32> to vector<2x4xf32>
    %369 = arith.addf %367, %368 : vector<2x4xf32>
    %cst_148 = arith.constant 0.000000e+00 : f32
    %370 = vector.broadcast %cst_148 : f32 to vector<2x4xf32>
    %371 = arith.maximumf %369, %370 : vector<2x4xf32>
    %cst_149 = arith.constant 0.000000e+00 : f32
    %372 = vector.broadcast %cst_149 : f32 to vector<2x4xf32>
    %373 = arith.minimumf %369, %372 : vector<2x4xf32>
    %374 = math.exp %373 : vector<2x4xf32>
    %cst_150 = arith.constant 1.000000e+00 : f32
    %375 = vector.broadcast %cst_150 : f32 to vector<2x4xf32>
    %376 = arith.subf %374, %375 : vector<2x4xf32>
    %377 = arith.addf %371, %376 : vector<2x4xf32>
    %cst_151 = arith.constant dense<0.000000e+00> : vector<8x4xf32>
    %378 = tpu.matmul %5, %377, %cst_151 {dimension_numbers = #tpu.dot_dimension_numbers<[1], [0], [0], [1], [0, 0, 1, 1], [], []>} : vector<8x2xf32>, vector<2x4xf32>, vector<8x4xf32> -> vector<8x4xf32>
    %379 = vector.broadcast %6 : vector<8x1xf32> to vector<8x4xf32>
    %380 = arith.addf %378, %379 : vector<8x4xf32>
    %cst_152 = arith.constant 0.000000e+00 : f32
    %381 = vector.broadcast %cst_152 : f32 to vector<8x4xf32>
    %382 = arith.subf %381, %380 : vector<8x4xf32>
    %383 = math.exp %382 : vector<8x4xf32>
    %cst_153 = arith.constant 1.000000e+00 : f32
    %384 = vector.broadcast %cst_153 : f32 to vector<8x4xf32>
    %385 = arith.addf %384, %383 : vector<8x4xf32>
    %cst_154 = arith.constant 1.000000e+00 : f32
    %386 = vector.broadcast %cst_154 : f32 to vector<8x4xf32>
    %387 = arith.divf %386, %385 : vector<8x4xf32>
    %388 = vector.extract_strided_slice %1 {offsets = [0, 2], sizes = [16, 1], strides = [1, 1]} : vector<16x4xf32> to vector<16x1xf32>
    %389 = vector.shape_cast %388 : vector<16x1xf32> to vector<1x16x1xf32>
    %390 = vector.shape_cast %387 : vector<8x4xf32> to vector<8x1x4xf32>
    %391 = vector.broadcast %389 : vector<1x16x1xf32> to vector<8x16x4xf32>
    %392 = vector.broadcast %390 : vector<8x1x4xf32> to vector<8x16x4xf32>
    %393 = arith.mulf %391, %392 : vector<8x16x4xf32>
    %394 = arith.addf %362, %393 : vector<8x16x4xf32>
    %395 = vector.extract_strided_slice %297 {offsets = [0, 12, 0], sizes = [8, 4, 4], strides = [1, 1, 1]} : vector<8x16x4xf32> to vector<8x4x4xf32>
    %cst_155 = arith.constant dense<0.000000e+00> : vector<8x4xf32>
    %396 = vector.multi_reduction <add>, %395, %cst_155 [1] : vector<8x4x4xf32> to vector<8x4xf32>
    %cst_156 = arith.constant 4.000000e+00 : f32
    %397 = vector.broadcast %cst_156 : f32 to vector<8x4xf32>
    %398 = arith.divf %396, %397 : vector<8x4xf32>
    %cst_157 = arith.constant dense<0.000000e+00> : vector<2x4xf32>
    %399 = tpu.matmul %3, %398, %cst_157 {dimension_numbers = #tpu.dot_dimension_numbers<[1], [0], [0], [1], [0, 0, 1, 1], [], []>} : vector<2x8xf32>, vector<8x4xf32>, vector<2x4xf32> -> vector<2x4xf32>
    %400 = vector.broadcast %4 : vector<2x1xf32> to vector<2x4xf32>
    %401 = arith.addf %399, %400 : vector<2x4xf32>
    %cst_158 = arith.constant 0.000000e+00 : f32
    %402 = vector.broadcast %cst_158 : f32 to vector<2x4xf32>
    %403 = arith.maximumf %401, %402 : vector<2x4xf32>
    %cst_159 = arith.constant 0.000000e+00 : f32
    %404 = vector.broadcast %cst_159 : f32 to vector<2x4xf32>
    %405 = arith.minimumf %401, %404 : vector<2x4xf32>
    %406 = math.exp %405 : vector<2x4xf32>
    %cst_160 = arith.constant 1.000000e+00 : f32
    %407 = vector.broadcast %cst_160 : f32 to vector<2x4xf32>
    %408 = arith.subf %406, %407 : vector<2x4xf32>
    %409 = arith.addf %403, %408 : vector<2x4xf32>
    %cst_161 = arith.constant dense<0.000000e+00> : vector<8x4xf32>
    %410 = tpu.matmul %5, %409, %cst_161 {dimension_numbers = #tpu.dot_dimension_numbers<[1], [0], [0], [1], [0, 0, 1, 1], [], []>} : vector<8x2xf32>, vector<2x4xf32>, vector<8x4xf32> -> vector<8x4xf32>
    %411 = vector.broadcast %6 : vector<8x1xf32> to vector<8x4xf32>
    %412 = arith.addf %410, %411 : vector<8x4xf32>
    %cst_162 = arith.constant 0.000000e+00 : f32
    %413 = vector.broadcast %cst_162 : f32 to vector<8x4xf32>
    %414 = arith.subf %413, %412 : vector<8x4xf32>
    %415 = math.exp %414 : vector<8x4xf32>
    %cst_163 = arith.constant 1.000000e+00 : f32
    %416 = vector.broadcast %cst_163 : f32 to vector<8x4xf32>
    %417 = arith.addf %416, %415 : vector<8x4xf32>
    %cst_164 = arith.constant 1.000000e+00 : f32
    %418 = vector.broadcast %cst_164 : f32 to vector<8x4xf32>
    %419 = arith.divf %418, %417 : vector<8x4xf32>
    %420 = vector.extract_strided_slice %1 {offsets = [0, 3], sizes = [16, 1], strides = [1, 1]} : vector<16x4xf32> to vector<16x1xf32>
    %421 = vector.shape_cast %420 : vector<16x1xf32> to vector<1x16x1xf32>
    %422 = vector.shape_cast %419 : vector<8x4xf32> to vector<8x1x4xf32>
    %423 = vector.broadcast %421 : vector<1x16x1xf32> to vector<8x16x4xf32>
    %424 = vector.broadcast %422 : vector<8x1x4xf32> to vector<8x16x4xf32>
    %425 = arith.mulf %423, %424 : vector<8x16x4xf32>
    %426 = arith.addf %394, %425 : vector<8x16x4xf32>
    %427 = vector.shape_cast %426 : vector<8x16x4xf32> to vector<128x4xf32>
    %cst_165 = arith.constant dense<0.000000e+00> : vector<128x16xf32>
    %428 = tpu.matmul %427, %2, %cst_165 {dimension_numbers = #tpu.dot_dimension_numbers<[1], [0], [0], [1], [0, 0, 1, 1], [], []>} : vector<128x4xf32>, vector<4x16xf32>, vector<128x16xf32> -> vector<128x16xf32>
    %cst_166 = arith.constant 1.000000e+00 : f32
    %429 = vector.broadcast %cst_166 : f32 to vector<128x16xf32>
    %430 = arith.addf %429, %428 : vector<128x16xf32>
    %431 = arith.mulf %295, %430 : vector<128x16xf32>
    %432 = vector.shape_cast %431 : vector<128x16xf32> to vector<8x16x16xf32>
    %c0_167 = arith.constant 0 : index
    %c0_168 = arith.constant 0 : index
    %c2_169 = arith.constant 2 : index
    %c0_170 = arith.constant 0 : index
    %c0_171 = arith.constant 0 : index
    %433 = vector.load %arg10[%c0_167, %c0_168, %c2_169, %c0_170, %c0_171] : memref<1x8x4x16x16xf32, #tpu.memory_space<vmem>>, vector<1x8x1x16x16xf32>
    %434 = vector.shape_cast %433 : vector<1x8x1x16x16xf32> to vector<8x16x16xf32>
    %435 = vector.shape_cast %432 : vector<8x16x16xf32> to vector<1x8x1x16x16xf32>
    tpu.vector_store %arg10[%c0_167, %c0_168, %c2_169, %c0_170, %c0_171], %435 {strides = array<i32>} : memref<1x8x4x16x16xf32, #tpu.memory_space<vmem>>, vector<1x8x1x16x16xf32>,
    %c0_172 = arith.constant 0 : index
    %c0_173 = arith.constant 0 : index
    %c3 = arith.constant 3 : index
    %c0_174 = arith.constant 0 : index
    %c0_175 = arith.constant 0 : index
    %436 = vector.load %arg2[%c0_172, %c0_173, %c3, %c0_174, %c0_175] : memref<1x8x4x16x16xf32, #tpu.memory_space<vmem>>, vector<1x8x1x16x16xf32>
    %437 = vector.shape_cast %436 : vector<1x8x1x16x16xf32> to vector<8x16x16xf32>
    %438 = vector.shape_cast %437 : vector<8x16x16xf32> to vector<128x16xf32>
    %cst_176 = arith.constant dense<0.000000e+00> : vector<128x4xf32>
    %439 = tpu.matmul %438, %0, %cst_176 {dimension_numbers = #tpu.dot_dimension_numbers<[1], [0], [0], [1], [0, 0, 1, 1], [], []>} : vector<128x16xf32>, vector<16x4xf32>, vector<128x4xf32> -> vector<128x4xf32>
    %440 = vector.shape_cast %439 : vector<128x4xf32> to vector<8x16x4xf32>
    %cst_177 = arith.constant 0.000000e+00 : f32
    %441 = vector.broadcast %cst_177 : f32 to vector<8x16x4xf32>
    %442 = vector.extract_strided_slice %440 {offsets = [0, 0, 0], sizes = [8, 4, 4], strides = [1, 1, 1]} : vector<8x16x4xf32> to vector<8x4x4xf32>
    %cst_178 = arith.constant dense<0.000000e+00> : vector<8x4xf32>
    %443 = vector.multi_reduction <add>, %442, %cst_178 [1] : vector<8x4x4xf32> to vector<8x4xf32>
    %cst_179 = arith.constant 4.000000e+00 : f32
    %444 = vector.broadcast %cst_179 : f32 to vector<8x4xf32>
    %445 = arith.divf %443, %444 : vector<8x4xf32>
    %cst_180 = arith.constant dense<0.000000e+00> : vector<2x4xf32>
    %446 = tpu.matmul %3, %445, %cst_180 {dimension_numbers = #tpu.dot_dimension_numbers<[1], [0], [0], [1], [0, 0, 1, 1], [], []>} : vector<2x8xf32>, vector<8x4xf32>, vector<2x4xf32> -> vector<2x4xf32>
    %447 = vector.broadcast %4 : vector<2x1xf32> to vector<2x4xf32>
    %448 = arith.addf %446, %447 : vector<2x4xf32>
    %cst_181 = arith.constant 0.000000e+00 : f32
    %449 = vector.broadcast %cst_181 : f32 to vector<2x4xf32>
    %450 = arith.maximumf %448, %449 : vector<2x4xf32>
    %cst_182 = arith.constant 0.000000e+00 : f32
    %451 = vector.broadcast %cst_182 : f32 to vector<2x4xf32>
    %452 = arith.minimumf %448, %451 : vector<2x4xf32>
    %453 = math.exp %452 : vector<2x4xf32>
    %cst_183 = arith.constant 1.000000e+00 : f32
    %454 = vector.broadcast %cst_183 : f32 to vector<2x4xf32>
    %455 = arith.subf %453, %454 : vector<2x4xf32>
    %456 = arith.addf %450, %455 : vector<2x4xf32>
    %cst_184 = arith.constant dense<0.000000e+00> : vector<8x4xf32>
    %457 = tpu.matmul %5, %456, %cst_184 {dimension_numbers = #tpu.dot_dimension_numbers<[1], [0], [0], [1], [0, 0, 1, 1], [], []>} : vector<8x2xf32>, vector<2x4xf32>, vector<8x4xf32> -> vector<8x4xf32>
    %458 = vector.broadcast %6 : vector<8x1xf32> to vector<8x4xf32>
    %459 = arith.addf %457, %458 : vector<8x4xf32>
    %cst_185 = arith.constant 0.000000e+00 : f32
    %460 = vector.broadcast %cst_185 : f32 to vector<8x4xf32>
    %461 = arith.subf %460, %459 : vector<8x4xf32>
    %462 = math.exp %461 : vector<8x4xf32>
    %cst_186 = arith.constant 1.000000e+00 : f32
    %463 = vector.broadcast %cst_186 : f32 to vector<8x4xf32>
    %464 = arith.addf %463, %462 : vector<8x4xf32>
    %cst_187 = arith.constant 1.000000e+00 : f32
    %465 = vector.broadcast %cst_187 : f32 to vector<8x4xf32>
    %466 = arith.divf %465, %464 : vector<8x4xf32>
    %467 = vector.extract_strided_slice %1 {offsets = [0, 0], sizes = [16, 1], strides = [1, 1]} : vector<16x4xf32> to vector<16x1xf32>
    %468 = vector.shape_cast %467 : vector<16x1xf32> to vector<1x16x1xf32>
    %469 = vector.shape_cast %466 : vector<8x4xf32> to vector<8x1x4xf32>
    %470 = vector.broadcast %468 : vector<1x16x1xf32> to vector<8x16x4xf32>
    %471 = vector.broadcast %469 : vector<8x1x4xf32> to vector<8x16x4xf32>
    %472 = arith.mulf %470, %471 : vector<8x16x4xf32>
    %473 = arith.addf %441, %472 : vector<8x16x4xf32>
    %474 = vector.extract_strided_slice %440 {offsets = [0, 4, 0], sizes = [8, 4, 4], strides = [1, 1, 1]} : vector<8x16x4xf32> to vector<8x4x4xf32>
    %cst_188 = arith.constant dense<0.000000e+00> : vector<8x4xf32>
    %475 = vector.multi_reduction <add>, %474, %cst_188 [1] : vector<8x4x4xf32> to vector<8x4xf32>
    %cst_189 = arith.constant 4.000000e+00 : f32
    %476 = vector.broadcast %cst_189 : f32 to vector<8x4xf32>
    %477 = arith.divf %475, %476 : vector<8x4xf32>
    %cst_190 = arith.constant dense<0.000000e+00> : vector<2x4xf32>
    %478 = tpu.matmul %3, %477, %cst_190 {dimension_numbers = #tpu.dot_dimension_numbers<[1], [0], [0], [1], [0, 0, 1, 1], [], []>} : vector<2x8xf32>, vector<8x4xf32>, vector<2x4xf32> -> vector<2x4xf32>
    %479 = vector.broadcast %4 : vector<2x1xf32> to vector<2x4xf32>
    %480 = arith.addf %478, %479 : vector<2x4xf32>
    %cst_191 = arith.constant 0.000000e+00 : f32
    %481 = vector.broadcast %cst_191 : f32 to vector<2x4xf32>
    %482 = arith.maximumf %480, %481 : vector<2x4xf32>
    %cst_192 = arith.constant 0.000000e+00 : f32
    %483 = vector.broadcast %cst_192 : f32 to vector<2x4xf32>
    %484 = arith.minimumf %480, %483 : vector<2x4xf32>
    %485 = math.exp %484 : vector<2x4xf32>
    %cst_193 = arith.constant 1.000000e+00 : f32
    %486 = vector.broadcast %cst_193 : f32 to vector<2x4xf32>
    %487 = arith.subf %485, %486 : vector<2x4xf32>
    %488 = arith.addf %482, %487 : vector<2x4xf32>
    %cst_194 = arith.constant dense<0.000000e+00> : vector<8x4xf32>
    %489 = tpu.matmul %5, %488, %cst_194 {dimension_numbers = #tpu.dot_dimension_numbers<[1], [0], [0], [1], [0, 0, 1, 1], [], []>} : vector<8x2xf32>, vector<2x4xf32>, vector<8x4xf32> -> vector<8x4xf32>
    %490 = vector.broadcast %6 : vector<8x1xf32> to vector<8x4xf32>
    %491 = arith.addf %489, %490 : vector<8x4xf32>
    %cst_195 = arith.constant 0.000000e+00 : f32
    %492 = vector.broadcast %cst_195 : f32 to vector<8x4xf32>
    %493 = arith.subf %492, %491 : vector<8x4xf32>
    %494 = math.exp %493 : vector<8x4xf32>
    %cst_196 = arith.constant 1.000000e+00 : f32
    %495 = vector.broadcast %cst_196 : f32 to vector<8x4xf32>
    %496 = arith.addf %495, %494 : vector<8x4xf32>
    %cst_197 = arith.constant 1.000000e+00 : f32
    %497 = vector.broadcast %cst_197 : f32 to vector<8x4xf32>
    %498 = arith.divf %497, %496 : vector<8x4xf32>
    %499 = vector.extract_strided_slice %1 {offsets = [0, 1], sizes = [16, 1], strides = [1, 1]} : vector<16x4xf32> to vector<16x1xf32>
    %500 = vector.shape_cast %499 : vector<16x1xf32> to vector<1x16x1xf32>
    %501 = vector.shape_cast %498 : vector<8x4xf32> to vector<8x1x4xf32>
    %502 = vector.broadcast %500 : vector<1x16x1xf32> to vector<8x16x4xf32>
    %503 = vector.broadcast %501 : vector<8x1x4xf32> to vector<8x16x4xf32>
    %504 = arith.mulf %502, %503 : vector<8x16x4xf32>
    %505 = arith.addf %473, %504 : vector<8x16x4xf32>
    %506 = vector.extract_strided_slice %440 {offsets = [0, 8, 0], sizes = [8, 4, 4], strides = [1, 1, 1]} : vector<8x16x4xf32> to vector<8x4x4xf32>
    %cst_198 = arith.constant dense<0.000000e+00> : vector<8x4xf32>
    %507 = vector.multi_reduction <add>, %506, %cst_198 [1] : vector<8x4x4xf32> to vector<8x4xf32>
    %cst_199 = arith.constant 4.000000e+00 : f32
    %508 = vector.broadcast %cst_199 : f32 to vector<8x4xf32>
    %509 = arith.divf %507, %508 : vector<8x4xf32>
    %cst_200 = arith.constant dense<0.000000e+00> : vector<2x4xf32>
    %510 = tpu.matmul %3, %509, %cst_200 {dimension_numbers = #tpu.dot_dimension_numbers<[1], [0], [0], [1], [0, 0, 1, 1], [], []>} : vector<2x8xf32>, vector<8x4xf32>, vector<2x4xf32> -> vector<2x4xf32>
    %511 = vector.broadcast %4 : vector<2x1xf32> to vector<2x4xf32>
    %512 = arith.addf %510, %511 : vector<2x4xf32>
    %cst_201 = arith.constant 0.000000e+00 : f32
    %513 = vector.broadcast %cst_201 : f32 to vector<2x4xf32>
    %514 = arith.maximumf %512, %513 : vector<2x4xf32>
    %cst_202 = arith.constant 0.000000e+00 : f32
    %515 = vector.broadcast %cst_202 : f32 to vector<2x4xf32>
    %516 = arith.minimumf %512, %515 : vector<2x4xf32>
    %517 = math.exp %516 : vector<2x4xf32>
    %cst_203 = arith.constant 1.000000e+00 : f32
    %518 = vector.broadcast %cst_203 : f32 to vector<2x4xf32>
    %519 = arith.subf %517, %518 : vector<2x4xf32>
    %520 = arith.addf %514, %519 : vector<2x4xf32>
    %cst_204 = arith.constant dense<0.000000e+00> : vector<8x4xf32>
    %521 = tpu.matmul %5, %520, %cst_204 {dimension_numbers = #tpu.dot_dimension_numbers<[1], [0], [0], [1], [0, 0, 1, 1], [], []>} : vector<8x2xf32>, vector<2x4xf32>, vector<8x4xf32> -> vector<8x4xf32>
    %522 = vector.broadcast %6 : vector<8x1xf32> to vector<8x4xf32>
    %523 = arith.addf %521, %522 : vector<8x4xf32>
    %cst_205 = arith.constant 0.000000e+00 : f32
    %524 = vector.broadcast %cst_205 : f32 to vector<8x4xf32>
    %525 = arith.subf %524, %523 : vector<8x4xf32>
    %526 = math.exp %525 : vector<8x4xf32>
    %cst_206 = arith.constant 1.000000e+00 : f32
    %527 = vector.broadcast %cst_206 : f32 to vector<8x4xf32>
    %528 = arith.addf %527, %526 : vector<8x4xf32>
    %cst_207 = arith.constant 1.000000e+00 : f32
    %529 = vector.broadcast %cst_207 : f32 to vector<8x4xf32>
    %530 = arith.divf %529, %528 : vector<8x4xf32>
    %531 = vector.extract_strided_slice %1 {offsets = [0, 2], sizes = [16, 1], strides = [1, 1]} : vector<16x4xf32> to vector<16x1xf32>
    %532 = vector.shape_cast %531 : vector<16x1xf32> to vector<1x16x1xf32>
    %533 = vector.shape_cast %530 : vector<8x4xf32> to vector<8x1x4xf32>
    %534 = vector.broadcast %532 : vector<1x16x1xf32> to vector<8x16x4xf32>
    %535 = vector.broadcast %533 : vector<8x1x4xf32> to vector<8x16x4xf32>
    %536 = arith.mulf %534, %535 : vector<8x16x4xf32>
    %537 = arith.addf %505, %536 : vector<8x16x4xf32>
    %538 = vector.extract_strided_slice %440 {offsets = [0, 12, 0], sizes = [8, 4, 4], strides = [1, 1, 1]} : vector<8x16x4xf32> to vector<8x4x4xf32>
    %cst_208 = arith.constant dense<0.000000e+00> : vector<8x4xf32>
    %539 = vector.multi_reduction <add>, %538, %cst_208 [1] : vector<8x4x4xf32> to vector<8x4xf32>
    %cst_209 = arith.constant 4.000000e+00 : f32
    %540 = vector.broadcast %cst_209 : f32 to vector<8x4xf32>
    %541 = arith.divf %539, %540 : vector<8x4xf32>
    %cst_210 = arith.constant dense<0.000000e+00> : vector<2x4xf32>
    %542 = tpu.matmul %3, %541, %cst_210 {dimension_numbers = #tpu.dot_dimension_numbers<[1], [0], [0], [1], [0, 0, 1, 1], [], []>} : vector<2x8xf32>, vector<8x4xf32>, vector<2x4xf32> -> vector<2x4xf32>
    %543 = vector.broadcast %4 : vector<2x1xf32> to vector<2x4xf32>
    %544 = arith.addf %542, %543 : vector<2x4xf32>
    %cst_211 = arith.constant 0.000000e+00 : f32
    %545 = vector.broadcast %cst_211 : f32 to vector<2x4xf32>
    %546 = arith.maximumf %544, %545 : vector<2x4xf32>
    %cst_212 = arith.constant 0.000000e+00 : f32
    %547 = vector.broadcast %cst_212 : f32 to vector<2x4xf32>
    %548 = arith.minimumf %544, %547 : vector<2x4xf32>
    %549 = math.exp %548 : vector<2x4xf32>
    %cst_213 = arith.constant 1.000000e+00 : f32
    %550 = vector.broadcast %cst_213 : f32 to vector<2x4xf32>
    %551 = arith.subf %549, %550 : vector<2x4xf32>
    %552 = arith.addf %546, %551 : vector<2x4xf32>
    %cst_214 = arith.constant dense<0.000000e+00> : vector<8x4xf32>
    %553 = tpu.matmul %5, %552, %cst_214 {dimension_numbers = #tpu.dot_dimension_numbers<[1], [0], [0], [1], [0, 0, 1, 1], [], []>} : vector<8x2xf32>, vector<2x4xf32>, vector<8x4xf32> -> vector<8x4xf32>
    %554 = vector.broadcast %6 : vector<8x1xf32> to vector<8x4xf32>
    %555 = arith.addf %553, %554 : vector<8x4xf32>
    %cst_215 = arith.constant 0.000000e+00 : f32
    %556 = vector.broadcast %cst_215 : f32 to vector<8x4xf32>
    %557 = arith.subf %556, %555 : vector<8x4xf32>
    %558 = math.exp %557 : vector<8x4xf32>
    %cst_216 = arith.constant 1.000000e+00 : f32
    %559 = vector.broadcast %cst_216 : f32 to vector<8x4xf32>
    %560 = arith.addf %559, %558 : vector<8x4xf32>
    %cst_217 = arith.constant 1.000000e+00 : f32
    %561 = vector.broadcast %cst_217 : f32 to vector<8x4xf32>
    %562 = arith.divf %561, %560 : vector<8x4xf32>
    %563 = vector.extract_strided_slice %1 {offsets = [0, 3], sizes = [16, 1], strides = [1, 1]} : vector<16x4xf32> to vector<16x1xf32>
    %564 = vector.shape_cast %563 : vector<16x1xf32> to vector<1x16x1xf32>
    %565 = vector.shape_cast %562 : vector<8x4xf32> to vector<8x1x4xf32>
    %566 = vector.broadcast %564 : vector<1x16x1xf32> to vector<8x16x4xf32>
    %567 = vector.broadcast %565 : vector<8x1x4xf32> to vector<8x16x4xf32>
    %568 = arith.mulf %566, %567 : vector<8x16x4xf32>
    %569 = arith.addf %537, %568 : vector<8x16x4xf32>
    %570 = vector.shape_cast %569 : vector<8x16x4xf32> to vector<128x4xf32>
    %cst_218 = arith.constant dense<0.000000e+00> : vector<128x16xf32>
    %571 = tpu.matmul %570, %2, %cst_218 {dimension_numbers = #tpu.dot_dimension_numbers<[1], [0], [0], [1], [0, 0, 1, 1], [], []>} : vector<128x4xf32>, vector<4x16xf32>, vector<128x16xf32> -> vector<128x16xf32>
    %cst_219 = arith.constant 1.000000e+00 : f32
    %572 = vector.broadcast %cst_219 : f32 to vector<128x16xf32>
    %573 = arith.addf %572, %571 : vector<128x16xf32>
    %574 = arith.mulf %438, %573 : vector<128x16xf32>
    %575 = vector.shape_cast %574 : vector<128x16xf32> to vector<8x16x16xf32>
    %c0_220 = arith.constant 0 : index
    %c0_221 = arith.constant 0 : index
    %c3_222 = arith.constant 3 : index
    %c0_223 = arith.constant 0 : index
    %c0_224 = arith.constant 0 : index
    %576 = vector.load %arg10[%c0_220, %c0_221, %c3_222, %c0_223, %c0_224] : memref<1x8x4x16x16xf32, #tpu.memory_space<vmem>>, vector<1x8x1x16x16xf32>
    %577 = vector.shape_cast %576 : vector<1x8x1x16x16xf32> to vector<8x16x16xf32>
    %578 = vector.shape_cast %575 : vector<8x16x16xf32> to vector<1x8x1x16x16xf32>
    tpu.vector_store %arg10[%c0_220, %c0_221, %c3_222, %c0_223, %c0_224], %578 {strides = array<i32>} : memref<1x8x4x16x16xf32, #tpu.memory_space<vmem>>, vector<1x8x1x16x16xf32>,
    return
  }
  func.func @transform_0(%arg0: i32, %arg1: i32) -> (i32, i32, i32, i32, i32) {
    %c0_i32 = arith.constant 0 : i32
    %c0_i32_0 = arith.constant 0 : i32
    %c0_i32_1 = arith.constant 0 : i32
    %c0_i32_2 = arith.constant 0 : i32
    return %arg0, %c0_i32, %arg1, %c0_i32_0, %c0_i32_1 : i32, i32, i32, i32, i32
  }
  func.func @transform_1(%arg0: i32, %arg1: i32) -> (i32, i32) {
    %c0_i32 = arith.constant 0 : i32
    %c0_i32_0 = arith.constant 0 : i32
    %c0_i32_1 = arith.constant 0 : i32
    return %c0_i32, %c0_i32_0 : i32, i32
  }
  func.func @transform_2(%arg0: i32, %arg1: i32) -> (i32, i32) {
    %c0_i32 = arith.constant 0 : i32
    %c0_i32_0 = arith.constant 0 : i32
    %c0_i32_1 = arith.constant 0 : i32
    return %c0_i32, %c0_i32_0 : i32, i32
  }
  func.func @transform_3(%arg0: i32, %arg1: i32) -> (i32, i32) {
    %c0_i32 = arith.constant 0 : i32
    %c0_i32_0 = arith.constant 0 : i32
    %c0_i32_1 = arith.constant 0 : i32
    return %c0_i32, %c0_i32_0 : i32, i32
  }
  func.func @transform_4(%arg0: i32, %arg1: i32) -> (i32, i32) {
    %c0_i32 = arith.constant 0 : i32
    %c0_i32_0 = arith.constant 0 : i32
    %c0_i32_1 = arith.constant 0 : i32
    return %c0_i32, %c0_i32_0 : i32, i32
  }
  func.func @transform_5(%arg0: i32, %arg1: i32) -> (i32, i32) {
    %c0_i32 = arith.constant 0 : i32
    %c0_i32_0 = arith.constant 0 : i32
    %c0_i32_1 = arith.constant 0 : i32
    return %c0_i32, %c0_i32_0 : i32, i32
  }
  func.func @transform_6(%arg0: i32, %arg1: i32) -> (i32, i32) {
    %c0_i32 = arith.constant 0 : i32
    %c0_i32_0 = arith.constant 0 : i32
    %c0_i32_1 = arith.constant 0 : i32
    return %c0_i32, %c0_i32_0 : i32, i32
  }
  func.func @transform_7(%arg0: i32, %arg1: i32) -> (i32, i32) {
    %c0_i32 = arith.constant 0 : i32
    %c0_i32_0 = arith.constant 0 : i32
    %c0_i32_1 = arith.constant 0 : i32
    return %c0_i32, %c0_i32_0 : i32, i32
  }
  func.func @transform_8(%arg0: i32, %arg1: i32) -> (i32, i32, i32, i32, i32) {
    %c0_i32 = arith.constant 0 : i32
    %c0_i32_0 = arith.constant 0 : i32
    %c0_i32_1 = arith.constant 0 : i32
    %c0_i32_2 = arith.constant 0 : i32
    return %arg0, %c0_i32, %arg1, %c0_i32_0, %c0_i32_1 : i32, i32, i32, i32, i32
  }
}

</mosaic_0001>

<llo_original>
// kernel: tpu_custom_call.1
$region0: #{tpu_custom_call.1}
  #allocation0 [shape = 'u32[]', space=smem, size = 0x4, offset = 0x4, fixed_abs, tag = 'smem constant byte address 0x4 - core index']
  #allocation1 [shape = 'u32[144,128]{1,0:T(1,128)}', space=vmem, size = 0x12000, scoped, tag = 'internal scratch']
  %s0 = inlined_call_operand.hbm [shape: f32[2,8,4,16,16], index: 0, kind: input, shape index: {}]
  %s1 = inlined_call_operand.vmem [shape: f32[16,4], index: 1, kind: input, shape index: {}]
  %s2 = inlined_call_operand.vmem [shape: f32[16,4], index: 2, kind: input, shape index: {}]
  %s3 = inlined_call_operand.vmem [shape: f32[4,16], index: 3, kind: input, shape index: {}]
  %s4 = inlined_call_operand.vmem [shape: f32[2,8], index: 4, kind: input, shape index: {}]
  %s5 = inlined_call_operand.vmem [shape: f32[2,1], index: 5, kind: input, shape index: {}]
  %s6 = inlined_call_operand.vmem [shape: f32[8,2], index: 6, kind: input, shape index: {}]
  %s7 = inlined_call_operand.vmem [shape: f32[8,1], index: 7, kind: input, shape index: {}]
  %s8 = inlined_call_operand.hbm [shape: f32[2,8,4,16,16], index: 8, kind: output, shape index: {}]
  %s9 = sld [smem:[#allocation0]]
  $region69: #{tpu_custom_call.1} parent=0
    _
  %s11 = ssub.s32 1, %s9
  %s12 = scalar_select 0, %s11, %s9
  $region1: #{tpu_custom_call.1} parent=0
    #allocation2 [shape = 'u8[524288]{0}', space=vmem, size = 0x80000, scoped, tag = 'input window, operand 0']
    #allocation3 [shape = 's32[2]{0}', space=sflag, size = 0x8, scoped, tag = 'scoped memory for tpu_custom_call.1']
    #allocation4 [shape = 's32[2]{0}', space=sflag, size = 0x8, scoped, tag = 'scoped memory for tpu_custom_call.1']
    #allocation5 [shape = 'u8[524288]{0}', space=vmem, size = 0x80000, scoped, tag = 'output window, operand 0']
    %13 = vsyncpa [#allocation3], 0
    %s14 = scalar_lea.sflag [#allocation3], 1
    %15 = vsyncpa %s14, 0
    %16 = vsyncpa [#allocation4], 0
    %s17 = scalar_lea.sflag [#allocation4], 1
    %18 = vsyncpa %s17, 0
    loop: start=0, step=1, limit=4
    $region2: #{tpu_custom_call.1} parent=1 // loop_pre_header
      _
    $region3: #{tpu_custom_call.1} parent=1 // loop_header
      %s20 = sphi 0, %s24
      %p21 = scmp.ge.s32.totalorder %s20, 4
      %s27 = sphi 0, %s39
      %s28 = sphi 0, %s35
      %s29 = sphi 0, %s27
      %s30 = sphi 0, %s28
      %s31 = sphi 0, %s29
      %s32 = sphi 0, %s30
      %s44 = sphi 0, %s46
      %s47 = sphi 0, %s44
      %s48 = sphi 0, %s47
      %s64 = sphi 0, %s48
      %s68 = sphi 0, %s68
      %s70 = sphi 0, %s68
      %s71 = sphi 0, %s70
      %s85 = sphi 0, %s71
      %s89 = sphi 0, %s89
      %s91 = sphi 0, %s89
      %s92 = sphi 0, %s91
      %s106 = sphi 0, %s92
      %s110 = sphi 0, %s110
      %s112 = sphi 0, %s110
      %s113 = sphi 0, %s112
      %s127 = sphi 0, %s113
      %s131 = sphi 0, %s131
      %s133 = sphi 0, %s131
      %s134 = sphi 0, %s133
      %s148 = sphi 0, %s134
      %s152 = sphi 0, %s152
      %s154 = sphi 0, %s152
      %s155 = sphi 0, %s154
      %s169 = sphi 0, %s155
      %s173 = sphi 0, %s173
      %s175 = sphi 0, %s173
      %s176 = sphi 0, %s175
      %s190 = sphi 0, %s176
      %s194 = sphi 0, %s194
      %s196 = sphi 0, %s194
      %s197 = sphi 0, %s196
      %s211 = sphi 0, %s197
      %s219 = sphi 0, %s221
      %s222 = sphi 0, %s219
      %s223 = sphi 0, %s222
      %s239 = sphi 0, %s223
    $region4: #{tpu_custom_call.1} parent=1 // loop_header_branch
      %23 = sbr.rel (%p21) target = $region8
    $region5: #{tpu_custom_call.1} parent=1 // loop_body
      %s25 = ssub.s32 %s20, 1
      %s26 = ssub.s32 %s20, 2
      %s33 = sadd.s32 1, %s28
      %p34 = scmp.ge.s32.totalorder %s33, 1
      %s35 = scalar_select %p34, 0, %s33
      %s36 = sadd.s32 1, %s27
      %s37 = scalar_select %p34, %s36, %s27
      %p38 = scmp.ge.s32.totalorder %s37, 2
      %s39 = scalar_select %p38, 0, %s37
      %s40 = ssub.s32 %s27, %s39
      %s41 = ssub.s32 %s28, %s35
      %s42 = sor.u32 %s40, %s41
      %p43 = scmp.eq.s32.totalorder %s42, 0
      %s45 = sadd.s32 %s44, 1
      %s46 = scalar_select %p43, %s44, %s45
      %p49 = pneg %p43
      %p50 = scmp.eq.s32.totalorder %s20, 1
      %p51 = por %p49, %p50
      %p52 = scmp.ne.s32.totalorder %s44, %s47
      %p53 = scmp.eq.s32.totalorder %s20, 0
      %p54 = por %p52, %p53
      %p55 = scmp.ne.s32.totalorder %s44, %s47
      %p56 = scmp.eq.s32.totalorder %s25, 1
      %p57 = por %p55, %p56
      %p58 = scmp.ne.s32.totalorder %s47, %s48
      %p59 = scmp.eq.s32.totalorder %s25, 0
      %p60 = por %p58, %p59
      %p61 = scmp.ne.s32.totalorder %s47, %s48
      %p62 = scmp.eq.s32.totalorder %s26, 1
      %p63 = por %p61, %p62
      %p65 = scmp.ne.s32.totalorder %s48, %s64
      %p66 = scmp.eq.s32.totalorder %s26, 0
      %p67 = por %p65, %p66
      %s69 = sadd.s32 %s68, 1
      %p72 = scmp.eq.s32.totalorder %s20, 1
      %p73 = scmp.ne.s32.totalorder %s68, %s70
      %p74 = scmp.eq.s32.totalorder %s20, 0
      %p75 = por %p73, %p74
      %p76 = scmp.ne.s32.totalorder %s68, %s70
      %p77 = scmp.eq.s32.totalorder %s25, 1
      %p78 = por %p76, %p77
      %p79 = scmp.ne.s32.totalorder %s70, %s71
      %p80 = scmp.eq.s32.totalorder %s25, 0
      %p81 = por %p79, %p80
      %p82 = scmp.ne.s32.totalorder %s70, %s71
      %p83 = scmp.eq.s32.totalorder %s26, 1
      %p84 = por %p82, %p83
      %p86 = scmp.ne.s32.totalorder %s71, %s85
      %p87 = scmp.eq.s32.totalorder %s26, 0
      %p88 = por %p86, %p87
      %s90 = sadd.s32 %s89, 1
      %p93 = scmp.eq.s32.totalorder %s20, 1
      %p94 = scmp.ne.s32.totalorder %s89, %s91
      %p95 = scmp.eq.s32.totalorder %s20, 0
      %p96 = por %p94, %p95
      %p97 = scmp.ne.s32.totalorder %s89, %s91
      %p98 = scmp.eq.s32.totalorder %s25, 1
      %p99 = por %p97, %p98
      %p100 = scmp.ne.s32.totalorder %s91, %s92
      %p101 = scmp.eq.s32.totalorder %s25, 0
      %p102 = por %p100, %p101
      %p103 = scmp.ne.s32.totalorder %s91, %s92
      %p104 = scmp.eq.s32.totalorder %s26, 1
      %p105 = por %p103, %p104
      %p107 = scmp.ne.s32.totalorder %s92, %s106
      %p108 = scmp.eq.s32.totalorder %s26, 0
      %p109 = por %p107, %p108
      %s111 = sadd.s32 %s110, 1
      %p114 = scmp.eq.s32.totalorder %s20, 1
      %p115 = scmp.ne.s32.totalorder %s110, %s112
      %p116 = scmp.eq.s32.totalorder %s20, 0
      %p117 = por %p115, %p116
      %p118 = scmp.ne.s32.totalorder %s110, %s112
      %p119 = scmp.eq.s32.totalorder %s25, 1
      %p120 = por %p118, %p119
      %p121 = scmp.ne.s32.totalorder %s112, %s113
      %p122 = scmp.eq.s32.totalorder %s25, 0
      %p123 = por %p121, %p122
      %p124 = scmp.ne.s32.totalorder %s112, %s113
      %p125 = scmp.eq.s32.totalorder %s26, 1
      %p126 = por %p124, %p125
      %p128 = scmp.ne.s32.totalorder %s113, %s127
      %p129 = scmp.eq.s32.totalorder %s26, 0
      %p130 = por %p128, %p129
      %s132 = sadd.s32 %s131, 1
      %p135 = scmp.eq.s32.totalorder %s20, 1
      %p136 = scmp.ne.s32.totalorder %s131, %s133
      %p137 = scmp.eq.s32.totalorder %s20, 0
      %p138 = por %p136, %p137
      %p139 = scmp.ne.s32.totalorder %s131, %s133
      %p140 = scmp.eq.s32.totalorder %s25, 1
      %p141 = por %p139, %p140
      %p142 = scmp.ne.s32.totalorder %s133, %s134
      %p143 = scmp.eq.s32.totalorder %s25, 0
      %p144 = por %p142, %p143
      %p145 = scmp.ne.s32.totalorder %s133, %s134
      %p146 = scmp.eq.s32.totalorder %s26, 1
      %p147 = por %p145, %p146
      %p149 = scmp.ne.s32.totalorder %s134, %s148
      %p150 = scmp.eq.s32.totalorder %s26, 0
      %p151 = por %p149, %p150
      %s153 = sadd.s32 %s152, 1
      %p156 = scmp.eq.s32.totalorder %s20, 1
      %p157 = scmp.ne.s32.totalorder %s152, %s154
      %p158 = scmp.eq.s32.totalorder %s20, 0
      %p159 = por %p157, %p158
      %p160 = scmp.ne.s32.totalorder %s152, %s154
      %p161 = scmp.eq.s32.totalorder %s25, 1
      %p162 = por %p160, %p161
      %p163 = scmp.ne.s32.totalorder %s154, %s155
      %p164 = scmp.eq.s32.totalorder %s25, 0
      %p165 = por %p163, %p164
      %p166 = scmp.ne.s32.totalorder %s154, %s155
      %p167 = scmp.eq.s32.totalorder %s26, 1
      %p168 = por %p166, %p167
      %p170 = scmp.ne.s32.totalorder %s155, %s169
      %p171 = scmp.eq.s32.totalorder %s26, 0
      %p172 = por %p170, %p171
      %s174 = sadd.s32 %s173, 1
      %p177 = scmp.eq.s32.totalorder %s20, 1
      %p178 = scmp.ne.s32.totalorder %s173, %s175
      %p179 = scmp.eq.s32.totalorder %s20, 0
      %p180 = por %p178, %p179
      %p181 = scmp.ne.s32.totalorder %s173, %s175
      %p182 = scmp.eq.s32.totalorder %s25, 1
      %p183 = por %p181, %p182
      %p184 = scmp.ne.s32.totalorder %s175, %s176
      %p185 = scmp.eq.s32.totalorder %s25, 0
      %p186 = por %p184, %p185
      %p187 = scmp.ne.s32.totalorder %s175, %s176
      %p188 = scmp.eq.s32.totalorder %s26, 1
      %p189 = por %p187, %p188
      %p191 = scmp.ne.s32.totalorder %s176, %s190
      %p192 = scmp.eq.s32.totalorder %s26, 0
      %p193 = por %p191, %p192
      %s195 = sadd.s32 %s194, 1
      %p198 = scmp.eq.s32.totalorder %s20, 1
      %p199 = scmp.ne.s32.totalorder %s194, %s196
      %p200 = scmp.eq.s32.totalorder %s20, 0
      %p201 = por %p199, %p200
      %p202 = scmp.ne.s32.totalorder %s194, %s196
      %p203 = scmp.eq.s32.totalorder %s25, 1
      %p204 = por %p202, %p203
      %p205 = scmp.ne.s32.totalorder %s196, %s197
      %p206 = scmp.eq.s32.totalorder %s25, 0
      %p207 = por %p205, %p206
      %p208 = scmp.ne.s32.totalorder %s196, %s197
      %p209 = scmp.eq.s32.totalorder %s26, 1
      %p210 = por %p208, %p209
      %p212 = scmp.ne.s32.totalorder %s197, %s211
      %p213 = scmp.eq.s32.totalorder %s26, 0
      %p214 = por %p212, %p213
      %s215 = ssub.s32 %s27, %s39
      %s216 = ssub.s32 %s28, %s35
      %s217 = sor.u32 %s215, %s216
      %p218 = scmp.eq.s32.totalorder %s217, 0
      %s220 = sadd.s32 %s219, 1
      %s221 = scalar_select %p218, %s219, %s220
      %p224 = pneg %p218
      %p225 = scmp.eq.s32.totalorder %s20, 1
      %p226 = por %p224, %p225
      %p227 = scmp.ne.s32.totalorder %s219, %s222
      %p228 = scmp.eq.s32.totalorder %s20, 0
      %p229 = por %p227, %p228
      %p230 = scmp.ne.s32.totalorder %s219, %s222
      %p231 = scmp.eq.s32.totalorder %s25, 1
      %p232 = por %p230, %p231
      %p233 = scmp.ne.s32.totalorder %s222, %s223
      %p234 = scmp.eq.s32.totalorder %s25, 0
      %p235 = por %p233, %p234
      %p236 = scmp.ne.s32.totalorder %s222, %s223
      %p237 = scmp.eq.s32.totalorder %s26, 1
      %p238 = por %p236, %p237
      %p240 = scmp.ne.s32.totalorder %s223, %s239
      %p241 = scmp.eq.s32.totalorder %s26, 0
      %p242 = por %p240, %p241
      %p243 = scmp.le.s32.totalorder 1, %s20
      %p244 = scmp.lt.s32.totalorder %s20, 3
      %p245 = pnand %p243, %p244
      %p246 = pneg %p245
      // Predicated region
      $region9: #{tpu_custom_call.1} parent=5 // pred_check
        _
      $region10: #{tpu_custom_call.1} parent=5 // pred_check_branch
        %248 = sbr.rel (%p245) target = $region12
      $region11: #{tpu_custom_call.1} parent=5 // pred_region
        %s249 = ssub.s32 %s20, 1
        // Predicated region
        $region13: #{tpu_custom_call.1} parent=11 // pred_check
          %p250 = pneg %p81
        $region14: #{tpu_custom_call.1} parent=11 // pred_check_branch
          %252 = sbr.rel (%p250) target = $region16
        $region15: #{tpu_custom_call.1} parent=11 // pred_region
          _
        $region16: #{tpu_custom_call.1} parent=11 // pred_fallthru
          _
        // Predicated region
        $region17: #{tpu_custom_call.1} parent=11 // pred_check
          %p253 = pneg %p102
        $region18: #{tpu_custom_call.1} parent=11 // pred_check_branch
          %255 = sbr.rel (%p253) target = $region20
        $region19: #{tpu_custom_call.1} parent=11 // pred_region
          _
        $region20: #{tpu_custom_call.1} parent=11 // pred_fallthru
          _
        // Predicated region
        $region21: #{tpu_custom_call.1} parent=11 // pred_check
          %p256 = pneg %p123
        $region22: #{tpu_custom_call.1} parent=11 // pred_check_branch
          %258 = sbr.rel (%p256) target = $region24
        $region23: #{tpu_custom_call.1} parent=11 // pred_region
          _
        $region24: #{tpu_custom_call.1} parent=11 // pred_fallthru
          _
        // Predicated region
        $region25: #{tpu_custom_call.1} parent=11 // pred_check
          %p259 = pneg %p144
        $region26: #{tpu_custom_call.1} parent=11 // pred_check_branch
          %261 = sbr.rel (%p259) target = $region28
        $region27: #{tpu_custom_call.1} parent=11 // pred_region
          _
        $region28: #{tpu_custom_call.1} parent=11 // pred_fallthru
          _
        // Predicated region
        $region29: #{tpu_custom_call.1} parent=11 // pred_check
          %p262 = pneg %p165
        $region30: #{tpu_custom_call.1} parent=11 // pred_check_branch
          %264 = sbr.rel (%p262) target = $region32
        $region31: #{tpu_custom_call.1} parent=11 // pred_region
          _
        $region32: #{tpu_custom_call.1} parent=11 // pred_fallthru
          _
        // Predicated region
        $region33: #{tpu_custom_call.1} parent=11 // pred_check
          %p265 = pneg %p186
        $region34: #{tpu_custom_call.1} parent=11 // pred_check_branch
          %267 = sbr.rel (%p265) target = $region36
        $region35: #{tpu_custom_call.1} parent=11 // pred_region
          _
        $region36: #{tpu_custom_call.1} parent=11 // pred_fallthru
          _
        // Predicated region
        $region37: #{tpu_custom_call.1} parent=11 // pred_check
          %p268 = pneg %p207
        $region38: #{tpu_custom_call.1} parent=11 // pred_check_branch
          %270 = sbr.rel (%p268) target = $region40
        $region39: #{tpu_custom_call.1} parent=11 // pred_region
          _
        $region40: #{tpu_custom_call.1} parent=11 // pred_fallthru
          _
      $region12: #{tpu_custom_call.1} parent=5 // pred_fallthru
        _
      %p271 = scmp.lt.s32.totalorder %s20, 2
      // Predicated region
      $region41: #{tpu_custom_call.1} parent=5 // pred_check
        %p272 = pneg %p271
      $region42: #{tpu_custom_call.1} parent=5 // pred_check_branch
        %274 = sbr.rel (%p272) target = $region44
      $region43: #{tpu_custom_call.1} parent=5 // pred_region
        // Predicated region
        $region45: #{tpu_custom_call.1} parent=43 // pred_check
          %p275 = pneg %p54
        $region46: #{tpu_custom_call.1} parent=43 // pred_check_branch
          %277 = sbr.rel (%p275) target = $region48
        $region47: #{tpu_custom_call.1} parent=43 // pred_region
          %s278 = sand.u32 %s44, 1
          %s279 = scalar_lea.sflag [#allocation3], %s278
          %s280 = sand.u32 %s44, 1
          %s281 = smul.addr %s280, 512
          %s282 = scalar_lea.vmem [#allocation2], %s281
          %s283 = smul.u32 4, %s28
          %s285 = ssub.s32 8192, 8192
          %286 = vsyncadd %s279, %s285
          %s287 = smul.addr %s283, 2
          %s288 = smul.addr %s27, 64
          %s289 = sadd.s32 %s287, %s288
          %s290 = smul.addr %s289, 128
          %s291 = scalar_lea.hbm %s0, %s290
          %s292 = sshll.u32 %s282, 4
          %s293 = int_to_ptr.vmem [resolvable:$true] %s292
          %298 = dma.hbm_to_vmem [thread:$0]  %s291, 8192, %s293, %s279, 128, 128, 8
        $region48: #{tpu_custom_call.1} parent=43 // pred_fallthru
          _
      $region44: #{tpu_custom_call.1} parent=5 // pred_fallthru
        _
      %p299 = scmp.le.s32.totalorder 1, %s20
      %p300 = scmp.lt.s32.totalorder %s20, 3
      %p301 = pnand %p299, %p300
      %p302 = pneg %p301
      // Predicated region
      $region49: #{tpu_custom_call.1} parent=5 // pred_check
        _
      $region50: #{tpu_custom_call.1} parent=5 // pred_check_branch
        %304 = sbr.rel (%p301) target = $region52
      $region51: #{tpu_custom_call.1} parent=5 // pred_region
        %s305 = ssub.s32 %s20, 1
        %s306 = sand.u32 %s47, 1
        %s307 = scalar_lea.sflag [#allocation3], %s306
        %s308 = sand.u32 %s47, 1
        %s309 = smul.addr %s308, 512
        %s310 = scalar_lea.vmem [#allocation2], %s309
        // Predicated region
        $region53: #{tpu_custom_call.1} parent=51 // pred_check
          %p311 = pneg %p60
        $region54: #{tpu_custom_call.1} parent=51 // pred_check_branch
          %313 = sbr.rel (%p311) target = $region56
        $region55: #{tpu_custom_call.1} parent=51 // pred_region
          %314 = dma.done %s307, 8192
        $region56: #{tpu_custom_call.1} parent=51 // pred_fallthru
          _
        %s315 = sand.u32 %s47, 1
        %s316 = scalar_lea.sflag [#allocation3], %s315
        %s317 = sand.u32 %s47, 1
        %s318 = smul.addr %s317, 512
        %s319 = scalar_lea.vmem [#allocation2], %s318
        %p320 = pneg %p60
        %p321 = pneg %p57
        %p322 = pneg %p81
        %p323 = pneg %p78
        %p324 = pneg %p102
        %p325 = pneg %p99
        %p326 = pneg %p123
        %p327 = pneg %p120
        %p328 = pneg %p144
        %p329 = pneg %p141
        %p330 = pneg %p165
        %p331 = pneg %p162
        %p332 = pneg %p186
        %p333 = pneg %p183
        %p334 = pneg %p207
        %p335 = pneg %p204
        %p336 = pneg %p235
        %p337 = pneg %p232
        %s338 = sand.u32 %s222, 1
        %s339 = scalar_lea.sflag [#allocation4], %s338
        %s340 = sand.u32 %s222, 1
        %s341 = smul.addr %s340, 512
        %s342 = scalar_lea.vmem [#allocation5], %s341
        %s343 = smul.u32 4, %s30
        %s344 = smul.u32 4, %s30
        %v345 = vld [vmem:[%s1] sm:$0xff]
        %v346 = vld [vmem:[%s1 + $0x8] sm:$0xff]
        %v347 = vld [vmem:[%s2] sm:$0xff]
        %v348 = vld [vmem:[%s2 + $0x8] sm:$0xff]
        %v349 = vld [vmem:[%s3] sm:$0xf]
        %v350 = vld [vmem:[%s4] sm:$0x3]
        %v351 = vld [vmem:[%s5] sm:$0x3]
        %v352 = vld [vmem:[%s6] sm:$0xff]
        %v353 = vld [vmem:[%s7] sm:$0xff]
        %v354 = vld [vmem:[%s310] sm:$0xff]
        %v355 = vld [vmem:[%s310 + $0x8] sm:$0xff]
        %v356 = vld [vmem:[%s310 + $0x40] sm:$0xff]
        %v357 = vld [vmem:[%s310 + $0x48] sm:$0xff]
        %v358 = vld [vmem:[%s310 + $0x80] sm:$0xff]
        %v359 = vld [vmem:[%s310 + $0x88] sm:$0xff]
        %v360 = vld [vmem:[%s310 + $0xc0] sm:$0xff]
        %v361 = vld [vmem:[%s310 + $0xc8] sm:$0xff]
        %v362 = vld [vmem:[%s310 + $0x100] sm:$0xff]
        %v363 = vld [vmem:[%s310 + $0x108] sm:$0xff]
        %v364 = vld [vmem:[%s310 + $0x140] sm:$0xff]
        %v365 = vld [vmem:[%s310 + $0x148] sm:$0xff]
        %v366 = vld [vmem:[%s310 + $0x180] sm:$0xff]
        %v367 = vld [vmem:[%s310 + $0x188] sm:$0xff]
        %v368 = vld [vmem:[%s310 + $0x1c0] sm:$0xff]
        %v369 = vld [vmem:[%s310 + $0x1c8] sm:$0xff]
        %vm370 = vcmask 130048
        %v372 = vsel %vm370, %v354, 0
        %v375 = vsel %vm370, %v355, 0
        %v378 = vsel %vm370, %v356, 0
        %v381 = vsel %vm370, %v357, 0
        %v384 = vsel %vm370, %v358, 0
        %v387 = vsel %vm370, %v359, 0
        %v390 = vsel %vm370, %v360, 0
        %v393 = vsel %vm370, %v361, 0
        %v396 = vsel %vm370, %v362, 0
        %v399 = vsel %vm370, %v363, 0
        %v402 = vsel %vm370, %v364, 0
        %v405 = vsel %vm370, %v365, 0
        %v408 = vsel %vm370, %v366, 0
        %v411 = vsel %vm370, %v367, 0
        %v414 = vsel %vm370, %v368, 0
        %v417 = vsel %vm370, %v369, 0
        %419 = vmatprep.subr.mxu0 0.0
        %420 = vmatpush1.msra.mxu0 %v345
        %421 = vmatprep.subr.mxu0 0.0
        %422 = vmatpush1.msra.mxu0 %v346
        %423 = vmatprep.subr.mxu0 0.0
        %424 = vmatpush1.msra.mxu0 0.0
        %425 = vmatprep.subr.mxu0 0.0
        %426 = vmatpush1.msra.mxu0 0.0
        %427 = vmatprep.subr.mxu0 0.0
        %428 = vmatpush1.msra.mxu0 0.0
        %429 = vmatprep.subr.mxu0 0.0
        %430 = vmatpush1.msra.mxu0 0.0
        %431 = vmatprep.subr.mxu0 0.0
        %432 = vmatpush1.msra.mxu0 0.0
        %433 = vmatprep.subr.mxu0 0.0
        %434 = vmatpush1.msra.mxu0 0.0
        %435 = vmatprep.subr.mxu0 0.0
        %436 = vmatpush1.msra.mxu0 0.0
        %437 = vmatprep.subr.mxu0 0.0
        %438 = vmatpush1.msra.mxu0 0.0
        %439 = vmatprep.subr.mxu0 0.0
        %440 = vmatpush1.msra.mxu0 0.0
        %441 = vmatprep.subr.mxu0 0.0
        %442 = vmatpush1.msra.mxu0 0.0
        %443 = vmatprep.subr.mxu0 0.0
        %444 = vmatpush1.msra.mxu0 0.0
        %445 = vmatprep.subr.mxu0 0.0
        %446 = vmatpush1.msra.mxu0 0.0
        %447 = vmatprep.subr.mxu0 0.0
        %448 = vmatpush1.msra.mxu0 0.0
        %449 = vmatprep.subr.mxu0 0.0
        %450 = vmatpush1.msra.mxu0 0.0
        %451 = vmatprep.subr.mxu0 0.0
        %452 = vmatpush1.msra.mxu0 0.0
        %453 = vmatprep.subr.mxu0 0.0
        %454 = vmatpush1.msra.mxu0 0.0
        %455 = vmatprep.subr.mxu0 0.0
        %456 = vmatpush1.msra.mxu0 0.0
        %457 = vmatprep.subr.mxu0 0.0
        %458 = vmatpush1.msra.mxu0 0.0
        %459 = vmatprep.subr.mxu0 0.0
        %460 = vmatpush1.msra.mxu0 0.0
        %461 = vmatprep.subr.mxu0 0.0
        %462 = vmatpush1.msra.mxu0 0.0
        %463 = vmatprep.subr.mxu0 0.0
        %464 = vmatpush1.msra.mxu0 0.0
        %465 = vmatprep.subr.mxu0 0.0
        %466 = vmatpush1.msra.mxu0 0.0
        %467 = vmatprep.subr.mxu0 0.0
        %468 = vmatpush1.msra.mxu0 0.0
        %469 = vmatprep.subr.mxu0 0.0
        %470 = vmatpush1.msra.mxu0 0.0
        %471 = vmatprep.subr.mxu0 0.0
        %472 = vmatpush1.msra.mxu0 0.0
        %473 = vmatprep.subr.mxu0 0.0
        %474 = vmatpush1.msra.mxu0 0.0
        %475 = vmatprep.subr.mxu0 0.0
        %476 = vmatpush1.msra.mxu0 0.0
        %477 = vmatprep.subr.mxu0 0.0
        %478 = vmatpush1.msra.mxu0 0.0
        %479 = vmatprep.subr.mxu0 0.0
        %480 = vmatpush1.msra.mxu0 0.0
        %481 = vmatprep.subr.mxu0 0.0
        %482 = vmatpush1.msra.mxu0 0.0
        %483 = vmatprep.mubr.f32.mxu0 0.0
        %484 = vmatmul.mubr.f32.gmra.mrb[0].mxu0 %v372
        %v485 = vpop.f32.mrb[0].mxu0
        %v486 = vadd.f32 0.0, %v485
        %v487 = vpop.f32.mrb[0].mxu0
        %488 = vmatprep.mubr.f32.mxu0 0.0
        %489 = vmatmul.mubr.f32.gmra.mrb[0].mxu0 %v375
        %v490 = vpop.f32.mrb[0].mxu0
        %v491 = vadd.f32 0.0, %v490
        %v492 = vpop.f32.mrb[0].mxu0
        %493 = vmatprep.mubr.f32.mxu0 0.0
        %494 = vmatmul.mubr.f32.gmra.mrb[0].mxu0 %v378
        %v495 = vpop.f32.mrb[0].mxu0
        %v496 = vadd.f32 0.0, %v495
        %v497 = vpop.f32.mrb[0].mxu0
        %498 = vmatprep.mubr.f32.mxu0 0.0
        %499 = vmatmul.mubr.f32.gmra.mrb[0].mxu0 %v381
        %v500 = vpop.f32.mrb[0].mxu0
        %v501 = vadd.f32 0.0, %v500
        %v502 = vpop.f32.mrb[0].mxu0
        %503 = vmatprep.mubr.f32.mxu0 0.0
        %504 = vmatmul.mubr.f32.gmra.mrb[0].mxu0 %v384
        %v505 = vpop.f32.mrb[0].mxu0
        %v506 = vadd.f32 0.0, %v505
        %v507 = vpop.f32.mrb[0].mxu0
        %508 = vmatprep.mubr.f32.mxu0 0.0
        %509 = vmatmul.mubr.f32.gmra.mrb[0].mxu0 %v387
        %v510 = vpop.f32.mrb[0].mxu0
        %v511 = vadd.f32 0.0, %v510
        %v512 = vpop.f32.mrb[0].mxu0
        %513 = vmatprep.mubr.f32.mxu0 0.0
        %514 = vmatmul.mubr.f32.gmra.mrb[0].mxu0 %v390
        %v515 = vpop.f32.mrb[0].mxu0
        %v516 = vadd.f32 0.0, %v515
        %v517 = vpop.f32.mrb[0].mxu0
        %518 = vmatprep.mubr.f32.mxu0 0.0
        %519 = vmatmul.mubr.f32.gmra.mrb[0].mxu0 %v393
        %v520 = vpop.f32.mrb[0].mxu0
        %v521 = vadd.f32 0.0, %v520
        %v522 = vpop.f32.mrb[0].mxu0
        %523 = vmatprep.mubr.f32.mxu0 0.0
        %524 = vmatmul.mubr.f32.gmra.mrb[0].mxu0 %v396
        %v525 = vpop.f32.mrb[0].mxu0
        %v526 = vadd.f32 0.0, %v525
        %v527 = vpop.f32.mrb[0].mxu0
        %528 = vmatprep.mubr.f32.mxu0 0.0
        %529 = vmatmul.mubr.f32.gmra.mrb[0].mxu0 %v399
        %v530 = vpop.f32.mrb[0].mxu0
        %v531 = vadd.f32 0.0, %v530
        %v532 = vpop.f32.mrb[0].mxu0
        %533 = vmatprep.mubr.f32.mxu0 0.0
        %534 = vmatmul.mubr.f32.gmra.mrb[0].mxu0 %v402
        %v535 = vpop.f32.mrb[0].mxu0
        %v536 = vadd.f32 0.0, %v535
        %v537 = vpop.f32.mrb[0].mxu0
        %538 = vmatprep.mubr.f32.mxu0 0.0
        %539 = vmatmul.mubr.f32.gmra.mrb[0].mxu0 %v405
        %v540 = vpop.f32.mrb[0].mxu0
        %v541 = vadd.f32 0.0, %v540
        %v542 = vpop.f32.mrb[0].mxu0
        %543 = vmatprep.mubr.f32.mxu0 0.0
        %544 = vmatmul.mubr.f32.gmra.mrb[0].mxu0 %v408
        %v545 = vpop.f32.mrb[0].mxu0
        %v546 = vadd.f32 0.0, %v545
        %v547 = vpop.f32.mrb[0].mxu0
        %548 = vmatprep.mubr.f32.mxu0 0.0
        %549 = vmatmul.mubr.f32.gmra.mrb[0].mxu0 %v411
        %v550 = vpop.f32.mrb[0].mxu0
        %v551 = vadd.f32 0.0, %v550
        %v552 = vpop.f32.mrb[0].mxu0
        %553 = vmatprep.mubr.f32.mxu0 0.0
        %554 = vmatmul.mubr.f32.gmra.mrb[0].mxu0 %v414
        %v555 = vpop.f32.mrb[0].mxu0
        %v556 = vadd.f32 0.0, %v555
        %v557 = vpop.f32.mrb[0].mxu0
        %558 = vmatprep.mubr.f32.mxu0 0.0
        %559 = vmatmul.mubr.f32.gmra.mrb[0].mxu0 %v417
        %v560 = vpop.f32.mrb[0].mxu0
        %v561 = vadd.f32 0.0, %v560
        %v562 = vpop.f32.mrb[0].mxu0
        %563 = vdwg.mxu0
        %vm564 = vcmask 27648
        %v565 = vsel %vm564, %v486, 0.0
        %v566 = vrot.slane %v565, 4
        %v567 = vadd.f32 %v565, %v566
        %v568 = vrot.slane %v567, 2
        %v569 = vadd.f32 %v567, %v568
        %v570 = vrot.slane %v569, 1
        %v571 = vadd.f32 %v569, %v570
        %v572 = vsel %vm564, %v496, 0.0
        %v573 = vrot.slane %v572, 4
        %v574 = vadd.f32 %v572, %v573
        %v575 = vrot.slane %v574, 2
        %v576 = vadd.f32 %v574, %v575
        %v577 = vrot.slane %v576, 1
        %v578 = vadd.f32 %v576, %v577
        %v579 = vsel %vm564, %v506, 0.0
        %v580 = vrot.slane %v579, 4
        %v581 = vadd.f32 %v579, %v580
        %v582 = vrot.slane %v581, 2
        %v583 = vadd.f32 %v581, %v582
        %v584 = vrot.slane %v583, 1
        %v585 = vadd.f32 %v583, %v584
        %v586 = vsel %vm564, %v516, 0.0
        %v587 = vrot.slane %v586, 4
        %v588 = vadd.f32 %v586, %v587
        %v589 = vrot.slane %v588, 2
        %v590 = vadd.f32 %v588, %v589
        %v591 = vrot.slane %v590, 1
        %v592 = vadd.f32 %v590, %v591
        %v593 = vsel %vm564, %v526, 0.0
        %v594 = vrot.slane %v593, 4
        %v595 = vadd.f32 %v593, %v594
        %v596 = vrot.slane %v595, 2
        %v597 = vadd.f32 %v595, %v596
        %v598 = vrot.slane %v597, 1
        %v599 = vadd.f32 %v597, %v598
        %v600 = vsel %vm564, %v536, 0.0
        %v601 = vrot.slane %v600, 4
        %v602 = vadd.f32 %v600, %v601
        %v603 = vrot.slane %v602, 2
        %v604 = vadd.f32 %v602, %v603
        %v605 = vrot.slane %v604, 1
        %v606 = vadd.f32 %v604, %v605
        %v607 = vsel %vm564, %v546, 0.0
        %v608 = vrot.slane %v607, 4
        %v609 = vadd.f32 %v607, %v608
        %v610 = vrot.slane %v609, 2
        %v611 = vadd.f32 %v609, %v610
        %v612 = vrot.slane %v611, 1
        %v613 = vadd.f32 %v611, %v612
        %v614 = vsel %vm564, %v556, 0.0
        %v615 = vrot.slane %v614, 4
        %v616 = vadd.f32 %v614, %v615
        %v617 = vrot.slane %v616, 2
        %v618 = vadd.f32 %v616, %v617
        %v619 = vrot.slane %v618, 1
        %v620 = vadd.f32 %v618, %v619
        %v621 = vrcp.pop 4.0
        %v622 = vmul.f32 %v571, %v621
        %v623 = vmul.f32 %v578, %v621
        %v624 = vmul.f32 %v585, %v621
        %v625 = vmul.f32 %v592, %v621
        %v626 = vmul.f32 %v599, %v621
        %v627 = vmul.f32 %v606, %v621
        %v628 = vmul.f32 %v613, %v621
        %v629 = vmul.f32 %v620, %v621
        %631 = vset.pattern.permute.xlu0 0
        %632 = vperm.xlu0 %631, %v351
        %v633 = vpop.permute.xlu0 %632
        %vm643 = vcmask 1041409
        %v644 = vsel %vm643, %v623, %v622
        %vm645 = vcmask 1042434
        %v646 = vsel %vm645, %v624, %v644
        %vm647 = vcmask 1043459
        %v648 = vsel %vm647, %v625, %v646
        %vm649 = vcmask 1044484
        %v650 = vsel %vm649, %v626, %v648
        %vm651 = vcmask 1045509
        %v652 = vsel %vm651, %v627, %v650
        %vm653 = vcmask 1046534
        %v654 = vsel %vm653, %v628, %v652
        %vm655 = vcmask 1047559
        %v656 = vsel %vm655, %v629, %v654
        %vm658 = vcmask 64512
        %v660 = vsel %vm658, %v350, 0
        %662 = vmatprep.subr.mxu0 0.0
        %663 = vmatpush1.msra.mxu0 %v656
        %664 = vmatprep.subr.mxu0 0.0
        %665 = vmatpush1.msra.mxu0 0.0
        %666 = vmatprep.subr.mxu0 0.0
        %667 = vmatpush1.msra.mxu0 0.0
        %668 = vmatprep.subr.mxu0 0.0
        %669 = vmatpush1.msra.mxu0 0.0
        %670 = vmatprep.subr.mxu0 0.0
        %671 = vmatpush1.msra.mxu0 0.0
        %672 = vmatprep.subr.mxu0 0.0
        %673 = vmatpush1.msra.mxu0 0.0
        %674 = vmatprep.subr.mxu0 0.0
        %675 = vmatpush1.msra.mxu0 0.0
        %676 = vmatprep.subr.mxu0 0.0
        %677 = vmatpush1.msra.mxu0 0.0
        %678 = vmatprep.subr.mxu0 0.0
        %679 = vmatpush1.msra.mxu0 0.0
        %680 = vmatprep.subr.mxu0 0.0
        %681 = vmatpush1.msra.mxu0 0.0
        %682 = vmatprep.subr.mxu0 0.0
        %683 = vmatpush1.msra.mxu0 0.0
        %684 = vmatprep.subr.mxu0 0.0
        %685 = vmatpush1.msra.mxu0 0.0
        %686 = vmatprep.subr.mxu0 0.0
        %687 = vmatpush1.msra.mxu0 0.0
        %688 = vmatprep.subr.mxu0 0.0
        %689 = vmatpush1.msra.mxu0 0.0
        %690 = vmatprep.subr.mxu0 0.0
        %691 = vmatpush1.msra.mxu0 0.0
        %692 = vmatprep.subr.mxu0 0.0
        %693 = vmatpush1.msra.mxu0 0.0
        %694 = vmatprep.subr.mxu0 0.0
        %695 = vmatpush1.msra.mxu0 0.0
        %696 = vmatprep.subr.mxu0 0.0
        %697 = vmatpush1.msra.mxu0 0.0
        %698 = vmatprep.subr.mxu0 0.0
        %699 = vmatpush1.msra.mxu0 0.0
        %700 = vmatprep.subr.mxu0 0.0
        %701 = vmatpush1.msra.mxu0 0.0
        %702 = vmatprep.subr.mxu0 0.0
        %703 = vmatpush1.msra.mxu0 0.0
        %704 = vmatprep.subr.mxu0 0.0
        %705 = vmatpush1.msra.mxu0 0.0
        %706 = vmatprep.subr.mxu0 0.0
        %707 = vmatpush1.msra.mxu0 0.0
        %708 = vmatprep.subr.mxu0 0.0
        %709 = vmatpush1.msra.mxu0 0.0
        %710 = vmatprep.subr.mxu0 0.0
        %711 = vmatpush1.msra.mxu0 0.0
        %712 = vmatprep.subr.mxu0 0.0
        %713 = vmatpush1.msra.mxu0 0.0
        %714 = vmatprep.subr.mxu0 0.0
        %715 = vmatpush1.msra.mxu0 0.0
        %716 = vmatprep.subr.mxu0 0.0
        %717 = vmatpush1.msra.mxu0 0.0
        %718 = vmatprep.subr.mxu0 0.0
        %719 = vmatpush1.msra.mxu0 0.0
        %720 = vmatprep.subr.mxu0 0.0
        %721 = vmatpush1.msra.mxu0 0.0
        %722 = vmatprep.subr.mxu0 0.0
        %723 = vmatpush1.msra.mxu0 0.0
        %724 = vmatprep.subr.mxu0 0.0
        %725 = vmatpush1.msra.mxu0 0.0
        %726 = vmatprep.mubr.f32.mxu0 0.0
        %727 = vmatmul.mubr.f32.gmra.mrb[0].mxu0 %v660
        %v728 = vpop.f32.mrb[0].mxu0
        %v729 = vadd.f32 %v633, %v728
        %v730 = vpop.f32.mrb[0].mxu0
        %731 = vdwg.mxu0
        %v732 = vmax.f32 %v729, 0.0
        %v733 = vmin.f32 %v729, 0.0
        %v734 = vmul.f32 %v733, 1.442695
        %v735 = vpow.pop %v734
        %v736 = vsub.f32 %v735, 1.0
        %v737 = vadd.f32 %v732, %v736
        %739 = vset.pattern.permute.xlu0 0
        %740 = vperm.xlu0 %739, %v353
        %v741 = vpop.permute.xlu0 %740
        %vm743 = vcmask 15360
        %v745 = vsel %vm743, %v352, 0
        %vm747 = vcmask 1041408
        %v749 = vsel %vm747, %v737, 0
        %751 = vmatprep.subr.mxu0 0.0
        %752 = vmatpush1.msra.mxu0 %v749
        %753 = vmatprep.subr.mxu0 0.0
        %754 = vmatpush1.msra.mxu0 0.0
        %755 = vmatprep.subr.mxu0 0.0
        %756 = vmatpush1.msra.mxu0 0.0
        %757 = vmatprep.subr.mxu0 0.0
        %758 = vmatpush1.msra.mxu0 0.0
        %759 = vmatprep.subr.mxu0 0.0
        %760 = vmatpush1.msra.mxu0 0.0
        %761 = vmatprep.subr.mxu0 0.0
        %762 = vmatpush1.msra.mxu0 0.0
        %763 = vmatprep.subr.mxu0 0.0
        %764 = vmatpush1.msra.mxu0 0.0
        %765 = vmatprep.subr.mxu0 0.0
        %766 = vmatpush1.msra.mxu0 0.0
        %767 = vmatprep.subr.mxu0 0.0
        %768 = vmatpush1.msra.mxu0 0.0
        %769 = vmatprep.subr.mxu0 0.0
        %770 = vmatpush1.msra.mxu0 0.0
        %771 = vmatprep.subr.mxu0 0.0
        %772 = vmatpush1.msra.mxu0 0.0
        %773 = vmatprep.subr.mxu0 0.0
        %774 = vmatpush1.msra.mxu0 0.0
        %775 = vmatprep.subr.mxu0 0.0
        %776 = vmatpush1.msra.mxu0 0.0
        %777 = vmatprep.subr.mxu0 0.0
        %778 = vmatpush1.msra.mxu0 0.0
        %779 = vmatprep.subr.mxu0 0.0
        %780 = vmatpush1.msra.mxu0 0.0
        %781 = vmatprep.subr.mxu0 0.0
        %782 = vmatpush1.msra.mxu0 0.0
        %783 = vmatprep.subr.mxu0 0.0
        %784 = vmatpush1.msra.mxu0 0.0
        %785 = vmatprep.subr.mxu0 0.0
        %786 = vmatpush1.msra.mxu0 0.0
        %787 = vmatprep.subr.mxu0 0.0
        %788 = vmatpush1.msra.mxu0 0.0
        %789 = vmatprep.subr.mxu0 0.0
        %790 = vmatpush1.msra.mxu0 0.0
        %791 = vmatprep.subr.mxu0 0.0
        %792 = vmatpush1.msra.mxu0 0.0
        %793 = vmatprep.subr.mxu0 0.0
        %794 = vmatpush1.msra.mxu0 0.0
        %795 = vmatprep.subr.mxu0 0.0
        %796 = vmatpush1.msra.mxu0 0.0
        %797 = vmatprep.subr.mxu0 0.0
        %798 = vmatpush1.msra.mxu0 0.0
        %799 = vmatprep.subr.mxu0 0.0
        %800 = vmatpush1.msra.mxu0 0.0
        %801 = vmatprep.subr.mxu0 0.0
        %802 = vmatpush1.msra.mxu0 0.0
        %803 = vmatprep.subr.mxu0 0.0
        %804 = vmatpush1.msra.mxu0 0.0
        %805 = vmatprep.subr.mxu0 0.0
        %806 = vmatpush1.msra.mxu0 0.0
        %807 = vmatprep.subr.mxu0 0.0
        %808 = vmatpush1.msra.mxu0 0.0
        %809 = vmatprep.subr.mxu0 0.0
        %810 = vmatpush1.msra.mxu0 0.0
        %811 = vmatprep.subr.mxu0 0.0
        %812 = vmatpush1.msra.mxu0 0.0
        %813 = vmatprep.subr.mxu0 0.0
        %814 = vmatpush1.msra.mxu0 0.0
        %815 = vmatprep.mubr.f32.mxu0 0.0
        %816 = vmatmul.mubr.f32.gmra.mrb[0].mxu0 %v745
        %v817 = vpop.f32.mrb[0].mxu0
        %v818 = vadd.f32 %v741, %v817
        %v819 = vpop.f32.mrb[0].mxu0
        %820 = vdwg.mxu0
        %v821 = vsub.f32 0.0, %v818
        %v822 = vmul.f32 %v821, 1.442695
        %v823 = vpow.pop %v822
        %v824 = vadd.f32 %v823, 1.0
        %v825 = vrcp.pop %v824
        %v826 = vmul.f32 1.0, %v825
        %v828 = vcombine.high %v826, %v826
        %v830 = vunpack.c.l.s4 1966171168
        %v831 = vunpack.c.0.s8 %v830
        %v832 = vlaneseq
        %v833 = vshrl.u32 %v832, 7
        %v834 = vsub.s32 %v831, %v833
        %v835 = vrot.slane %v826, %v834
        %v837 = vunpack.c.l.s4 1966171168
        %v838 = vunpack.c.0.s8 %v837
        %v839 = vlaneseq
        %v840 = vshrl.u32 %v839, 7
        %v841 = vsub.s32 %v838, %v840
        %v842 = vrot.slane %v828, %v841
        %v843 = vcombine.high %v835, %v835
        %v844 = vcombine.high %v842, %v842
        %v846 = vunpack.c.l.s4 1966171168
        %v847 = vunpack.c.0.s8 %v846
        %v848 = vlaneseq
        %v849 = vshrl.u32 %v848, 7
        %v850 = vsub.s32 %v847, %v849
        %v851 = vrot.slane %v835, %v850
        %v853 = vunpack.c.l.s4 1966171168
        %v854 = vunpack.c.0.s8 %v853
        %v855 = vlaneseq
        %v856 = vshrl.u32 %v855, 7
        %v857 = vsub.s32 %v854, %v856
        %v858 = vrot.slane %v842, %v857
        %v860 = vunpack.c.l.s4 1966171168
        %v861 = vunpack.c.0.s8 %v860
        %v862 = vlaneseq
        %v863 = vshrl.u32 %v862, 7
        %v864 = vsub.s32 %v861, %v863
        %v865 = vrot.slane %v843, %v864
        %v867 = vunpack.c.l.s4 1966171168
        %v868 = vunpack.c.0.s8 %v867
        %v869 = vlaneseq
        %v870 = vshrl.u32 %v869, 7
        %v871 = vsub.s32 %v868, %v870
        %v872 = vrot.slane %v844, %v871
        %v873 = vcombine.high %v851, %v851
        %v874 = vcombine.high %v858, %v858
        %v875 = vcombine.high %v865, %v865
        %v876 = vcombine.high %v872, %v872
        %878 = vset.pattern.permute.xlu0 0
        %879 = vperm.xlu0 %878, %v347
        %v880 = vpop.permute.xlu0 %879
        %883 = vset.pattern.permute.xlu0 0
        %884 = vperm.xlu0 %883, %v348
        %v885 = vpop.permute.xlu0 %884
        %v887 = vlaneseq
        %v888 = vshrl.u32 %v887, 7
        %v889 = vsub.s32 0, %v888
        %v890 = vrot.slane %v851, %v889
        %v891 = vlaneseq
        %v892 = vshrl.u32 %v891, 7
        %v893 = vsub.s32 0, %v892
        %v894 = vrot.slane %v865, %v893
        %v895 = vlaneseq
        %v896 = vshrl.u32 %v895, 7
        %v897 = vsub.s32 0, %v896
        %v898 = vrot.slane %v873, %v897
        %v899 = vlaneseq
        %v900 = vshrl.u32 %v899, 7
        %v901 = vsub.s32 0, %v900
        %v902 = vrot.slane %v875, %v901
        %v903 = vlaneseq
        %v904 = vshrl.u32 %v903, 7
        %v905 = vsub.s32 0, %v904
        %v906 = vrot.slane %v858, %v905
        %v907 = vlaneseq
        %v908 = vshrl.u32 %v907, 7
        %v909 = vsub.s32 0, %v908
        %v910 = vrot.slane %v872, %v909
        %v911 = vlaneseq
        %v912 = vshrl.u32 %v911, 7
        %v913 = vsub.s32 0, %v912
        %v914 = vrot.slane %v874, %v913
        %v915 = vlaneseq
        %v916 = vshrl.u32 %v915, 7
        %v917 = vsub.s32 0, %v916
        %v918 = vrot.slane %v876, %v917
        %v927 = vmul.f32 %v880, %v890
        %v928 = vmul.f32 %v885, %v890
        %v929 = vmul.f32 %v880, %v894
        %v930 = vmul.f32 %v885, %v894
        %v931 = vmul.f32 %v880, %v898
        %v932 = vmul.f32 %v885, %v898
        %v933 = vmul.f32 %v880, %v902
        %v934 = vmul.f32 %v885, %v902
        %v935 = vmul.f32 %v880, %v906
        %v936 = vmul.f32 %v885, %v906
        %v937 = vmul.f32 %v880, %v910
        %v938 = vmul.f32 %v885, %v910
        %v939 = vmul.f32 %v880, %v914
        %v940 = vmul.f32 %v885, %v914
        %v941 = vmul.f32 %v880, %v918
        %v942 = vmul.f32 %v885, %v918
        %v943 = vadd.f32 %v927, 0.0
        %v944 = vadd.f32 %v928, 0.0
        %v945 = vadd.f32 %v929, 0.0
        %v946 = vadd.f32 %v930, 0.0
        %v947 = vadd.f32 %v931, 0.0
        %v948 = vadd.f32 %v932, 0.0
        %v949 = vadd.f32 %v933, 0.0
        %v950 = vadd.f32 %v934, 0.0
        %v951 = vadd.f32 %v935, 0.0
        %v952 = vadd.f32 %v936, 0.0
        %v953 = vadd.f32 %v937, 0.0
        %v954 = vadd.f32 %v938, 0.0
        %v955 = vadd.f32 %v939, 0.0
        %v956 = vadd.f32 %v940, 0.0
        %v957 = vadd.f32 %v941, 0.0
        %v958 = vadd.f32 %v942, 0.0
        %v967 = vrot.slane %v486, 4
        %v968 = vrot.slane %v496, 4
        %v969 = vrot.slane %v506, 4
        %v970 = vrot.slane %v516, 4
        %v971 = vrot.slane %v526, 4
        %v972 = vrot.slane %v536, 4
        %v973 = vrot.slane %v546, 4
        %v974 = vrot.slane %v556, 4
        %v983 = vsel %vm564, %v967, 0.0
        %v984 = vrot.slane %v983, 4
        %v985 = vadd.f32 %v983, %v984
        %v986 = vrot.slane %v985, 2
        %v987 = vadd.f32 %v985, %v986
        %v988 = vrot.slane %v987, 1
        %v989 = vadd.f32 %v987, %v988
        %v990 = vsel %vm564, %v968, 0.0
        %v991 = vrot.slane %v990, 4
        %v992 = vadd.f32 %v990, %v991
        %v993 = vrot.slane %v992, 2
        %v994 = vadd.f32 %v992, %v993
        %v995 = vrot.slane %v994, 1
        %v996 = vadd.f32 %v994, %v995
        %v997 = vsel %vm564, %v969, 0.0
        %v998 = vrot.slane %v997, 4
        %v999 = vadd.f32 %v997, %v998
        %v1000 = vrot.slane %v999, 2
        %v1001 = vadd.f32 %v999, %v1000
        %v1002 = vrot.slane %v1001, 1
        %v1003 = vadd.f32 %v1001, %v1002
        %v1004 = vsel %vm564, %v970, 0.0
        %v1005 = vrot.slane %v1004, 4
        %v1006 = vadd.f32 %v1004, %v1005
        %v1007 = vrot.slane %v1006, 2
        %v1008 = vadd.f32 %v1006, %v1007
        %v1009 = vrot.slane %v1008, 1
        %v1010 = vadd.f32 %v1008, %v1009
        %v1011 = vsel %vm564, %v971, 0.0
        %v1012 = vrot.slane %v1011, 4
        %v1013 = vadd.f32 %v1011, %v1012
        %v1014 = vrot.slane %v1013, 2
        %v1015 = vadd.f32 %v1013, %v1014
        %v1016 = vrot.slane %v1015, 1
        %v1017 = vadd.f32 %v1015, %v1016
        %v1018 = vsel %vm564, %v972, 0.0
        %v1019 = vrot.slane %v1018, 4
        %v1020 = vadd.f32 %v1018, %v1019
        %v1021 = vrot.slane %v1020, 2
        %v1022 = vadd.f32 %v1020, %v1021
        %v1023 = vrot.slane %v1022, 1
        %v1024 = vadd.f32 %v1022, %v1023
        %v1025 = vsel %vm564, %v973, 0.0
        %v1026 = vrot.slane %v1025, 4
        %v1027 = vadd.f32 %v1025, %v1026
        %v1028 = vrot.slane %v1027, 2
        %v1029 = vadd.f32 %v1027, %v1028
        %v1030 = vrot.slane %v1029, 1
        %v1031 = vadd.f32 %v1029, %v1030
        %v1032 = vsel %vm564, %v974, 0.0
        %v1033 = vrot.slane %v1032, 4
        %v1034 = vadd.f32 %v1032, %v1033
        %v1035 = vrot.slane %v1034, 2
        %v1036 = vadd.f32 %v1034, %v1035
        %v1037 = vrot.slane %v1036, 1
        %v1038 = vadd.f32 %v1036, %v1037
        %v1039 = vmul.f32 %v989, %v621
        %v1040 = vmul.f32 %v996, %v621
        %v1041 = vmul.f32 %v1003, %v621
        %v1042 = vmul.f32 %v1010, %v621
        %v1043 = vmul.f32 %v1017, %v621
        %v1044 = vmul.f32 %v1024, %v621
        %v1045 = vmul.f32 %v1031, %v621
        %v1046 = vmul.f32 %v1038, %v621
        %v1055 = vsel %vm643, %v1040, %v1039
        %v1056 = vsel %vm645, %v1041, %v1055
        %v1057 = vsel %vm647, %v1042, %v1056
        %v1058 = vsel %vm649, %v1043, %v1057
        %v1059 = vsel %vm651, %v1044, %v1058
        %v1060 = vsel %vm653, %v1045, %v1059
        %v1061 = vsel %vm655, %v1046, %v1060
        %1063 = vmatprep.subr.mxu0 0.0
        %1064 = vmatpush1.msra.mxu0 %v1061
        %1065 = vmatprep.subr.mxu0 0.0
        %1066 = vmatpush1.msra.mxu0 0.0
        %1067 = vmatprep.subr.mxu0 0.0
        %1068 = vmatpush1.msra.mxu0 0.0
        %1069 = vmatprep.subr.mxu0 0.0
        %1070 = vmatpush1.msra.mxu0 0.0
        %1071 = vmatprep.subr.mxu0 0.0
        %1072 = vmatpush1.msra.mxu0 0.0
        %1073 = vmatprep.subr.mxu0 0.0
        %1074 = vmatpush1.msra.mxu0 0.0
        %1075 = vmatprep.subr.mxu0 0.0
        %1076 = vmatpush1.msra.mxu0 0.0
        %1077 = vmatprep.subr.mxu0 0.0
        %1078 = vmatpush1.msra.mxu0 0.0
        %1079 = vmatprep.subr.mxu0 0.0
        %1080 = vmatpush1.msra.mxu0 0.0
        %1081 = vmatprep.subr.mxu0 0.0
        %1082 = vmatpush1.msra.mxu0 0.0
        %1083 = vmatprep.subr.mxu0 0.0
        %1084 = vmatpush1.msra.mxu0 0.0
        %1085 = vmatprep.subr.mxu0 0.0
        %1086 = vmatpush1.msra.mxu0 0.0
        %1087 = vmatprep.subr.mxu0 0.0
        %1088 = vmatpush1.msra.mxu0 0.0
        %1089 = vmatprep.subr.mxu0 0.0
        %1090 = vmatpush1.msra.mxu0 0.0
        %1091 = vmatprep.subr.mxu0 0.0
        %1092 = vmatpush1.msra.mxu0 0.0
        %1093 = vmatprep.subr.mxu0 0.0
        %1094 = vmatpush1.msra.mxu0 0.0
        %1095 = vmatprep.subr.mxu0 0.0
        %1096 = vmatpush1.msra.mxu0 0.0
        %1097 = vmatprep.subr.mxu0 0.0
        %1098 = vmatpush1.msra.mxu0 0.0
        %1099 = vmatprep.subr.mxu0 0.0
        %1100 = vmatpush1.msra.mxu0 0.0
        %1101 = vmatprep.subr.mxu0 0.0
        %1102 = vmatpush1.msra.mxu0 0.0
        %1103 = vmatprep.subr.mxu0 0.0
        %1104 = vmatpush1.msra.mxu0 0.0
        %1105 = vmatprep.subr.mxu0 0.0
        %1106 = vmatpush1.msra.mxu0 0.0
        %1107 = vmatprep.subr.mxu0 0.0
        %1108 = vmatpush1.msra.mxu0 0.0
        %1109 = vmatprep.subr.mxu0 0.0
        %1110 = vmatpush1.msra.mxu0 0.0
        %1111 = vmatprep.subr.mxu0 0.0
        %1112 = vmatpush1.msra.mxu0 0.0
        %1113 = vmatprep.subr.mxu0 0.0
        %1114 = vmatpush1.msra.mxu0 0.0
        %1115 = vmatprep.subr.mxu0 0.0
        %1116 = vmatpush1.msra.mxu0 0.0
        %1117 = vmatprep.subr.mxu0 0.0
        %1118 = vmatpush1.msra.mxu0 0.0
        %1119 = vmatprep.subr.mxu0 0.0
        %1120 = vmatpush1.msra.mxu0 0.0
        %1121 = vmatprep.subr.mxu0 0.0
        %1122 = vmatpush1.msra.mxu0 0.0
        %1123 = vmatprep.subr.mxu0 0.0
        %1124 = vmatpush1.msra.mxu0 0.0
        %1125 = vmatprep.subr.mxu0 0.0
        %1126 = vmatpush1.msra.mxu0 0.0
        %1127 = vmatprep.mubr.f32.mxu0 0.0
        %1128 = vmatmul.mubr.f32.gmra.mrb[0].mxu0 %v660
        %v1129 = vpop.f32.mrb[0].mxu0
        %v1130 = vadd.f32 %v633, %v1129
        %v1131 = vpop.f32.mrb[0].mxu0
        %1132 = vdwg.mxu0
        %v1133 = vmax.f32 %v1130, 0.0
        %v1134 = vmin.f32 %v1130, 0.0
        %v1135 = vmul.f32 %v1134, 1.442695
        %v1136 = vpow.pop %v1135
        %v1137 = vsub.f32 %v1136, 1.0
        %v1138 = vadd.f32 %v1133, %v1137
        %v1140 = vsel %vm747, %v1138, 0
        %1142 = vmatprep.subr.mxu0 0.0
        %1143 = vmatpush1.msra.mxu0 %v1140
        %1144 = vmatprep.subr.mxu0 0.0
        %1145 = vmatpush1.msra.mxu0 0.0
        %1146 = vmatprep.subr.mxu0 0.0
        %1147 = vmatpush1.msra.mxu0 0.0
        %1148 = vmatprep.subr.mxu0 0.0
        %1149 = vmatpush1.msra.mxu0 0.0
        %1150 = vmatprep.subr.mxu0 0.0
        %1151 = vmatpush1.msra.mxu0 0.0
        %1152 = vmatprep.subr.mxu0 0.0
        %1153 = vmatpush1.msra.mxu0 0.0
        %1154 = vmatprep.subr.mxu0 0.0
        %1155 = vmatpush1.msra.mxu0 0.0
        %1156 = vmatprep.subr.mxu0 0.0
        %1157 = vmatpush1.msra.mxu0 0.0
        %1158 = vmatprep.subr.mxu0 0.0
        %1159 = vmatpush1.msra.mxu0 0.0
        %1160 = vmatprep.subr.mxu0 0.0
        %1161 = vmatpush1.msra.mxu0 0.0
        %1162 = vmatprep.subr.mxu0 0.0
        %1163 = vmatpush1.msra.mxu0 0.0
        %1164 = vmatprep.subr.mxu0 0.0
        %1165 = vmatpush1.msra.mxu0 0.0
        %1166 = vmatprep.subr.mxu0 0.0
        %1167 = vmatpush1.msra.mxu0 0.0
        %1168 = vmatprep.subr.mxu0 0.0
        %1169 = vmatpush1.msra.mxu0 0.0
        %1170 = vmatprep.subr.mxu0 0.0
        %1171 = vmatpush1.msra.mxu0 0.0
        %1172 = vmatprep.subr.mxu0 0.0
        %1173 = vmatpush1.msra.mxu0 0.0
        %1174 = vmatprep.subr.mxu0 0.0
        %1175 = vmatpush1.msra.mxu0 0.0
        %1176 = vmatprep.subr.mxu0 0.0
        %1177 = vmatpush1.msra.mxu0 0.0
        %1178 = vmatprep.subr.mxu0 0.0
        %1179 = vmatpush1.msra.mxu0 0.0
        %1180 = vmatprep.subr.mxu0 0.0
        %1181 = vmatpush1.msra.mxu0 0.0
        %1182 = vmatprep.subr.mxu0 0.0
        %1183 = vmatpush1.msra.mxu0 0.0
        %1184 = vmatprep.subr.mxu0 0.0
        %1185 = vmatpush1.msra.mxu0 0.0
        %1186 = vmatprep.subr.mxu0 0.0
        %1187 = vmatpush1.msra.mxu0 0.0
        %1188 = vmatprep.subr.mxu0 0.0
        %1189 = vmatpush1.msra.mxu0 0.0
        %1190 = vmatprep.subr.mxu0 0.0
        %1191 = vmatpush1.msra.mxu0 0.0
        %1192 = vmatprep.subr.mxu0 0.0
        %1193 = vmatpush1.msra.mxu0 0.0
        %1194 = vmatprep.subr.mxu0 0.0
        %1195 = vmatpush1.msra.mxu0 0.0
        %1196 = vmatprep.subr.mxu0 0.0
        %1197 = vmatpush1.msra.mxu0 0.0
        %1198 = vmatprep.subr.mxu0 0.0
        %1199 = vmatpush1.msra.mxu0 0.0
        %1200 = vmatprep.subr.mxu0 0.0
        %1201 = vmatpush1.msra.mxu0 0.0
        %1202 = vmatprep.subr.mxu0 0.0
        %1203 = vmatpush1.msra.mxu0 0.0
        %1204 = vmatprep.subr.mxu0 0.0
        %1205 = vmatpush1.msra.mxu0 0.0
        %1206 = vmatprep.mubr.f32.mxu0 0.0
        %1207 = vmatmul.mubr.f32.gmra.mrb[0].mxu0 %v745
        %v1208 = vpop.f32.mrb[0].mxu0
        %v1209 = vadd.f32 %v741, %v1208
        %v1210 = vpop.f32.mrb[0].mxu0
        %1211 = vdwg.mxu0
        %v1212 = vsub.f32 0.0, %v1209
        %v1213 = vmul.f32 %v1212, 1.442695
        %v1214 = vpow.pop %v1213
        %v1215 = vadd.f32 %v1214, 1.0
        %v1216 = vrcp.pop %v1215
        %v1217 = vmul.f32 1.0, %v1216
        %v1219 = vcombine.high %v1217, %v1217
        %v1221 = vunpack.c.l.s4 1966171168
        %v1222 = vunpack.c.0.s8 %v1221
        %v1223 = vlaneseq
        %v1224 = vshrl.u32 %v1223, 7
        %v1225 = vsub.s32 %v1222, %v1224
        %v1226 = vrot.slane %v1217, %v1225
        %v1228 = vunpack.c.l.s4 1966171168
        %v1229 = vunpack.c.0.s8 %v1228
        %v1230 = vlaneseq
        %v1231 = vshrl.u32 %v1230, 7
        %v1232 = vsub.s32 %v1229, %v1231
        %v1233 = vrot.slane %v1219, %v1232
        %v1234 = vcombine.high %v1226, %v1226
        %v1235 = vcombine.high %v1233, %v1233
        %v1237 = vunpack.c.l.s4 1966171168
        %v1238 = vunpack.c.0.s8 %v1237
        %v1239 = vlaneseq
        %v1240 = vshrl.u32 %v1239, 7
        %v1241 = vsub.s32 %v1238, %v1240
        %v1242 = vrot.slane %v1226, %v1241
        %v1244 = vunpack.c.l.s4 1966171168
        %v1245 = vunpack.c.0.s8 %v1244
        %v1246 = vlaneseq
        %v1247 = vshrl.u32 %v1246, 7
        %v1248 = vsub.s32 %v1245, %v1247
        %v1249 = vrot.slane %v1233, %v1248
        %v1251 = vunpack.c.l.s4 1966171168
        %v1252 = vunpack.c.0.s8 %v1251
        %v1253 = vlaneseq
        %v1254 = vshrl.u32 %v1253, 7
        %v1255 = vsub.s32 %v1252, %v1254
        %v1256 = vrot.slane %v1234, %v1255
        %v1258 = vunpack.c.l.s4 1966171168
        %v1259 = vunpack.c.0.s8 %v1258
        %v1260 = vlaneseq
        %v1261 = vshrl.u32 %v1260, 7
        %v1262 = vsub.s32 %v1259, %v1261
        %v1263 = vrot.slane %v1235, %v1262
        %v1264 = vcombine.high %v1242, %v1242
        %v1265 = vcombine.high %v1249, %v1249
        %v1266 = vcombine.high %v1256, %v1256
        %v1267 = vcombine.high %v1263, %v1263
        %1268 = vset.pattern.permute.xlu0 1
        %1269 = vperm.xlu0 %1268, %v347
        %v1270 = vpop.permute.xlu0 %1269
        %1272 = vset.pattern.permute.xlu0 1
        %1273 = vperm.xlu0 %1272, %v348
        %v1274 = vpop.permute.xlu0 %1273
        %v1276 = vlaneseq
        %v1277 = vshrl.u32 %v1276, 7
        %v1278 = vsub.s32 0, %v1277
        %v1279 = vrot.slane %v1242, %v1278
        %v1280 = vlaneseq
        %v1281 = vshrl.u32 %v1280, 7
        %v1282 = vsub.s32 0, %v1281
        %v1283 = vrot.slane %v1256, %v1282
        %v1284 = vlaneseq
        %v1285 = vshrl.u32 %v1284, 7
        %v1286 = vsub.s32 0, %v1285
        %v1287 = vrot.slane %v1264, %v1286
        %v1288 = vlaneseq
        %v1289 = vshrl.u32 %v1288, 7
        %v1290 = vsub.s32 0, %v1289
        %v1291 = vrot.slane %v1266, %v1290
        %v1292 = vlaneseq
        %v1293 = vshrl.u32 %v1292, 7
        %v1294 = vsub.s32 0, %v1293
        %v1295 = vrot.slane %v1249, %v1294
        %v1296 = vlaneseq
        %v1297 = vshrl.u32 %v1296, 7
        %v1298 = vsub.s32 0, %v1297
        %v1299 = vrot.slane %v1263, %v1298
        %v1300 = vlaneseq
        %v1301 = vshrl.u32 %v1300, 7
        %v1302 = vsub.s32 0, %v1301
        %v1303 = vrot.slane %v1265, %v1302
        %v1304 = vlaneseq
        %v1305 = vshrl.u32 %v1304, 7
        %v1306 = vsub.s32 0, %v1305
        %v1307 = vrot.slane %v1267, %v1306
        %v1316 = vmul.f32 %v1270, %v1279
        %v1317 = vmul.f32 %v1274, %v1279
        %v1318 = vmul.f32 %v1270, %v1283
        %v1319 = vmul.f32 %v1274, %v1283
        %v1320 = vmul.f32 %v1270, %v1287
        %v1321 = vmul.f32 %v1274, %v1287
        %v1322 = vmul.f32 %v1270, %v1291
        %v1323 = vmul.f32 %v1274, %v1291
        %v1324 = vmul.f32 %v1270, %v1295
        %v1325 = vmul.f32 %v1274, %v1295
        %v1326 = vmul.f32 %v1270, %v1299
        %v1327 = vmul.f32 %v1274, %v1299
        %v1328 = vmul.f32 %v1270, %v1303
        %v1329 = vmul.f32 %v1274, %v1303
        %v1330 = vmul.f32 %v1270, %v1307
        %v1331 = vmul.f32 %v1274, %v1307
        %v1332 = vadd.f32 %v943, %v1316
        %v1333 = vadd.f32 %v944, %v1317
        %v1334 = vadd.f32 %v945, %v1318
        %v1335 = vadd.f32 %v946, %v1319
        %v1336 = vadd.f32 %v947, %v1320
        %v1337 = vadd.f32 %v948, %v1321
        %v1338 = vadd.f32 %v949, %v1322
        %v1339 = vadd.f32 %v950, %v1323
        %v1340 = vadd.f32 %v951, %v1324
        %v1341 = vadd.f32 %v952, %v1325
        %v1342 = vadd.f32 %v953, %v1326
        %v1343 = vadd.f32 %v954, %v1327
        %v1344 = vadd.f32 %v955, %v1328
        %v1345 = vadd.f32 %v956, %v1329
        %v1346 = vadd.f32 %v957, %v1330
        %v1347 = vadd.f32 %v958, %v1331
        %v1348 = vsel %vm564, %v491, 0.0
        %v1349 = vrot.slane %v1348, 4
        %v1350 = vadd.f32 %v1348, %v1349
        %v1351 = vrot.slane %v1350, 2
        %v1352 = vadd.f32 %v1350, %v1351
        %v1353 = vrot.slane %v1352, 1
        %v1354 = vadd.f32 %v1352, %v1353
        %v1355 = vsel %vm564, %v501, 0.0
        %v1356 = vrot.slane %v1355, 4
        %v1357 = vadd.f32 %v1355, %v1356
        %v1358 = vrot.slane %v1357, 2
        %v1359 = vadd.f32 %v1357, %v1358
        %v1360 = vrot.slane %v1359, 1
        %v1361 = vadd.f32 %v1359, %v1360
        %v1362 = vsel %vm564, %v511, 0.0
        %v1363 = vrot.slane %v1362, 4
        %v1364 = vadd.f32 %v1362, %v1363
        %v1365 = vrot.slane %v1364, 2
        %v1366 = vadd.f32 %v1364, %v1365
        %v1367 = vrot.slane %v1366, 1
        %v1368 = vadd.f32 %v1366, %v1367
        %v1369 = vsel %vm564, %v521, 0.0
        %v1370 = vrot.slane %v1369, 4
        %v1371 = vadd.f32 %v1369, %v1370
        %v1372 = vrot.slane %v1371, 2
        %v1373 = vadd.f32 %v1371, %v1372
        %v1374 = vrot.slane %v1373, 1
        %v1375 = vadd.f32 %v1373, %v1374
        %v1376 = vsel %vm564, %v531, 0.0
        %v1377 = vrot.slane %v1376, 4
        %v1378 = vadd.f32 %v1376, %v1377
        %v1379 = vrot.slane %v1378, 2
        %v1380 = vadd.f32 %v1378, %v1379
        %v1381 = vrot.slane %v1380, 1
        %v1382 = vadd.f32 %v1380, %v1381
        %v1383 = vsel %vm564, %v541, 0.0
        %v1384 = vrot.slane %v1383, 4
        %v1385 = vadd.f32 %v1383, %v1384
        %v1386 = vrot.slane %v1385, 2
        %v1387 = vadd.f32 %v1385, %v1386
        %v1388 = vrot.slane %v1387, 1
        %v1389 = vadd.f32 %v1387, %v1388
        %v1390 = vsel %vm564, %v551, 0.0
        %v1391 = vrot.slane %v1390, 4
        %v1392 = vadd.f32 %v1390, %v1391
        %v1393 = vrot.slane %v1392, 2
        %v1394 = vadd.f32 %v1392, %v1393
        %v1395 = vrot.slane %v1394, 1
        %v1396 = vadd.f32 %v1394, %v1395
        %v1397 = vsel %vm564, %v561, 0.0
        %v1398 = vrot.slane %v1397, 4
        %v1399 = vadd.f32 %v1397, %v1398
        %v1400 = vrot.slane %v1399, 2
        %v1401 = vadd.f32 %v1399, %v1400
        %v1402 = vrot.slane %v1401, 1
        %v1403 = vadd.f32 %v1401, %v1402
        %v1404 = vmul.f32 %v1354, %v621
        %v1405 = vmul.f32 %v1361, %v621
        %v1406 = vmul.f32 %v1368, %v621
        %v1407 = vmul.f32 %v1375, %v621
        %v1408 = vmul.f32 %v1382, %v621
        %v1409 = vmul.f32 %v1389, %v621
        %v1410 = vmul.f32 %v1396, %v621
        %v1411 = vmul.f32 %v1403, %v621
        %v1420 = vsel %vm643, %v1405, %v1404
        %v1421 = vsel %vm645, %v1406, %v1420
        %v1422 = vsel %vm647, %v1407, %v1421
        %v1423 = vsel %vm649, %v1408, %v1422
        %v1424 = vsel %vm651, %v1409, %v1423
        %v1425 = vsel %vm653, %v1410, %v1424
        %v1426 = vsel %vm655, %v1411, %v1425
        %1428 = vmatprep.subr.mxu0 0.0
        %1429 = vmatpush1.msra.mxu0 %v1426
        %1430 = vmatprep.subr.mxu0 0.0
        %1431 = vmatpush1.msra.mxu0 0.0
        %1432 = vmatprep.subr.mxu0 0.0
        %1433 = vmatpush1.msra.mxu0 0.0
        %1434 = vmatprep.subr.mxu0 0.0
        %1435 = vmatpush1.msra.mxu0 0.0
        %1436 = vmatprep.subr.mxu0 0.0
        %1437 = vmatpush1.msra.mxu0 0.0
        %1438 = vmatprep.subr.mxu0 0.0
        %1439 = vmatpush1.msra.mxu0 0.0
        %1440 = vmatprep.subr.mxu0 0.0
        %1441 = vmatpush1.msra.mxu0 0.0
        %1442 = vmatprep.subr.mxu0 0.0
        %1443 = vmatpush1.msra.mxu0 0.0
        %1444 = vmatprep.subr.mxu0 0.0
        %1445 = vmatpush1.msra.mxu0 0.0
        %1446 = vmatprep.subr.mxu0 0.0
        %1447 = vmatpush1.msra.mxu0 0.0
        %1448 = vmatprep.subr.mxu0 0.0
        %1449 = vmatpush1.msra.mxu0 0.0
        %1450 = vmatprep.subr.mxu0 0.0
        %1451 = vmatpush1.msra.mxu0 0.0
        %1452 = vmatprep.subr.mxu0 0.0
        %1453 = vmatpush1.msra.mxu0 0.0
        %1454 = vmatprep.subr.mxu0 0.0
        %1455 = vmatpush1.msra.mxu0 0.0
        %1456 = vmatprep.subr.mxu0 0.0
        %1457 = vmatpush1.msra.mxu0 0.0
        %1458 = vmatprep.subr.mxu0 0.0
        %1459 = vmatpush1.msra.mxu0 0.0
        %1460 = vmatprep.subr.mxu0 0.0
        %1461 = vmatpush1.msra.mxu0 0.0
        %1462 = vmatprep.subr.mxu0 0.0
        %1463 = vmatpush1.msra.mxu0 0.0
        %1464 = vmatprep.subr.mxu0 0.0
        %1465 = vmatpush1.msra.mxu0 0.0
        %1466 = vmatprep.subr.mxu0 0.0
        %1467 = vmatpush1.msra.mxu0 0.0
        %1468 = vmatprep.subr.mxu0 0.0
        %1469 = vmatpush1.msra.mxu0 0.0
        %1470 = vmatprep.subr.mxu0 0.0
        %1471 = vmatpush1.msra.mxu0 0.0
        %1472 = vmatprep.subr.mxu0 0.0
        %1473 = vmatpush1.msra.mxu0 0.0
        %1474 = vmatprep.subr.mxu0 0.0
        %1475 = vmatpush1.msra.mxu0 0.0
        %1476 = vmatprep.subr.mxu0 0.0
        %1477 = vmatpush1.msra.mxu0 0.0
        %1478 = vmatprep.subr.mxu0 0.0
        %1479 = vmatpush1.msra.mxu0 0.0
        %1480 = vmatprep.subr.mxu0 0.0
        %1481 = vmatpush1.msra.mxu0 0.0
        %1482 = vmatprep.subr.mxu0 0.0
        %1483 = vmatpush1.msra.mxu0 0.0
        %1484 = vmatprep.subr.mxu0 0.0
        %1485 = vmatpush1.msra.mxu0 0.0
        %1486 = vmatprep.subr.mxu0 0.0
        %1487 = vmatpush1.msra.mxu0 0.0
        %1488 = vmatprep.subr.mxu0 0.0
        %1489 = vmatpush1.msra.mxu0 0.0
        %1490 = vmatprep.subr.mxu0 0.0
        %1491 = vmatpush1.msra.mxu0 0.0
        %1492 = vmatprep.mubr.f32.mxu0 0.0
        %1493 = vmatmul.mubr.f32.gmra.mrb[0].mxu0 %v660
        %v1494 = vpop.f32.mrb[0].mxu0
        %v1495 = vadd.f32 %v633, %v1494
        %v1496 = vpop.f32.mrb[0].mxu0
        %1497 = vdwg.mxu0
        %v1498 = vmax.f32 %v1495, 0.0
        %v1499 = vmin.f32 %v1495, 0.0
        %v1500 = vmul.f32 %v1499, 1.442695
        %v1501 = vpow.pop %v1500
        %v1502 = vsub.f32 %v1501, 1.0
        %v1503 = vadd.f32 %v1498, %v1502
        %v1505 = vsel %vm747, %v1503, 0
        %1507 = vmatprep.subr.mxu0 0.0
        %1508 = vmatpush1.msra.mxu0 %v1505
        %1509 = vmatprep.subr.mxu0 0.0
        %1510 = vmatpush1.msra.mxu0 0.0
        %1511 = vmatprep.subr.mxu0 0.0
        %1512 = vmatpush1.msra.mxu0 0.0
        %1513 = vmatprep.subr.mxu0 0.0
        %1514 = vmatpush1.msra.mxu0 0.0
        %1515 = vmatprep.subr.mxu0 0.0
        %1516 = vmatpush1.msra.mxu0 0.0
        %1517 = vmatprep.subr.mxu0 0.0
        %1518 = vmatpush1.msra.mxu0 0.0
        %1519 = vmatprep.subr.mxu0 0.0
        %1520 = vmatpush1.msra.mxu0 0.0
        %1521 = vmatprep.subr.mxu0 0.0
        %1522 = vmatpush1.msra.mxu0 0.0
        %1523 = vmatprep.subr.mxu0 0.0
        %1524 = vmatpush1.msra.mxu0 0.0
        %1525 = vmatprep.subr.mxu0 0.0
        %1526 = vmatpush1.msra.mxu0 0.0
        %1527 = vmatprep.subr.mxu0 0.0
        %1528 = vmatpush1.msra.mxu0 0.0
        %1529 = vmatprep.subr.mxu0 0.0
        %1530 = vmatpush1.msra.mxu0 0.0
        %1531 = vmatprep.subr.mxu0 0.0
        %1532 = vmatpush1.msra.mxu0 0.0
        %1533 = vmatprep.subr.mxu0 0.0
        %1534 = vmatpush1.msra.mxu0 0.0
        %1535 = vmatprep.subr.mxu0 0.0
        %1536 = vmatpush1.msra.mxu0 0.0
        %1537 = vmatprep.subr.mxu0 0.0
        %1538 = vmatpush1.msra.mxu0 0.0
        %1539 = vmatprep.subr.mxu0 0.0
        %1540 = vmatpush1.msra.mxu0 0.0
        %1541 = vmatprep.subr.mxu0 0.0
        %1542 = vmatpush1.msra.mxu0 0.0
        %1543 = vmatprep.subr.mxu0 0.0
        %1544 = vmatpush1.msra.mxu0 0.0
        %1545 = vmatprep.subr.mxu0 0.0
        %1546 = vmatpush1.msra.mxu0 0.0
        %1547 = vmatprep.subr.mxu0 0.0
        %1548 = vmatpush1.msra.mxu0 0.0
        %1549 = vmatprep.subr.mxu0 0.0
        %1550 = vmatpush1.msra.mxu0 0.0
        %1551 = vmatprep.subr.mxu0 0.0
        %1552 = vmatpush1.msra.mxu0 0.0
        %1553 = vmatprep.subr.mxu0 0.0
        %1554 = vmatpush1.msra.mxu0 0.0
        %1555 = vmatprep.subr.mxu0 0.0
        %1556 = vmatpush1.msra.mxu0 0.0
        %1557 = vmatprep.subr.mxu0 0.0
        %1558 = vmatpush1.msra.mxu0 0.0
        %1559 = vmatprep.subr.mxu0 0.0
        %1560 = vmatpush1.msra.mxu0 0.0
        %1561 = vmatprep.subr.mxu0 0.0
        %1562 = vmatpush1.msra.mxu0 0.0
        %1563 = vmatprep.subr.mxu0 0.0
        %1564 = vmatpush1.msra.mxu0 0.0
        %1565 = vmatprep.subr.mxu0 0.0
        %1566 = vmatpush1.msra.mxu0 0.0
        %1567 = vmatprep.subr.mxu0 0.0
        %1568 = vmatpush1.msra.mxu0 0.0
        %1569 = vmatprep.subr.mxu0 0.0
        %1570 = vmatpush1.msra.mxu0 0.0
        %1571 = vmatprep.mubr.f32.mxu0 0.0
        %1572 = vmatmul.mubr.f32.gmra.mrb[0].mxu0 %v745
        %v1573 = vpop.f32.mrb[0].mxu0
        %v1574 = vadd.f32 %v741, %v1573
        %v1575 = vpop.f32.mrb[0].mxu0
        %1576 = vdwg.mxu0
        %v1577 = vsub.f32 0.0, %v1574
        %v1578 = vmul.f32 %v1577, 1.442695
        %v1579 = vpow.pop %v1578
        %v1580 = vadd.f32 %v1579, 1.0
        %v1581 = vrcp.pop %v1580
        %v1582 = vmul.f32 1.0, %v1581
        %v1584 = vcombine.high %v1582, %v1582
        %v1586 = vunpack.c.l.s4 1966171168
        %v1587 = vunpack.c.0.s8 %v1586
        %v1588 = vlaneseq
        %v1589 = vshrl.u32 %v1588, 7
        %v1590 = vsub.s32 %v1587, %v1589
        %v1591 = vrot.slane %v1582, %v1590
        %v1593 = vunpack.c.l.s4 1966171168
        %v1594 = vunpack.c.0.s8 %v1593
        %v1595 = vlaneseq
        %v1596 = vshrl.u32 %v1595, 7
        %v1597 = vsub.s32 %v1594, %v1596
        %v1598 = vrot.slane %v1584, %v1597
        %v1599 = vcombine.high %v1591, %v1591
        %v1600 = vcombine.high %v1598, %v1598
        %v1602 = vunpack.c.l.s4 1966171168
        %v1603 = vunpack.c.0.s8 %v1602
        %v1604 = vlaneseq
        %v1605 = vshrl.u32 %v1604, 7
        %v1606 = vsub.s32 %v1603, %v1605
        %v1607 = vrot.slane %v1591, %v1606
        %v1609 = vunpack.c.l.s4 1966171168
        %v1610 = vunpack.c.0.s8 %v1609
        %v1611 = vlaneseq
        %v1612 = vshrl.u32 %v1611, 7
        %v1613 = vsub.s32 %v1610, %v1612
        %v1614 = vrot.slane %v1598, %v1613
        %v1616 = vunpack.c.l.s4 1966171168
        %v1617 = vunpack.c.0.s8 %v1616
        %v1618 = vlaneseq
        %v1619 = vshrl.u32 %v1618, 7
        %v1620 = vsub.s32 %v1617, %v1619
        %v1621 = vrot.slane %v1599, %v1620
        %v1623 = vunpack.c.l.s4 1966171168
        %v1624 = vunpack.c.0.s8 %v1623
        %v1625 = vlaneseq
        %v1626 = vshrl.u32 %v1625, 7
        %v1627 = vsub.s32 %v1624, %v1626
        %v1628 = vrot.slane %v1600, %v1627
        %v1629 = vcombine.high %v1607, %v1607
        %v1630 = vcombine.high %v1614, %v1614
        %v1631 = vcombine.high %v1621, %v1621
        %v1632 = vcombine.high %v1628, %v1628
        %1633 = vset.pattern.permute.xlu0 2
        %1634 = vperm.xlu0 %1633, %v347
        %v1635 = vpop.permute.xlu0 %1634
        %1637 = vset.pattern.permute.xlu0 2
        %1638 = vperm.xlu0 %1637, %v348
        %v1639 = vpop.permute.xlu0 %1638
        %v1641 = vlaneseq
        %v1642 = vshrl.u32 %v1641, 7
        %v1643 = vsub.s32 0, %v1642
        %v1644 = vrot.slane %v1607, %v1643
        %v1645 = vlaneseq
        %v1646 = vshrl.u32 %v1645, 7
        %v1647 = vsub.s32 0, %v1646
        %v1648 = vrot.slane %v1621, %v1647
        %v1649 = vlaneseq
        %v1650 = vshrl.u32 %v1649, 7
        %v1651 = vsub.s32 0, %v1650
        %v1652 = vrot.slane %v1629, %v1651
        %v1653 = vlaneseq
        %v1654 = vshrl.u32 %v1653, 7
        %v1655 = vsub.s32 0, %v1654
        %v1656 = vrot.slane %v1631, %v1655
        %v1657 = vlaneseq
        %v1658 = vshrl.u32 %v1657, 7
        %v1659 = vsub.s32 0, %v1658
        %v1660 = vrot.slane %v1614, %v1659
        %v1661 = vlaneseq
        %v1662 = vshrl.u32 %v1661, 7
        %v1663 = vsub.s32 0, %v1662
        %v1664 = vrot.slane %v1628, %v1663
        %v1665 = vlaneseq
        %v1666 = vshrl.u32 %v1665, 7
        %v1667 = vsub.s32 0, %v1666
        %v1668 = vrot.slane %v1630, %v1667
        %v1669 = vlaneseq
        %v1670 = vshrl.u32 %v1669, 7
        %v1671 = vsub.s32 0, %v1670
        %v1672 = vrot.slane %v1632, %v1671
        %v1681 = vmul.f32 %v1635, %v1644
        %v1682 = vmul.f32 %v1639, %v1644
        %v1683 = vmul.f32 %v1635, %v1648
        %v1684 = vmul.f32 %v1639, %v1648
        %v1685 = vmul.f32 %v1635, %v1652
        %v1686 = vmul.f32 %v1639, %v1652
        %v1687 = vmul.f32 %v1635, %v1656
        %v1688 = vmul.f32 %v1639, %v1656
        %v1689 = vmul.f32 %v1635, %v1660
        %v1690 = vmul.f32 %v1639, %v1660
        %v1691 = vmul.f32 %v1635, %v1664
        %v1692 = vmul.f32 %v1639, %v1664
        %v1693 = vmul.f32 %v1635, %v1668
        %v1694 = vmul.f32 %v1639, %v1668
        %v1695 = vmul.f32 %v1635, %v1672
        %v1696 = vmul.f32 %v1639, %v1672
        %v1697 = vadd.f32 %v1332, %v1681
        %v1698 = vadd.f32 %v1333, %v1682
        %v1699 = vadd.f32 %v1334, %v1683
        %v1700 = vadd.f32 %v1335, %v1684
        %v1701 = vadd.f32 %v1336, %v1685
        %v1702 = vadd.f32 %v1337, %v1686
        %v1703 = vadd.f32 %v1338, %v1687
        %v1704 = vadd.f32 %v1339, %v1688
        %v1705 = vadd.f32 %v1340, %v1689
        %v1706 = vadd.f32 %v1341, %v1690
        %v1707 = vadd.f32 %v1342, %v1691
        %v1708 = vadd.f32 %v1343, %v1692
        %v1709 = vadd.f32 %v1344, %v1693
        %v1710 = vadd.f32 %v1345, %v1694
        %v1711 = vadd.f32 %v1346, %v1695
        %v1712 = vadd.f32 %v1347, %v1696
        %v1721 = vrot.slane %v491, 4
        %v1722 = vrot.slane %v501, 4
        %v1723 = vrot.slane %v511, 4
        %v1724 = vrot.slane %v521, 4
        %v1725 = vrot.slane %v531, 4
        %v1726 = vrot.slane %v541, 4
        %v1727 = vrot.slane %v551, 4
        %v1728 = vrot.slane %v561, 4
        %v1737 = vsel %vm564, %v1721, 0.0
        %v1738 = vrot.slane %v1737, 4
        %v1739 = vadd.f32 %v1737, %v1738
        %v1740 = vrot.slane %v1739, 2
        %v1741 = vadd.f32 %v1739, %v1740
        %v1742 = vrot.slane %v1741, 1
        %v1743 = vadd.f32 %v1741, %v1742
        %v1744 = vsel %vm564, %v1722, 0.0
        %v1745 = vrot.slane %v1744, 4
        %v1746 = vadd.f32 %v1744, %v1745
        %v1747 = vrot.slane %v1746, 2
        %v1748 = vadd.f32 %v1746, %v1747
        %v1749 = vrot.slane %v1748, 1
        %v1750 = vadd.f32 %v1748, %v1749
        %v1751 = vsel %vm564, %v1723, 0.0
        %v1752 = vrot.slane %v1751, 4
        %v1753 = vadd.f32 %v1751, %v1752
        %v1754 = vrot.slane %v1753, 2
        %v1755 = vadd.f32 %v1753, %v1754
        %v1756 = vrot.slane %v1755, 1
        %v1757 = vadd.f32 %v1755, %v1756
        %v1758 = vsel %vm564, %v1724, 0.0
        %v1759 = vrot.slane %v1758, 4
        %v1760 = vadd.f32 %v1758, %v1759
        %v1761 = vrot.slane %v1760, 2
        %v1762 = vadd.f32 %v1760, %v1761
        %v1763 = vrot.slane %v1762, 1
        %v1764 = vadd.f32 %v1762, %v1763
        %v1765 = vsel %vm564, %v1725, 0.0
        %v1766 = vrot.slane %v1765, 4
        %v1767 = vadd.f32 %v1765, %v1766
        %v1768 = vrot.slane %v1767, 2
        %v1769 = vadd.f32 %v1767, %v1768
        %v1770 = vrot.slane %v1769, 1
        %v1771 = vadd.f32 %v1769, %v1770
        %v1772 = vsel %vm564, %v1726, 0.0
        %v1773 = vrot.slane %v1772, 4
        %v1774 = vadd.f32 %v1772, %v1773
        %v1775 = vrot.slane %v1774, 2
        %v1776 = vadd.f32 %v1774, %v1775
        %v1777 = vrot.slane %v1776, 1
        %v1778 = vadd.f32 %v1776, %v1777
        %v1779 = vsel %vm564, %v1727, 0.0
        %v1780 = vrot.slane %v1779, 4
        %v1781 = vadd.f32 %v1779, %v1780
        %v1782 = vrot.slane %v1781, 2
        %v1783 = vadd.f32 %v1781, %v1782
        %v1784 = vrot.slane %v1783, 1
        %v1785 = vadd.f32 %v1783, %v1784
        %v1786 = vsel %vm564, %v1728, 0.0
        %v1787 = vrot.slane %v1786, 4
        %v1788 = vadd.f32 %v1786, %v1787
        %v1789 = vrot.slane %v1788, 2
        %v1790 = vadd.f32 %v1788, %v1789
        %v1791 = vrot.slane %v1790, 1
        %v1792 = vadd.f32 %v1790, %v1791
        %v1793 = vmul.f32 %v1743, %v621
        %v1794 = vmul.f32 %v1750, %v621
        %v1795 = vmul.f32 %v1757, %v621
        %v1796 = vmul.f32 %v1764, %v621
        %v1797 = vmul.f32 %v1771, %v621
        %v1798 = vmul.f32 %v1778, %v621
        %v1799 = vmul.f32 %v1785, %v621
        %v1800 = vmul.f32 %v1792, %v621
        %v1809 = vsel %vm643, %v1794, %v1793
        %v1810 = vsel %vm645, %v1795, %v1809
        %v1811 = vsel %vm647, %v1796, %v1810
        %v1812 = vsel %vm649, %v1797, %v1811
        %v1813 = vsel %vm651, %v1798, %v1812
        %v1814 = vsel %vm653, %v1799, %v1813
        %v1815 = vsel %vm655, %v1800, %v1814
        %1817 = vmatprep.subr.mxu0 0.0
        %1818 = vmatpush1.msra.mxu0 %v1815
        %1819 = vmatprep.subr.mxu0 0.0
        %1820 = vmatpush1.msra.mxu0 0.0
        %1821 = vmatprep.subr.mxu0 0.0
        %1822 = vmatpush1.msra.mxu0 0.0
        %1823 = vmatprep.subr.mxu0 0.0
        %1824 = vmatpush1.msra.mxu0 0.0
        %1825 = vmatprep.subr.mxu0 0.0
        %1826 = vmatpush1.msra.mxu0 0.0
        %1827 = vmatprep.subr.mxu0 0.0
        %1828 = vmatpush1.msra.mxu0 0.0
        %1829 = vmatprep.subr.mxu0 0.0
        %1830 = vmatpush1.msra.mxu0 0.0
        %1831 = vmatprep.subr.mxu0 0.0
        %1832 = vmatpush1.msra.mxu0 0.0
        %1833 = vmatprep.subr.mxu0 0.0
        %1834 = vmatpush1.msra.mxu0 0.0
        %1835 = vmatprep.subr.mxu0 0.0
        %1836 = vmatpush1.msra.mxu0 0.0
        %1837 = vmatprep.subr.mxu0 0.0
        %1838 = vmatpush1.msra.mxu0 0.0
        %1839 = vmatprep.subr.mxu0 0.0
        %1840 = vmatpush1.msra.mxu0 0.0
        %1841 = vmatprep.subr.mxu0 0.0
        %1842 = vmatpush1.msra.mxu0 0.0
        %1843 = vmatprep.subr.mxu0 0.0
        %1844 = vmatpush1.msra.mxu0 0.0
        %1845 = vmatprep.subr.mxu0 0.0
        %1846 = vmatpush1.msra.mxu0 0.0
        %1847 = vmatprep.subr.mxu0 0.0
        %1848 = vmatpush1.msra.mxu0 0.0
        %1849 = vmatprep.subr.mxu0 0.0
        %1850 = vmatpush1.msra.mxu0 0.0
        %1851 = vmatprep.subr.mxu0 0.0
        %1852 = vmatpush1.msra.mxu0 0.0
        %1853 = vmatprep.subr.mxu0 0.0
        %1854 = vmatpush1.msra.mxu0 0.0
        %1855 = vmatprep.subr.mxu0 0.0
        %1856 = vmatpush1.msra.mxu0 0.0
        %1857 = vmatprep.subr.mxu0 0.0
        %1858 = vmatpush1.msra.mxu0 0.0
        %1859 = vmatprep.subr.mxu0 0.0
        %1860 = vmatpush1.msra.mxu0 0.0
        %1861 = vmatprep.subr.mxu0 0.0
        %1862 = vmatpush1.msra.mxu0 0.0
        %1863 = vmatprep.subr.mxu0 0.0
        %1864 = vmatpush1.msra.mxu0 0.0
        %1865 = vmatprep.subr.mxu0 0.0
        %1866 = vmatpush1.msra.mxu0 0.0
        %1867 = vmatprep.subr.mxu0 0.0
        %1868 = vmatpush1.msra.mxu0 0.0
        %1869 = vmatprep.subr.mxu0 0.0
        %1870 = vmatpush1.msra.mxu0 0.0
        %1871 = vmatprep.subr.mxu0 0.0
        %1872 = vmatpush1.msra.mxu0 0.0
        %1873 = vmatprep.subr.mxu0 0.0
        %1874 = vmatpush1.msra.mxu0 0.0
        %1875 = vmatprep.subr.mxu0 0.0
        %1876 = vmatpush1.msra.mxu0 0.0
        %1877 = vmatprep.subr.mxu0 0.0
        %1878 = vmatpush1.msra.mxu0 0.0
        %1879 = vmatprep.subr.mxu0 0.0
        %1880 = vmatpush1.msra.mxu0 0.0
        %1881 = vmatprep.mubr.f32.mxu0 0.0
        %1882 = vmatmul.mubr.f32.gmra.mrb[0].mxu0 %v660
        %v1883 = vpop.f32.mrb[0].mxu0
        %v1884 = vadd.f32 %v633, %v1883
        %v1885 = vpop.f32.mrb[0].mxu0
        %1886 = vdwg.mxu0
        %v1887 = vmax.f32 %v1884, 0.0
        %v1888 = vmin.f32 %v1884, 0.0
        %v1889 = vmul.f32 %v1888, 1.442695
        %v1890 = vpow.pop %v1889
        %v1891 = vsub.f32 %v1890, 1.0
        %v1892 = vadd.f32 %v1887, %v1891
        %v1894 = vsel %vm747, %v1892, 0
        %1896 = vmatprep.subr.mxu0 0.0
        %1897 = vmatpush1.msra.mxu0 %v1894
        %1898 = vmatprep.subr.mxu0 0.0
        %1899 = vmatpush1.msra.mxu0 0.0
        %1900 = vmatprep.subr.mxu0 0.0
        %1901 = vmatpush1.msra.mxu0 0.0
        %1902 = vmatprep.subr.mxu0 0.0
        %1903 = vmatpush1.msra.mxu0 0.0
        %1904 = vmatprep.subr.mxu0 0.0
        %1905 = vmatpush1.msra.mxu0 0.0
        %1906 = vmatprep.subr.mxu0 0.0
        %1907 = vmatpush1.msra.mxu0 0.0
        %1908 = vmatprep.subr.mxu0 0.0
        %1909 = vmatpush1.msra.mxu0 0.0
        %1910 = vmatprep.subr.mxu0 0.0
        %1911 = vmatpush1.msra.mxu0 0.0
        %1912 = vmatprep.subr.mxu0 0.0
        %1913 = vmatpush1.msra.mxu0 0.0
        %1914 = vmatprep.subr.mxu0 0.0
        %1915 = vmatpush1.msra.mxu0 0.0
        %1916 = vmatprep.subr.mxu0 0.0
        %1917 = vmatpush1.msra.mxu0 0.0
        %1918 = vmatprep.subr.mxu0 0.0
        %1919 = vmatpush1.msra.mxu0 0.0
        %1920 = vmatprep.subr.mxu0 0.0
        %1921 = vmatpush1.msra.mxu0 0.0
        %1922 = vmatprep.subr.mxu0 0.0
        %1923 = vmatpush1.msra.mxu0 0.0
        %1924 = vmatprep.subr.mxu0 0.0
        %1925 = vmatpush1.msra.mxu0 0.0
        %1926 = vmatprep.subr.mxu0 0.0
        %1927 = vmatpush1.msra.mxu0 0.0
        %1928 = vmatprep.subr.mxu0 0.0
        %1929 = vmatpush1.msra.mxu0 0.0
        %1930 = vmatprep.subr.mxu0 0.0
        %1931 = vmatpush1.msra.mxu0 0.0
        %1932 = vmatprep.subr.mxu0 0.0
        %1933 = vmatpush1.msra.mxu0 0.0
        %1934 = vmatprep.subr.mxu0 0.0
        %1935 = vmatpush1.msra.mxu0 0.0
        %1936 = vmatprep.subr.mxu0 0.0
        %1937 = vmatpush1.msra.mxu0 0.0
        %1938 = vmatprep.subr.mxu0 0.0
        %1939 = vmatpush1.msra.mxu0 0.0
        %1940 = vmatprep.subr.mxu0 0.0
        %1941 = vmatpush1.msra.mxu0 0.0
        %1942 = vmatprep.subr.mxu0 0.0
        %1943 = vmatpush1.msra.mxu0 0.0
        %1944 = vmatprep.subr.mxu0 0.0
        %1945 = vmatpush1.msra.mxu0 0.0
        %1946 = vmatprep.subr.mxu0 0.0
        %1947 = vmatpush1.msra.mxu0 0.0
        %1948 = vmatprep.subr.mxu0 0.0
        %1949 = vmatpush1.msra.mxu0 0.0
        %1950 = vmatprep.subr.mxu0 0.0
        %1951 = vmatpush1.msra.mxu0 0.0
        %1952 = vmatprep.subr.mxu0 0.0
        %1953 = vmatpush1.msra.mxu0 0.0
        %1954 = vmatprep.subr.mxu0 0.0
        %1955 = vmatpush1.msra.mxu0 0.0
        %1956 = vmatprep.subr.mxu0 0.0
        %1957 = vmatpush1.msra.mxu0 0.0
        %1958 = vmatprep.subr.mxu0 0.0
        %1959 = vmatpush1.msra.mxu0 0.0
        %1960 = vmatprep.mubr.f32.mxu0 0.0
        %1961 = vmatmul.mubr.f32.gmra.mrb[0].mxu0 %v745
        %v1962 = vpop.f32.mrb[0].mxu0
        %v1963 = vadd.f32 %v741, %v1962
        %v1964 = vpop.f32.mrb[0].mxu0
        %1965 = vdwg.mxu0
        %v1966 = vsub.f32 0.0, %v1963
        %v1967 = vmul.f32 %v1966, 1.442695
        %v1968 = vpow.pop %v1967
        %v1969 = vadd.f32 %v1968, 1.0
        %v1970 = vrcp.pop %v1969
        %v1971 = vmul.f32 1.0, %v1970
        %v1973 = vcombine.high %v1971, %v1971
        %v1975 = vunpack.c.l.s4 1966171168
        %v1976 = vunpack.c.0.s8 %v1975
        %v1977 = vlaneseq
        %v1978 = vshrl.u32 %v1977, 7
        %v1979 = vsub.s32 %v1976, %v1978
        %v1980 = vrot.slane %v1971, %v1979
        %v1982 = vunpack.c.l.s4 1966171168
        %v1983 = vunpack.c.0.s8 %v1982
        %v1984 = vlaneseq
        %v1985 = vshrl.u32 %v1984, 7
        %v1986 = vsub.s32 %v1983, %v1985
        %v1987 = vrot.slane %v1973, %v1986
        %v1988 = vcombine.high %v1980, %v1980
        %v1989 = vcombine.high %v1987, %v1987
        %v1991 = vunpack.c.l.s4 1966171168
        %v1992 = vunpack.c.0.s8 %v1991
        %v1993 = vlaneseq
        %v1994 = vshrl.u32 %v1993, 7
        %v1995 = vsub.s32 %v1992, %v1994
        %v1996 = vrot.slane %v1980, %v1995
        %v1998 = vunpack.c.l.s4 1966171168
        %v1999 = vunpack.c.0.s8 %v1998
        %v2000 = vlaneseq
        %v2001 = vshrl.u32 %v2000, 7
        %v2002 = vsub.s32 %v1999, %v2001
        %v2003 = vrot.slane %v1987, %v2002
        %v2005 = vunpack.c.l.s4 1966171168
        %v2006 = vunpack.c.0.s8 %v2005
        %v2007 = vlaneseq
        %v2008 = vshrl.u32 %v2007, 7
        %v2009 = vsub.s32 %v2006, %v2008
        %v2010 = vrot.slane %v1988, %v2009
        %v2012 = vunpack.c.l.s4 1966171168
        %v2013 = vunpack.c.0.s8 %v2012
        %v2014 = vlaneseq
        %v2015 = vshrl.u32 %v2014, 7
        %v2016 = vsub.s32 %v2013, %v2015
        %v2017 = vrot.slane %v1989, %v2016
        %v2018 = vcombine.high %v1996, %v1996
        %v2019 = vcombine.high %v2003, %v2003
        %v2020 = vcombine.high %v2010, %v2010
        %v2021 = vcombine.high %v2017, %v2017
        %2022 = vset.pattern.permute.xlu0 3
        %2023 = vperm.xlu0 %2022, %v347
        %v2024 = vpop.permute.xlu0 %2023
        %2026 = vset.pattern.permute.xlu0 3
        %2027 = vperm.xlu0 %2026, %v348
        %v2028 = vpop.permute.xlu0 %2027
        %v2030 = vlaneseq
        %v2031 = vshrl.u32 %v2030, 7
        %v2032 = vsub.s32 0, %v2031
        %v2033 = vrot.slane %v1996, %v2032
        %v2034 = vlaneseq
        %v2035 = vshrl.u32 %v2034, 7
        %v2036 = vsub.s32 0, %v2035
        %v2037 = vrot.slane %v2010, %v2036
        %v2038 = vlaneseq
        %v2039 = vshrl.u32 %v2038, 7
        %v2040 = vsub.s32 0, %v2039
        %v2041 = vrot.slane %v2018, %v2040
        %v2042 = vlaneseq
        %v2043 = vshrl.u32 %v2042, 7
        %v2044 = vsub.s32 0, %v2043
        %v2045 = vrot.slane %v2020, %v2044
        %v2046 = vlaneseq
        %v2047 = vshrl.u32 %v2046, 7
        %v2048 = vsub.s32 0, %v2047
        %v2049 = vrot.slane %v2003, %v2048
        %v2050 = vlaneseq
        %v2051 = vshrl.u32 %v2050, 7
        %v2052 = vsub.s32 0, %v2051
        %v2053 = vrot.slane %v2017, %v2052
        %v2054 = vlaneseq
        %v2055 = vshrl.u32 %v2054, 7
        %v2056 = vsub.s32 0, %v2055
        %v2057 = vrot.slane %v2019, %v2056
        %v2058 = vlaneseq
        %v2059 = vshrl.u32 %v2058, 7
        %v2060 = vsub.s32 0, %v2059
        %v2061 = vrot.slane %v2021, %v2060
        %v2070 = vmul.f32 %v2024, %v2033
        %v2071 = vmul.f32 %v2028, %v2033
        %v2072 = vmul.f32 %v2024, %v2037
        %v2073 = vmul.f32 %v2028, %v2037
        %v2074 = vmul.f32 %v2024, %v2041
        %v2075 = vmul.f32 %v2028, %v2041
        %v2076 = vmul.f32 %v2024, %v2045
        %v2077 = vmul.f32 %v2028, %v2045
        %v2078 = vmul.f32 %v2024, %v2049
        %v2079 = vmul.f32 %v2028, %v2049
        %v2080 = vmul.f32 %v2024, %v2053
        %v2081 = vmul.f32 %v2028, %v2053
        %v2082 = vmul.f32 %v2024, %v2057
        %v2083 = vmul.f32 %v2028, %v2057
        %v2084 = vmul.f32 %v2024, %v2061
        %v2085 = vmul.f32 %v2028, %v2061
        %v2086 = vadd.f32 %v1697, %v2070
        %v2087 = vadd.f32 %v1698, %v2071
        %v2088 = vadd.f32 %v1699, %v2072
        %v2089 = vadd.f32 %v1700, %v2073
        %v2090 = vadd.f32 %v1701, %v2074
        %v2091 = vadd.f32 %v1702, %v2075
        %v2092 = vadd.f32 %v1703, %v2076
        %v2093 = vadd.f32 %v1704, %v2077
        %v2094 = vadd.f32 %v1705, %v2078
        %v2095 = vadd.f32 %v1706, %v2079
        %v2096 = vadd.f32 %v1707, %v2080
        %v2097 = vadd.f32 %v1708, %v2081
        %v2098 = vadd.f32 %v1709, %v2082
        %v2099 = vadd.f32 %v1710, %v2083
        %v2100 = vadd.f32 %v1711, %v2084
        %v2101 = vadd.f32 %v1712, %v2085
        %vm2102 = vcmask 31744
        %v2104 = vsel %vm2102, %v2086, 0
        %v2107 = vsel %vm2102, %v2087, 0
        %v2110 = vsel %vm2102, %v2088, 0
        %v2113 = vsel %vm2102, %v2089, 0
        %v2116 = vsel %vm2102, %v2090, 0
        %v2119 = vsel %vm2102, %v2091, 0
        %v2122 = vsel %vm2102, %v2092, 0
        %v2125 = vsel %vm2102, %v2093, 0
        %v2128 = vsel %vm2102, %v2094, 0
        %v2131 = vsel %vm2102, %v2095, 0
        %v2134 = vsel %vm2102, %v2096, 0
        %v2137 = vsel %vm2102, %v2097, 0
        %v2140 = vsel %vm2102, %v2098, 0
        %v2143 = vsel %vm2102, %v2099, 0
        %v2146 = vsel %vm2102, %v2100, 0
        %v2149 = vsel %vm2102, %v2101, 0
        %vm2151 = vcmask 1043456
        %v2153 = vsel %vm2151, %v349, 0
        %2155 = vmatprep.subr.mxu0 0.0
        %2156 = vmatpush1.msra.mxu0 %v2153
        %2157 = vmatprep.subr.mxu0 0.0
        %2158 = vmatpush1.msra.mxu0 0.0
        %2159 = vmatprep.subr.mxu0 0.0
        %2160 = vmatpush1.msra.mxu0 0.0
        %2161 = vmatprep.subr.mxu0 0.0
        %2162 = vmatpush1.msra.mxu0 0.0
        %2163 = vmatprep.subr.mxu0 0.0
        %2164 = vmatpush1.msra.mxu0 0.0
        %2165 = vmatprep.subr.mxu0 0.0
        %2166 = vmatpush1.msra.mxu0 0.0
        %2167 = vmatprep.subr.mxu0 0.0
        %2168 = vmatpush1.msra.mxu0 0.0
        %2169 = vmatprep.subr.mxu0 0.0
        %2170 = vmatpush1.msra.mxu0 0.0
        %2171 = vmatprep.subr.mxu0 0.0
        %2172 = vmatpush1.msra.mxu0 0.0
        %2173 = vmatprep.subr.mxu0 0.0
        %2174 = vmatpush1.msra.mxu0 0.0
        %2175 = vmatprep.subr.mxu0 0.0
        %2176 = vmatpush1.msra.mxu0 0.0
        %2177 = vmatprep.subr.mxu0 0.0
        %2178 = vmatpush1.msra.mxu0 0.0
        %2179 = vmatprep.subr.mxu0 0.0
        %2180 = vmatpush1.msra.mxu0 0.0
        %2181 = vmatprep.subr.mxu0 0.0
        %2182 = vmatpush1.msra.mxu0 0.0
        %2183 = vmatprep.subr.mxu0 0.0
        %2184 = vmatpush1.msra.mxu0 0.0
        %2185 = vmatprep.subr.mxu0 0.0
        %2186 = vmatpush1.msra.mxu0 0.0
        %2187 = vmatprep.subr.mxu0 0.0
        %2188 = vmatpush1.msra.mxu0 0.0
        %2189 = vmatprep.subr.mxu0 0.0
        %2190 = vmatpush1.msra.mxu0 0.0
        %2191 = vmatprep.subr.mxu0 0.0
        %2192 = vmatpush1.msra.mxu0 0.0
        %2193 = vmatprep.subr.mxu0 0.0
        %2194 = vmatpush1.msra.mxu0 0.0
        %2195 = vmatprep.subr.mxu0 0.0
        %2196 = vmatpush1.msra.mxu0 0.0
        %2197 = vmatprep.subr.mxu0 0.0
        %2198 = vmatpush1.msra.mxu0 0.0
        %2199 = vmatprep.subr.mxu0 0.0
        %2200 = vmatpush1.msra.mxu0 0.0
        %2201 = vmatprep.subr.mxu0 0.0
        %2202 = vmatpush1.msra.mxu0 0.0
        %2203 = vmatprep.subr.mxu0 0.0
        %2204 = vmatpush1.msra.mxu0 0.0
        %2205 = vmatprep.subr.mxu0 0.0
        %2206 = vmatpush1.msra.mxu0 0.0
        %2207 = vmatprep.subr.mxu0 0.0
        %2208 = vmatpush1.msra.mxu0 0.0
        %2209 = vmatprep.subr.mxu0 0.0
        %2210 = vmatpush1.msra.mxu0 0.0
        %2211 = vmatprep.subr.mxu0 0.0
        %2212 = vmatpush1.msra.mxu0 0.0
        %2213 = vmatprep.subr.mxu0 0.0
        %2214 = vmatpush1.msra.mxu0 0.0
        %2215 = vmatprep.subr.mxu0 0.0
        %2216 = vmatpush1.msra.mxu0 0.0
        %2217 = vmatprep.subr.mxu0 0.0
        %2218 = vmatpush1.msra.mxu0 0.0
        %2219 = vmatprep.mubr.f32.mxu0 0.0
        %2220 = vmatmul.mubr.f32.gmra.mrb[0].mxu0 %v2104
        %v2221 = vpop.f32.mrb[0].mxu0
        %v2222 = vadd.f32 1.0, %v2221
        %v2223 = vpop.f32.mrb[0].mxu0
        %2224 = vmatprep.mubr.f32.mxu0 0.0
        %2225 = vmatmul.mubr.f32.gmra.mrb[0].mxu0 %v2107
        %v2226 = vpop.f32.mrb[0].mxu0
        %v2227 = vadd.f32 1.0, %v2226
        %v2228 = vpop.f32.mrb[0].mxu0
        %2229 = vmatprep.mubr.f32.mxu0 0.0
        %2230 = vmatmul.mubr.f32.gmra.mrb[0].mxu0 %v2110
        %v2231 = vpop.f32.mrb[0].mxu0
        %v2232 = vadd.f32 1.0, %v2231
        %v2233 = vpop.f32.mrb[0].mxu0
        %2234 = vmatprep.mubr.f32.mxu0 0.0
        %2235 = vmatmul.mubr.f32.gmra.mrb[0].mxu0 %v2113
        %v2236 = vpop.f32.mrb[0].mxu0
        %v2237 = vadd.f32 1.0, %v2236
        %v2238 = vpop.f32.mrb[0].mxu0
        %2239 = vmatprep.mubr.f32.mxu0 0.0
        %2240 = vmatmul.mubr.f32.gmra.mrb[0].mxu0 %v2116
        %v2241 = vpop.f32.mrb[0].mxu0
        %v2242 = vadd.f32 1.0, %v2241
        %v2243 = vpop.f32.mrb[0].mxu0
        %2244 = vmatprep.mubr.f32.mxu0 0.0
        %2245 = vmatmul.mubr.f32.gmra.mrb[0].mxu0 %v2119
        %v2246 = vpop.f32.mrb[0].mxu0
        %v2247 = vadd.f32 1.0, %v2246
        %v2248 = vpop.f32.mrb[0].mxu0
        %2249 = vmatprep.mubr.f32.mxu0 0.0
        %2250 = vmatmul.mubr.f32.gmra.mrb[0].mxu0 %v2122
        %v2251 = vpop.f32.mrb[0].mxu0
        %v2252 = vadd.f32 1.0, %v2251
        %v2253 = vpop.f32.mrb[0].mxu0
        %2254 = vmatprep.mubr.f32.mxu0 0.0
        %2255 = vmatmul.mubr.f32.gmra.mrb[0].mxu0 %v2125
        %v2256 = vpop.f32.mrb[0].mxu0
        %v2257 = vadd.f32 1.0, %v2256
        %v2258 = vpop.f32.mrb[0].mxu0
        %2259 = vmatprep.mubr.f32.mxu0 0.0
        %2260 = vmatmul.mubr.f32.gmra.mrb[0].mxu0 %v2128
        %v2261 = vpop.f32.mrb[0].mxu0
        %v2262 = vadd.f32 1.0, %v2261
        %v2263 = vpop.f32.mrb[0].mxu0
        %2264 = vmatprep.mubr.f32.mxu0 0.0
        %2265 = vmatmul.mubr.f32.gmra.mrb[0].mxu0 %v2131
        %v2266 = vpop.f32.mrb[0].mxu0
        %v2267 = vadd.f32 1.0, %v2266
        %v2268 = vpop.f32.mrb[0].mxu0
        %2269 = vmatprep.mubr.f32.mxu0 0.0
        %2270 = vmatmul.mubr.f32.gmra.mrb[0].mxu0 %v2134
        %v2271 = vpop.f32.mrb[0].mxu0
        %v2272 = vadd.f32 1.0, %v2271
        %v2273 = vpop.f32.mrb[0].mxu0
        %2274 = vmatprep.mubr.f32.mxu0 0.0
        %2275 = vmatmul.mubr.f32.gmra.mrb[0].mxu0 %v2137
        %v2276 = vpop.f32.mrb[0].mxu0
        %v2277 = vadd.f32 1.0, %v2276
        %v2278 = vpop.f32.mrb[0].mxu0
        %2279 = vmatprep.mubr.f32.mxu0 0.0
        %2280 = vmatmul.mubr.f32.gmra.mrb[0].mxu0 %v2140
        %v2281 = vpop.f32.mrb[0].mxu0
        %v2282 = vadd.f32 1.0, %v2281
        %v2283 = vpop.f32.mrb[0].mxu0
        %2284 = vmatprep.mubr.f32.mxu0 0.0
        %2285 = vmatmul.mubr.f32.gmra.mrb[0].mxu0 %v2143
        %v2286 = vpop.f32.mrb[0].mxu0
        %v2287 = vadd.f32 1.0, %v2286
        %v2288 = vpop.f32.mrb[0].mxu0
        %2289 = vmatprep.mubr.f32.mxu0 0.0
        %2290 = vmatmul.mubr.f32.gmra.mrb[0].mxu0 %v2146
        %v2291 = vpop.f32.mrb[0].mxu0
        %v2292 = vadd.f32 1.0, %v2291
        %v2293 = vpop.f32.mrb[0].mxu0
        %2294 = vmatprep.mubr.f32.mxu0 0.0
        %2295 = vmatmul.mubr.f32.gmra.mrb[0].mxu0 %v2149
        %v2296 = vpop.f32.mrb[0].mxu0
        %v2297 = vadd.f32 1.0, %v2296
        %v2298 = vpop.f32.mrb[0].mxu0
        %2299 = vdwg.mxu0
        %v2300 = vmul.f32 %v354, %v2222
        %v2301 = vmul.f32 %v355, %v2227
        %v2302 = vmul.f32 %v356, %v2232
        %v2303 = vmul.f32 %v357, %v2237
        %v2304 = vmul.f32 %v358, %v2242
        %v2305 = vmul.f32 %v359, %v2247
        %v2306 = vmul.f32 %v360, %v2252
        %v2307 = vmul.f32 %v361, %v2257
        %v2308 = vmul.f32 %v362, %v2262
        %v2309 = vmul.f32 %v363, %v2267
        %v2310 = vmul.f32 %v364, %v2272
        %v2311 = vmul.f32 %v365, %v2277
        %v2312 = vmul.f32 %v366, %v2282
        %v2313 = vmul.f32 %v367, %v2287
        %v2314 = vmul.f32 %v368, %v2292
        %v2315 = vmul.f32 %v369, %v2297
        %2316 = vst.msk [vmem:[%s342] sm:$0xff] %vm370, %v2300
        %2317 = vst.msk [vmem:[%s342 + $0x8] sm:$0xff] %vm370, %v2301
        %2318 = vst.msk [vmem:[%s342 + $0x40] sm:$0xff] %vm370, %v2302
        %2319 = vst.msk [vmem:[%s342 + $0x48] sm:$0xff] %vm370, %v2303
        %2320 = vst.msk [vmem:[%s342 + $0x80] sm:$0xff] %vm370, %v2304
        %2321 = vst.msk [vmem:[%s342 + $0x88] sm:$0xff] %vm370, %v2305
        %2322 = vst.msk [vmem:[%s342 + $0xc0] sm:$0xff] %vm370, %v2306
        %2323 = vst.msk [vmem:[%s342 + $0xc8] sm:$0xff] %vm370, %v2307
        %2324 = vst.msk [vmem:[%s342 + $0x100] sm:$0xff] %vm370, %v2308
        %2325 = vst.msk [vmem:[%s342 + $0x108] sm:$0xff] %vm370, %v2309
        %2326 = vst.msk [vmem:[%s342 + $0x140] sm:$0xff] %vm370, %v2310
        %2327 = vst.msk [vmem:[%s342 + $0x148] sm:$0xff] %vm370, %v2311
        %2328 = vst.msk [vmem:[%s342 + $0x180] sm:$0xff] %vm370, %v2312
        %2329 = vst.msk [vmem:[%s342 + $0x188] sm:$0xff] %vm370, %v2313
        %2330 = vst.msk [vmem:[%s342 + $0x1c0] sm:$0xff] %vm370, %v2314
        %2331 = vst.msk [vmem:[%s342 + $0x1c8] sm:$0xff] %vm370, %v2315
        %s2332 = scalar_lea.vmem %s310, 16 [#allocation2]
        %v2333 = vld [vmem:[%s2332] sm:$0xff]
        %v2334 = vld [vmem:[%s2332 + $0x8] sm:$0xff]
        %v2335 = vld [vmem:[%s2332 + $0x40] sm:$0xff]
        %v2336 = vld [vmem:[%s2332 + $0x48] sm:$0xff]
        %v2337 = vld [vmem:[%s2332 + $0x80] sm:$0xff]
        %v2338 = vld [vmem:[%s2332 + $0x88] sm:$0xff]
        %v2339 = vld [vmem:[%s2332 + $0xc0] sm:$0xff]
        %v2340 = vld [vmem:[%s2332 + $0xc8] sm:$0xff]
        %v2341 = vld [vmem:[%s2332 + $0x100] sm:$0xff]
        %v2342 = vld [vmem:[%s2332 + $0x108] sm:$0xff]
        %v2343 = vld [vmem:[%s2332 + $0x140] sm:$0xff]
        %v2344 = vld [vmem:[%s2332 + $0x148] sm:$0xff]
        %v2345 = vld [vmem:[%s2332 + $0x180] sm:$0xff]
        %v2346 = vld [vmem:[%s2332 + $0x188] sm:$0xff]
        %v2347 = vld [vmem:[%s2332 + $0x1c0] sm:$0xff]
        %v2348 = vld [vmem:[%s2332 + $0x1c8] sm:$0xff]
        %v2350 = vsel %vm370, %v2333, 0
        %v2353 = vsel %vm370, %v2334, 0
        %v2356 = vsel %vm370, %v2335, 0
        %v2359 = vsel %vm370, %v2336, 0
        %v2362 = vsel %vm370, %v2337, 0
        %v2365 = vsel %vm370, %v2338, 0
        %v2368 = vsel %vm370, %v2339, 0
        %v2371 = vsel %vm370, %v2340, 0
        %v2374 = vsel %vm370, %v2341, 0
        %v2377 = vsel %vm370, %v2342, 0
        %v2380 = vsel %vm370, %v2343, 0
        %v2383 = vsel %vm370, %v2344, 0
        %v2386 = vsel %vm370, %v2345, 0
        %v2389 = vsel %vm370, %v2346, 0
        %v2392 = vsel %vm370, %v2347, 0
        %v2395 = vsel %vm370, %v2348, 0
        %2397 = vmatprep.subr.mxu0 0.0
        %2398 = vmatpush1.msra.mxu0 %v345
        %2399 = vmatprep.subr.mxu0 0.0
        %2400 = vmatpush1.msra.mxu0 %v346
        %2401 = vmatprep.subr.mxu0 0.0
        %2402 = vmatpush1.msra.mxu0 0.0
        %2403 = vmatprep.subr.mxu0 0.0
        %2404 = vmatpush1.msra.mxu0 0.0
        %2405 = vmatprep.subr.mxu0 0.0
        %2406 = vmatpush1.msra.mxu0 0.0
        %2407 = vmatprep.subr.mxu0 0.0
        %2408 = vmatpush1.msra.mxu0 0.0
        %2409 = vmatprep.subr.mxu0 0.0
        %2410 = vmatpush1.msra.mxu0 0.0
        %2411 = vmatprep.subr.mxu0 0.0
        %2412 = vmatpush1.msra.mxu0 0.0
        %2413 = vmatprep.subr.mxu0 0.0
        %2414 = vmatpush1.msra.mxu0 0.0
        %2415 = vmatprep.subr.mxu0 0.0
        %2416 = vmatpush1.msra.mxu0 0.0
        %2417 = vmatprep.subr.mxu0 0.0
        %2418 = vmatpush1.msra.mxu0 0.0
        %2419 = vmatprep.subr.mxu0 0.0
        %2420 = vmatpush1.msra.mxu0 0.0
        %2421 = vmatprep.subr.mxu0 0.0
        %2422 = vmatpush1.msra.mxu0 0.0
        %2423 = vmatprep.subr.mxu0 0.0
        %2424 = vmatpush1.msra.mxu0 0.0
        %2425 = vmatprep.subr.mxu0 0.0
        %2426 = vmatpush1.msra.mxu0 0.0
        %2427 = vmatprep.subr.mxu0 0.0
        %2428 = vmatpush1.msra.mxu0 0.0
        %2429 = vmatprep.subr.mxu0 0.0
        %2430 = vmatpush1.msra.mxu0 0.0
        %2431 = vmatprep.subr.mxu0 0.0
        %2432 = vmatpush1.msra.mxu0 0.0
        %2433 = vmatprep.subr.mxu0 0.0
        %2434 = vmatpush1.msra.mxu0 0.0
        %2435 = vmatprep.subr.mxu0 0.0
        %2436 = vmatpush1.msra.mxu0 0.0
        %2437 = vmatprep.subr.mxu0 0.0
        %2438 = vmatpush1.msra.mxu0 0.0
        %2439 = vmatprep.subr.mxu0 0.0
        %2440 = vmatpush1.msra.mxu0 0.0
        %2441 = vmatprep.subr.mxu0 0.0
        %2442 = vmatpush1.msra.mxu0 0.0
        %2443 = vmatprep.subr.mxu0 0.0
        %2444 = vmatpush1.msra.mxu0 0.0
        %2445 = vmatprep.subr.mxu0 0.0
        %2446 = vmatpush1.msra.mxu0 0.0
        %2447 = vmatprep.subr.mxu0 0.0
        %2448 = vmatpush1.msra.mxu0 0.0
        %2449 = vmatprep.subr.mxu0 0.0
        %2450 = vmatpush1.msra.mxu0 0.0
        %2451 = vmatprep.subr.mxu0 0.0
        %2452 = vmatpush1.msra.mxu0 0.0
        %2453 = vmatprep.subr.mxu0 0.0
        %2454 = vmatpush1.msra.mxu0 0.0
        %2455 = vmatprep.subr.mxu0 0.0
        %2456 = vmatpush1.msra.mxu0 0.0
        %2457 = vmatprep.subr.mxu0 0.0
        %2458 = vmatpush1.msra.mxu0 0.0
        %2459 = vmatprep.subr.mxu0 0.0
        %2460 = vmatpush1.msra.mxu0 0.0
        %2461 = vmatprep.mubr.f32.mxu0 0.0
        %2462 = vmatmul.mubr.f32.gmra.mrb[0].mxu0 %v2350
        %v2463 = vpop.f32.mrb[0].mxu0
        %v2464 = vadd.f32 0.0, %v2463
        %v2465 = vpop.f32.mrb[0].mxu0
        %2466 = vmatprep.mubr.f32.mxu0 0.0
        %2467 = vmatmul.mubr.f32.gmra.mrb[0].mxu0 %v2353
        %v2468 = vpop.f32.mrb[0].mxu0
        %v2469 = vadd.f32 0.0, %v2468
        %v2470 = vpop.f32.mrb[0].mxu0
        %2471 = vmatprep.mubr.f32.mxu0 0.0
        %2472 = vmatmul.mubr.f32.gmra.mrb[0].mxu0 %v2356
        %v2473 = vpop.f32.mrb[0].mxu0
        %v2474 = vadd.f32 0.0, %v2473
        %v2475 = vpop.f32.mrb[0].mxu0
        %2476 = vmatprep.mubr.f32.mxu0 0.0
        %2477 = vmatmul.mubr.f32.gmra.mrb[0].mxu0 %v2359
        %v2478 = vpop.f32.mrb[0].mxu0
        %v2479 = vadd.f32 0.0, %v2478
        %v2480 = vpop.f32.mrb[0].mxu0
        %2481 = vmatprep.mubr.f32.mxu0 0.0
        %2482 = vmatmul.mubr.f32.gmra.mrb[0].mxu0 %v2362
        %v2483 = vpop.f32.mrb[0].mxu0
        %v2484 = vadd.f32 0.0, %v2483
        %v2485 = vpop.f32.mrb[0].mxu0
        %2486 = vmatprep.mubr.f32.mxu0 0.0
        %2487 = vmatmul.mubr.f32.gmra.mrb[0].mxu0 %v2365
        %v2488 = vpop.f32.mrb[0].mxu0
        %v2489 = vadd.f32 0.0, %v2488
        %v2490 = vpop.f32.mrb[0].mxu0
        %2491 = vmatprep.mubr.f32.mxu0 0.0
        %2492 = vmatmul.mubr.f32.gmra.mrb[0].mxu0 %v2368
        %v2493 = vpop.f32.mrb[0].mxu0
        %v2494 = vadd.f32 0.0, %v2493
        %v2495 = vpop.f32.mrb[0].mxu0
        %2496 = vmatprep.mubr.f32.mxu0 0.0
        %2497 = vmatmul.mubr.f32.gmra.mrb[0].mxu0 %v2371
        %v2498 = vpop.f32.mrb[0].mxu0
        %v2499 = vadd.f32 0.0, %v2498
        %v2500 = vpop.f32.mrb[0].mxu0
        %2501 = vmatprep.mubr.f32.mxu0 0.0
        %2502 = vmatmul.mubr.f32.gmra.mrb[0].mxu0 %v2374
        %v2503 = vpop.f32.mrb[0].mxu0
        %v2504 = vadd.f32 0.0, %v2503
        %v2505 = vpop.f32.mrb[0].mxu0
        %2506 = vmatprep.mubr.f32.mxu0 0.0
        %2507 = vmatmul.mubr.f32.gmra.mrb[0].mxu0 %v2377
        %v2508 = vpop.f32.mrb[0].mxu0
        %v2509 = vadd.f32 0.0, %v2508
        %v2510 = vpop.f32.mrb[0].mxu0
        %2511 = vmatprep.mubr.f32.mxu0 0.0
        %2512 = vmatmul.mubr.f32.gmra.mrb[0].mxu0 %v2380
        %v2513 = vpop.f32.mrb[0].mxu0
        %v2514 = vadd.f32 0.0, %v2513
        %v2515 = vpop.f32.mrb[0].mxu0
        %2516 = vmatprep.mubr.f32.mxu0 0.0
        %2517 = vmatmul.mubr.f32.gmra.mrb[0].mxu0 %v2383
        %v2518 = vpop.f32.mrb[0].mxu0
        %v2519 = vadd.f32 0.0, %v2518
        %v2520 = vpop.f32.mrb[0].mxu0
        %2521 = vmatprep.mubr.f32.mxu0 0.0
        %2522 = vmatmul.mubr.f32.gmra.mrb[0].mxu0 %v2386
        %v2523 = vpop.f32.mrb[0].mxu0
        %v2524 = vadd.f32 0.0, %v2523
        %v2525 = vpop.f32.mrb[0].mxu0
        %2526 = vmatprep.mubr.f32.mxu0 0.0
        %2527 = vmatmul.mubr.f32.gmra.mrb[0].mxu0 %v2389
        %v2528 = vpop.f32.mrb[0].mxu0
        %v2529 = vadd.f32 0.0, %v2528
        %v2530 = vpop.f32.mrb[0].mxu0
        %2531 = vmatprep.mubr.f32.mxu0 0.0
        %2532 = vmatmul.mubr.f32.gmra.mrb[0].mxu0 %v2392
        %v2533 = vpop.f32.mrb[0].mxu0
        %v2534 = vadd.f32 0.0, %v2533
        %v2535 = vpop.f32.mrb[0].mxu0
        %2536 = vmatprep.mubr.f32.mxu0 0.0
        %2537 = vmatmul.mubr.f32.gmra.mrb[0].mxu0 %v2395
        %v2538 = vpop.f32.mrb[0].mxu0
        %v2539 = vadd.f32 0.0, %v2538
        %v2540 = vpop.f32.mrb[0].mxu0
        %2541 = vdwg.mxu0
        %v2542 = vsel %vm564, %v2464, 0.0
        %v2543 = vrot.slane %v2542, 4
        %v2544 = vadd.f32 %v2542, %v2543
        %v2545 = vrot.slane %v2544, 2
        %v2546 = vadd.f32 %v2544, %v2545
        %v2547 = vrot.slane %v2546, 1
        %v2548 = vadd.f32 %v2546, %v2547
        %v2549 = vsel %vm564, %v2474, 0.0
        %v2550 = vrot.slane %v2549, 4
        %v2551 = vadd.f32 %v2549, %v2550
        %v2552 = vrot.slane %v2551, 2
        %v2553 = vadd.f32 %v2551, %v2552
        %v2554 = vrot.slane %v2553, 1
        %v2555 = vadd.f32 %v2553, %v2554
        %v2556 = vsel %vm564, %v2484, 0.0
        %v2557 = vrot.slane %v2556, 4
        %v2558 = vadd.f32 %v2556, %v2557
        %v2559 = vrot.slane %v2558, 2
        %v2560 = vadd.f32 %v2558, %v2559
        %v2561 = vrot.slane %v2560, 1
        %v2562 = vadd.f32 %v2560, %v2561
        %v2563 = vsel %vm564, %v2494, 0.0
        %v2564 = vrot.slane %v2563, 4
        %v2565 = vadd.f32 %v2563, %v2564
        %v2566 = vrot.slane %v2565, 2
        %v2567 = vadd.f32 %v2565, %v2566
        %v2568 = vrot.slane %v2567, 1
        %v2569 = vadd.f32 %v2567, %v2568
        %v2570 = vsel %vm564, %v2504, 0.0
        %v2571 = vrot.slane %v2570, 4
        %v2572 = vadd.f32 %v2570, %v2571
        %v2573 = vrot.slane %v2572, 2
        %v2574 = vadd.f32 %v2572, %v2573
        %v2575 = vrot.slane %v2574, 1
        %v2576 = vadd.f32 %v2574, %v2575
        %v2577 = vsel %vm564, %v2514, 0.0
        %v2578 = vrot.slane %v2577, 4
        %v2579 = vadd.f32 %v2577, %v2578
        %v2580 = vrot.slane %v2579, 2
        %v2581 = vadd.f32 %v2579, %v2580
        %v2582 = vrot.slane %v2581, 1
        %v2583 = vadd.f32 %v2581, %v2582
        %v2584 = vsel %vm564, %v2524, 0.0
        %v2585 = vrot.slane %v2584, 4
        %v2586 = vadd.f32 %v2584, %v2585
        %v2587 = vrot.slane %v2586, 2
        %v2588 = vadd.f32 %v2586, %v2587
        %v2589 = vrot.slane %v2588, 1
        %v2590 = vadd.f32 %v2588, %v2589
        %v2591 = vsel %vm564, %v2534, 0.0
        %v2592 = vrot.slane %v2591, 4
        %v2593 = vadd.f32 %v2591, %v2592
        %v2594 = vrot.slane %v2593, 2
        %v2595 = vadd.f32 %v2593, %v2594
        %v2596 = vrot.slane %v2595, 1
        %v2597 = vadd.f32 %v2595, %v2596
        %v2598 = vmul.f32 %v2548, %v621
        %v2599 = vmul.f32 %v2555, %v621
        %v2600 = vmul.f32 %v2562, %v621
        %v2601 = vmul.f32 %v2569, %v621
        %v2602 = vmul.f32 %v2576, %v621
        %v2603 = vmul.f32 %v2583, %v621
        %v2604 = vmul.f32 %v2590, %v621
        %v2605 = vmul.f32 %v2597, %v621
        %v2614 = vsel %vm643, %v2599, %v2598
        %v2615 = vsel %vm645, %v2600, %v2614
        %v2616 = vsel %vm647, %v2601, %v2615
        %v2617 = vsel %vm649, %v2602, %v2616
        %v2618 = vsel %vm651, %v2603, %v2617
        %v2619 = vsel %vm653, %v2604, %v2618
        %v2620 = vsel %vm655, %v2605, %v2619
        %2622 = vmatprep.subr.mxu0 0.0
        %2623 = vmatpush1.msra.mxu0 %v2620
        %2624 = vmatprep.subr.mxu0 0.0
        %2625 = vmatpush1.msra.mxu0 0.0
        %2626 = vmatprep.subr.mxu0 0.0
        %2627 = vmatpush1.msra.mxu0 0.0
        %2628 = vmatprep.subr.mxu0 0.0
        %2629 = vmatpush1.msra.mxu0 0.0
        %2630 = vmatprep.subr.mxu0 0.0
        %2631 = vmatpush1.msra.mxu0 0.0
        %2632 = vmatprep.subr.mxu0 0.0
        %2633 = vmatpush1.msra.mxu0 0.0
        %2634 = vmatprep.subr.mxu0 0.0
        %2635 = vmatpush1.msra.mxu0 0.0
        %2636 = vmatprep.subr.mxu0 0.0
        %2637 = vmatpush1.msra.mxu0 0.0
        %2638 = vmatprep.subr.mxu0 0.0
        %2639 = vmatpush1.msra.mxu0 0.0
        %2640 = vmatprep.subr.mxu0 0.0
        %2641 = vmatpush1.msra.mxu0 0.0
        %2642 = vmatprep.subr.mxu0 0.0
        %2643 = vmatpush1.msra.mxu0 0.0
        %2644 = vmatprep.subr.mxu0 0.0
        %2645 = vmatpush1.msra.mxu0 0.0
        %2646 = vmatprep.subr.mxu0 0.0
        %2647 = vmatpush1.msra.mxu0 0.0
        %2648 = vmatprep.subr.mxu0 0.0
        %2649 = vmatpush1.msra.mxu0 0.0
        %2650 = vmatprep.subr.mxu0 0.0
        %2651 = vmatpush1.msra.mxu0 0.0
        %2652 = vmatprep.subr.mxu0 0.0
        %2653 = vmatpush1.msra.mxu0 0.0
        %2654 = vmatprep.subr.mxu0 0.0
        %2655 = vmatpush1.msra.mxu0 0.0
        %2656 = vmatprep.subr.mxu0 0.0
        %2657 = vmatpush1.msra.mxu0 0.0
        %2658 = vmatprep.subr.mxu0 0.0
        %2659 = vmatpush1.msra.mxu0 0.0
        %2660 = vmatprep.subr.mxu0 0.0
        %2661 = vmatpush1.msra.mxu0 0.0
        %2662 = vmatprep.subr.mxu0 0.0
        %2663 = vmatpush1.msra.mxu0 0.0
        %2664 = vmatprep.subr.mxu0 0.0
        %2665 = vmatpush1.msra.mxu0 0.0
        %2666 = vmatprep.subr.mxu0 0.0
        %2667 = vmatpush1.msra.mxu0 0.0
        %2668 = vmatprep.subr.mxu0 0.0
        %2669 = vmatpush1.msra.mxu0 0.0
        %2670 = vmatprep.subr.mxu0 0.0
        %2671 = vmatpush1.msra.mxu0 0.0
        %2672 = vmatprep.subr.mxu0 0.0
        %2673 = vmatpush1.msra.mxu0 0.0
        %2674 = vmatprep.subr.mxu0 0.0
        %2675 = vmatpush1.msra.mxu0 0.0
        %2676 = vmatprep.subr.mxu0 0.0
        %2677 = vmatpush1.msra.mxu0 0.0
        %2678 = vmatprep.subr.mxu0 0.0
        %2679 = vmatpush1.msra.mxu0 0.0
        %2680 = vmatprep.subr.mxu0 0.0
        %2681 = vmatpush1.msra.mxu0 0.0
        %2682 = vmatprep.subr.mxu0 0.0
        %2683 = vmatpush1.msra.mxu0 0.0
        %2684 = vmatprep.subr.mxu0 0.0
        %2685 = vmatpush1.msra.mxu0 0.0
        %2686 = vmatprep.mubr.f32.mxu0 0.0
        %2687 = vmatmul.mubr.f32.gmra.mrb[0].mxu0 %v660
        %v2688 = vpop.f32.mrb[0].mxu0
        %v2689 = vadd.f32 %v633, %v2688
        %v2690 = vpop.f32.mrb[0].mxu0
        %2691 = vdwg.mxu0
        %v2692 = vmax.f32 %v2689, 0.0
        %v2693 = vmin.f32 %v2689, 0.0
        %v2694 = vmul.f32 %v2693, 1.442695
        %v2695 = vpow.pop %v2694
        %v2696 = vsub.f32 %v2695, 1.0
        %v2697 = vadd.f32 %v2692, %v2696
        %v2699 = vsel %vm747, %v2697, 0
        %2701 = vmatprep.subr.mxu0 0.0
        %2702 = vmatpush1.msra.mxu0 %v2699
        %2703 = vmatprep.subr.mxu0 0.0
        %2704 = vmatpush1.msra.mxu0 0.0
        %2705 = vmatprep.subr.mxu0 0.0
        %2706 = vmatpush1.msra.mxu0 0.0
        %2707 = vmatprep.subr.mxu0 0.0
        %2708 = vmatpush1.msra.mxu0 0.0
        %2709 = vmatprep.subr.mxu0 0.0
        %2710 = vmatpush1.msra.mxu0 0.0
        %2711 = vmatprep.subr.mxu0 0.0
        %2712 = vmatpush1.msra.mxu0 0.0
        %2713 = vmatprep.subr.mxu0 0.0
        %2714 = vmatpush1.msra.mxu0 0.0
        %2715 = vmatprep.subr.mxu0 0.0
        %2716 = vmatpush1.msra.mxu0 0.0
        %2717 = vmatprep.subr.mxu0 0.0
        %2718 = vmatpush1.msra.mxu0 0.0
        %2719 = vmatprep.subr.mxu0 0.0
        %2720 = vmatpush1.msra.mxu0 0.0
        %2721 = vmatprep.subr.mxu0 0.0
        %2722 = vmatpush1.msra.mxu0 0.0
        %2723 = vmatprep.subr.mxu0 0.0
        %2724 = vmatpush1.msra.mxu0 0.0
        %2725 = vmatprep.subr.mxu0 0.0
        %2726 = vmatpush1.msra.mxu0 0.0
        %2727 = vmatprep.subr.mxu0 0.0
        %2728 = vmatpush1.msra.mxu0 0.0
        %2729 = vmatprep.subr.mxu0 0.0
        %2730 = vmatpush1.msra.mxu0 0.0
        %2731 = vmatprep.subr.mxu0 0.0
        %2732 = vmatpush1.msra.mxu0 0.0
        %2733 = vmatprep.subr.mxu0 0.0
        %2734 = vmatpush1.msra.mxu0 0.0
        %2735 = vmatprep.subr.mxu0 0.0
        %2736 = vmatpush1.msra.mxu0 0.0
        %2737 = vmatprep.subr.mxu0 0.0
        %2738 = vmatpush1.msra.mxu0 0.0
        %2739 = vmatprep.subr.mxu0 0.0
        %2740 = vmatpush1.msra.mxu0 0.0
        %2741 = vmatprep.subr.mxu0 0.0
        %2742 = vmatpush1.msra.mxu0 0.0
        %2743 = vmatprep.subr.mxu0 0.0
        %2744 = vmatpush1.msra.mxu0 0.0
        %2745 = vmatprep.subr.mxu0 0.0
        %2746 = vmatpush1.msra.mxu0 0.0
        %2747 = vmatprep.subr.mxu0 0.0
        %2748 = vmatpush1.msra.mxu0 0.0
        %2749 = vmatprep.subr.mxu0 0.0
        %2750 = vmatpush1.msra.mxu0 0.0
        %2751 = vmatprep.subr.mxu0 0.0
        %2752 = vmatpush1.msra.mxu0 0.0
        %2753 = vmatprep.subr.mxu0 0.0
        %2754 = vmatpush1.msra.mxu0 0.0
        %2755 = vmatprep.subr.mxu0 0.0
        %2756 = vmatpush1.msra.mxu0 0.0
        %2757 = vmatprep.subr.mxu0 0.0
        %2758 = vmatpush1.msra.mxu0 0.0
        %2759 = vmatprep.subr.mxu0 0.0
        %2760 = vmatpush1.msra.mxu0 0.0
        %2761 = vmatprep.subr.mxu0 0.0
        %2762 = vmatpush1.msra.mxu0 0.0
        %2763 = vmatprep.subr.mxu0 0.0
        %2764 = vmatpush1.msra.mxu0 0.0
        %2765 = vmatprep.mubr.f32.mxu0 0.0
        %2766 = vmatmul.mubr.f32.gmra.mrb[0].mxu0 %v745
        %v2767 = vpop.f32.mrb[0].mxu0
        %v2768 = vadd.f32 %v741, %v2767
        %v2769 = vpop.f32.mrb[0].mxu0
        %2770 = vdwg.mxu0
        %v2771 = vsub.f32 0.0, %v2768
        %v2772 = vmul.f32 %v2771, 1.442695
        %v2773 = vpow.pop %v2772
        %v2774 = vadd.f32 %v2773, 1.0
        %v2775 = vrcp.pop %v2774
        %v2776 = vmul.f32 1.0, %v2775
        %v2778 = vcombine.high %v2776, %v2776
        %v2780 = vunpack.c.l.s4 1966171168
        %v2781 = vunpack.c.0.s8 %v2780
        %v2782 = vlaneseq
        %v2783 = vshrl.u32 %v2782, 7
        %v2784 = vsub.s32 %v2781, %v2783
        %v2785 = vrot.slane %v2776, %v2784
        %v2787 = vunpack.c.l.s4 1966171168
        %v2788 = vunpack.c.0.s8 %v2787
        %v2789 = vlaneseq
        %v2790 = vshrl.u32 %v2789, 7
        %v2791 = vsub.s32 %v2788, %v2790
        %v2792 = vrot.slane %v2778, %v2791
        %v2793 = vcombine.high %v2785, %v2785
        %v2794 = vcombine.high %v2792, %v2792
        %v2796 = vunpack.c.l.s4 1966171168
        %v2797 = vunpack.c.0.s8 %v2796
        %v2798 = vlaneseq
        %v2799 = vshrl.u32 %v2798, 7
        %v2800 = vsub.s32 %v2797, %v2799
        %v2801 = vrot.slane %v2785, %v2800
        %v2803 = vunpack.c.l.s4 1966171168
        %v2804 = vunpack.c.0.s8 %v2803
        %v2805 = vlaneseq
        %v2806 = vshrl.u32 %v2805, 7
        %v2807 = vsub.s32 %v2804, %v2806
        %v2808 = vrot.slane %v2792, %v2807
        %v2810 = vunpack.c.l.s4 1966171168
        %v2811 = vunpack.c.0.s8 %v2810
        %v2812 = vlaneseq
        %v2813 = vshrl.u32 %v2812, 7
        %v2814 = vsub.s32 %v2811, %v2813
        %v2815 = vrot.slane %v2793, %v2814
        %v2817 = vunpack.c.l.s4 1966171168
        %v2818 = vunpack.c.0.s8 %v2817
        %v2819 = vlaneseq
        %v2820 = vshrl.u32 %v2819, 7
        %v2821 = vsub.s32 %v2818, %v2820
        %v2822 = vrot.slane %v2794, %v2821
        %v2823 = vcombine.high %v2801, %v2801
        %v2824 = vcombine.high %v2808, %v2808
        %v2825 = vcombine.high %v2815, %v2815
        %v2826 = vcombine.high %v2822, %v2822
        %v2827 = vlaneseq
        %v2828 = vshrl.u32 %v2827, 7
        %v2829 = vsub.s32 0, %v2828
        %v2830 = vrot.slane %v2801, %v2829
        %v2831 = vlaneseq
        %v2832 = vshrl.u32 %v2831, 7
        %v2833 = vsub.s32 0, %v2832
        %v2834 = vrot.slane %v2815, %v2833
        %v2835 = vlaneseq
        %v2836 = vshrl.u32 %v2835, 7
        %v2837 = vsub.s32 0, %v2836
        %v2838 = vrot.slane %v2823, %v2837
        %v2839 = vlaneseq
        %v2840 = vshrl.u32 %v2839, 7
        %v2841 = vsub.s32 0, %v2840
        %v2842 = vrot.slane %v2825, %v2841
        %v2843 = vlaneseq
        %v2844 = vshrl.u32 %v2843, 7
        %v2845 = vsub.s32 0, %v2844
        %v2846 = vrot.slane %v2808, %v2845
        %v2847 = vlaneseq
        %v2848 = vshrl.u32 %v2847, 7
        %v2849 = vsub.s32 0, %v2848
        %v2850 = vrot.slane %v2822, %v2849
        %v2851 = vlaneseq
        %v2852 = vshrl.u32 %v2851, 7
        %v2853 = vsub.s32 0, %v2852
        %v2854 = vrot.slane %v2824, %v2853
        %v2855 = vlaneseq
        %v2856 = vshrl.u32 %v2855, 7
        %v2857 = vsub.s32 0, %v2856
        %v2858 = vrot.slane %v2826, %v2857
        %v2867 = vmul.f32 %v880, %v2830
        %v2868 = vmul.f32 %v885, %v2830
        %v2869 = vmul.f32 %v880, %v2834
        %v2870 = vmul.f32 %v885, %v2834
        %v2871 = vmul.f32 %v880, %v2838
        %v2872 = vmul.f32 %v885, %v2838
        %v2873 = vmul.f32 %v880, %v2842
        %v2874 = vmul.f32 %v885, %v2842
        %v2875 = vmul.f32 %v880, %v2846
        %v2876 = vmul.f32 %v885, %v2846
        %v2877 = vmul.f32 %v880, %v2850
        %v2878 = vmul.f32 %v885, %v2850
        %v2879 = vmul.f32 %v880, %v2854
        %v2880 = vmul.f32 %v885, %v2854
        %v2881 = vmul.f32 %v880, %v2858
        %v2882 = vmul.f32 %v885, %v2858
        %v2883 = vadd.f32 %v2867, 0.0
        %v2884 = vadd.f32 %v2868, 0.0
        %v2885 = vadd.f32 %v2869, 0.0
        %v2886 = vadd.f32 %v2870, 0.0
        %v2887 = vadd.f32 %v2871, 0.0
        %v2888 = vadd.f32 %v2872, 0.0
        %v2889 = vadd.f32 %v2873, 0.0
        %v2890 = vadd.f32 %v2874, 0.0
        %v2891 = vadd.f32 %v2875, 0.0
        %v2892 = vadd.f32 %v2876, 0.0
        %v2893 = vadd.f32 %v2877, 0.0
        %v2894 = vadd.f32 %v2878, 0.0
        %v2895 = vadd.f32 %v2879, 0.0
        %v2896 = vadd.f32 %v2880, 0.0
        %v2897 = vadd.f32 %v2881, 0.0
        %v2898 = vadd.f32 %v2882, 0.0
        %v2907 = vrot.slane %v2464, 4
        %v2908 = vrot.slane %v2474, 4
        %v2909 = vrot.slane %v2484, 4
        %v2910 = vrot.slane %v2494, 4
        %v2911 = vrot.slane %v2504, 4
        %v2912 = vrot.slane %v2514, 4
        %v2913 = vrot.slane %v2524, 4
        %v2914 = vrot.slane %v2534, 4
        %v2923 = vsel %vm564, %v2907, 0.0
        %v2924 = vrot.slane %v2923, 4
        %v2925 = vadd.f32 %v2923, %v2924
        %v2926 = vrot.slane %v2925, 2
        %v2927 = vadd.f32 %v2925, %v2926
        %v2928 = vrot.slane %v2927, 1
        %v2929 = vadd.f32 %v2927, %v2928
        %v2930 = vsel %vm564, %v2908, 0.0
        %v2931 = vrot.slane %v2930, 4
        %v2932 = vadd.f32 %v2930, %v2931
        %v2933 = vrot.slane %v2932, 2
        %v2934 = vadd.f32 %v2932, %v2933
        %v2935 = vrot.slane %v2934, 1
        %v2936 = vadd.f32 %v2934, %v2935
        %v2937 = vsel %vm564, %v2909, 0.0
        %v2938 = vrot.slane %v2937, 4
        %v2939 = vadd.f32 %v2937, %v2938
        %v2940 = vrot.slane %v2939, 2
        %v2941 = vadd.f32 %v2939, %v2940
        %v2942 = vrot.slane %v2941, 1
        %v2943 = vadd.f32 %v2941, %v2942
        %v2944 = vsel %vm564, %v2910, 0.0
        %v2945 = vrot.slane %v2944, 4
        %v2946 = vadd.f32 %v2944, %v2945
        %v2947 = vrot.slane %v2946, 2
        %v2948 = vadd.f32 %v2946, %v2947
        %v2949 = vrot.slane %v2948, 1
        %v2950 = vadd.f32 %v2948, %v2949
        %v2951 = vsel %vm564, %v2911, 0.0
        %v2952 = vrot.slane %v2951, 4
        %v2953 = vadd.f32 %v2951, %v2952
        %v2954 = vrot.slane %v2953, 2
        %v2955 = vadd.f32 %v2953, %v2954
        %v2956 = vrot.slane %v2955, 1
        %v2957 = vadd.f32 %v2955, %v2956
        %v2958 = vsel %vm564, %v2912, 0.0
        %v2959 = vrot.slane %v2958, 4
        %v2960 = vadd.f32 %v2958, %v2959
        %v2961 = vrot.slane %v2960, 2
        %v2962 = vadd.f32 %v2960, %v2961
        %v2963 = vrot.slane %v2962, 1
        %v2964 = vadd.f32 %v2962, %v2963
        %v2965 = vsel %vm564, %v2913, 0.0
        %v2966 = vrot.slane %v2965, 4
        %v2967 = vadd.f32 %v2965, %v2966
        %v2968 = vrot.slane %v2967, 2
        %v2969 = vadd.f32 %v2967, %v2968
        %v2970 = vrot.slane %v2969, 1
        %v2971 = vadd.f32 %v2969, %v2970
        %v2972 = vsel %vm564, %v2914, 0.0
        %v2973 = vrot.slane %v2972, 4
        %v2974 = vadd.f32 %v2972, %v2973
        %v2975 = vrot.slane %v2974, 2
        %v2976 = vadd.f32 %v2974, %v2975
        %v2977 = vrot.slane %v2976, 1
        %v2978 = vadd.f32 %v2976, %v2977
        %v2979 = vmul.f32 %v2929, %v621
        %v2980 = vmul.f32 %v2936, %v621
        %v2981 = vmul.f32 %v2943, %v621
        %v2982 = vmul.f32 %v2950, %v621
        %v2983 = vmul.f32 %v2957, %v621
        %v2984 = vmul.f32 %v2964, %v621
        %v2985 = vmul.f32 %v2971, %v621
        %v2986 = vmul.f32 %v2978, %v621
        %v2995 = vsel %vm643, %v2980, %v2979
        %v2996 = vsel %vm645, %v2981, %v2995
        %v2997 = vsel %vm647, %v2982, %v2996
        %v2998 = vsel %vm649, %v2983, %v2997
        %v2999 = vsel %vm651, %v2984, %v2998
        %v3000 = vsel %vm653, %v2985, %v2999
        %v3001 = vsel %vm655, %v2986, %v3000
        %3003 = vmatprep.subr.mxu0 0.0
        %3004 = vmatpush1.msra.mxu0 %v3001
        %3005 = vmatprep.subr.mxu0 0.0
        %3006 = vmatpush1.msra.mxu0 0.0
        %3007 = vmatprep.subr.mxu0 0.0
        %3008 = vmatpush1.msra.mxu0 0.0
        %3009 = vmatprep.subr.mxu0 0.0
        %3010 = vmatpush1.msra.mxu0 0.0
        %3011 = vmatprep.subr.mxu0 0.0
        %3012 = vmatpush1.msra.mxu0 0.0
        %3013 = vmatprep.subr.mxu0 0.0
        %3014 = vmatpush1.msra.mxu0 0.0
        %3015 = vmatprep.subr.mxu0 0.0
        %3016 = vmatpush1.msra.mxu0 0.0
        %3017 = vmatprep.subr.mxu0 0.0
        %3018 = vmatpush1.msra.mxu0 0.0
        %3019 = vmatprep.subr.mxu0 0.0
        %3020 = vmatpush1.msra.mxu0 0.0
        %3021 = vmatprep.subr.mxu0 0.0
        %3022 = vmatpush1.msra.mxu0 0.0
        %3023 = vmatprep.subr.mxu0 0.0
        %3024 = vmatpush1.msra.mxu0 0.0
        %3025 = vmatprep.subr.mxu0 0.0
        %3026 = vmatpush1.msra.mxu0 0.0
        %3027 = vmatprep.subr.mxu0 0.0
        %3028 = vmatpush1.msra.mxu0 0.0
        %3029 = vmatprep.subr.mxu0 0.0
        %3030 = vmatpush1.msra.mxu0 0.0
        %3031 = vmatprep.subr.mxu0 0.0
        %3032 = vmatpush1.msra.mxu0 0.0
        %3033 = vmatprep.subr.mxu0 0.0
        %3034 = vmatpush1.msra.mxu0 0.0
        %3035 = vmatprep.subr.mxu0 0.0
        %3036 = vmatpush1.msra.mxu0 0.0
        %3037 = vmatprep.subr.mxu0 0.0
        %3038 = vmatpush1.msra.mxu0 0.0
        %3039 = vmatprep.subr.mxu0 0.0
        %3040 = vmatpush1.msra.mxu0 0.0
        %3041 = vmatprep.subr.mxu0 0.0
        %3042 = vmatpush1.msra.mxu0 0.0
        %3043 = vmatprep.subr.mxu0 0.0
        %3044 = vmatpush1.msra.mxu0 0.0
        %3045 = vmatprep.subr.mxu0 0.0
        %3046 = vmatpush1.msra.mxu0 0.0
        %3047 = vmatprep.subr.mxu0 0.0
        %3048 = vmatpush1.msra.mxu0 0.0
        %3049 = vmatprep.subr.mxu0 0.0
        %3050 = vmatpush1.msra.mxu0 0.0
        %3051 = vmatprep.subr.mxu0 0.0
        %3052 = vmatpush1.msra.mxu0 0.0
        %3053 = vmatprep.subr.mxu0 0.0
        %3054 = vmatpush1.msra.mxu0 0.0
        %3055 = vmatprep.subr.mxu0 0.0
        %3056 = vmatpush1.msra.mxu0 0.0
        %3057 = vmatprep.subr.mxu0 0.0
        %3058 = vmatpush1.msra.mxu0 0.0
        %3059 = vmatprep.subr.mxu0 0.0
        %3060 = vmatpush1.msra.mxu0 0.0
        %3061 = vmatprep.subr.mxu0 0.0
        %3062 = vmatpush1.msra.mxu0 0.0
        %3063 = vmatprep.subr.mxu0 0.0
        %3064 = vmatpush1.msra.mxu0 0.0
        %3065 = vmatprep.subr.mxu0 0.0
        %3066 = vmatpush1.msra.mxu0 0.0
        %3067 = vmatprep.mubr.f32.mxu0 0.0
        %3068 = vmatmul.mubr.f32.gmra.mrb[0].mxu0 %v660
        %v3069 = vpop.f32.mrb[0].mxu0
        %v3070 = vadd.f32 %v633, %v3069
        %v3071 = vpop.f32.mrb[0].mxu0
        %3072 = vdwg.mxu0
        %v3073 = vmax.f32 %v3070, 0.0
        %v3074 = vmin.f32 %v3070, 0.0
        %v3075 = vmul.f32 %v3074, 1.442695
        %v3076 = vpow.pop %v3075
        %v3077 = vsub.f32 %v3076, 1.0
        %v3078 = vadd.f32 %v3073, %v3077
        %v3080 = vsel %vm747, %v3078, 0
        %3082 = vmatprep.subr.mxu0 0.0
        %3083 = vmatpush1.msra.mxu0 %v3080
        %3084 = vmatprep.subr.mxu0 0.0
        %3085 = vmatpush1.msra.mxu0 0.0
        %3086 = vmatprep.subr.mxu0 0.0
        %3087 = vmatpush1.msra.mxu0 0.0
        %3088 = vmatprep.subr.mxu0 0.0
        %3089 = vmatpush1.msra.mxu0 0.0
        %3090 = vmatprep.subr.mxu0 0.0
        %3091 = vmatpush1.msra.mxu0 0.0
        %3092 = vmatprep.subr.mxu0 0.0
        %3093 = vmatpush1.msra.mxu0 0.0
        %3094 = vmatprep.subr.mxu0 0.0
        %3095 = vmatpush1.msra.mxu0 0.0
        %3096 = vmatprep.subr.mxu0 0.0
        %3097 = vmatpush1.msra.mxu0 0.0
        %3098 = vmatprep.subr.mxu0 0.0
        %3099 = vmatpush1.msra.mxu0 0.0
        %3100 = vmatprep.subr.mxu0 0.0
        %3101 = vmatpush1.msra.mxu0 0.0
        %3102 = vmatprep.subr.mxu0 0.0
        %3103 = vmatpush1.msra.mxu0 0.0
        %3104 = vmatprep.subr.mxu0 0.0
        %3105 = vmatpush1.msra.mxu0 0.0
        %3106 = vmatprep.subr.mxu0 0.0
        %3107 = vmatpush1.msra.mxu0 0.0
        %3108 = vmatprep.subr.mxu0 0.0
        %3109 = vmatpush1.msra.mxu0 0.0
        %3110 = vmatprep.subr.mxu0 0.0
        %3111 = vmatpush1.msra.mxu0 0.0
        %3112 = vmatprep.subr.mxu0 0.0
        %3113 = vmatpush1.msra.mxu0 0.0
        %3114 = vmatprep.subr.mxu0 0.0
        %3115 = vmatpush1.msra.mxu0 0.0
        %3116 = vmatprep.subr.mxu0 0.0
        %3117 = vmatpush1.msra.mxu0 0.0
        %3118 = vmatprep.subr.mxu0 0.0
        %3119 = vmatpush1.msra.mxu0 0.0
        %3120 = vmatprep.subr.mxu0 0.0
        %3121 = vmatpush1.msra.mxu0 0.0
        %3122 = vmatprep.subr.mxu0 0.0
        %3123 = vmatpush1.msra.mxu0 0.0
        %3124 = vmatprep.subr.mxu0 0.0
        %3125 = vmatpush1.msra.mxu0 0.0
        %3126 = vmatprep.subr.mxu0 0.0
        %3127 = vmatpush1.msra.mxu0 0.0
        %3128 = vmatprep.subr.mxu0 0.0
        %3129 = vmatpush1.msra.mxu0 0.0
        %3130 = vmatprep.subr.mxu0 0.0
        %3131 = vmatpush1.msra.mxu0 0.0
        %3132 = vmatprep.subr.mxu0 0.0
        %3133 = vmatpush1.msra.mxu0 0.0
        %3134 = vmatprep.subr.mxu0 0.0
        %3135 = vmatpush1.msra.mxu0 0.0
        %3136 = vmatprep.subr.mxu0 0.0
        %3137 = vmatpush1.msra.mxu0 0.0
        %3138 = vmatprep.subr.mxu0 0.0
        %3139 = vmatpush1.msra.mxu0 0.0
        %3140 = vmatprep.subr.mxu0 0.0
        %3141 = vmatpush1.msra.mxu0 0.0
        %3142 = vmatprep.subr.mxu0 0.0
        %3143 = vmatpush1.msra.mxu0 0.0
        %3144 = vmatprep.subr.mxu0 0.0
        %3145 = vmatpush1.msra.mxu0 0.0
        %3146 = vmatprep.mubr.f32.mxu0 0.0
        %3147 = vmatmul.mubr.f32.gmra.mrb[0].mxu0 %v745
        %v3148 = vpop.f32.mrb[0].mxu0
        %v3149 = vadd.f32 %v741, %v3148
        %v3150 = vpop.f32.mrb[0].mxu0
        %3151 = vdwg.mxu0
        %v3152 = vsub.f32 0.0, %v3149
        %v3153 = vmul.f32 %v3152, 1.442695
        %v3154 = vpow.pop %v3153
        %v3155 = vadd.f32 %v3154, 1.0
        %v3156 = vrcp.pop %v3155
        %v3157 = vmul.f32 1.0, %v3156
        %v3159 = vcombine.high %v3157, %v3157
        %v3161 = vunpack.c.l.s4 1966171168
        %v3162 = vunpack.c.0.s8 %v3161
        %v3163 = vlaneseq
        %v3164 = vshrl.u32 %v3163, 7
        %v3165 = vsub.s32 %v3162, %v3164
        %v3166 = vrot.slane %v3157, %v3165
        %v3168 = vunpack.c.l.s4 1966171168
        %v3169 = vunpack.c.0.s8 %v3168
        %v3170 = vlaneseq
        %v3171 = vshrl.u32 %v3170, 7
        %v3172 = vsub.s32 %v3169, %v3171
        %v3173 = vrot.slane %v3159, %v3172
        %v3174 = vcombine.high %v3166, %v3166
        %v3175 = vcombine.high %v3173, %v3173
        %v3177 = vunpack.c.l.s4 1966171168
        %v3178 = vunpack.c.0.s8 %v3177
        %v3179 = vlaneseq
        %v3180 = vshrl.u32 %v3179, 7
        %v3181 = vsub.s32 %v3178, %v3180
        %v3182 = vrot.slane %v3166, %v3181
        %v3184 = vunpack.c.l.s4 1966171168
        %v3185 = vunpack.c.0.s8 %v3184
        %v3186 = vlaneseq
        %v3187 = vshrl.u32 %v3186, 7
        %v3188 = vsub.s32 %v3185, %v3187
        %v3189 = vrot.slane %v3173, %v3188
        %v3191 = vunpack.c.l.s4 1966171168
        %v3192 = vunpack.c.0.s8 %v3191
        %v3193 = vlaneseq
        %v3194 = vshrl.u32 %v3193, 7
        %v3195 = vsub.s32 %v3192, %v3194
        %v3196 = vrot.slane %v3174, %v3195
        %v3198 = vunpack.c.l.s4 1966171168
        %v3199 = vunpack.c.0.s8 %v3198
        %v3200 = vlaneseq
        %v3201 = vshrl.u32 %v3200, 7
        %v3202 = vsub.s32 %v3199, %v3201
        %v3203 = vrot.slane %v3175, %v3202
        %v3204 = vcombine.high %v3182, %v3182
        %v3205 = vcombine.high %v3189, %v3189
        %v3206 = vcombine.high %v3196, %v3196
        %v3207 = vcombine.high %v3203, %v3203
        %v3208 = vlaneseq
        %v3209 = vshrl.u32 %v3208, 7
        %v3210 = vsub.s32 0, %v3209
        %v3211 = vrot.slane %v3182, %v3210
        %v3212 = vlaneseq
        %v3213 = vshrl.u32 %v3212, 7
        %v3214 = vsub.s32 0, %v3213
        %v3215 = vrot.slane %v3196, %v3214
        %v3216 = vlaneseq
        %v3217 = vshrl.u32 %v3216, 7
        %v3218 = vsub.s32 0, %v3217
        %v3219 = vrot.slane %v3204, %v3218
        %v3220 = vlaneseq
        %v3221 = vshrl.u32 %v3220, 7
        %v3222 = vsub.s32 0, %v3221
        %v3223 = vrot.slane %v3206, %v3222
        %v3224 = vlaneseq
        %v3225 = vshrl.u32 %v3224, 7
        %v3226 = vsub.s32 0, %v3225
        %v3227 = vrot.slane %v3189, %v3226
        %v3228 = vlaneseq
        %v3229 = vshrl.u32 %v3228, 7
        %v3230 = vsub.s32 0, %v3229
        %v3231 = vrot.slane %v3203, %v3230
        %v3232 = vlaneseq
        %v3233 = vshrl.u32 %v3232, 7
        %v3234 = vsub.s32 0, %v3233
        %v3235 = vrot.slane %v3205, %v3234
        %v3236 = vlaneseq
        %v3237 = vshrl.u32 %v3236, 7
        %v3238 = vsub.s32 0, %v3237
        %v3239 = vrot.slane %v3207, %v3238
        %v3248 = vmul.f32 %v1270, %v3211
        %v3249 = vmul.f32 %v1274, %v3211
        %v3250 = vmul.f32 %v1270, %v3215
        %v3251 = vmul.f32 %v1274, %v3215
        %v3252 = vmul.f32 %v1270, %v3219
        %v3253 = vmul.f32 %v1274, %v3219
        %v3254 = vmul.f32 %v1270, %v3223
        %v3255 = vmul.f32 %v1274, %v3223
        %v3256 = vmul.f32 %v1270, %v3227
        %v3257 = vmul.f32 %v1274, %v3227
        %v3258 = vmul.f32 %v1270, %v3231
        %v3259 = vmul.f32 %v1274, %v3231
        %v3260 = vmul.f32 %v1270, %v3235
        %v3261 = vmul.f32 %v1274, %v3235
        %v3262 = vmul.f32 %v1270, %v3239
        %v3263 = vmul.f32 %v1274, %v3239
        %v3264 = vadd.f32 %v2883, %v3248
        %v3265 = vadd.f32 %v2884, %v3249
        %v3266 = vadd.f32 %v2885, %v3250
        %v3267 = vadd.f32 %v2886, %v3251
        %v3268 = vadd.f32 %v2887, %v3252
        %v3269 = vadd.f32 %v2888, %v3253
        %v3270 = vadd.f32 %v2889, %v3254
        %v3271 = vadd.f32 %v2890, %v3255
        %v3272 = vadd.f32 %v2891, %v3256
        %v3273 = vadd.f32 %v2892, %v3257
        %v3274 = vadd.f32 %v2893, %v3258
        %v3275 = vadd.f32 %v2894, %v3259
        %v3276 = vadd.f32 %v2895, %v3260
        %v3277 = vadd.f32 %v2896, %v3261
        %v3278 = vadd.f32 %v2897, %v3262
        %v3279 = vadd.f32 %v2898, %v3263
        %v3280 = vsel %vm564, %v2469, 0.0
        %v3281 = vrot.slane %v3280, 4
        %v3282 = vadd.f32 %v3280, %v3281
        %v3283 = vrot.slane %v3282, 2
        %v3284 = vadd.f32 %v3282, %v3283
        %v3285 = vrot.slane %v3284, 1
        %v3286 = vadd.f32 %v3284, %v3285
        %v3287 = vsel %vm564, %v2479, 0.0
        %v3288 = vrot.slane %v3287, 4
        %v3289 = vadd.f32 %v3287, %v3288
        %v3290 = vrot.slane %v3289, 2
        %v3291 = vadd.f32 %v3289, %v3290
        %v3292 = vrot.slane %v3291, 1
        %v3293 = vadd.f32 %v3291, %v3292
        %v3294 = vsel %vm564, %v2489, 0.0
        %v3295 = vrot.slane %v3294, 4
        %v3296 = vadd.f32 %v3294, %v3295
        %v3297 = vrot.slane %v3296, 2
        %v3298 = vadd.f32 %v3296, %v3297
        %v3299 = vrot.slane %v3298, 1
        %v3300 = vadd.f32 %v3298, %v3299
        %v3301 = vsel %vm564, %v2499, 0.0
        %v3302 = vrot.slane %v3301, 4
        %v3303 = vadd.f32 %v3301, %v3302
        %v3304 = vrot.slane %v3303, 2
        %v3305 = vadd.f32 %v3303, %v3304
        %v3306 = vrot.slane %v3305, 1
        %v3307 = vadd.f32 %v3305, %v3306
        %v3308 = vsel %vm564, %v2509, 0.0
        %v3309 = vrot.slane %v3308, 4
        %v3310 = vadd.f32 %v3308, %v3309
        %v3311 = vrot.slane %v3310, 2
        %v3312 = vadd.f32 %v3310, %v3311
        %v3313 = vrot.slane %v3312, 1
        %v3314 = vadd.f32 %v3312, %v3313
        %v3315 = vsel %vm564, %v2519, 0.0
        %v3316 = vrot.slane %v3315, 4
        %v3317 = vadd.f32 %v3315, %v3316
        %v3318 = vrot.slane %v3317, 2
        %v3319 = vadd.f32 %v3317, %v3318
        %v3320 = vrot.slane %v3319, 1
        %v3321 = vadd.f32 %v3319, %v3320
        %v3322 = vsel %vm564, %v2529, 0.0
        %v3323 = vrot.slane %v3322, 4
        %v3324 = vadd.f32 %v3322, %v3323
        %v3325 = vrot.slane %v3324, 2
        %v3326 = vadd.f32 %v3324, %v3325
        %v3327 = vrot.slane %v3326, 1
        %v3328 = vadd.f32 %v3326, %v3327
        %v3329 = vsel %vm564, %v2539, 0.0
        %v3330 = vrot.slane %v3329, 4
        %v3331 = vadd.f32 %v3329, %v3330
        %v3332 = vrot.slane %v3331, 2
        %v3333 = vadd.f32 %v3331, %v3332
        %v3334 = vrot.slane %v3333, 1
        %v3335 = vadd.f32 %v3333, %v3334
        %v3336 = vmul.f32 %v3286, %v621
        %v3337 = vmul.f32 %v3293, %v621
        %v3338 = vmul.f32 %v3300, %v621
        %v3339 = vmul.f32 %v3307, %v621
        %v3340 = vmul.f32 %v3314, %v621
        %v3341 = vmul.f32 %v3321, %v621
        %v3342 = vmul.f32 %v3328, %v621
        %v3343 = vmul.f32 %v3335, %v621
        %v3352 = vsel %vm643, %v3337, %v3336
        %v3353 = vsel %vm645, %v3338, %v3352
        %v3354 = vsel %vm647, %v3339, %v3353
        %v3355 = vsel %vm649, %v3340, %v3354
        %v3356 = vsel %vm651, %v3341, %v3355
        %v3357 = vsel %vm653, %v3342, %v3356
        %v3358 = vsel %vm655, %v3343, %v3357
        %3360 = vmatprep.subr.mxu0 0.0
        %3361 = vmatpush1.msra.mxu0 %v3358
        %3362 = vmatprep.subr.mxu0 0.0
        %3363 = vmatpush1.msra.mxu0 0.0
        %3364 = vmatprep.subr.mxu0 0.0
        %3365 = vmatpush1.msra.mxu0 0.0
        %3366 = vmatprep.subr.mxu0 0.0
        %3367 = vmatpush1.msra.mxu0 0.0
        %3368 = vmatprep.subr.mxu0 0.0
        %3369 = vmatpush1.msra.mxu0 0.0
        %3370 = vmatprep.subr.mxu0 0.0
        %3371 = vmatpush1.msra.mxu0 0.0
        %3372 = vmatprep.subr.mxu0 0.0
        %3373 = vmatpush1.msra.mxu0 0.0
        %3374 = vmatprep.subr.mxu0 0.0
        %3375 = vmatpush1.msra.mxu0 0.0
        %3376 = vmatprep.subr.mxu0 0.0
        %3377 = vmatpush1.msra.mxu0 0.0
        %3378 = vmatprep.subr.mxu0 0.0
        %3379 = vmatpush1.msra.mxu0 0.0
        %3380 = vmatprep.subr.mxu0 0.0
        %3381 = vmatpush1.msra.mxu0 0.0
        %3382 = vmatprep.subr.mxu0 0.0
        %3383 = vmatpush1.msra.mxu0 0.0
        %3384 = vmatprep.subr.mxu0 0.0
        %3385 = vmatpush1.msra.mxu0 0.0
        %3386 = vmatprep.subr.mxu0 0.0
        %3387 = vmatpush1.msra.mxu0 0.0
        %3388 = vmatprep.subr.mxu0 0.0
        %3389 = vmatpush1.msra.mxu0 0.0
        %3390 = vmatprep.subr.mxu0 0.0
        %3391 = vmatpush1.msra.mxu0 0.0
        %3392 = vmatprep.subr.mxu0 0.0
        %3393 = vmatpush1.msra.mxu0 0.0
        %3394 = vmatprep.subr.mxu0 0.0
        %3395 = vmatpush1.msra.mxu0 0.0
        %3396 = vmatprep.subr.mxu0 0.0
        %3397 = vmatpush1.msra.mxu0 0.0
        %3398 = vmatprep.subr.mxu0 0.0
        %3399 = vmatpush1.msra.mxu0 0.0
        %3400 = vmatprep.subr.mxu0 0.0
        %3401 = vmatpush1.msra.mxu0 0.0
        %3402 = vmatprep.subr.mxu0 0.0
        %3403 = vmatpush1.msra.mxu0 0.0
        %3404 = vmatprep.subr.mxu0 0.0
        %3405 = vmatpush1.msra.mxu0 0.0
        %3406 = vmatprep.subr.mxu0 0.0
        %3407 = vmatpush1.msra.mxu0 0.0
        %3408 = vmatprep.subr.mxu0 0.0
        %3409 = vmatpush1.msra.mxu0 0.0
        %3410 = vmatprep.subr.mxu0 0.0
        %3411 = vmatpush1.msra.mxu0 0.0
        %3412 = vmatprep.subr.mxu0 0.0
        %3413 = vmatpush1.msra.mxu0 0.0
        %3414 = vmatprep.subr.mxu0 0.0
        %3415 = vmatpush1.msra.mxu0 0.0
        %3416 = vmatprep.subr.mxu0 0.0
        %3417 = vmatpush1.msra.mxu0 0.0
        %3418 = vmatprep.subr.mxu0 0.0
        %3419 = vmatpush1.msra.mxu0 0.0
        %3420 = vmatprep.subr.mxu0 0.0
        %3421 = vmatpush1.msra.mxu0 0.0
        %3422 = vmatprep.subr.mxu0 0.0
        %3423 = vmatpush1.msra.mxu0 0.0
        %3424 = vmatprep.mubr.f32.mxu0 0.0
        %3425 = vmatmul.mubr.f32.gmra.mrb[0].mxu0 %v660
        %v3426 = vpop.f32.mrb[0].mxu0
        %v3427 = vadd.f32 %v633, %v3426
        %v3428 = vpop.f32.mrb[0].mxu0
        %3429 = vdwg.mxu0
        %v3430 = vmax.f32 %v3427, 0.0
        %v3431 = vmin.f32 %v3427, 0.0
        %v3432 = vmul.f32 %v3431, 1.442695
        %v3433 = vpow.pop %v3432
        %v3434 = vsub.f32 %v3433, 1.0
        %v3435 = vadd.f32 %v3430, %v3434
        %v3437 = vsel %vm747, %v3435, 0
        %3439 = vmatprep.subr.mxu0 0.0
        %3440 = vmatpush1.msra.mxu0 %v3437
        %3441 = vmatprep.subr.mxu0 0.0
        %3442 = vmatpush1.msra.mxu0 0.0
        %3443 = vmatprep.subr.mxu0 0.0
        %3444 = vmatpush1.msra.mxu0 0.0
        %3445 = vmatprep.subr.mxu0 0.0
        %3446 = vmatpush1.msra.mxu0 0.0
        %3447 = vmatprep.subr.mxu0 0.0
        %3448 = vmatpush1.msra.mxu0 0.0
        %3449 = vmatprep.subr.mxu0 0.0
        %3450 = vmatpush1.msra.mxu0 0.0
        %3451 = vmatprep.subr.mxu0 0.0
        %3452 = vmatpush1.msra.mxu0 0.0
        %3453 = vmatprep.subr.mxu0 0.0
        %3454 = vmatpush1.msra.mxu0 0.0
        %3455 = vmatprep.subr.mxu0 0.0
        %3456 = vmatpush1.msra.mxu0 0.0
        %3457 = vmatprep.subr.mxu0 0.0
        %3458 = vmatpush1.msra.mxu0 0.0
        %3459 = vmatprep.subr.mxu0 0.0
        %3460 = vmatpush1.msra.mxu0 0.0
        %3461 = vmatprep.subr.mxu0 0.0
        %3462 = vmatpush1.msra.mxu0 0.0
        %3463 = vmatprep.subr.mxu0 0.0
        %3464 = vmatpush1.msra.mxu0 0.0
        %3465 = vmatprep.subr.mxu0 0.0
        %3466 = vmatpush1.msra.mxu0 0.0
        %3467 = vmatprep.subr.mxu0 0.0
        %3468 = vmatpush1.msra.mxu0 0.0
        %3469 = vmatprep.subr.mxu0 0.0
        %3470 = vmatpush1.msra.mxu0 0.0
        %3471 = vmatprep.subr.mxu0 0.0
        %3472 = vmatpush1.msra.mxu0 0.0
        %3473 = vmatprep.subr.mxu0 0.0
        %3474 = vmatpush1.msra.mxu0 0.0
        %3475 = vmatprep.subr.mxu0 0.0
        %3476 = vmatpush1.msra.mxu0 0.0
        %3477 = vmatprep.subr.mxu0 0.0
        %3478 = vmatpush1.msra.mxu0 0.0
        %3479 = vmatprep.subr.mxu0 0.0
        %3480 = vmatpush1.msra.mxu0 0.0
        %3481 = vmatprep.subr.mxu0 0.0
        %3482 = vmatpush1.msra.mxu0 0.0
        %3483 = vmatprep.subr.mxu0 0.0
        %3484 = vmatpush1.msra.mxu0 0.0
        %3485 = vmatprep.subr.mxu0 0.0
        %3486 = vmatpush1.msra.mxu0 0.0
        %3487 = vmatprep.subr.mxu0 0.0
        %3488 = vmatpush1.msra.mxu0 0.0
        %3489 = vmatprep.subr.mxu0 0.0
        %3490 = vmatpush1.msra.mxu0 0.0
        %3491 = vmatprep.subr.mxu0 0.0
        %3492 = vmatpush1.msra.mxu0 0.0
        %3493 = vmatprep.subr.mxu0 0.0
        %3494 = vmatpush1.msra.mxu0 0.0
        %3495 = vmatprep.subr.mxu0 0.0
        %3496 = vmatpush1.msra.mxu0 0.0
        %3497 = vmatprep.subr.mxu0 0.0
        %3498 = vmatpush1.msra.mxu0 0.0
        %3499 = vmatprep.subr.mxu0 0.0
        %3500 = vmatpush1.msra.mxu0 0.0
        %3501 = vmatprep.subr.mxu0 0.0
        %3502 = vmatpush1.msra.mxu0 0.0
        %3503 = vmatprep.mubr.f32.mxu0 0.0
        %3504 = vmatmul.mubr.f32.gmra.mrb[0].mxu0 %v745
        %v3505 = vpop.f32.mrb[0].mxu0
        %v3506 = vadd.f32 %v741, %v3505
        %v3507 = vpop.f32.mrb[0].mxu0
        %3508 = vdwg.mxu0
        %v3509 = vsub.f32 0.0, %v3506
        %v3510 = vmul.f32 %v3509, 1.442695
        %v3511 = vpow.pop %v3510
        %v3512 = vadd.f32 %v3511, 1.0
        %v3513 = vrcp.pop %v3512
        %v3514 = vmul.f32 1.0, %v3513
        %v3516 = vcombine.high %v3514, %v3514
        %v3518 = vunpack.c.l.s4 1966171168
        %v3519 = vunpack.c.0.s8 %v3518
        %v3520 = vlaneseq
        %v3521 = vshrl.u32 %v3520, 7
        %v3522 = vsub.s32 %v3519, %v3521
        %v3523 = vrot.slane %v3514, %v3522
        %v3525 = vunpack.c.l.s4 1966171168
        %v3526 = vunpack.c.0.s8 %v3525
        %v3527 = vlaneseq
        %v3528 = vshrl.u32 %v3527, 7
        %v3529 = vsub.s32 %v3526, %v3528
        %v3530 = vrot.slane %v3516, %v3529
        %v3531 = vcombine.high %v3523, %v3523
        %v3532 = vcombine.high %v3530, %v3530
        %v3534 = vunpack.c.l.s4 1966171168
        %v3535 = vunpack.c.0.s8 %v3534
        %v3536 = vlaneseq
        %v3537 = vshrl.u32 %v3536, 7
        %v3538 = vsub.s32 %v3535, %v3537
        %v3539 = vrot.slane %v3523, %v3538
        %v3541 = vunpack.c.l.s4 1966171168
        %v3542 = vunpack.c.0.s8 %v3541
        %v3543 = vlaneseq
        %v3544 = vshrl.u32 %v3543, 7
        %v3545 = vsub.s32 %v3542, %v3544
        %v3546 = vrot.slane %v3530, %v3545
        %v3548 = vunpack.c.l.s4 1966171168
        %v3549 = vunpack.c.0.s8 %v3548
        %v3550 = vlaneseq
        %v3551 = vshrl.u32 %v3550, 7
        %v3552 = vsub.s32 %v3549, %v3551
        %v3553 = vrot.slane %v3531, %v3552
        %v3555 = vunpack.c.l.s4 1966171168
        %v3556 = vunpack.c.0.s8 %v3555
        %v3557 = vlaneseq
        %v3558 = vshrl.u32 %v3557, 7
        %v3559 = vsub.s32 %v3556, %v3558
        %v3560 = vrot.slane %v3532, %v3559
        %v3561 = vcombine.high %v3539, %v3539
        %v3562 = vcombine.high %v3546, %v3546
        %v3563 = vcombine.high %v3553, %v3553
        %v3564 = vcombine.high %v3560, %v3560
        %v3565 = vlaneseq
        %v3566 = vshrl.u32 %v3565, 7
        %v3567 = vsub.s32 0, %v3566
        %v3568 = vrot.slane %v3539, %v3567
        %v3569 = vlaneseq
        %v3570 = vshrl.u32 %v3569, 7
        %v3571 = vsub.s32 0, %v3570
        %v3572 = vrot.slane %v3553, %v3571
        %v3573 = vlaneseq
        %v3574 = vshrl.u32 %v3573, 7
        %v3575 = vsub.s32 0, %v3574
        %v3576 = vrot.slane %v3561, %v3575
        %v3577 = vlaneseq
        %v3578 = vshrl.u32 %v3577, 7
        %v3579 = vsub.s32 0, %v3578
        %v3580 = vrot.slane %v3563, %v3579
        %v3581 = vlaneseq
        %v3582 = vshrl.u32 %v3581, 7
        %v3583 = vsub.s32 0, %v3582
        %v3584 = vrot.slane %v3546, %v3583
        %v3585 = vlaneseq
        %v3586 = vshrl.u32 %v3585, 7
        %v3587 = vsub.s32 0, %v3586
        %v3588 = vrot.slane %v3560, %v3587
        %v3589 = vlaneseq
        %v3590 = vshrl.u32 %v3589, 7
        %v3591 = vsub.s32 0, %v3590
        %v3592 = vrot.slane %v3562, %v3591
        %v3593 = vlaneseq
        %v3594 = vshrl.u32 %v3593, 7
        %v3595 = vsub.s32 0, %v3594
        %v3596 = vrot.slane %v3564, %v3595
        %v3605 = vmul.f32 %v1635, %v3568
        %v3606 = vmul.f32 %v1639, %v3568
        %v3607 = vmul.f32 %v1635, %v3572
        %v3608 = vmul.f32 %v1639, %v3572
        %v3609 = vmul.f32 %v1635, %v3576
        %v3610 = vmul.f32 %v1639, %v3576
        %v3611 = vmul.f32 %v1635, %v3580
        %v3612 = vmul.f32 %v1639, %v3580
        %v3613 = vmul.f32 %v1635, %v3584
        %v3614 = vmul.f32 %v1639, %v3584
        %v3615 = vmul.f32 %v1635, %v3588
        %v3616 = vmul.f32 %v1639, %v3588
        %v3617 = vmul.f32 %v1635, %v3592
        %v3618 = vmul.f32 %v1639, %v3592
        %v3619 = vmul.f32 %v1635, %v3596
        %v3620 = vmul.f32 %v1639, %v3596
        %v3621 = vadd.f32 %v3264, %v3605
        %v3622 = vadd.f32 %v3265, %v3606
        %v3623 = vadd.f32 %v3266, %v3607
        %v3624 = vadd.f32 %v3267, %v3608
        %v3625 = vadd.f32 %v3268, %v3609
        %v3626 = vadd.f32 %v3269, %v3610
        %v3627 = vadd.f32 %v3270, %v3611
        %v3628 = vadd.f32 %v3271, %v3612
        %v3629 = vadd.f32 %v3272, %v3613
        %v3630 = vadd.f32 %v3273, %v3614
        %v3631 = vadd.f32 %v3274, %v3615
        %v3632 = vadd.f32 %v3275, %v3616
        %v3633 = vadd.f32 %v3276, %v3617
        %v3634 = vadd.f32 %v3277, %v3618
        %v3635 = vadd.f32 %v3278, %v3619
        %v3636 = vadd.f32 %v3279, %v3620
        %v3645 = vrot.slane %v2469, 4
        %v3646 = vrot.slane %v2479, 4
        %v3647 = vrot.slane %v2489, 4
        %v3648 = vrot.slane %v2499, 4
        %v3649 = vrot.slane %v2509, 4
        %v3650 = vrot.slane %v2519, 4
        %v3651 = vrot.slane %v2529, 4
        %v3652 = vrot.slane %v2539, 4
        %v3661 = vsel %vm564, %v3645, 0.0
        %v3662 = vrot.slane %v3661, 4
        %v3663 = vadd.f32 %v3661, %v3662
        %v3664 = vrot.slane %v3663, 2
        %v3665 = vadd.f32 %v3663, %v3664
        %v3666 = vrot.slane %v3665, 1
        %v3667 = vadd.f32 %v3665, %v3666
        %v3668 = vsel %vm564, %v3646, 0.0
        %v3669 = vrot.slane %v3668, 4
        %v3670 = vadd.f32 %v3668, %v3669
        %v3671 = vrot.slane %v3670, 2
        %v3672 = vadd.f32 %v3670, %v3671
        %v3673 = vrot.slane %v3672, 1
        %v3674 = vadd.f32 %v3672, %v3673
        %v3675 = vsel %vm564, %v3647, 0.0
        %v3676 = vrot.slane %v3675, 4
        %v3677 = vadd.f32 %v3675, %v3676
        %v3678 = vrot.slane %v3677, 2
        %v3679 = vadd.f32 %v3677, %v3678
        %v3680 = vrot.slane %v3679, 1
        %v3681 = vadd.f32 %v3679, %v3680
        %v3682 = vsel %vm564, %v3648, 0.0
        %v3683 = vrot.slane %v3682, 4
        %v3684 = vadd.f32 %v3682, %v3683
        %v3685 = vrot.slane %v3684, 2
        %v3686 = vadd.f32 %v3684, %v3685
        %v3687 = vrot.slane %v3686, 1
        %v3688 = vadd.f32 %v3686, %v3687
        %v3689 = vsel %vm564, %v3649, 0.0
        %v3690 = vrot.slane %v3689, 4
        %v3691 = vadd.f32 %v3689, %v3690
        %v3692 = vrot.slane %v3691, 2
        %v3693 = vadd.f32 %v3691, %v3692
        %v3694 = vrot.slane %v3693, 1
        %v3695 = vadd.f32 %v3693, %v3694
        %v3696 = vsel %vm564, %v3650, 0.0
        %v3697 = vrot.slane %v3696, 4
        %v3698 = vadd.f32 %v3696, %v3697
        %v3699 = vrot.slane %v3698, 2
        %v3700 = vadd.f32 %v3698, %v3699
        %v3701 = vrot.slane %v3700, 1
        %v3702 = vadd.f32 %v3700, %v3701
        %v3703 = vsel %vm564, %v3651, 0.0
        %v3704 = vrot.slane %v3703, 4
        %v3705 = vadd.f32 %v3703, %v3704
        %v3706 = vrot.slane %v3705, 2
        %v3707 = vadd.f32 %v3705, %v3706
        %v3708 = vrot.slane %v3707, 1
        %v3709 = vadd.f32 %v3707, %v3708
        %v3710 = vsel %vm564, %v3652, 0.0
        %v3711 = vrot.slane %v3710, 4
        %v3712 = vadd.f32 %v3710, %v3711
        %v3713 = vrot.slane %v3712, 2
        %v3714 = vadd.f32 %v3712, %v3713
        %v3715 = vrot.slane %v3714, 1
        %v3716 = vadd.f32 %v3714, %v3715
        %v3717 = vmul.f32 %v3667, %v621
        %v3718 = vmul.f32 %v3674, %v621
        %v3719 = vmul.f32 %v3681, %v621
        %v3720 = vmul.f32 %v3688, %v621
        %v3721 = vmul.f32 %v3695, %v621
        %v3722 = vmul.f32 %v3702, %v621
        %v3723 = vmul.f32 %v3709, %v621
        %v3724 = vmul.f32 %v3716, %v621
        %v3733 = vsel %vm643, %v3718, %v3717
        %v3734 = vsel %vm645, %v3719, %v3733
        %v3735 = vsel %vm647, %v3720, %v3734
        %v3736 = vsel %vm649, %v3721, %v3735
        %v3737 = vsel %vm651, %v3722, %v3736
        %v3738 = vsel %vm653, %v3723, %v3737
        %v3739 = vsel %vm655, %v3724, %v3738
        %3741 = vmatprep.subr.mxu0 0.0
        %3742 = vmatpush1.msra.mxu0 %v3739
        %3743 = vmatprep.subr.mxu0 0.0
        %3744 = vmatpush1.msra.mxu0 0.0
        %3745 = vmatprep.subr.mxu0 0.0
        %3746 = vmatpush1.msra.mxu0 0.0
        %3747 = vmatprep.subr.mxu0 0.0
        %3748 = vmatpush1.msra.mxu0 0.0
        %3749 = vmatprep.subr.mxu0 0.0
        %3750 = vmatpush1.msra.mxu0 0.0
        %3751 = vmatprep.subr.mxu0 0.0
        %3752 = vmatpush1.msra.mxu0 0.0
        %3753 = vmatprep.subr.mxu0 0.0
        %3754 = vmatpush1.msra.mxu0 0.0
        %3755 = vmatprep.subr.mxu0 0.0
        %3756 = vmatpush1.msra.mxu0 0.0
        %3757 = vmatprep.subr.mxu0 0.0
        %3758 = vmatpush1.msra.mxu0 0.0
        %3759 = vmatprep.subr.mxu0 0.0
        %3760 = vmatpush1.msra.mxu0 0.0
        %3761 = vmatprep.subr.mxu0 0.0
        %3762 = vmatpush1.msra.mxu0 0.0
        %3763 = vmatprep.subr.mxu0 0.0
        %3764 = vmatpush1.msra.mxu0 0.0
        %3765 = vmatprep.subr.mxu0 0.0
        %3766 = vmatpush1.msra.mxu0 0.0
        %3767 = vmatprep.subr.mxu0 0.0
        %3768 = vmatpush1.msra.mxu0 0.0
        %3769 = vmatprep.subr.mxu0 0.0
        %3770 = vmatpush1.msra.mxu0 0.0
        %3771 = vmatprep.subr.mxu0 0.0
        %3772 = vmatpush1.msra.mxu0 0.0
        %3773 = vmatprep.subr.mxu0 0.0
        %3774 = vmatpush1.msra.mxu0 0.0
        %3775 = vmatprep.subr.mxu0 0.0
        %3776 = vmatpush1.msra.mxu0 0.0
        %3777 = vmatprep.subr.mxu0 0.0
        %3778 = vmatpush1.msra.mxu0 0.0
        %3779 = vmatprep.subr.mxu0 0.0
        %3780 = vmatpush1.msra.mxu0 0.0
        %3781 = vmatprep.subr.mxu0 0.0
        %3782 = vmatpush1.msra.mxu0 0.0
        %3783 = vmatprep.subr.mxu0 0.0
        %3784 = vmatpush1.msra.mxu0 0.0
        %3785 = vmatprep.subr.mxu0 0.0
        %3786 = vmatpush1.msra.mxu0 0.0
        %3787 = vmatprep.subr.mxu0 0.0
        %3788 = vmatpush1.msra.mxu0 0.0
        %3789 = vmatprep.subr.mxu0 0.0
        %3790 = vmatpush1.msra.mxu0 0.0
        %3791 = vmatprep.subr.mxu0 0.0
        %3792 = vmatpush1.msra.mxu0 0.0
        %3793 = vmatprep.subr.mxu0 0.0
        %3794 = vmatpush1.msra.mxu0 0.0
        %3795 = vmatprep.subr.mxu0 0.0
        %3796 = vmatpush1.msra.mxu0 0.0
        %3797 = vmatprep.subr.mxu0 0.0
        %3798 = vmatpush1.msra.mxu0 0.0
        %3799 = vmatprep.subr.mxu0 0.0
        %3800 = vmatpush1.msra.mxu0 0.0
        %3801 = vmatprep.subr.mxu0 0.0
        %3802 = vmatpush1.msra.mxu0 0.0
        %3803 = vmatprep.subr.mxu0 0.0
        %3804 = vmatpush1.msra.mxu0 0.0
        %3805 = vmatprep.mubr.f32.mxu0 0.0
        %3806 = vmatmul.mubr.f32.gmra.mrb[0].mxu0 %v660
        %v3807 = vpop.f32.mrb[0].mxu0
        %v3808 = vadd.f32 %v633, %v3807
        %v3809 = vpop.f32.mrb[0].mxu0
        %3810 = vdwg.mxu0
        %v3811 = vmax.f32 %v3808, 0.0
        %v3812 = vmin.f32 %v3808, 0.0
        %v3813 = vmul.f32 %v3812, 1.442695
        %v3814 = vpow.pop %v3813
        %v3815 = vsub.f32 %v3814, 1.0
        %v3816 = vadd.f32 %v3811, %v3815
        %v3818 = vsel %vm747, %v3816, 0
        %3820 = vmatprep.subr.mxu0 0.0
        %3821 = vmatpush1.msra.mxu0 %v3818
        %3822 = vmatprep.subr.mxu0 0.0
        %3823 = vmatpush1.msra.mxu0 0.0
        %3824 = vmatprep.subr.mxu0 0.0
        %3825 = vmatpush1.msra.mxu0 0.0
        %3826 = vmatprep.subr.mxu0 0.0
        %3827 = vmatpush1.msra.mxu0 0.0
        %3828 = vmatprep.subr.mxu0 0.0
        %3829 = vmatpush1.msra.mxu0 0.0
        %3830 = vmatprep.subr.mxu0 0.0
        %3831 = vmatpush1.msra.mxu0 0.0
        %3832 = vmatprep.subr.mxu0 0.0
        %3833 = vmatpush1.msra.mxu0 0.0
        %3834 = vmatprep.subr.mxu0 0.0
        %3835 = vmatpush1.msra.mxu0 0.0
        %3836 = vmatprep.subr.mxu0 0.0
        %3837 = vmatpush1.msra.mxu0 0.0
        %3838 = vmatprep.subr.mxu0 0.0
        %3839 = vmatpush1.msra.mxu0 0.0
        %3840 = vmatprep.subr.mxu0 0.0
        %3841 = vmatpush1.msra.mxu0 0.0
        %3842 = vmatprep.subr.mxu0 0.0
        %3843 = vmatpush1.msra.mxu0 0.0
        %3844 = vmatprep.subr.mxu0 0.0
        %3845 = vmatpush1.msra.mxu0 0.0
        %3846 = vmatprep.subr.mxu0 0.0
        %3847 = vmatpush1.msra.mxu0 0.0
        %3848 = vmatprep.subr.mxu0 0.0
        %3849 = vmatpush1.msra.mxu0 0.0
        %3850 = vmatprep.subr.mxu0 0.0
        %3851 = vmatpush1.msra.mxu0 0.0
        %3852 = vmatprep.subr.mxu0 0.0
        %3853 = vmatpush1.msra.mxu0 0.0
        %3854 = vmatprep.subr.mxu0 0.0
        %3855 = vmatpush1.msra.mxu0 0.0
        %3856 = vmatprep.subr.mxu0 0.0
        %3857 = vmatpush1.msra.mxu0 0.0
        %3858 = vmatprep.subr.mxu0 0.0
        %3859 = vmatpush1.msra.mxu0 0.0
        %3860 = vmatprep.subr.mxu0 0.0
        %3861 = vmatpush1.msra.mxu0 0.0
        %3862 = vmatprep.subr.mxu0 0.0
        %3863 = vmatpush1.msra.mxu0 0.0
        %3864 = vmatprep.subr.mxu0 0.0
        %3865 = vmatpush1.msra.mxu0 0.0
        %3866 = vmatprep.subr.mxu0 0.0
        %3867 = vmatpush1.msra.mxu0 0.0
        %3868 = vmatprep.subr.mxu0 0.0
        %3869 = vmatpush1.msra.mxu0 0.0
        %3870 = vmatprep.subr.mxu0 0.0
        %3871 = vmatpush1.msra.mxu0 0.0
        %3872 = vmatprep.subr.mxu0 0.0
        %3873 = vmatpush1.msra.mxu0 0.0
        %3874 = vmatprep.subr.mxu0 0.0
        %3875 = vmatpush1.msra.mxu0 0.0
        %3876 = vmatprep.subr.mxu0 0.0
        %3877 = vmatpush1.msra.mxu0 0.0
        %3878 = vmatprep.subr.mxu0 0.0
        %3879 = vmatpush1.msra.mxu0 0.0
        %3880 = vmatprep.subr.mxu0 0.0
        %3881 = vmatpush1.msra.mxu0 0.0
        %3882 = vmatprep.subr.mxu0 0.0
        %3883 = vmatpush1.msra.mxu0 0.0
        %3884 = vmatprep.mubr.f32.mxu0 0.0
        %3885 = vmatmul.mubr.f32.gmra.mrb[0].mxu0 %v745
        %v3886 = vpop.f32.mrb[0].mxu0
        %v3887 = vadd.f32 %v741, %v3886
        %v3888 = vpop.f32.mrb[0].mxu0
        %3889 = vdwg.mxu0
        %v3890 = vsub.f32 0.0, %v3887
        %v3891 = vmul.f32 %v3890, 1.442695
        %v3892 = vpow.pop %v3891
        %v3893 = vadd.f32 %v3892, 1.0
        %v3894 = vrcp.pop %v3893
        %v3895 = vmul.f32 1.0, %v3894
        %v3897 = vcombine.high %v3895, %v3895
        %v3899 = vunpack.c.l.s4 1966171168
        %v3900 = vunpack.c.0.s8 %v3899
        %v3901 = vlaneseq
        %v3902 = vshrl.u32 %v3901, 7
        %v3903 = vsub.s32 %v3900, %v3902
        %v3904 = vrot.slane %v3895, %v3903
        %v3906 = vunpack.c.l.s4 1966171168
        %v3907 = vunpack.c.0.s8 %v3906
        %v3908 = vlaneseq
        %v3909 = vshrl.u32 %v3908, 7
        %v3910 = vsub.s32 %v3907, %v3909
        %v3911 = vrot.slane %v3897, %v3910
        %v3912 = vcombine.high %v3904, %v3904
        %v3913 = vcombine.high %v3911, %v3911
        %v3915 = vunpack.c.l.s4 1966171168
        %v3916 = vunpack.c.0.s8 %v3915
        %v3917 = vlaneseq
        %v3918 = vshrl.u32 %v3917, 7
        %v3919 = vsub.s32 %v3916, %v3918
        %v3920 = vrot.slane %v3904, %v3919
        %v3922 = vunpack.c.l.s4 1966171168
        %v3923 = vunpack.c.0.s8 %v3922
        %v3924 = vlaneseq
        %v3925 = vshrl.u32 %v3924, 7
        %v3926 = vsub.s32 %v3923, %v3925
        %v3927 = vrot.slane %v3911, %v3926
        %v3929 = vunpack.c.l.s4 1966171168
        %v3930 = vunpack.c.0.s8 %v3929
        %v3931 = vlaneseq
        %v3932 = vshrl.u32 %v3931, 7
        %v3933 = vsub.s32 %v3930, %v3932
        %v3934 = vrot.slane %v3912, %v3933
        %v3936 = vunpack.c.l.s4 1966171168
        %v3937 = vunpack.c.0.s8 %v3936
        %v3938 = vlaneseq
        %v3939 = vshrl.u32 %v3938, 7
        %v3940 = vsub.s32 %v3937, %v3939
        %v3941 = vrot.slane %v3913, %v3940
        %v3942 = vcombine.high %v3920, %v3920
        %v3943 = vcombine.high %v3927, %v3927
        %v3944 = vcombine.high %v3934, %v3934
        %v3945 = vcombine.high %v3941, %v3941
        %v3946 = vlaneseq
        %v3947 = vshrl.u32 %v3946, 7
        %v3948 = vsub.s32 0, %v3947
        %v3949 = vrot.slane %v3920, %v3948
        %v3950 = vlaneseq
        %v3951 = vshrl.u32 %v3950, 7
        %v3952 = vsub.s32 0, %v3951
        %v3953 = vrot.slane %v3934, %v3952
        %v3954 = vlaneseq
        %v3955 = vshrl.u32 %v3954, 7
        %v3956 = vsub.s32 0, %v3955
        %v3957 = vrot.slane %v3942, %v3956
        %v3958 = vlaneseq
        %v3959 = vshrl.u32 %v3958, 7
        %v3960 = vsub.s32 0, %v3959
        %v3961 = vrot.slane %v3944, %v3960
        %v3962 = vlaneseq
        %v3963 = vshrl.u32 %v3962, 7
        %v3964 = vsub.s32 0, %v3963
        %v3965 = vrot.slane %v3927, %v3964
        %v3966 = vlaneseq
        %v3967 = vshrl.u32 %v3966, 7
        %v3968 = vsub.s32 0, %v3967
        %v3969 = vrot.slane %v3941, %v3968
        %v3970 = vlaneseq
        %v3971 = vshrl.u32 %v3970, 7
        %v3972 = vsub.s32 0, %v3971
        %v3973 = vrot.slane %v3943, %v3972
        %v3974 = vlaneseq
        %v3975 = vshrl.u32 %v3974, 7
        %v3976 = vsub.s32 0, %v3975
        %v3977 = vrot.slane %v3945, %v3976
        %v3986 = vmul.f32 %v2024, %v3949
        %v3987 = vmul.f32 %v2028, %v3949
        %v3988 = vmul.f32 %v2024, %v3953
        %v3989 = vmul.f32 %v2028, %v3953
        %v3990 = vmul.f32 %v2024, %v3957
        %v3991 = vmul.f32 %v2028, %v3957
        %v3992 = vmul.f32 %v2024, %v3961
        %v3993 = vmul.f32 %v2028, %v3961
        %v3994 = vmul.f32 %v2024, %v3965
        %v3995 = vmul.f32 %v2028, %v3965
        %v3996 = vmul.f32 %v2024, %v3969
        %v3997 = vmul.f32 %v2028, %v3969
        %v3998 = vmul.f32 %v2024, %v3973
        %v3999 = vmul.f32 %v2028, %v3973
        %v4000 = vmul.f32 %v2024, %v3977
        %v4001 = vmul.f32 %v2028, %v3977
        %v4002 = vadd.f32 %v3621, %v3986
        %v4003 = vadd.f32 %v3622, %v3987
        %v4004 = vadd.f32 %v3623, %v3988
        %v4005 = vadd.f32 %v3624, %v3989
        %v4006 = vadd.f32 %v3625, %v3990
        %v4007 = vadd.f32 %v3626, %v3991
        %v4008 = vadd.f32 %v3627, %v3992
        %v4009 = vadd.f32 %v3628, %v3993
        %v4010 = vadd.f32 %v3629, %v3994
        %v4011 = vadd.f32 %v3630, %v3995
        %v4012 = vadd.f32 %v3631, %v3996
        %v4013 = vadd.f32 %v3632, %v3997
        %v4014 = vadd.f32 %v3633, %v3998
        %v4015 = vadd.f32 %v3634, %v3999
        %v4016 = vadd.f32 %v3635, %v4000
        %v4017 = vadd.f32 %v3636, %v4001
        %v4019 = vsel %vm2102, %v4002, 0
        %v4022 = vsel %vm2102, %v4003, 0
        %v4025 = vsel %vm2102, %v4004, 0
        %v4028 = vsel %vm2102, %v4005, 0
        %v4031 = vsel %vm2102, %v4006, 0
        %v4034 = vsel %vm2102, %v4007, 0
        %v4037 = vsel %vm2102, %v4008, 0
        %v4040 = vsel %vm2102, %v4009, 0
        %v4043 = vsel %vm2102, %v4010, 0
        %v4046 = vsel %vm2102, %v4011, 0
        %v4049 = vsel %vm2102, %v4012, 0
        %v4052 = vsel %vm2102, %v4013, 0
        %v4055 = vsel %vm2102, %v4014, 0
        %v4058 = vsel %vm2102, %v4015, 0
        %v4061 = vsel %vm2102, %v4016, 0
        %v4064 = vsel %vm2102, %v4017, 0
        %4066 = vmatprep.subr.mxu0 0.0
        %4067 = vmatpush1.msra.mxu0 %v2153
        %4068 = vmatprep.subr.mxu0 0.0
        %4069 = vmatpush1.msra.mxu0 0.0
        %4070 = vmatprep.subr.mxu0 0.0
        %4071 = vmatpush1.msra.mxu0 0.0
        %4072 = vmatprep.subr.mxu0 0.0
        %4073 = vmatpush1.msra.mxu0 0.0
        %4074 = vmatprep.subr.mxu0 0.0
        %4075 = vmatpush1.msra.mxu0 0.0
        %4076 = vmatprep.subr.mxu0 0.0
        %4077 = vmatpush1.msra.mxu0 0.0
        %4078 = vmatprep.subr.mxu0 0.0
        %4079 = vmatpush1.msra.mxu0 0.0
        %4080 = vmatprep.subr.mxu0 0.0
        %4081 = vmatpush1.msra.mxu0 0.0
        %4082 = vmatprep.subr.mxu0 0.0
        %4083 = vmatpush1.msra.mxu0 0.0
        %4084 = vmatprep.subr.mxu0 0.0
        %4085 = vmatpush1.msra.mxu0 0.0
        %4086 = vmatprep.subr.mxu0 0.0
        %4087 = vmatpush1.msra.mxu0 0.0
        %4088 = vmatprep.subr.mxu0 0.0
        %4089 = vmatpush1.msra.mxu0 0.0
        %4090 = vmatprep.subr.mxu0 0.0
        %4091 = vmatpush1.msra.mxu0 0.0
        %4092 = vmatprep.subr.mxu0 0.0
        %4093 = vmatpush1.msra.mxu0 0.0
        %4094 = vmatprep.subr.mxu0 0.0
        %4095 = vmatpush1.msra.mxu0 0.0
        %4096 = vmatprep.subr.mxu0 0.0
        %4097 = vmatpush1.msra.mxu0 0.0
        %4098 = vmatprep.subr.mxu0 0.0
        %4099 = vmatpush1.msra.mxu0 0.0
        %4100 = vmatprep.subr.mxu0 0.0
        %4101 = vmatpush1.msra.mxu0 0.0
        %4102 = vmatprep.subr.mxu0 0.0
        %4103 = vmatpush1.msra.mxu0 0.0
        %4104 = vmatprep.subr.mxu0 0.0
        %4105 = vmatpush1.msra.mxu0 0.0
        %4106 = vmatprep.subr.mxu0 0.0
        %4107 = vmatpush1.msra.mxu0 0.0
        %4108 = vmatprep.subr.mxu0 0.0
        %4109 = vmatpush1.msra.mxu0 0.0
        %4110 = vmatprep.subr.mxu0 0.0
        %4111 = vmatpush1.msra.mxu0 0.0
        %4112 = vmatprep.subr.mxu0 0.0
        %4113 = vmatpush1.msra.mxu0 0.0
        %4114 = vmatprep.subr.mxu0 0.0
        %4115 = vmatpush1.msra.mxu0 0.0
        %4116 = vmatprep.subr.mxu0 0.0
        %4117 = vmatpush1.msra.mxu0 0.0
        %4118 = vmatprep.subr.mxu0 0.0
        %4119 = vmatpush1.msra.mxu0 0.0
        %4120 = vmatprep.subr.mxu0 0.0
        %4121 = vmatpush1.msra.mxu0 0.0
        %4122 = vmatprep.subr.mxu0 0.0
        %4123 = vmatpush1.msra.mxu0 0.0
        %4124 = vmatprep.subr.mxu0 0.0
        %4125 = vmatpush1.msra.mxu0 0.0
        %4126 = vmatprep.subr.mxu0 0.0
        %4127 = vmatpush1.msra.mxu0 0.0
        %4128 = vmatprep.subr.mxu0 0.0
        %4129 = vmatpush1.msra.mxu0 0.0
        %4130 = vmatprep.mubr.f32.mxu0 0.0
        %4131 = vmatmul.mubr.f32.gmra.mrb[0].mxu0 %v4019
        %v4132 = vpop.f32.mrb[0].mxu0
        %v4133 = vadd.f32 1.0, %v4132
        %v4134 = vpop.f32.mrb[0].mxu0
        %4135 = vmatprep.mubr.f32.mxu0 0.0
        %4136 = vmatmul.mubr.f32.gmra.mrb[0].mxu0 %v4022
        %v4137 = vpop.f32.mrb[0].mxu0
        %v4138 = vadd.f32 1.0, %v4137
        %v4139 = vpop.f32.mrb[0].mxu0
        %4140 = vmatprep.mubr.f32.mxu0 0.0
        %4141 = vmatmul.mubr.f32.gmra.mrb[0].mxu0 %v4025
        %v4142 = vpop.f32.mrb[0].mxu0
        %v4143 = vadd.f32 1.0, %v4142
        %v4144 = vpop.f32.mrb[0].mxu0
        %4145 = vmatprep.mubr.f32.mxu0 0.0
        %4146 = vmatmul.mubr.f32.gmra.mrb[0].mxu0 %v4028
        %v4147 = vpop.f32.mrb[0].mxu0
        %v4148 = vadd.f32 1.0, %v4147
        %v4149 = vpop.f32.mrb[0].mxu0
        %4150 = vmatprep.mubr.f32.mxu0 0.0
        %4151 = vmatmul.mubr.f32.gmra.mrb[0].mxu0 %v4031
        %v4152 = vpop.f32.mrb[0].mxu0
        %v4153 = vadd.f32 1.0, %v4152
        %v4154 = vpop.f32.mrb[0].mxu0
        %4155 = vmatprep.mubr.f32.mxu0 0.0
        %4156 = vmatmul.mubr.f32.gmra.mrb[0].mxu0 %v4034
        %v4157 = vpop.f32.mrb[0].mxu0
        %v4158 = vadd.f32 1.0, %v4157
        %v4159 = vpop.f32.mrb[0].mxu0
        %4160 = vmatprep.mubr.f32.mxu0 0.0
        %4161 = vmatmul.mubr.f32.gmra.mrb[0].mxu0 %v4037
        %v4162 = vpop.f32.mrb[0].mxu0
        %v4163 = vadd.f32 1.0, %v4162
        %v4164 = vpop.f32.mrb[0].mxu0
        %4165 = vmatprep.mubr.f32.mxu0 0.0
        %4166 = vmatmul.mubr.f32.gmra.mrb[0].mxu0 %v4040
        %v4167 = vpop.f32.mrb[0].mxu0
        %v4168 = vadd.f32 1.0, %v4167
        %v4169 = vpop.f32.mrb[0].mxu0
        %4170 = vmatprep.mubr.f32.mxu0 0.0
        %4171 = vmatmul.mubr.f32.gmra.mrb[0].mxu0 %v4043
        %v4172 = vpop.f32.mrb[0].mxu0
        %v4173 = vadd.f32 1.0, %v4172
        %v4174 = vpop.f32.mrb[0].mxu0
        %4175 = vmatprep.mubr.f32.mxu0 0.0
        %4176 = vmatmul.mubr.f32.gmra.mrb[0].mxu0 %v4046
        %v4177 = vpop.f32.mrb[0].mxu0
        %v4178 = vadd.f32 1.0, %v4177
        %v4179 = vpop.f32.mrb[0].mxu0
        %4180 = vmatprep.mubr.f32.mxu0 0.0
        %4181 = vmatmul.mubr.f32.gmra.mrb[0].mxu0 %v4049
        %v4182 = vpop.f32.mrb[0].mxu0
        %v4183 = vadd.f32 1.0, %v4182
        %v4184 = vpop.f32.mrb[0].mxu0
        %4185 = vmatprep.mubr.f32.mxu0 0.0
        %4186 = vmatmul.mubr.f32.gmra.mrb[0].mxu0 %v4052
        %v4187 = vpop.f32.mrb[0].mxu0
        %v4188 = vadd.f32 1.0, %v4187
        %v4189 = vpop.f32.mrb[0].mxu0
        %4190 = vmatprep.mubr.f32.mxu0 0.0
        %4191 = vmatmul.mubr.f32.gmra.mrb[0].mxu0 %v4055
        %v4192 = vpop.f32.mrb[0].mxu0
        %v4193 = vadd.f32 1.0, %v4192
        %v4194 = vpop.f32.mrb[0].mxu0
        %4195 = vmatprep.mubr.f32.mxu0 0.0
        %4196 = vmatmul.mubr.f32.gmra.mrb[0].mxu0 %v4058
        %v4197 = vpop.f32.mrb[0].mxu0
        %v4198 = vadd.f32 1.0, %v4197
        %v4199 = vpop.f32.mrb[0].mxu0
        %4200 = vmatprep.mubr.f32.mxu0 0.0
        %4201 = vmatmul.mubr.f32.gmra.mrb[0].mxu0 %v4061
        %v4202 = vpop.f32.mrb[0].mxu0
        %v4203 = vadd.f32 1.0, %v4202
        %v4204 = vpop.f32.mrb[0].mxu0
        %4205 = vmatprep.mubr.f32.mxu0 0.0
        %4206 = vmatmul.mubr.f32.gmra.mrb[0].mxu0 %v4064
        %v4207 = vpop.f32.mrb[0].mxu0
        %v4208 = vadd.f32 1.0, %v4207
        %v4209 = vpop.f32.mrb[0].mxu0
        %4210 = vdwg.mxu0
        %v4211 = vmul.f32 %v2333, %v4133
        %v4212 = vmul.f32 %v2334, %v4138
        %v4213 = vmul.f32 %v2335, %v4143
        %v4214 = vmul.f32 %v2336, %v4148
        %v4215 = vmul.f32 %v2337, %v4153
        %v4216 = vmul.f32 %v2338, %v4158
        %v4217 = vmul.f32 %v2339, %v4163
        %v4218 = vmul.f32 %v2340, %v4168
        %v4219 = vmul.f32 %v2341, %v4173
        %v4220 = vmul.f32 %v2342, %v4178
        %v4221 = vmul.f32 %v2343, %v4183
        %v4222 = vmul.f32 %v2344, %v4188
        %v4223 = vmul.f32 %v2345, %v4193
        %v4224 = vmul.f32 %v2346, %v4198
        %v4225 = vmul.f32 %v2347, %v4203
        %v4226 = vmul.f32 %v2348, %v4208
        %s4227 = scalar_lea.vmem %s342, 16 [#allocation5]
        %4228 = vst.msk [vmem:[%s4227] sm:$0xff] %vm370, %v4211
        %4229 = vst.msk [vmem:[%s4227 + $0x8] sm:$0xff] %vm370, %v4212
        %4230 = vst.msk [vmem:[%s4227 + $0x40] sm:$0xff] %vm370, %v4213
        %4231 = vst.msk [vmem:[%s4227 + $0x48] sm:$0xff] %vm370, %v4214
        %4232 = vst.msk [vmem:[%s4227 + $0x80] sm:$0xff] %vm370, %v4215
        %4233 = vst.msk [vmem:[%s4227 + $0x88] sm:$0xff] %vm370, %v4216
        %4234 = vst.msk [vmem:[%s4227 + $0xc0] sm:$0xff] %vm370, %v4217
        %4235 = vst.msk [vmem:[%s4227 + $0xc8] sm:$0xff] %vm370, %v4218
        %4236 = vst.msk [vmem:[%s4227 + $0x100] sm:$0xff] %vm370, %v4219
        %4237 = vst.msk [vmem:[%s4227 + $0x108] sm:$0xff] %vm370, %v4220
        %4238 = vst.msk [vmem:[%s4227 + $0x140] sm:$0xff] %vm370, %v4221
        %4239 = vst.msk [vmem:[%s4227 + $0x148] sm:$0xff] %vm370, %v4222
        %4240 = vst.msk [vmem:[%s4227 + $0x180] sm:$0xff] %vm370, %v4223
        %4241 = vst.msk [vmem:[%s4227 + $0x188] sm:$0xff] %vm370, %v4224
        %4242 = vst.msk [vmem:[%s4227 + $0x1c0] sm:$0xff] %vm370, %v4225
        %4243 = vst.msk [vmem:[%s4227 + $0x1c8] sm:$0xff] %vm370, %v4226
        %s4244 = scalar_lea.vmem %s310, 32 [#allocation2]
        %v4245 = vld [vmem:[%s4244] sm:$0xff]
        %v4246 = vld [vmem:[%s4244 + $0x8] sm:$0xff]
        %v4247 = vld [vmem:[%s4244 + $0x40] sm:$0xff]
        %v4248 = vld [vmem:[%s4244 + $0x48] sm:$0xff]
        %v4249 = vld [vmem:[%s4244 + $0x80] sm:$0xff]
        %v4250 = vld [vmem:[%s4244 + $0x88] sm:$0xff]
        %v4251 = vld [vmem:[%s4244 + $0xc0] sm:$0xff]
        %v4252 = vld [vmem:[%s4244 + $0xc8] sm:$0xff]
        %v4253 = vld [vmem:[%s4244 + $0x100] sm:$0xff]
        %v4254 = vld [vmem:[%s4244 + $0x108] sm:$0xff]
        %v4255 = vld [vmem:[%s4244 + $0x140] sm:$0xff]
        %v4256 = vld [vmem:[%s4244 + $0x148] sm:$0xff]
        %v4257 = vld [vmem:[%s4244 + $0x180] sm:$0xff]
        %v4258 = vld [vmem:[%s4244 + $0x188] sm:$0xff]
        %v4259 = vld [vmem:[%s4244 + $0x1c0] sm:$0xff]
        %v4260 = vld [vmem:[%s4244 + $0x1c8] sm:$0xff]
        %v4262 = vsel %vm370, %v4245, 0
        %v4265 = vsel %vm370, %v4246, 0
        %v4268 = vsel %vm370, %v4247, 0
        %v4271 = vsel %vm370, %v4248, 0
        %v4274 = vsel %vm370, %v4249, 0
        %v4277 = vsel %vm370, %v4250, 0
        %v4280 = vsel %vm370, %v4251, 0
        %v4283 = vsel %vm370, %v4252, 0
        %v4286 = vsel %vm370, %v4253, 0
        %v4289 = vsel %vm370, %v4254, 0
        %v4292 = vsel %vm370, %v4255, 0
        %v4295 = vsel %vm370, %v4256, 0
        %v4298 = vsel %vm370, %v4257, 0
        %v4301 = vsel %vm370, %v4258, 0
        %v4304 = vsel %vm370, %v4259, 0
        %v4307 = vsel %vm370, %v4260, 0
        %4309 = vmatprep.subr.mxu0 0.0
        %4310 = vmatpush1.msra.mxu0 %v345
        %4311 = vmatprep.subr.mxu0 0.0
        %4312 = vmatpush1.msra.mxu0 %v346
        %4313 = vmatprep.subr.mxu0 0.0
        %4314 = vmatpush1.msra.mxu0 0.0
        %4315 = vmatprep.subr.mxu0 0.0
        %4316 = vmatpush1.msra.mxu0 0.0
        %4317 = vmatprep.subr.mxu0 0.0
        %4318 = vmatpush1.msra.mxu0 0.0
        %4319 = vmatprep.subr.mxu0 0.0
        %4320 = vmatpush1.msra.mxu0 0.0
        %4321 = vmatprep.subr.mxu0 0.0
        %4322 = vmatpush1.msra.mxu0 0.0
        %4323 = vmatprep.subr.mxu0 0.0
        %4324 = vmatpush1.msra.mxu0 0.0
        %4325 = vmatprep.subr.mxu0 0.0
        %4326 = vmatpush1.msra.mxu0 0.0
        %4327 = vmatprep.subr.mxu0 0.0
        %4328 = vmatpush1.msra.mxu0 0.0
        %4329 = vmatprep.subr.mxu0 0.0
        %4330 = vmatpush1.msra.mxu0 0.0
        %4331 = vmatprep.subr.mxu0 0.0
        %4332 = vmatpush1.msra.mxu0 0.0
        %4333 = vmatprep.subr.mxu0 0.0
        %4334 = vmatpush1.msra.mxu0 0.0
        %4335 = vmatprep.subr.mxu0 0.0
        %4336 = vmatpush1.msra.mxu0 0.0
        %4337 = vmatprep.subr.mxu0 0.0
        %4338 = vmatpush1.msra.mxu0 0.0
        %4339 = vmatprep.subr.mxu0 0.0
        %4340 = vmatpush1.msra.mxu0 0.0
        %4341 = vmatprep.subr.mxu0 0.0
        %4342 = vmatpush1.msra.mxu0 0.0
        %4343 = vmatprep.subr.mxu0 0.0
        %4344 = vmatpush1.msra.mxu0 0.0
        %4345 = vmatprep.subr.mxu0 0.0
        %4346 = vmatpush1.msra.mxu0 0.0
        %4347 = vmatprep.subr.mxu0 0.0
        %4348 = vmatpush1.msra.mxu0 0.0
        %4349 = vmatprep.subr.mxu0 0.0
        %4350 = vmatpush1.msra.mxu0 0.0
        %4351 = vmatprep.subr.mxu0 0.0
        %4352 = vmatpush1.msra.mxu0 0.0
        %4353 = vmatprep.subr.mxu0 0.0
        %4354 = vmatpush1.msra.mxu0 0.0
        %4355 = vmatprep.subr.mxu0 0.0
        %4356 = vmatpush1.msra.mxu0 0.0
        %4357 = vmatprep.subr.mxu0 0.0
        %4358 = vmatpush1.msra.mxu0 0.0
        %4359 = vmatprep.subr.mxu0 0.0
        %4360 = vmatpush1.msra.mxu0 0.0
        %4361 = vmatprep.subr.mxu0 0.0
        %4362 = vmatpush1.msra.mxu0 0.0
        %4363 = vmatprep.subr.mxu0 0.0
        %4364 = vmatpush1.msra.mxu0 0.0
        %4365 = vmatprep.subr.mxu0 0.0
        %4366 = vmatpush1.msra.mxu0 0.0
        %4367 = vmatprep.subr.mxu0 0.0
        %4368 = vmatpush1.msra.mxu0 0.0
        %4369 = vmatprep.subr.mxu0 0.0
        %4370 = vmatpush1.msra.mxu0 0.0
        %4371 = vmatprep.subr.mxu0 0.0
        %4372 = vmatpush1.msra.mxu0 0.0
        %4373 = vmatprep.mubr.f32.mxu0 0.0
        %4374 = vmatmul.mubr.f32.gmra.mrb[0].mxu0 %v4262
        %v4375 = vpop.f32.mrb[0].mxu0
        %v4376 = vadd.f32 0.0, %v4375
        %v4377 = vpop.f32.mrb[0].mxu0
        %4378 = vmatprep.mubr.f32.mxu0 0.0
        %4379 = vmatmul.mubr.f32.gmra.mrb[0].mxu0 %v4265
        %v4380 = vpop.f32.mrb[0].mxu0
        %v4381 = vadd.f32 0.0, %v4380
        %v4382 = vpop.f32.mrb[0].mxu0
        %4383 = vmatprep.mubr.f32.mxu0 0.0
        %4384 = vmatmul.mubr.f32.gmra.mrb[0].mxu0 %v4268
        %v4385 = vpop.f32.mrb[0].mxu0
        %v4386 = vadd.f32 0.0, %v4385
        %v4387 = vpop.f32.mrb[0].mxu0
        %4388 = vmatprep.mubr.f32.mxu0 0.0
        %4389 = vmatmul.mubr.f32.gmra.mrb[0].mxu0 %v4271
        %v4390 = vpop.f32.mrb[0].mxu0
        %v4391 = vadd.f32 0.0, %v4390
        %v4392 = vpop.f32.mrb[0].mxu0
        %4393 = vmatprep.mubr.f32.mxu0 0.0
        %4394 = vmatmul.mubr.f32.gmra.mrb[0].mxu0 %v4274
        %v4395 = vpop.f32.mrb[0].mxu0
        %v4396 = vadd.f32 0.0, %v4395
        %v4397 = vpop.f32.mrb[0].mxu0
        %4398 = vmatprep.mubr.f32.mxu0 0.0
        %4399 = vmatmul.mubr.f32.gmra.mrb[0].mxu0 %v4277
        %v4400 = vpop.f32.mrb[0].mxu0
        %v4401 = vadd.f32 0.0, %v4400
        %v4402 = vpop.f32.mrb[0].mxu0
        %4403 = vmatprep.mubr.f32.mxu0 0.0
        %4404 = vmatmul.mubr.f32.gmra.mrb[0].mxu0 %v4280
        %v4405 = vpop.f32.mrb[0].mxu0
        %v4406 = vadd.f32 0.0, %v4405
        %v4407 = vpop.f32.mrb[0].mxu0
        %4408 = vmatprep.mubr.f32.mxu0 0.0
        %4409 = vmatmul.mubr.f32.gmra.mrb[0].mxu0 %v4283
        %v4410 = vpop.f32.mrb[0].mxu0
        %v4411 = vadd.f32 0.0, %v4410
        %v4412 = vpop.f32.mrb[0].mxu0
        %4413 = vmatprep.mubr.f32.mxu0 0.0
        %4414 = vmatmul.mubr.f32.gmra.mrb[0].mxu0 %v4286
        %v4415 = vpop.f32.mrb[0].mxu0
        %v4416 = vadd.f32 0.0, %v4415
        %v4417 = vpop.f32.mrb[0].mxu0
        %4418 = vmatprep.mubr.f32.mxu0 0.0
        %4419 = vmatmul.mubr.f32.gmra.mrb[0].mxu0 %v4289
        %v4420 = vpop.f32.mrb[0].mxu0
        %v4421 = vadd.f32 0.0, %v4420
        %v4422 = vpop.f32.mrb[0].mxu0
        %4423 = vmatprep.mubr.f32.mxu0 0.0
        %4424 = vmatmul.mubr.f32.gmra.mrb[0].mxu0 %v4292
        %v4425 = vpop.f32.mrb[0].mxu0
        %v4426 = vadd.f32 0.0, %v4425
        %v4427 = vpop.f32.mrb[0].mxu0
        %4428 = vmatprep.mubr.f32.mxu0 0.0
        %4429 = vmatmul.mubr.f32.gmra.mrb[0].mxu0 %v4295
        %v4430 = vpop.f32.mrb[0].mxu0
        %v4431 = vadd.f32 0.0, %v4430
        %v4432 = vpop.f32.mrb[0].mxu0
        %4433 = vmatprep.mubr.f32.mxu0 0.0
        %4434 = vmatmul.mubr.f32.gmra.mrb[0].mxu0 %v4298
        %v4435 = vpop.f32.mrb[0].mxu0
        %v4436 = vadd.f32 0.0, %v4435
        %v4437 = vpop.f32.mrb[0].mxu0
        %4438 = vmatprep.mubr.f32.mxu0 0.0
        %4439 = vmatmul.mubr.f32.gmra.mrb[0].mxu0 %v4301
        %v4440 = vpop.f32.mrb[0].mxu0
        %v4441 = vadd.f32 0.0, %v4440
        %v4442 = vpop.f32.mrb[0].mxu0
        %4443 = vmatprep.mubr.f32.mxu0 0.0
        %4444 = vmatmul.mubr.f32.gmra.mrb[0].mxu0 %v4304
        %v4445 = vpop.f32.mrb[0].mxu0
        %v4446 = vadd.f32 0.0, %v4445
        %v4447 = vpop.f32.mrb[0].mxu0
        %4448 = vmatprep.mubr.f32.mxu0 0.0
        %4449 = vmatmul.mubr.f32.gmra.mrb[0].mxu0 %v4307
        %v4450 = vpop.f32.mrb[0].mxu0
        %v4451 = vadd.f32 0.0, %v4450
        %v4452 = vpop.f32.mrb[0].mxu0
        %4453 = vdwg.mxu0
        %v4454 = vsel %vm564, %v4376, 0.0
        %v4455 = vrot.slane %v4454, 4
        %v4456 = vadd.f32 %v4454, %v4455
        %v4457 = vrot.slane %v4456, 2
        %v4458 = vadd.f32 %v4456, %v4457
        %v4459 = vrot.slane %v4458, 1
        %v4460 = vadd.f32 %v4458, %v4459
        %v4461 = vsel %vm564, %v4386, 0.0
        %v4462 = vrot.slane %v4461, 4
        %v4463 = vadd.f32 %v4461, %v4462
        %v4464 = vrot.slane %v4463, 2
        %v4465 = vadd.f32 %v4463, %v4464
        %v4466 = vrot.slane %v4465, 1
        %v4467 = vadd.f32 %v4465, %v4466
        %v4468 = vsel %vm564, %v4396, 0.0
        %v4469 = vrot.slane %v4468, 4
        %v4470 = vadd.f32 %v4468, %v4469
        %v4471 = vrot.slane %v4470, 2
        %v4472 = vadd.f32 %v4470, %v4471
        %v4473 = vrot.slane %v4472, 1
        %v4474 = vadd.f32 %v4472, %v4473
        %v4475 = vsel %vm564, %v4406, 0.0
        %v4476 = vrot.slane %v4475, 4
        %v4477 = vadd.f32 %v4475, %v4476
        %v4478 = vrot.slane %v4477, 2
        %v4479 = vadd.f32 %v4477, %v4478
        %v4480 = vrot.slane %v4479, 1
        %v4481 = vadd.f32 %v4479, %v4480
        %v4482 = vsel %vm564, %v4416, 0.0
        %v4483 = vrot.slane %v4482, 4
        %v4484 = vadd.f32 %v4482, %v4483
        %v4485 = vrot.slane %v4484, 2
        %v4486 = vadd.f32 %v4484, %v4485
        %v4487 = vrot.slane %v4486, 1
        %v4488 = vadd.f32 %v4486, %v4487
        %v4489 = vsel %vm564, %v4426, 0.0
        %v4490 = vrot.slane %v4489, 4
        %v4491 = vadd.f32 %v4489, %v4490
        %v4492 = vrot.slane %v4491, 2
        %v4493 = vadd.f32 %v4491, %v4492
        %v4494 = vrot.slane %v4493, 1
        %v4495 = vadd.f32 %v4493, %v4494
        %v4496 = vsel %vm564, %v4436, 0.0
        %v4497 = vrot.slane %v4496, 4
        %v4498 = vadd.f32 %v4496, %v4497
        %v4499 = vrot.slane %v4498, 2
        %v4500 = vadd.f32 %v4498, %v4499
        %v4501 = vrot.slane %v4500, 1
        %v4502 = vadd.f32 %v4500, %v4501
        %v4503 = vsel %vm564, %v4446, 0.0
        %v4504 = vrot.slane %v4503, 4
        %v4505 = vadd.f32 %v4503, %v4504
        %v4506 = vrot.slane %v4505, 2
        %v4507 = vadd.f32 %v4505, %v4506
        %v4508 = vrot.slane %v4507, 1
        %v4509 = vadd.f32 %v4507, %v4508
        %v4510 = vmul.f32 %v4460, %v621
        %v4511 = vmul.f32 %v4467, %v621
        %v4512 = vmul.f32 %v4474, %v621
        %v4513 = vmul.f32 %v4481, %v621
        %v4514 = vmul.f32 %v4488, %v621
        %v4515 = vmul.f32 %v4495, %v621
        %v4516 = vmul.f32 %v4502, %v621
        %v4517 = vmul.f32 %v4509, %v621
        %v4526 = vsel %vm643, %v4511, %v4510
        %v4527 = vsel %vm645, %v4512, %v4526
        %v4528 = vsel %vm647, %v4513, %v4527
        %v4529 = vsel %vm649, %v4514, %v4528
        %v4530 = vsel %vm651, %v4515, %v4529
        %v4531 = vsel %vm653, %v4516, %v4530
        %v4532 = vsel %vm655, %v4517, %v4531
        %4534 = vmatprep.subr.mxu0 0.0
        %4535 = vmatpush1.msra.mxu0 %v4532
        %4536 = vmatprep.subr.mxu0 0.0
        %4537 = vmatpush1.msra.mxu0 0.0
        %4538 = vmatprep.subr.mxu0 0.0
        %4539 = vmatpush1.msra.mxu0 0.0
        %4540 = vmatprep.subr.mxu0 0.0
        %4541 = vmatpush1.msra.mxu0 0.0
        %4542 = vmatprep.subr.mxu0 0.0
        %4543 = vmatpush1.msra.mxu0 0.0
        %4544 = vmatprep.subr.mxu0 0.0
        %4545 = vmatpush1.msra.mxu0 0.0
        %4546 = vmatprep.subr.mxu0 0.0
        %4547 = vmatpush1.msra.mxu0 0.0
        %4548 = vmatprep.subr.mxu0 0.0
        %4549 = vmatpush1.msra.mxu0 0.0
        %4550 = vmatprep.subr.mxu0 0.0
        %4551 = vmatpush1.msra.mxu0 0.0
        %4552 = vmatprep.subr.mxu0 0.0
        %4553 = vmatpush1.msra.mxu0 0.0
        %4554 = vmatprep.subr.mxu0 0.0
        %4555 = vmatpush1.msra.mxu0 0.0
        %4556 = vmatprep.subr.mxu0 0.0
        %4557 = vmatpush1.msra.mxu0 0.0
        %4558 = vmatprep.subr.mxu0 0.0
        %4559 = vmatpush1.msra.mxu0 0.0
        %4560 = vmatprep.subr.mxu0 0.0
        %4561 = vmatpush1.msra.mxu0 0.0
        %4562 = vmatprep.subr.mxu0 0.0
        %4563 = vmatpush1.msra.mxu0 0.0
        %4564 = vmatprep.subr.mxu0 0.0
        %4565 = vmatpush1.msra.mxu0 0.0
        %4566 = vmatprep.subr.mxu0 0.0
        %4567 = vmatpush1.msra.mxu0 0.0
        %4568 = vmatprep.subr.mxu0 0.0
        %4569 = vmatpush1.msra.mxu0 0.0
        %4570 = vmatprep.subr.mxu0 0.0
        %4571 = vmatpush1.msra.mxu0 0.0
        %4572 = vmatprep.subr.mxu0 0.0
        %4573 = vmatpush1.msra.mxu0 0.0
        %4574 = vmatprep.subr.mxu0 0.0
        %4575 = vmatpush1.msra.mxu0 0.0
        %4576 = vmatprep.subr.mxu0 0.0
        %4577 = vmatpush1.msra.mxu0 0.0
        %4578 = vmatprep.subr.mxu0 0.0
        %4579 = vmatpush1.msra.mxu0 0.0
        %4580 = vmatprep.subr.mxu0 0.0
        %4581 = vmatpush1.msra.mxu0 0.0
        %4582 = vmatprep.subr.mxu0 0.0
        %4583 = vmatpush1.msra.mxu0 0.0
        %4584 = vmatprep.subr.mxu0 0.0
        %4585 = vmatpush1.msra.mxu0 0.0
        %4586 = vmatprep.subr.mxu0 0.0
        %4587 = vmatpush1.msra.mxu0 0.0
        %4588 = vmatprep.subr.mxu0 0.0
        %4589 = vmatpush1.msra.mxu0 0.0
        %4590 = vmatprep.subr.mxu0 0.0
        %4591 = vmatpush1.msra.mxu0 0.0
        %4592 = vmatprep.subr.mxu0 0.0
        %4593 = vmatpush1.msra.mxu0 0.0
        %4594 = vmatprep.subr.mxu0 0.0
        %4595 = vmatpush1.msra.mxu0 0.0
        %4596 = vmatprep.subr.mxu0 0.0
        %4597 = vmatpush1.msra.mxu0 0.0
        %4598 = vmatprep.mubr.f32.mxu0 0.0
        %4599 = vmatmul.mubr.f32.gmra.mrb[0].mxu0 %v660
        %v4600 = vpop.f32.mrb[0].mxu0
        %v4601 = vadd.f32 %v633, %v4600
        %v4602 = vpop.f32.mrb[0].mxu0
        %4603 = vdwg.mxu0
        %v4604 = vmax.f32 %v4601, 0.0
        %v4605 = vmin.f32 %v4601, 0.0
        %v4606 = vmul.f32 %v4605, 1.442695
        %v4607 = vpow.pop %v4606
        %v4608 = vsub.f32 %v4607, 1.0
        %v4609 = vadd.f32 %v4604, %v4608
        %v4611 = vsel %vm747, %v4609, 0
        %4613 = vmatprep.subr.mxu0 0.0
        %4614 = vmatpush1.msra.mxu0 %v4611
        %4615 = vmatprep.subr.mxu0 0.0
        %4616 = vmatpush1.msra.mxu0 0.0
        %4617 = vmatprep.subr.mxu0 0.0
        %4618 = vmatpush1.msra.mxu0 0.0
        %4619 = vmatprep.subr.mxu0 0.0
        %4620 = vmatpush1.msra.mxu0 0.0
        %4621 = vmatprep.subr.mxu0 0.0
        %4622 = vmatpush1.msra.mxu0 0.0
        %4623 = vmatprep.subr.mxu0 0.0
        %4624 = vmatpush1.msra.mxu0 0.0
        %4625 = vmatprep.subr.mxu0 0.0
        %4626 = vmatpush1.msra.mxu0 0.0
        %4627 = vmatprep.subr.mxu0 0.0
        %4628 = vmatpush1.msra.mxu0 0.0
        %4629 = vmatprep.subr.mxu0 0.0
        %4630 = vmatpush1.msra.mxu0 0.0
        %4631 = vmatprep.subr.mxu0 0.0
        %4632 = vmatpush1.msra.mxu0 0.0
        %4633 = vmatprep.subr.mxu0 0.0
        %4634 = vmatpush1.msra.mxu0 0.0
        %4635 = vmatprep.subr.mxu0 0.0
        %4636 = vmatpush1.msra.mxu0 0.0
        %4637 = vmatprep.subr.mxu0 0.0
        %4638 = vmatpush1.msra.mxu0 0.0
        %4639 = vmatprep.subr.mxu0 0.0
        %4640 = vmatpush1.msra.mxu0 0.0
        %4641 = vmatprep.subr.mxu0 0.0
        %4642 = vmatpush1.msra.mxu0 0.0
        %4643 = vmatprep.subr.mxu0 0.0
        %4644 = vmatpush1.msra.mxu0 0.0
        %4645 = vmatprep.subr.mxu0 0.0
        %4646 = vmatpush1.msra.mxu0 0.0
        %4647 = vmatprep.subr.mxu0 0.0
        %4648 = vmatpush1.msra.mxu0 0.0
        %4649 = vmatprep.subr.mxu0 0.0
        %4650 = vmatpush1.msra.mxu0 0.0
        %4651 = vmatprep.subr.mxu0 0.0
        %4652 = vmatpush1.msra.mxu0 0.0
        %4653 = vmatprep.subr.mxu0 0.0
        %4654 = vmatpush1.msra.mxu0 0.0
        %4655 = vmatprep.subr.mxu0 0.0
        %4656 = vmatpush1.msra.mxu0 0.0
        %4657 = vmatprep.subr.mxu0 0.0
        %4658 = vmatpush1.msra.mxu0 0.0
        %4659 = vmatprep.subr.mxu0 0.0
        %4660 = vmatpush1.msra.mxu0 0.0
        %4661 = vmatprep.subr.mxu0 0.0
        %4662 = vmatpush1.msra.mxu0 0.0
        %4663 = vmatprep.subr.mxu0 0.0
        %4664 = vmatpush1.msra.mxu0 0.0
        %4665 = vmatprep.subr.mxu0 0.0
        %4666 = vmatpush1.msra.mxu0 0.0
        %4667 = vmatprep.subr.mxu0 0.0
        %4668 = vmatpush1.msra.mxu0 0.0
        %4669 = vmatprep.subr.mxu0 0.0
        %4670 = vmatpush1.msra.mxu0 0.0
        %4671 = vmatprep.subr.mxu0 0.0
        %4672 = vmatpush1.msra.mxu0 0.0
        %4673 = vmatprep.subr.mxu0 0.0
        %4674 = vmatpush1.msra.mxu0 0.0
        %4675 = vmatprep.subr.mxu0 0.0
        %4676 = vmatpush1.msra.mxu0 0.0
        %4677 = vmatprep.mubr.f32.mxu0 0.0
        %4678 = vmatmul.mubr.f32.gmra.mrb[0].mxu0 %v745
        %v4679 = vpop.f32.mrb[0].mxu0
        %v4680 = vadd.f32 %v741, %v4679
        %v4681 = vpop.f32.mrb[0].mxu0
        %4682 = vdwg.mxu0
        %v4683 = vsub.f32 0.0, %v4680
        %v4684 = vmul.f32 %v4683, 1.442695
        %v4685 = vpow.pop %v4684
        %v4686 = vadd.f32 %v4685, 1.0
        %v4687 = vrcp.pop %v4686
        %v4688 = vmul.f32 1.0, %v4687
        %v4690 = vcombine.high %v4688, %v4688
        %v4692 = vunpack.c.l.s4 1966171168
        %v4693 = vunpack.c.0.s8 %v4692
        %v4694 = vlaneseq
        %v4695 = vshrl.u32 %v4694, 7
        %v4696 = vsub.s32 %v4693, %v4695
        %v4697 = vrot.slane %v4688, %v4696
        %v4699 = vunpack.c.l.s4 1966171168
        %v4700 = vunpack.c.0.s8 %v4699
        %v4701 = vlaneseq
        %v4702 = vshrl.u32 %v4701, 7
        %v4703 = vsub.s32 %v4700, %v4702
        %v4704 = vrot.slane %v4690, %v4703
        %v4705 = vcombine.high %v4697, %v4697
        %v4706 = vcombine.high %v4704, %v4704
        %v4708 = vunpack.c.l.s4 1966171168
        %v4709 = vunpack.c.0.s8 %v4708
        %v4710 = vlaneseq
        %v4711 = vshrl.u32 %v4710, 7
        %v4712 = vsub.s32 %v4709, %v4711
        %v4713 = vrot.slane %v4697, %v4712
        %v4715 = vunpack.c.l.s4 1966171168
        %v4716 = vunpack.c.0.s8 %v4715
        %v4717 = vlaneseq
        %v4718 = vshrl.u32 %v4717, 7
        %v4719 = vsub.s32 %v4716, %v4718
        %v4720 = vrot.slane %v4704, %v4719
        %v4722 = vunpack.c.l.s4 1966171168
        %v4723 = vunpack.c.0.s8 %v4722
        %v4724 = vlaneseq
        %v4725 = vshrl.u32 %v4724, 7
        %v4726 = vsub.s32 %v4723, %v4725
        %v4727 = vrot.slane %v4705, %v4726
        %v4729 = vunpack.c.l.s4 1966171168
        %v4730 = vunpack.c.0.s8 %v4729
        %v4731 = vlaneseq
        %v4732 = vshrl.u32 %v4731, 7
        %v4733 = vsub.s32 %v4730, %v4732
        %v4734 = vrot.slane %v4706, %v4733
        %v4735 = vcombine.high %v4713, %v4713
        %v4736 = vcombine.high %v4720, %v4720
        %v4737 = vcombine.high %v4727, %v4727
        %v4738 = vcombine.high %v4734, %v4734
        %v4739 = vlaneseq
        %v4740 = vshrl.u32 %v4739, 7
        %v4741 = vsub.s32 0, %v4740
        %v4742 = vrot.slane %v4713, %v4741
        %v4743 = vlaneseq
        %v4744 = vshrl.u32 %v4743, 7
        %v4745 = vsub.s32 0, %v4744
        %v4746 = vrot.slane %v4727, %v4745
        %v4747 = vlaneseq
        %v4748 = vshrl.u32 %v4747, 7
        %v4749 = vsub.s32 0, %v4748
        %v4750 = vrot.slane %v4735, %v4749
        %v4751 = vlaneseq
        %v4752 = vshrl.u32 %v4751, 7
        %v4753 = vsub.s32 0, %v4752
        %v4754 = vrot.slane %v4737, %v4753
        %v4755 = vlaneseq
        %v4756 = vshrl.u32 %v4755, 7
        %v4757 = vsub.s32 0, %v4756
        %v4758 = vrot.slane %v4720, %v4757
        %v4759 = vlaneseq
        %v4760 = vshrl.u32 %v4759, 7
        %v4761 = vsub.s32 0, %v4760
        %v4762 = vrot.slane %v4734, %v4761
        %v4763 = vlaneseq
        %v4764 = vshrl.u32 %v4763, 7
        %v4765 = vsub.s32 0, %v4764
        %v4766 = vrot.slane %v4736, %v4765
        %v4767 = vlaneseq
        %v4768 = vshrl.u32 %v4767, 7
        %v4769 = vsub.s32 0, %v4768
        %v4770 = vrot.slane %v4738, %v4769
        %v4779 = vmul.f32 %v880, %v4742
        %v4780 = vmul.f32 %v885, %v4742
        %v4781 = vmul.f32 %v880, %v4746
        %v4782 = vmul.f32 %v885, %v4746
        %v4783 = vmul.f32 %v880, %v4750
        %v4784 = vmul.f32 %v885, %v4750
        %v4785 = vmul.f32 %v880, %v4754
        %v4786 = vmul.f32 %v885, %v4754
        %v4787 = vmul.f32 %v880, %v4758
        %v4788 = vmul.f32 %v885, %v4758
        %v4789 = vmul.f32 %v880, %v4762
        %v4790 = vmul.f32 %v885, %v4762
        %v4791 = vmul.f32 %v880, %v4766
        %v4792 = vmul.f32 %v885, %v4766
        %v4793 = vmul.f32 %v880, %v4770
        %v4794 = vmul.f32 %v885, %v4770
        %v4795 = vadd.f32 %v4779, 0.0
        %v4796 = vadd.f32 %v4780, 0.0
        %v4797 = vadd.f32 %v4781, 0.0
        %v4798 = vadd.f32 %v4782, 0.0
        %v4799 = vadd.f32 %v4783, 0.0
        %v4800 = vadd.f32 %v4784, 0.0
        %v4801 = vadd.f32 %v4785, 0.0
        %v4802 = vadd.f32 %v4786, 0.0
        %v4803 = vadd.f32 %v4787, 0.0
        %v4804 = vadd.f32 %v4788, 0.0
        %v4805 = vadd.f32 %v4789, 0.0
        %v4806 = vadd.f32 %v4790, 0.0
        %v4807 = vadd.f32 %v4791, 0.0
        %v4808 = vadd.f32 %v4792, 0.0
        %v4809 = vadd.f32 %v4793, 0.0
        %v4810 = vadd.f32 %v4794, 0.0
        %v4819 = vrot.slane %v4376, 4
        %v4820 = vrot.slane %v4386, 4
        %v4821 = vrot.slane %v4396, 4
        %v4822 = vrot.slane %v4406, 4
        %v4823 = vrot.slane %v4416, 4
        %v4824 = vrot.slane %v4426, 4
        %v4825 = vrot.slane %v4436, 4
        %v4826 = vrot.slane %v4446, 4
        %v4835 = vsel %vm564, %v4819, 0.0
        %v4836 = vrot.slane %v4835, 4
        %v4837 = vadd.f32 %v4835, %v4836
        %v4838 = vrot.slane %v4837, 2
        %v4839 = vadd.f32 %v4837, %v4838
        %v4840 = vrot.slane %v4839, 1
        %v4841 = vadd.f32 %v4839, %v4840
        %v4842 = vsel %vm564, %v4820, 0.0
        %v4843 = vrot.slane %v4842, 4
        %v4844 = vadd.f32 %v4842, %v4843
        %v4845 = vrot.slane %v4844, 2
        %v4846 = vadd.f32 %v4844, %v4845
        %v4847 = vrot.slane %v4846, 1
        %v4848 = vadd.f32 %v4846, %v4847
        %v4849 = vsel %vm564, %v4821, 0.0
        %v4850 = vrot.slane %v4849, 4
        %v4851 = vadd.f32 %v4849, %v4850
        %v4852 = vrot.slane %v4851, 2
        %v4853 = vadd.f32 %v4851, %v4852
        %v4854 = vrot.slane %v4853, 1
        %v4855 = vadd.f32 %v4853, %v4854
        %v4856 = vsel %vm564, %v4822, 0.0
        %v4857 = vrot.slane %v4856, 4
        %v4858 = vadd.f32 %v4856, %v4857
        %v4859 = vrot.slane %v4858, 2
        %v4860 = vadd.f32 %v4858, %v4859
        %v4861 = vrot.slane %v4860, 1
        %v4862 = vadd.f32 %v4860, %v4861
        %v4863 = vsel %vm564, %v4823, 0.0
        %v4864 = vrot.slane %v4863, 4
        %v4865 = vadd.f32 %v4863, %v4864
        %v4866 = vrot.slane %v4865, 2
        %v4867 = vadd.f32 %v4865, %v4866
        %v4868 = vrot.slane %v4867, 1
        %v4869 = vadd.f32 %v4867, %v4868
        %v4870 = vsel %vm564, %v4824, 0.0
        %v4871 = vrot.slane %v4870, 4
        %v4872 = vadd.f32 %v4870, %v4871
        %v4873 = vrot.slane %v4872, 2
        %v4874 = vadd.f32 %v4872, %v4873
        %v4875 = vrot.slane %v4874, 1
        %v4876 = vadd.f32 %v4874, %v4875
        %v4877 = vsel %vm564, %v4825, 0.0
        %v4878 = vrot.slane %v4877, 4
        %v4879 = vadd.f32 %v4877, %v4878
        %v4880 = vrot.slane %v4879, 2
        %v4881 = vadd.f32 %v4879, %v4880
        %v4882 = vrot.slane %v4881, 1
        %v4883 = vadd.f32 %v4881, %v4882
        %v4884 = vsel %vm564, %v4826, 0.0
        %v4885 = vrot.slane %v4884, 4
        %v4886 = vadd.f32 %v4884, %v4885
        %v4887 = vrot.slane %v4886, 2
        %v4888 = vadd.f32 %v4886, %v4887
        %v4889 = vrot.slane %v4888, 1
        %v4890 = vadd.f32 %v4888, %v4889
        %v4891 = vmul.f32 %v4841, %v621
        %v4892 = vmul.f32 %v4848, %v621
        %v4893 = vmul.f32 %v4855, %v621
        %v4894 = vmul.f32 %v4862, %v621
        %v4895 = vmul.f32 %v4869, %v621
        %v4896 = vmul.f32 %v4876, %v621
        %v4897 = vmul.f32 %v4883, %v621
        %v4898 = vmul.f32 %v4890, %v621
        %v4907 = vsel %vm643, %v4892, %v4891
        %v4908 = vsel %vm645, %v4893, %v4907
        %v4909 = vsel %vm647, %v4894, %v4908
        %v4910 = vsel %vm649, %v4895, %v4909
        %v4911 = vsel %vm651, %v4896, %v4910
        %v4912 = vsel %vm653, %v4897, %v4911
        %v4913 = vsel %vm655, %v4898, %v4912
        %4915 = vmatprep.subr.mxu0 0.0
        %4916 = vmatpush1.msra.mxu0 %v4913
        %4917 = vmatprep.subr.mxu0 0.0
        %4918 = vmatpush1.msra.mxu0 0.0
        %4919 = vmatprep.subr.mxu0 0.0
        %4920 = vmatpush1.msra.mxu0 0.0
        %4921 = vmatprep.subr.mxu0 0.0
        %4922 = vmatpush1.msra.mxu0 0.0
        %4923 = vmatprep.subr.mxu0 0.0
        %4924 = vmatpush1.msra.mxu0 0.0
        %4925 = vmatprep.subr.mxu0 0.0
        %4926 = vmatpush1.msra.mxu0 0.0
        %4927 = vmatprep.subr.mxu0 0.0
        %4928 = vmatpush1.msra.mxu0 0.0
        %4929 = vmatprep.subr.mxu0 0.0
        %4930 = vmatpush1.msra.mxu0 0.0
        %4931 = vmatprep.subr.mxu0 0.0
        %4932 = vmatpush1.msra.mxu0 0.0
        %4933 = vmatprep.subr.mxu0 0.0
        %4934 = vmatpush1.msra.mxu0 0.0
        %4935 = vmatprep.subr.mxu0 0.0
        %4936 = vmatpush1.msra.mxu0 0.0
        %4937 = vmatprep.subr.mxu0 0.0
        %4938 = vmatpush1.msra.mxu0 0.0
        %4939 = vmatprep.subr.mxu0 0.0
        %4940 = vmatpush1.msra.mxu0 0.0
        %4941 = vmatprep.subr.mxu0 0.0
        %4942 = vmatpush1.msra.mxu0 0.0
        %4943 = vmatprep.subr.mxu0 0.0
        %4944 = vmatpush1.msra.mxu0 0.0
        %4945 = vmatprep.subr.mxu0 0.0
        %4946 = vmatpush1.msra.mxu0 0.0
        %4947 = vmatprep.subr.mxu0 0.0
        %4948 = vmatpush1.msra.mxu0 0.0
        %4949 = vmatprep.subr.mxu0 0.0
        %4950 = vmatpush1.msra.mxu0 0.0
        %4951 = vmatprep.subr.mxu0 0.0
        %4952 = vmatpush1.msra.mxu0 0.0
        %4953 = vmatprep.subr.mxu0 0.0
        %4954 = vmatpush1.msra.mxu0 0.0
        %4955 = vmatprep.subr.mxu0 0.0
        %4956 = vmatpush1.msra.mxu0 0.0
        %4957 = vmatprep.subr.mxu0 0.0
        %4958 = vmatpush1.msra.mxu0 0.0
        %4959 = vmatprep.subr.mxu0 0.0
        %4960 = vmatpush1.msra.mxu0 0.0
        %4961 = vmatprep.subr.mxu0 0.0
        %4962 = vmatpush1.msra.mxu0 0.0
        %4963 = vmatprep.subr.mxu0 0.0
        %4964 = vmatpush1.msra.mxu0 0.0
        %4965 = vmatprep.subr.mxu0 0.0
        %4966 = vmatpush1.msra.mxu0 0.0
        %4967 = vmatprep.subr.mxu0 0.0
        %4968 = vmatpush1.msra.mxu0 0.0
        %4969 = vmatprep.subr.mxu0 0.0
        %4970 = vmatpush1.msra.mxu0 0.0
        %4971 = vmatprep.subr.mxu0 0.0
        %4972 = vmatpush1.msra.mxu0 0.0
        %4973 = vmatprep.subr.mxu0 0.0
        %4974 = vmatpush1.msra.mxu0 0.0
        %4975 = vmatprep.subr.mxu0 0.0
        %4976 = vmatpush1.msra.mxu0 0.0
        %4977 = vmatprep.subr.mxu0 0.0
        %4978 = vmatpush1.msra.mxu0 0.0
        %4979 = vmatprep.mubr.f32.mxu0 0.0
        %4980 = vmatmul.mubr.f32.gmra.mrb[0].mxu0 %v660
        %v4981 = vpop.f32.mrb[0].mxu0
        %v4982 = vadd.f32 %v633, %v4981
        %v4983 = vpop.f32.mrb[0].mxu0
        %4984 = vdwg.mxu0
        %v4985 = vmax.f32 %v4982, 0.0
        %v4986 = vmin.f32 %v4982, 0.0
        %v4987 = vmul.f32 %v4986, 1.442695
        %v4988 = vpow.pop %v4987
        %v4989 = vsub.f32 %v4988, 1.0
        %v4990 = vadd.f32 %v4985, %v4989
        %v4992 = vsel %vm747, %v4990, 0
        %4994 = vmatprep.subr.mxu0 0.0
        %4995 = vmatpush1.msra.mxu0 %v4992
        %4996 = vmatprep.subr.mxu0 0.0
        %4997 = vmatpush1.msra.mxu0 0.0
        %4998 = vmatprep.subr.mxu0 0.0
        %4999 = vmatpush1.msra.mxu0 0.0
        %5000 = vmatprep.subr.mxu0 0.0
        %5001 = vmatpush1.msra.mxu0 0.0
        %5002 = vmatprep.subr.mxu0 0.0
        %5003 = vmatpush1.msra.mxu0 0.0
        %5004 = vmatprep.subr.mxu0 0.0
        %5005 = vmatpush1.msra.mxu0 0.0
        %5006 = vmatprep.subr.mxu0 0.0
        %5007 = vmatpush1.msra.mxu0 0.0
        %5008 = vmatprep.subr.mxu0 0.0
        %5009 = vmatpush1.msra.mxu0 0.0
        %5010 = vmatprep.subr.mxu0 0.0
        %5011 = vmatpush1.msra.mxu0 0.0
        %5012 = vmatprep.subr.mxu0 0.0
        %5013 = vmatpush1.msra.mxu0 0.0
        %5014 = vmatprep.subr.mxu0 0.0
        %5015 = vmatpush1.msra.mxu0 0.0
        %5016 = vmatprep.subr.mxu0 0.0
        %5017 = vmatpush1.msra.mxu0 0.0
        %5018 = vmatprep.subr.mxu0 0.0
        %5019 = vmatpush1.msra.mxu0 0.0
        %5020 = vmatprep.subr.mxu0 0.0
        %5021 = vmatpush1.msra.mxu0 0.0
        %5022 = vmatprep.subr.mxu0 0.0
        %5023 = vmatpush1.msra.mxu0 0.0
        %5024 = vmatprep.subr.mxu0 0.0
        %5025 = vmatpush1.msra.mxu0 0.0
        %5026 = vmatprep.subr.mxu0 0.0
        %5027 = vmatpush1.msra.mxu0 0.0
        %5028 = vmatprep.subr.mxu0 0.0
        %5029 = vmatpush1.msra.mxu0 0.0
        %5030 = vmatprep.subr.mxu0 0.0
        %5031 = vmatpush1.msra.mxu0 0.0
        %5032 = vmatprep.subr.mxu0 0.0
        %5033 = vmatpush1.msra.mxu0 0.0
        %5034 = vmatprep.subr.mxu0 0.0
        %5035 = vmatpush1.msra.mxu0 0.0
        %5036 = vmatprep.subr.mxu0 0.0
        %5037 = vmatpush1.msra.mxu0 0.0
        %5038 = vmatprep.subr.mxu0 0.0
        %5039 = vmatpush1.msra.mxu0 0.0
        %5040 = vmatprep.subr.mxu0 0.0
        %5041 = vmatpush1.msra.mxu0 0.0
        %5042 = vmatprep.subr.mxu0 0.0
        %5043 = vmatpush1.msra.mxu0 0.0
        %5044 = vmatprep.subr.mxu0 0.0
        %5045 = vmatpush1.msra.mxu0 0.0
        %5046 = vmatprep.subr.mxu0 0.0
        %5047 = vmatpush1.msra.mxu0 0.0
        %5048 = vmatprep.subr.mxu0 0.0
        %5049 = vmatpush1.msra.mxu0 0.0
        %5050 = vmatprep.subr.mxu0 0.0
        %5051 = vmatpush1.msra.mxu0 0.0
        %5052 = vmatprep.subr.mxu0 0.0
        %5053 = vmatpush1.msra.mxu0 0.0
        %5054 = vmatprep.subr.mxu0 0.0
        %5055 = vmatpush1.msra.mxu0 0.0
        %5056 = vmatprep.subr.mxu0 0.0
        %5057 = vmatpush1.msra.mxu0 0.0
        %5058 = vmatprep.mubr.f32.mxu0 0.0
        %5059 = vmatmul.mubr.f32.gmra.mrb[0].mxu0 %v745
        %v5060 = vpop.f32.mrb[0].mxu0
        %v5061 = vadd.f32 %v741, %v5060
        %v5062 = vpop.f32.mrb[0].mxu0
        %5063 = vdwg.mxu0
        %v5064 = vsub.f32 0.0, %v5061
        %v5065 = vmul.f32 %v5064, 1.442695
        %v5066 = vpow.pop %v5065
        %v5067 = vadd.f32 %v5066, 1.0
        %v5068 = vrcp.pop %v5067
        %v5069 = vmul.f32 1.0, %v5068
        %v5071 = vcombine.high %v5069, %v5069
        %v5073 = vunpack.c.l.s4 1966171168
        %v5074 = vunpack.c.0.s8 %v5073
        %v5075 = vlaneseq
        %v5076 = vshrl.u32 %v5075, 7
        %v5077 = vsub.s32 %v5074, %v5076
        %v5078 = vrot.slane %v5069, %v5077
        %v5080 = vunpack.c.l.s4 1966171168
        %v5081 = vunpack.c.0.s8 %v5080
        %v5082 = vlaneseq
        %v5083 = vshrl.u32 %v5082, 7
        %v5084 = vsub.s32 %v5081, %v5083
        %v5085 = vrot.slane %v5071, %v5084
        %v5086 = vcombine.high %v5078, %v5078
        %v5087 = vcombine.high %v5085, %v5085
        %v5089 = vunpack.c.l.s4 1966171168
        %v5090 = vunpack.c.0.s8 %v5089
        %v5091 = vlaneseq
        %v5092 = vshrl.u32 %v5091, 7
        %v5093 = vsub.s32 %v5090, %v5092
        %v5094 = vrot.slane %v5078, %v5093
        %v5096 = vunpack.c.l.s4 1966171168
        %v5097 = vunpack.c.0.s8 %v5096
        %v5098 = vlaneseq
        %v5099 = vshrl.u32 %v5098, 7
        %v5100 = vsub.s32 %v5097, %v5099
        %v5101 = vrot.slane %v5085, %v5100
        %v5103 = vunpack.c.l.s4 1966171168
        %v5104 = vunpack.c.0.s8 %v5103
        %v5105 = vlaneseq
        %v5106 = vshrl.u32 %v5105, 7
        %v5107 = vsub.s32 %v5104, %v5106
        %v5108 = vrot.slane %v5086, %v5107
        %v5110 = vunpack.c.l.s4 1966171168
        %v5111 = vunpack.c.0.s8 %v5110
        %v5112 = vlaneseq
        %v5113 = vshrl.u32 %v5112, 7
        %v5114 = vsub.s32 %v5111, %v5113
        %v5115 = vrot.slane %v5087, %v5114
        %v5116 = vcombine.high %v5094, %v5094
        %v5117 = vcombine.high %v5101, %v5101
        %v5118 = vcombine.high %v5108, %v5108
        %v5119 = vcombine.high %v5115, %v5115
        %v5120 = vlaneseq
        %v5121 = vshrl.u32 %v5120, 7
        %v5122 = vsub.s32 0, %v5121
        %v5123 = vrot.slane %v5094, %v5122
        %v5124 = vlaneseq
        %v5125 = vshrl.u32 %v5124, 7
        %v5126 = vsub.s32 0, %v5125
        %v5127 = vrot.slane %v5108, %v5126
        %v5128 = vlaneseq
        %v5129 = vshrl.u32 %v5128, 7
        %v5130 = vsub.s32 0, %v5129
        %v5131 = vrot.slane %v5116, %v5130
        %v5132 = vlaneseq
        %v5133 = vshrl.u32 %v5132, 7
        %v5134 = vsub.s32 0, %v5133
        %v5135 = vrot.slane %v5118, %v5134
        %v5136 = vlaneseq
        %v5137 = vshrl.u32 %v5136, 7
        %v5138 = vsub.s32 0, %v5137
        %v5139 = vrot.slane %v5101, %v5138
        %v5140 = vlaneseq
        %v5141 = vshrl.u32 %v5140, 7
        %v5142 = vsub.s32 0, %v5141
        %v5143 = vrot.slane %v5115, %v5142
        %v5144 = vlaneseq
        %v5145 = vshrl.u32 %v5144, 7
        %v5146 = vsub.s32 0, %v5145
        %v5147 = vrot.slane %v5117, %v5146
        %v5148 = vlaneseq
        %v5149 = vshrl.u32 %v5148, 7
        %v5150 = vsub.s32 0, %v5149
        %v5151 = vrot.slane %v5119, %v5150
        %v5160 = vmul.f32 %v1270, %v5123
        %v5161 = vmul.f32 %v1274, %v5123
        %v5162 = vmul.f32 %v1270, %v5127
        %v5163 = vmul.f32 %v1274, %v5127
        %v5164 = vmul.f32 %v1270, %v5131
        %v5165 = vmul.f32 %v1274, %v5131
        %v5166 = vmul.f32 %v1270, %v5135
        %v5167 = vmul.f32 %v1274, %v5135
        %v5168 = vmul.f32 %v1270, %v5139
        %v5169 = vmul.f32 %v1274, %v5139
        %v5170 = vmul.f32 %v1270, %v5143
        %v5171 = vmul.f32 %v1274, %v5143
        %v5172 = vmul.f32 %v1270, %v5147
        %v5173 = vmul.f32 %v1274, %v5147
        %v5174 = vmul.f32 %v1270, %v5151
        %v5175 = vmul.f32 %v1274, %v5151
        %v5176 = vadd.f32 %v4795, %v5160
        %v5177 = vadd.f32 %v4796, %v5161
        %v5178 = vadd.f32 %v4797, %v5162
        %v5179 = vadd.f32 %v4798, %v5163
        %v5180 = vadd.f32 %v4799, %v5164
        %v5181 = vadd.f32 %v4800, %v5165
        %v5182 = vadd.f32 %v4801, %v5166
        %v5183 = vadd.f32 %v4802, %v5167
        %v5184 = vadd.f32 %v4803, %v5168
        %v5185 = vadd.f32 %v4804, %v5169
        %v5186 = vadd.f32 %v4805, %v5170
        %v5187 = vadd.f32 %v4806, %v5171
        %v5188 = vadd.f32 %v4807, %v5172
        %v5189 = vadd.f32 %v4808, %v5173
        %v5190 = vadd.f32 %v4809, %v5174
        %v5191 = vadd.f32 %v4810, %v5175
        %v5192 = vsel %vm564, %v4381, 0.0
        %v5193 = vrot.slane %v5192, 4
        %v5194 = vadd.f32 %v5192, %v5193
        %v5195 = vrot.slane %v5194, 2
        %v5196 = vadd.f32 %v5194, %v5195
        %v5197 = vrot.slane %v5196, 1
        %v5198 = vadd.f32 %v5196, %v5197
        %v5199 = vsel %vm564, %v4391, 0.0
        %v5200 = vrot.slane %v5199, 4
        %v5201 = vadd.f32 %v5199, %v5200
        %v5202 = vrot.slane %v5201, 2
        %v5203 = vadd.f32 %v5201, %v5202
        %v5204 = vrot.slane %v5203, 1
        %v5205 = vadd.f32 %v5203, %v5204
        %v5206 = vsel %vm564, %v4401, 0.0
        %v5207 = vrot.slane %v5206, 4
        %v5208 = vadd.f32 %v5206, %v5207
        %v5209 = vrot.slane %v5208, 2
        %v5210 = vadd.f32 %v5208, %v5209
        %v5211 = vrot.slane %v5210, 1
        %v5212 = vadd.f32 %v5210, %v5211
        %v5213 = vsel %vm564, %v4411, 0.0
        %v5214 = vrot.slane %v5213, 4
        %v5215 = vadd.f32 %v5213, %v5214
        %v5216 = vrot.slane %v5215, 2
        %v5217 = vadd.f32 %v5215, %v5216
        %v5218 = vrot.slane %v5217, 1
        %v5219 = vadd.f32 %v5217, %v5218
        %v5220 = vsel %vm564, %v4421, 0.0
        %v5221 = vrot.slane %v5220, 4
        %v5222 = vadd.f32 %v5220, %v5221
        %v5223 = vrot.slane %v5222, 2
        %v5224 = vadd.f32 %v5222, %v5223
        %v5225 = vrot.slane %v5224, 1
        %v5226 = vadd.f32 %v5224, %v5225
        %v5227 = vsel %vm564, %v4431, 0.0
        %v5228 = vrot.slane %v5227, 4
        %v5229 = vadd.f32 %v5227, %v5228
        %v5230 = vrot.slane %v5229, 2
        %v5231 = vadd.f32 %v5229, %v5230
        %v5232 = vrot.slane %v5231, 1
        %v5233 = vadd.f32 %v5231, %v5232
        %v5234 = vsel %vm564, %v4441, 0.0
        %v5235 = vrot.slane %v5234, 4
        %v5236 = vadd.f32 %v5234, %v5235
        %v5237 = vrot.slane %v5236, 2
        %v5238 = vadd.f32 %v5236, %v5237
        %v5239 = vrot.slane %v5238, 1
        %v5240 = vadd.f32 %v5238, %v5239
        %v5241 = vsel %vm564, %v4451, 0.0
        %v5242 = vrot.slane %v5241, 4
        %v5243 = vadd.f32 %v5241, %v5242
        %v5244 = vrot.slane %v5243, 2
        %v5245 = vadd.f32 %v5243, %v5244
        %v5246 = vrot.slane %v5245, 1
        %v5247 = vadd.f32 %v5245, %v5246
        %v5248 = vmul.f32 %v5198, %v621
        %v5249 = vmul.f32 %v5205, %v621
        %v5250 = vmul.f32 %v5212, %v621
        %v5251 = vmul.f32 %v5219, %v621
        %v5252 = vmul.f32 %v5226, %v621
        %v5253 = vmul.f32 %v5233, %v621
        %v5254 = vmul.f32 %v5240, %v621
        %v5255 = vmul.f32 %v5247, %v621
        %v5264 = vsel %vm643, %v5249, %v5248
        %v5265 = vsel %vm645, %v5250, %v5264
        %v5266 = vsel %vm647, %v5251, %v5265
        %v5267 = vsel %vm649, %v5252, %v5266
        %v5268 = vsel %vm651, %v5253, %v5267
        %v5269 = vsel %vm653, %v5254, %v5268
        %v5270 = vsel %vm655, %v5255, %v5269
        %5272 = vmatprep.subr.mxu0 0.0
        %5273 = vmatpush1.msra.mxu0 %v5270
        %5274 = vmatprep.subr.mxu0 0.0
        %5275 = vmatpush1.msra.mxu0 0.0
        %5276 = vmatprep.subr.mxu0 0.0
        %5277 = vmatpush1.msra.mxu0 0.0
        %5278 = vmatprep.subr.mxu0 0.0
        %5279 = vmatpush1.msra.mxu0 0.0
        %5280 = vmatprep.subr.mxu0 0.0
        %5281 = vmatpush1.msra.mxu0 0.0
        %5282 = vmatprep.subr.mxu0 0.0
        %5283 = vmatpush1.msra.mxu0 0.0
        %5284 = vmatprep.subr.mxu0 0.0
        %5285 = vmatpush1.msra.mxu0 0.0
        %5286 = vmatprep.subr.mxu0 0.0
        %5287 = vmatpush1.msra.mxu0 0.0
        %5288 = vmatprep.subr.mxu0 0.0
        %5289 = vmatpush1.msra.mxu0 0.0
        %5290 = vmatprep.subr.mxu0 0.0
        %5291 = vmatpush1.msra.mxu0 0.0
        %5292 = vmatprep.subr.mxu0 0.0
        %5293 = vmatpush1.msra.mxu0 0.0
        %5294 = vmatprep.subr.mxu0 0.0
        %5295 = vmatpush1.msra.mxu0 0.0
        %5296 = vmatprep.subr.mxu0 0.0
        %5297 = vmatpush1.msra.mxu0 0.0
        %5298 = vmatprep.subr.mxu0 0.0
        %5299 = vmatpush1.msra.mxu0 0.0
        %5300 = vmatprep.subr.mxu0 0.0
        %5301 = vmatpush1.msra.mxu0 0.0
        %5302 = vmatprep.subr.mxu0 0.0
        %5303 = vmatpush1.msra.mxu0 0.0
        %5304 = vmatprep.subr.mxu0 0.0
        %5305 = vmatpush1.msra.mxu0 0.0
        %5306 = vmatprep.subr.mxu0 0.0
        %5307 = vmatpush1.msra.mxu0 0.0
        %5308 = vmatprep.subr.mxu0 0.0
        %5309 = vmatpush1.msra.mxu0 0.0
        %5310 = vmatprep.subr.mxu0 0.0
        %5311 = vmatpush1.msra.mxu0 0.0
        %5312 = vmatprep.subr.mxu0 0.0
        %5313 = vmatpush1.msra.mxu0 0.0
        %5314 = vmatprep.subr.mxu0 0.0
        %5315 = vmatpush1.msra.mxu0 0.0
        %5316 = vmatprep.subr.mxu0 0.0
        %5317 = vmatpush1.msra.mxu0 0.0
        %5318 = vmatprep.subr.mxu0 0.0
        %5319 = vmatpush1.msra.mxu0 0.0
        %5320 = vmatprep.subr.mxu0 0.0
        %5321 = vmatpush1.msra.mxu0 0.0
        %5322 = vmatprep.subr.mxu0 0.0
        %5323 = vmatpush1.msra.mxu0 0.0
        %5324 = vmatprep.subr.mxu0 0.0
        %5325 = vmatpush1.msra.mxu0 0.0
        %5326 = vmatprep.subr.mxu0 0.0
        %5327 = vmatpush1.msra.mxu0 0.0
        %5328 = vmatprep.subr.mxu0 0.0
        %5329 = vmatpush1.msra.mxu0 0.0
        %5330 = vmatprep.subr.mxu0 0.0
        %5331 = vmatpush1.msra.mxu0 0.0
        %5332 = vmatprep.subr.mxu0 0.0
        %5333 = vmatpush1.msra.mxu0 0.0
        %5334 = vmatprep.subr.mxu0 0.0
        %5335 = vmatpush1.msra.mxu0 0.0
        %5336 = vmatprep.mubr.f32.mxu0 0.0
        %5337 = vmatmul.mubr.f32.gmra.mrb[0].mxu0 %v660
        %v5338 = vpop.f32.mrb[0].mxu0
        %v5339 = vadd.f32 %v633, %v5338
        %v5340 = vpop.f32.mrb[0].mxu0
        %5341 = vdwg.mxu0
        %v5342 = vmax.f32 %v5339, 0.0
        %v5343 = vmin.f32 %v5339, 0.0
        %v5344 = vmul.f32 %v5343, 1.442695
        %v5345 = vpow.pop %v5344
        %v5346 = vsub.f32 %v5345, 1.0
        %v5347 = vadd.f32 %v5342, %v5346
        %v5349 = vsel %vm747, %v5347, 0
        %5351 = vmatprep.subr.mxu0 0.0
        %5352 = vmatpush1.msra.mxu0 %v5349
        %5353 = vmatprep.subr.mxu0 0.0
        %5354 = vmatpush1.msra.mxu0 0.0
        %5355 = vmatprep.subr.mxu0 0.0
        %5356 = vmatpush1.msra.mxu0 0.0
        %5357 = vmatprep.subr.mxu0 0.0
        %5358 = vmatpush1.msra.mxu0 0.0
        %5359 = vmatprep.subr.mxu0 0.0
        %5360 = vmatpush1.msra.mxu0 0.0
        %5361 = vmatprep.subr.mxu0 0.0
        %5362 = vmatpush1.msra.mxu0 0.0
        %5363 = vmatprep.subr.mxu0 0.0
        %5364 = vmatpush1.msra.mxu0 0.0
        %5365 = vmatprep.subr.mxu0 0.0
        %5366 = vmatpush1.msra.mxu0 0.0
        %5367 = vmatprep.subr.mxu0 0.0
        %5368 = vmatpush1.msra.mxu0 0.0
        %5369 = vmatprep.subr.mxu0 0.0
        %5370 = vmatpush1.msra.mxu0 0.0
        %5371 = vmatprep.subr.mxu0 0.0
        %5372 = vmatpush1.msra.mxu0 0.0
        %5373 = vmatprep.subr.mxu0 0.0
        %5374 = vmatpush1.msra.mxu0 0.0
        %5375 = vmatprep.subr.mxu0 0.0
        %5376 = vmatpush1.msra.mxu0 0.0
        %5377 = vmatprep.subr.mxu0 0.0
        %5378 = vmatpush1.msra.mxu0 0.0
        %5379 = vmatprep.subr.mxu0 0.0
        %5380 = vmatpush1.msra.mxu0 0.0
        %5381 = vmatprep.subr.mxu0 0.0
        %5382 = vmatpush1.msra.mxu0 0.0
        %5383 = vmatprep.subr.mxu0 0.0
        %5384 = vmatpush1.msra.mxu0 0.0
        %5385 = vmatprep.subr.mxu0 0.0
        %5386 = vmatpush1.msra.mxu0 0.0
        %5387 = vmatprep.subr.mxu0 0.0
        %5388 = vmatpush1.msra.mxu0 0.0
        %5389 = vmatprep.subr.mxu0 0.0
        %5390 = vmatpush1.msra.mxu0 0.0
        %5391 = vmatprep.subr.mxu0 0.0
        %5392 = vmatpush1.msra.mxu0 0.0
        %5393 = vmatprep.subr.mxu0 0.0
        %5394 = vmatpush1.msra.mxu0 0.0
        %5395 = vmatprep.subr.mxu0 0.0
        %5396 = vmatpush1.msra.mxu0 0.0
        %5397 = vmatprep.subr.mxu0 0.0
        %5398 = vmatpush1.msra.mxu0 0.0
        %5399 = vmatprep.subr.mxu0 0.0
        %5400 = vmatpush1.msra.mxu0 0.0
        %5401 = vmatprep.subr.mxu0 0.0
        %5402 = vmatpush1.msra.mxu0 0.0
        %5403 = vmatprep.subr.mxu0 0.0
        %5404 = vmatpush1.msra.mxu0 0.0
        %5405 = vmatprep.subr.mxu0 0.0
        %5406 = vmatpush1.msra.mxu0 0.0
        %5407 = vmatprep.subr.mxu0 0.0
        %5408 = vmatpush1.msra.mxu0 0.0
        %5409 = vmatprep.subr.mxu0 0.0
        %5410 = vmatpush1.msra.mxu0 0.0
        %5411 = vmatprep.subr.mxu0 0.0
        %5412 = vmatpush1.msra.mxu0 0.0
        %5413 = vmatprep.subr.mxu0 0.0
        %5414 = vmatpush1.msra.mxu0 0.0
        %5415 = vmatprep.mubr.f32.mxu0 0.0
        %5416 = vmatmul.mubr.f32.gmra.mrb[0].mxu0 %v745
        %v5417 = vpop.f32.mrb[0].mxu0
        %v5418 = vadd.f32 %v741, %v5417
        %v5419 = vpop.f32.mrb[0].mxu0
        %5420 = vdwg.mxu0
        %v5421 = vsub.f32 0.0, %v5418
        %v5422 = vmul.f32 %v5421, 1.442695
        %v5423 = vpow.pop %v5422
        %v5424 = vadd.f32 %v5423, 1.0
        %v5425 = vrcp.pop %v5424
        %v5426 = vmul.f32 1.0, %v5425
        %v5428 = vcombine.high %v5426, %v5426
        %v5430 = vunpack.c.l.s4 1966171168
        %v5431 = vunpack.c.0.s8 %v5430
        %v5432 = vlaneseq
        %v5433 = vshrl.u32 %v5432, 7
        %v5434 = vsub.s32 %v5431, %v5433
        %v5435 = vrot.slane %v5426, %v5434
        %v5437 = vunpack.c.l.s4 1966171168
        %v5438 = vunpack.c.0.s8 %v5437
        %v5439 = vlaneseq
        %v5440 = vshrl.u32 %v5439, 7
        %v5441 = vsub.s32 %v5438, %v5440
        %v5442 = vrot.slane %v5428, %v5441
        %v5443 = vcombine.high %v5435, %v5435
        %v5444 = vcombine.high %v5442, %v5442
        %v5446 = vunpack.c.l.s4 1966171168
        %v5447 = vunpack.c.0.s8 %v5446
        %v5448 = vlaneseq
        %v5449 = vshrl.u32 %v5448, 7
        %v5450 = vsub.s32 %v5447, %v5449
        %v5451 = vrot.slane %v5435, %v5450
        %v5453 = vunpack.c.l.s4 1966171168
        %v5454 = vunpack.c.0.s8 %v5453
        %v5455 = vlaneseq
        %v5456 = vshrl.u32 %v5455, 7
        %v5457 = vsub.s32 %v5454, %v5456
        %v5458 = vrot.slane %v5442, %v5457
        %v5460 = vunpack.c.l.s4 1966171168
        %v5461 = vunpack.c.0.s8 %v5460
        %v5462 = vlaneseq
        %v5463 = vshrl.u32 %v5462, 7
        %v5464 = vsub.s32 %v5461, %v5463
        %v5465 = vrot.slane %v5443, %v5464
        %v5467 = vunpack.c.l.s4 1966171168
        %v5468 = vunpack.c.0.s8 %v5467
        %v5469 = vlaneseq
        %v5470 = vshrl.u32 %v5469, 7
        %v5471 = vsub.s32 %v5468, %v5470
        %v5472 = vrot.slane %v5444, %v5471
        %v5473 = vcombine.high %v5451, %v5451
        %v5474 = vcombine.high %v5458, %v5458
        %v5475 = vcombine.high %v5465, %v5465
        %v5476 = vcombine.high %v5472, %v5472
        %v5477 = vlaneseq
        %v5478 = vshrl.u32 %v5477, 7
        %v5479 = vsub.s32 0, %v5478
        %v5480 = vrot.slane %v5451, %v5479
        %v5481 = vlaneseq
        %v5482 = vshrl.u32 %v5481, 7
        %v5483 = vsub.s32 0, %v5482
        %v5484 = vrot.slane %v5465, %v5483
        %v5485 = vlaneseq
        %v5486 = vshrl.u32 %v5485, 7
        %v5487 = vsub.s32 0, %v5486
        %v5488 = vrot.slane %v5473, %v5487
        %v5489 = vlaneseq
        %v5490 = vshrl.u32 %v5489, 7
        %v5491 = vsub.s32 0, %v5490
        %v5492 = vrot.slane %v5475, %v5491
        %v5493 = vlaneseq
        %v5494 = vshrl.u32 %v5493, 7
        %v5495 = vsub.s32 0, %v5494
        %v5496 = vrot.slane %v5458, %v5495
        %v5497 = vlaneseq
        %v5498 = vshrl.u32 %v5497, 7
        %v5499 = vsub.s32 0, %v5498
        %v5500 = vrot.slane %v5472, %v5499
        %v5501 = vlaneseq
        %v5502 = vshrl.u32 %v5501, 7
        %v5503 = vsub.s32 0, %v5502
        %v5504 = vrot.slane %v5474, %v5503
        %v5505 = vlaneseq
        %v5506 = vshrl.u32 %v5505, 7
        %v5507 = vsub.s32 0, %v5506
        %v5508 = vrot.slane %v5476, %v5507
        %v5517 = vmul.f32 %v1635, %v5480
        %v5518 = vmul.f32 %v1639, %v5480
        %v5519 = vmul.f32 %v1635, %v5484
        %v5520 = vmul.f32 %v1639, %v5484
        %v5521 = vmul.f32 %v1635, %v5488
        %v5522 = vmul.f32 %v1639, %v5488
        %v5523 = vmul.f32 %v1635, %v5492
        %v5524 = vmul.f32 %v1639, %v5492
        %v5525 = vmul.f32 %v1635, %v5496
        %v5526 = vmul.f32 %v1639, %v5496
        %v5527 = vmul.f32 %v1635, %v5500
        %v5528 = vmul.f32 %v1639, %v5500
        %v5529 = vmul.f32 %v1635, %v5504
        %v5530 = vmul.f32 %v1639, %v5504
        %v5531 = vmul.f32 %v1635, %v5508
        %v5532 = vmul.f32 %v1639, %v5508
        %v5533 = vadd.f32 %v5176, %v5517
        %v5534 = vadd.f32 %v5177, %v5518
        %v5535 = vadd.f32 %v5178, %v5519
        %v5536 = vadd.f32 %v5179, %v5520
        %v5537 = vadd.f32 %v5180, %v5521
        %v5538 = vadd.f32 %v5181, %v5522
        %v5539 = vadd.f32 %v5182, %v5523
        %v5540 = vadd.f32 %v5183, %v5524
        %v5541 = vadd.f32 %v5184, %v5525
        %v5542 = vadd.f32 %v5185, %v5526
        %v5543 = vadd.f32 %v5186, %v5527
        %v5544 = vadd.f32 %v5187, %v5528
        %v5545 = vadd.f32 %v5188, %v5529
        %v5546 = vadd.f32 %v5189, %v5530
        %v5547 = vadd.f32 %v5190, %v5531
        %v5548 = vadd.f32 %v5191, %v5532
        %v5557 = vrot.slane %v4381, 4
        %v5558 = vrot.slane %v4391, 4
        %v5559 = vrot.slane %v4401, 4
        %v5560 = vrot.slane %v4411, 4
        %v5561 = vrot.slane %v4421, 4
        %v5562 = vrot.slane %v4431, 4
        %v5563 = vrot.slane %v4441, 4
        %v5564 = vrot.slane %v4451, 4
        %v5573 = vsel %vm564, %v5557, 0.0
        %v5574 = vrot.slane %v5573, 4
        %v5575 = vadd.f32 %v5573, %v5574
        %v5576 = vrot.slane %v5575, 2
        %v5577 = vadd.f32 %v5575, %v5576
        %v5578 = vrot.slane %v5577, 1
        %v5579 = vadd.f32 %v5577, %v5578
        %v5580 = vsel %vm564, %v5558, 0.0
        %v5581 = vrot.slane %v5580, 4
        %v5582 = vadd.f32 %v5580, %v5581
        %v5583 = vrot.slane %v5582, 2
        %v5584 = vadd.f32 %v5582, %v5583
        %v5585 = vrot.slane %v5584, 1
        %v5586 = vadd.f32 %v5584, %v5585
        %v5587 = vsel %vm564, %v5559, 0.0
        %v5588 = vrot.slane %v5587, 4
        %v5589 = vadd.f32 %v5587, %v5588
        %v5590 = vrot.slane %v5589, 2
        %v5591 = vadd.f32 %v5589, %v5590
        %v5592 = vrot.slane %v5591, 1
        %v5593 = vadd.f32 %v5591, %v5592
        %v5594 = vsel %vm564, %v5560, 0.0
        %v5595 = vrot.slane %v5594, 4
        %v5596 = vadd.f32 %v5594, %v5595
        %v5597 = vrot.slane %v5596, 2
        %v5598 = vadd.f32 %v5596, %v5597
        %v5599 = vrot.slane %v5598, 1
        %v5600 = vadd.f32 %v5598, %v5599
        %v5601 = vsel %vm564, %v5561, 0.0
        %v5602 = vrot.slane %v5601, 4
        %v5603 = vadd.f32 %v5601, %v5602
        %v5604 = vrot.slane %v5603, 2
        %v5605 = vadd.f32 %v5603, %v5604
        %v5606 = vrot.slane %v5605, 1
        %v5607 = vadd.f32 %v5605, %v5606
        %v5608 = vsel %vm564, %v5562, 0.0
        %v5609 = vrot.slane %v5608, 4
        %v5610 = vadd.f32 %v5608, %v5609
        %v5611 = vrot.slane %v5610, 2
        %v5612 = vadd.f32 %v5610, %v5611
        %v5613 = vrot.slane %v5612, 1
        %v5614 = vadd.f32 %v5612, %v5613
        %v5615 = vsel %vm564, %v5563, 0.0
        %v5616 = vrot.slane %v5615, 4
        %v5617 = vadd.f32 %v5615, %v5616
        %v5618 = vrot.slane %v5617, 2
        %v5619 = vadd.f32 %v5617, %v5618
        %v5620 = vrot.slane %v5619, 1
        %v5621 = vadd.f32 %v5619, %v5620
        %v5622 = vsel %vm564, %v5564, 0.0
        %v5623 = vrot.slane %v5622, 4
        %v5624 = vadd.f32 %v5622, %v5623
        %v5625 = vrot.slane %v5624, 2
        %v5626 = vadd.f32 %v5624, %v5625
        %v5627 = vrot.slane %v5626, 1
        %v5628 = vadd.f32 %v5626, %v5627
        %v5629 = vmul.f32 %v5579, %v621
        %v5630 = vmul.f32 %v5586, %v621
        %v5631 = vmul.f32 %v5593, %v621
        %v5632 = vmul.f32 %v5600, %v621
        %v5633 = vmul.f32 %v5607, %v621
        %v5634 = vmul.f32 %v5614, %v621
        %v5635 = vmul.f32 %v5621, %v621
        %v5636 = vmul.f32 %v5628, %v621
        %v5645 = vsel %vm643, %v5630, %v5629
        %v5646 = vsel %vm645, %v5631, %v5645
        %v5647 = vsel %vm647, %v5632, %v5646
        %v5648 = vsel %vm649, %v5633, %v5647
        %v5649 = vsel %vm651, %v5634, %v5648
        %v5650 = vsel %vm653, %v5635, %v5649
        %v5651 = vsel %vm655, %v5636, %v5650
        %5653 = vmatprep.subr.mxu0 0.0
        %5654 = vmatpush1.msra.mxu0 %v5651
        %5655 = vmatprep.subr.mxu0 0.0
        %5656 = vmatpush1.msra.mxu0 0.0
        %5657 = vmatprep.subr.mxu0 0.0
        %5658 = vmatpush1.msra.mxu0 0.0
        %5659 = vmatprep.subr.mxu0 0.0
        %5660 = vmatpush1.msra.mxu0 0.0
        %5661 = vmatprep.subr.mxu0 0.0
        %5662 = vmatpush1.msra.mxu0 0.0
        %5663 = vmatprep.subr.mxu0 0.0
        %5664 = vmatpush1.msra.mxu0 0.0
        %5665 = vmatprep.subr.mxu0 0.0
        %5666 = vmatpush1.msra.mxu0 0.0
        %5667 = vmatprep.subr.mxu0 0.0
        %5668 = vmatpush1.msra.mxu0 0.0
        %5669 = vmatprep.subr.mxu0 0.0
        %5670 = vmatpush1.msra.mxu0 0.0
        %5671 = vmatprep.subr.mxu0 0.0
        %5672 = vmatpush1.msra.mxu0 0.0
        %5673 = vmatprep.subr.mxu0 0.0
        %5674 = vmatpush1.msra.mxu0 0.0
        %5675 = vmatprep.subr.mxu0 0.0
        %5676 = vmatpush1.msra.mxu0 0.0
        %5677 = vmatprep.subr.mxu0 0.0
        %5678 = vmatpush1.msra.mxu0 0.0
        %5679 = vmatprep.subr.mxu0 0.0
        %5680 = vmatpush1.msra.mxu0 0.0
        %5681 = vmatprep.subr.mxu0 0.0
        %5682 = vmatpush1.msra.mxu0 0.0
        %5683 = vmatprep.subr.mxu0 0.0
        %5684 = vmatpush1.msra.mxu0 0.0
        %5685 = vmatprep.subr.mxu0 0.0
        %5686 = vmatpush1.msra.mxu0 0.0
        %5687 = vmatprep.subr.mxu0 0.0
        %5688 = vmatpush1.msra.mxu0 0.0
        %5689 = vmatprep.subr.mxu0 0.0
        %5690 = vmatpush1.msra.mxu0 0.0
        %5691 = vmatprep.subr.mxu0 0.0
        %5692 = vmatpush1.msra.mxu0 0.0
        %5693 = vmatprep.subr.mxu0 0.0
        %5694 = vmatpush1.msra.mxu0 0.0
        %5695 = vmatprep.subr.mxu0 0.0
        %5696 = vmatpush1.msra.mxu0 0.0
        %5697 = vmatprep.subr.mxu0 0.0
        %5698 = vmatpush1.msra.mxu0 0.0
        %5699 = vmatprep.subr.mxu0 0.0
        %5700 = vmatpush1.msra.mxu0 0.0
        %5701 = vmatprep.subr.mxu0 0.0
        %5702 = vmatpush1.msra.mxu0 0.0
        %5703 = vmatprep.subr.mxu0 0.0
        %5704 = vmatpush1.msra.mxu0 0.0
        %5705 = vmatprep.subr.mxu0 0.0
        %5706 = vmatpush1.msra.mxu0 0.0
        %5707 = vmatprep.subr.mxu0 0.0
        %5708 = vmatpush1.msra.mxu0 0.0
        %5709 = vmatprep.subr.mxu0 0.0
        %5710 = vmatpush1.msra.mxu0 0.0
        %5711 = vmatprep.subr.mxu0 0.0
        %5712 = vmatpush1.msra.mxu0 0.0
        %5713 = vmatprep.subr.mxu0 0.0
        %5714 = vmatpush1.msra.mxu0 0.0
        %5715 = vmatprep.subr.mxu0 0.0
        %5716 = vmatpush1.msra.mxu0 0.0
        %5717 = vmatprep.mubr.f32.mxu0 0.0
        %5718 = vmatmul.mubr.f32.gmra.mrb[0].mxu0 %v660
        %v5719 = vpop.f32.mrb[0].mxu0
        %v5720 = vadd.f32 %v633, %v5719
        %v5721 = vpop.f32.mrb[0].mxu0
        %5722 = vdwg.mxu0
        %v5723 = vmax.f32 %v5720, 0.0
        %v5724 = vmin.f32 %v5720, 0.0
        %v5725 = vmul.f32 %v5724, 1.442695
        %v5726 = vpow.pop %v5725
        %v5727 = vsub.f32 %v5726, 1.0
        %v5728 = vadd.f32 %v5723, %v5727
        %v5730 = vsel %vm747, %v5728, 0
        %5732 = vmatprep.subr.mxu0 0.0
        %5733 = vmatpush1.msra.mxu0 %v5730
        %5734 = vmatprep.subr.mxu0 0.0
        %5735 = vmatpush1.msra.mxu0 0.0
        %5736 = vmatprep.subr.mxu0 0.0
        %5737 = vmatpush1.msra.mxu0 0.0
        %5738 = vmatprep.subr.mxu0 0.0
        %5739 = vmatpush1.msra.mxu0 0.0
        %5740 = vmatprep.subr.mxu0 0.0
        %5741 = vmatpush1.msra.mxu0 0.0
        %5742 = vmatprep.subr.mxu0 0.0
        %5743 = vmatpush1.msra.mxu0 0.0
        %5744 = vmatprep.subr.mxu0 0.0
        %5745 = vmatpush1.msra.mxu0 0.0
        %5746 = vmatprep.subr.mxu0 0.0
        %5747 = vmatpush1.msra.mxu0 0.0
        %5748 = vmatprep.subr.mxu0 0.0
        %5749 = vmatpush1.msra.mxu0 0.0
        %5750 = vmatprep.subr.mxu0 0.0
        %5751 = vmatpush1.msra.mxu0 0.0
        %5752 = vmatprep.subr.mxu0 0.0
        %5753 = vmatpush1.msra.mxu0 0.0
        %5754 = vmatprep.subr.mxu0 0.0
        %5755 = vmatpush1.msra.mxu0 0.0
        %5756 = vmatprep.subr.mxu0 0.0
        %5757 = vmatpush1.msra.mxu0 0.0
        %5758 = vmatprep.subr.mxu0 0.0
        %5759 = vmatpush1.msra.mxu0 0.0
        %5760 = vmatprep.subr.mxu0 0.0
        %5761 = vmatpush1.msra.mxu0 0.0
        %5762 = vmatprep.subr.mxu0 0.0
        %5763 = vmatpush1.msra.mxu0 0.0
        %5764 = vmatprep.subr.mxu0 0.0
        %5765 = vmatpush1.msra.mxu0 0.0
        %5766 = vmatprep.subr.mxu0 0.0
        %5767 = vmatpush1.msra.mxu0 0.0
        %5768 = vmatprep.subr.mxu0 0.0
        %5769 = vmatpush1.msra.mxu0 0.0
        %5770 = vmatprep.subr.mxu0 0.0
        %5771 = vmatpush1.msra.mxu0 0.0
        %5772 = vmatprep.subr.mxu0 0.0
        %5773 = vmatpush1.msra.mxu0 0.0
        %5774 = vmatprep.subr.mxu0 0.0
        %5775 = vmatpush1.msra.mxu0 0.0
        %5776 = vmatprep.subr.mxu0 0.0
        %5777 = vmatpush1.msra.mxu0 0.0
        %5778 = vmatprep.subr.mxu0 0.0
        %5779 = vmatpush1.msra.mxu0 0.0
        %5780 = vmatprep.subr.mxu0 0.0
        %5781 = vmatpush1.msra.mxu0 0.0
        %5782 = vmatprep.subr.mxu0 0.0
        %5783 = vmatpush1.msra.mxu0 0.0
        %5784 = vmatprep.subr.mxu0 0.0
        %5785 = vmatpush1.msra.mxu0 0.0
        %5786 = vmatprep.subr.mxu0 0.0
        %5787 = vmatpush1.msra.mxu0 0.0
        %5788 = vmatprep.subr.mxu0 0.0
        %5789 = vmatpush1.msra.mxu0 0.0
        %5790 = vmatprep.subr.mxu0 0.0
        %5791 = vmatpush1.msra.mxu0 0.0
        %5792 = vmatprep.subr.mxu0 0.0
        %5793 = vmatpush1.msra.mxu0 0.0
        %5794 = vmatprep.subr.mxu0 0.0
        %5795 = vmatpush1.msra.mxu0 0.0
        %5796 = vmatprep.mubr.f32.mxu0 0.0
        %5797 = vmatmul.mubr.f32.gmra.mrb[0].mxu0 %v745
        %v5798 = vpop.f32.mrb[0].mxu0
        %v5799 = vadd.f32 %v741, %v5798
        %v5800 = vpop.f32.mrb[0].mxu0
        %5801 = vdwg.mxu0
        %v5802 = vsub.f32 0.0, %v5799
        %v5803 = vmul.f32 %v5802, 1.442695
        %v5804 = vpow.pop %v5803
        %v5805 = vadd.f32 %v5804, 1.0
        %v5806 = vrcp.pop %v5805
        %v5807 = vmul.f32 1.0, %v5806
        %v5809 = vcombine.high %v5807, %v5807
        %v5811 = vunpack.c.l.s4 1966171168
        %v5812 = vunpack.c.0.s8 %v5811
        %v5813 = vlaneseq
        %v5814 = vshrl.u32 %v5813, 7
        %v5815 = vsub.s32 %v5812, %v5814
        %v5816 = vrot.slane %v5807, %v5815
        %v5818 = vunpack.c.l.s4 1966171168
        %v5819 = vunpack.c.0.s8 %v5818
        %v5820 = vlaneseq
        %v5821 = vshrl.u32 %v5820, 7
        %v5822 = vsub.s32 %v5819, %v5821
        %v5823 = vrot.slane %v5809, %v5822
        %v5824 = vcombine.high %v5816, %v5816
        %v5825 = vcombine.high %v5823, %v5823
        %v5827 = vunpack.c.l.s4 1966171168
        %v5828 = vunpack.c.0.s8 %v5827
        %v5829 = vlaneseq
        %v5830 = vshrl.u32 %v5829, 7
        %v5831 = vsub.s32 %v5828, %v5830
        %v5832 = vrot.slane %v5816, %v5831
        %v5834 = vunpack.c.l.s4 1966171168
        %v5835 = vunpack.c.0.s8 %v5834
        %v5836 = vlaneseq
        %v5837 = vshrl.u32 %v5836, 7
        %v5838 = vsub.s32 %v5835, %v5837
        %v5839 = vrot.slane %v5823, %v5838
        %v5841 = vunpack.c.l.s4 1966171168
        %v5842 = vunpack.c.0.s8 %v5841
        %v5843 = vlaneseq
        %v5844 = vshrl.u32 %v5843, 7
        %v5845 = vsub.s32 %v5842, %v5844
        %v5846 = vrot.slane %v5824, %v5845
        %v5848 = vunpack.c.l.s4 1966171168
        %v5849 = vunpack.c.0.s8 %v5848
        %v5850 = vlaneseq
        %v5851 = vshrl.u32 %v5850, 7
        %v5852 = vsub.s32 %v5849, %v5851
        %v5853 = vrot.slane %v5825, %v5852
        %v5854 = vcombine.high %v5832, %v5832
        %v5855 = vcombine.high %v5839, %v5839
        %v5856 = vcombine.high %v5846, %v5846
        %v5857 = vcombine.high %v5853, %v5853
        %v5858 = vlaneseq
        %v5859 = vshrl.u32 %v5858, 7
        %v5860 = vsub.s32 0, %v5859
        %v5861 = vrot.slane %v5832, %v5860
        %v5862 = vlaneseq
        %v5863 = vshrl.u32 %v5862, 7
        %v5864 = vsub.s32 0, %v5863
        %v5865 = vrot.slane %v5846, %v5864
        %v5866 = vlaneseq
        %v5867 = vshrl.u32 %v5866, 7
        %v5868 = vsub.s32 0, %v5867
        %v5869 = vrot.slane %v5854, %v5868
        %v5870 = vlaneseq
        %v5871 = vshrl.u32 %v5870, 7
        %v5872 = vsub.s32 0, %v5871
        %v5873 = vrot.slane %v5856, %v5872
        %v5874 = vlaneseq
        %v5875 = vshrl.u32 %v5874, 7
        %v5876 = vsub.s32 0, %v5875
        %v5877 = vrot.slane %v5839, %v5876
        %v5878 = vlaneseq
        %v5879 = vshrl.u32 %v5878, 7
        %v5880 = vsub.s32 0, %v5879
        %v5881 = vrot.slane %v5853, %v5880
        %v5882 = vlaneseq
        %v5883 = vshrl.u32 %v5882, 7
        %v5884 = vsub.s32 0, %v5883
        %v5885 = vrot.slane %v5855, %v5884
        %v5886 = vlaneseq
        %v5887 = vshrl.u32 %v5886, 7
        %v5888 = vsub.s32 0, %v5887
        %v5889 = vrot.slane %v5857, %v5888
        %v5898 = vmul.f32 %v2024, %v5861
        %v5899 = vmul.f32 %v2028, %v5861
        %v5900 = vmul.f32 %v2024, %v5865
        %v5901 = vmul.f32 %v2028, %v5865
        %v5902 = vmul.f32 %v2024, %v5869
        %v5903 = vmul.f32 %v2028, %v5869
        %v5904 = vmul.f32 %v2024, %v5873
        %v5905 = vmul.f32 %v2028, %v5873
        %v5906 = vmul.f32 %v2024, %v5877
        %v5907 = vmul.f32 %v2028, %v5877
        %v5908 = vmul.f32 %v2024, %v5881
        %v5909 = vmul.f32 %v2028, %v5881
        %v5910 = vmul.f32 %v2024, %v5885
        %v5911 = vmul.f32 %v2028, %v5885
        %v5912 = vmul.f32 %v2024, %v5889
        %v5913 = vmul.f32 %v2028, %v5889
        %v5914 = vadd.f32 %v5533, %v5898
        %v5915 = vadd.f32 %v5534, %v5899
        %v5916 = vadd.f32 %v5535, %v5900
        %v5917 = vadd.f32 %v5536, %v5901
        %v5918 = vadd.f32 %v5537, %v5902
        %v5919 = vadd.f32 %v5538, %v5903
        %v5920 = vadd.f32 %v5539, %v5904
        %v5921 = vadd.f32 %v5540, %v5905
        %v5922 = vadd.f32 %v5541, %v5906
        %v5923 = vadd.f32 %v5542, %v5907
        %v5924 = vadd.f32 %v5543, %v5908
        %v5925 = vadd.f32 %v5544, %v5909
        %v5926 = vadd.f32 %v5545, %v5910
        %v5927 = vadd.f32 %v5546, %v5911
        %v5928 = vadd.f32 %v5547, %v5912
        %v5929 = vadd.f32 %v5548, %v5913
        %v5931 = vsel %vm2102, %v5914, 0
        %v5934 = vsel %vm2102, %v5915, 0
        %v5937 = vsel %vm2102, %v5916, 0
        %v5940 = vsel %vm2102, %v5917, 0
        %v5943 = vsel %vm2102, %v5918, 0
        %v5946 = vsel %vm2102, %v5919, 0
        %v5949 = vsel %vm2102, %v5920, 0
        %v5952 = vsel %vm2102, %v5921, 0
        %v5955 = vsel %vm2102, %v5922, 0
        %v5958 = vsel %vm2102, %v5923, 0
        %v5961 = vsel %vm2102, %v5924, 0
        %v5964 = vsel %vm2102, %v5925, 0
        %v5967 = vsel %vm2102, %v5926, 0
        %v5970 = vsel %vm2102, %v5927, 0
        %v5973 = vsel %vm2102, %v5928, 0
        %v5976 = vsel %vm2102, %v5929, 0
        %5978 = vmatprep.subr.mxu0 0.0
        %5979 = vmatpush1.msra.mxu0 %v2153
        %5980 = vmatprep.subr.mxu0 0.0
        %5981 = vmatpush1.msra.mxu0 0.0
        %5982 = vmatprep.subr.mxu0 0.0
        %5983 = vmatpush1.msra.mxu0 0.0
        %5984 = vmatprep.subr.mxu0 0.0
        %5985 = vmatpush1.msra.mxu0 0.0
        %5986 = vmatprep.subr.mxu0 0.0
        %5987 = vmatpush1.msra.mxu0 0.0
        %5988 = vmatprep.subr.mxu0 0.0
        %5989 = vmatpush1.msra.mxu0 0.0
        %5990 = vmatprep.subr.mxu0 0.0
        %5991 = vmatpush1.msra.mxu0 0.0
        %5992 = vmatprep.subr.mxu0 0.0
        %5993 = vmatpush1.msra.mxu0 0.0
        %5994 = vmatprep.subr.mxu0 0.0
        %5995 = vmatpush1.msra.mxu0 0.0
        %5996 = vmatprep.subr.mxu0 0.0
        %5997 = vmatpush1.msra.mxu0 0.0
        %5998 = vmatprep.subr.mxu0 0.0
        %5999 = vmatpush1.msra.mxu0 0.0
        %6000 = vmatprep.subr.mxu0 0.0
        %6001 = vmatpush1.msra.mxu0 0.0
        %6002 = vmatprep.subr.mxu0 0.0
        %6003 = vmatpush1.msra.mxu0 0.0
        %6004 = vmatprep.subr.mxu0 0.0
        %6005 = vmatpush1.msra.mxu0 0.0
        %6006 = vmatprep.subr.mxu0 0.0
        %6007 = vmatpush1.msra.mxu0 0.0
        %6008 = vmatprep.subr.mxu0 0.0
        %6009 = vmatpush1.msra.mxu0 0.0
        %6010 = vmatprep.subr.mxu0 0.0
        %6011 = vmatpush1.msra.mxu0 0.0
        %6012 = vmatprep.subr.mxu0 0.0
        %6013 = vmatpush1.msra.mxu0 0.0
        %6014 = vmatprep.subr.mxu0 0.0
        %6015 = vmatpush1.msra.mxu0 0.0
        %6016 = vmatprep.subr.mxu0 0.0
        %6017 = vmatpush1.msra.mxu0 0.0
        %6018 = vmatprep.subr.mxu0 0.0
        %6019 = vmatpush1.msra.mxu0 0.0
        %6020 = vmatprep.subr.mxu0 0.0
        %6021 = vmatpush1.msra.mxu0 0.0
        %6022 = vmatprep.subr.mxu0 0.0
        %6023 = vmatpush1.msra.mxu0 0.0
        %6024 = vmatprep.subr.mxu0 0.0
        %6025 = vmatpush1.msra.mxu0 0.0
        %6026 = vmatprep.subr.mxu0 0.0
        %6027 = vmatpush1.msra.mxu0 0.0
        %6028 = vmatprep.subr.mxu0 0.0
        %6029 = vmatpush1.msra.mxu0 0.0
        %6030 = vmatprep.subr.mxu0 0.0
        %6031 = vmatpush1.msra.mxu0 0.0
        %6032 = vmatprep.subr.mxu0 0.0
        %6033 = vmatpush1.msra.mxu0 0.0
        %6034 = vmatprep.subr.mxu0 0.0
        %6035 = vmatpush1.msra.mxu0 0.0
        %6036 = vmatprep.subr.mxu0 0.0
        %6037 = vmatpush1.msra.mxu0 0.0
        %6038 = vmatprep.subr.mxu0 0.0
        %6039 = vmatpush1.msra.mxu0 0.0
        %6040 = vmatprep.subr.mxu0 0.0
        %6041 = vmatpush1.msra.mxu0 0.0
        %6042 = vmatprep.mubr.f32.mxu0 0.0
        %6043 = vmatmul.mubr.f32.gmra.mrb[0].mxu0 %v5931
        %v6044 = vpop.f32.mrb[0].mxu0
        %v6045 = vadd.f32 1.0, %v6044
        %v6046 = vpop.f32.mrb[0].mxu0
        %6047 = vmatprep.mubr.f32.mxu0 0.0
        %6048 = vmatmul.mubr.f32.gmra.mrb[0].mxu0 %v5934
        %v6049 = vpop.f32.mrb[0].mxu0
        %v6050 = vadd.f32 1.0, %v6049
        %v6051 = vpop.f32.mrb[0].mxu0
        %6052 = vmatprep.mubr.f32.mxu0 0.0
        %6053 = vmatmul.mubr.f32.gmra.mrb[0].mxu0 %v5937
        %v6054 = vpop.f32.mrb[0].mxu0
        %v6055 = vadd.f32 1.0, %v6054
        %v6056 = vpop.f32.mrb[0].mxu0
        %6057 = vmatprep.mubr.f32.mxu0 0.0
        %6058 = vmatmul.mubr.f32.gmra.mrb[0].mxu0 %v5940
        %v6059 = vpop.f32.mrb[0].mxu0
        %v6060 = vadd.f32 1.0, %v6059
        %v6061 = vpop.f32.mrb[0].mxu0
        %6062 = vmatprep.mubr.f32.mxu0 0.0
        %6063 = vmatmul.mubr.f32.gmra.mrb[0].mxu0 %v5943
        %v6064 = vpop.f32.mrb[0].mxu0
        %v6065 = vadd.f32 1.0, %v6064
        %v6066 = vpop.f32.mrb[0].mxu0
        %6067 = vmatprep.mubr.f32.mxu0 0.0
        %6068 = vmatmul.mubr.f32.gmra.mrb[0].mxu0 %v5946
        %v6069 = vpop.f32.mrb[0].mxu0
        %v6070 = vadd.f32 1.0, %v6069
        %v6071 = vpop.f32.mrb[0].mxu0
        %6072 = vmatprep.mubr.f32.mxu0 0.0
        %6073 = vmatmul.mubr.f32.gmra.mrb[0].mxu0 %v5949
        %v6074 = vpop.f32.mrb[0].mxu0
        %v6075 = vadd.f32 1.0, %v6074
        %v6076 = vpop.f32.mrb[0].mxu0
        %6077 = vmatprep.mubr.f32.mxu0 0.0
        %6078 = vmatmul.mubr.f32.gmra.mrb[0].mxu0 %v5952
        %v6079 = vpop.f32.mrb[0].mxu0
        %v6080 = vadd.f32 1.0, %v6079
        %v6081 = vpop.f32.mrb[0].mxu0
        %6082 = vmatprep.mubr.f32.mxu0 0.0
        %6083 = vmatmul.mubr.f32.gmra.mrb[0].mxu0 %v5955
        %v6084 = vpop.f32.mrb[0].mxu0
        %v6085 = vadd.f32 1.0, %v6084
        %v6086 = vpop.f32.mrb[0].mxu0
        %6087 = vmatprep.mubr.f32.mxu0 0.0
        %6088 = vmatmul.mubr.f32.gmra.mrb[0].mxu0 %v5958
        %v6089 = vpop.f32.mrb[0].mxu0
        %v6090 = vadd.f32 1.0, %v6089
        %v6091 = vpop.f32.mrb[0].mxu0
        %6092 = vmatprep.mubr.f32.mxu0 0.0
        %6093 = vmatmul.mubr.f32.gmra.mrb[0].mxu0 %v5961
        %v6094 = vpop.f32.mrb[0].mxu0
        %v6095 = vadd.f32 1.0, %v6094
        %v6096 = vpop.f32.mrb[0].mxu0
        %6097 = vmatprep.mubr.f32.mxu0 0.0
        %6098 = vmatmul.mubr.f32.gmra.mrb[0].mxu0 %v5964
        %v6099 = vpop.f32.mrb[0].mxu0
        %v6100 = vadd.f32 1.0, %v6099
        %v6101 = vpop.f32.mrb[0].mxu0
        %6102 = vmatprep.mubr.f32.mxu0 0.0
        %6103 = vmatmul.mubr.f32.gmra.mrb[0].mxu0 %v5967
        %v6104 = vpop.f32.mrb[0].mxu0
        %v6105 = vadd.f32 1.0, %v6104
        %v6106 = vpop.f32.mrb[0].mxu0
        %6107 = vmatprep.mubr.f32.mxu0 0.0
        %6108 = vmatmul.mubr.f32.gmra.mrb[0].mxu0 %v5970
        %v6109 = vpop.f32.mrb[0].mxu0
        %v6110 = vadd.f32 1.0, %v6109
        %v6111 = vpop.f32.mrb[0].mxu0
        %6112 = vmatprep.mubr.f32.mxu0 0.0
        %6113 = vmatmul.mubr.f32.gmra.mrb[0].mxu0 %v5973
        %v6114 = vpop.f32.mrb[0].mxu0
        %v6115 = vadd.f32 1.0, %v6114
        %v6116 = vpop.f32.mrb[0].mxu0
        %6117 = vmatprep.mubr.f32.mxu0 0.0
        %6118 = vmatmul.mubr.f32.gmra.mrb[0].mxu0 %v5976
        %v6119 = vpop.f32.mrb[0].mxu0
        %v6120 = vadd.f32 1.0, %v6119
        %v6121 = vpop.f32.mrb[0].mxu0
        %6122 = vdwg.mxu0
        %v6123 = vmul.f32 %v4245, %v6045
        %v6124 = vmul.f32 %v4246, %v6050
        %v6125 = vmul.f32 %v4247, %v6055
        %v6126 = vmul.f32 %v4248, %v6060
        %v6127 = vmul.f32 %v4249, %v6065
        %v6128 = vmul.f32 %v4250, %v6070
        %v6129 = vmul.f32 %v4251, %v6075
        %v6130 = vmul.f32 %v4252, %v6080
        %v6131 = vmul.f32 %v4253, %v6085
        %v6132 = vmul.f32 %v4254, %v6090
        %v6133 = vmul.f32 %v4255, %v6095
        %v6134 = vmul.f32 %v4256, %v6100
        %v6135 = vmul.f32 %v4257, %v6105
        %v6136 = vmul.f32 %v4258, %v6110
        %v6137 = vmul.f32 %v4259, %v6115
        %v6138 = vmul.f32 %v4260, %v6120
        %s6139 = scalar_lea.vmem %s342, 32 [#allocation5]
        %6140 = vst.msk [vmem:[%s6139] sm:$0xff] %vm370, %v6123
        %6141 = vst.msk [vmem:[%s6139 + $0x8] sm:$0xff] %vm370, %v6124
        %6142 = vst.msk [vmem:[%s6139 + $0x40] sm:$0xff] %vm370, %v6125
        %6143 = vst.msk [vmem:[%s6139 + $0x48] sm:$0xff] %vm370, %v6126
        %6144 = vst.msk [vmem:[%s6139 + $0x80] sm:$0xff] %vm370, %v6127
        %6145 = vst.msk [vmem:[%s6139 + $0x88] sm:$0xff] %vm370, %v6128
        %6146 = vst.msk [vmem:[%s6139 + $0xc0] sm:$0xff] %vm370, %v6129
        %6147 = vst.msk [vmem:[%s6139 + $0xc8] sm:$0xff] %vm370, %v6130
        %6148 = vst.msk [vmem:[%s6139 + $0x100] sm:$0xff] %vm370, %v6131
        %6149 = vst.msk [vmem:[%s6139 + $0x108] sm:$0xff] %vm370, %v6132
        %6150 = vst.msk [vmem:[%s6139 + $0x140] sm:$0xff] %vm370, %v6133
        %6151 = vst.msk [vmem:[%s6139 + $0x148] sm:$0xff] %vm370, %v6134
        %6152 = vst.msk [vmem:[%s6139 + $0x180] sm:$0xff] %vm370, %v6135
        %6153 = vst.msk [vmem:[%s6139 + $0x188] sm:$0xff] %vm370, %v6136
        %6154 = vst.msk [vmem:[%s6139 + $0x1c0] sm:$0xff] %vm370, %v6137
        %6155 = vst.msk [vmem:[%s6139 + $0x1c8] sm:$0xff] %vm370, %v6138
        %s6156 = scalar_lea.vmem %s310, 48 [#allocation2]
        %v6157 = vld [vmem:[%s6156] sm:$0xff]
        %v6158 = vld [vmem:[%s6156 + $0x8] sm:$0xff]
        %v6159 = vld [vmem:[%s6156 + $0x40] sm:$0xff]
        %v6160 = vld [vmem:[%s6156 + $0x48] sm:$0xff]
        %v6161 = vld [vmem:[%s6156 + $0x80] sm:$0xff]
        %v6162 = vld [vmem:[%s6156 + $0x88] sm:$0xff]
        %v6163 = vld [vmem:[%s6156 + $0xc0] sm:$0xff]
        %v6164 = vld [vmem:[%s6156 + $0xc8] sm:$0xff]
        %v6165 = vld [vmem:[%s6156 + $0x100] sm:$0xff]
        %v6166 = vld [vmem:[%s6156 + $0x108] sm:$0xff]
        %v6167 = vld [vmem:[%s6156 + $0x140] sm:$0xff]
        %v6168 = vld [vmem:[%s6156 + $0x148] sm:$0xff]
        %v6169 = vld [vmem:[%s6156 + $0x180] sm:$0xff]
        %v6170 = vld [vmem:[%s6156 + $0x188] sm:$0xff]
        %v6171 = vld [vmem:[%s6156 + $0x1c0] sm:$0xff]
        %v6172 = vld [vmem:[%s6156 + $0x1c8] sm:$0xff]
        %v6174 = vsel %vm370, %v6157, 0
        %v6177 = vsel %vm370, %v6158, 0
        %v6180 = vsel %vm370, %v6159, 0
        %v6183 = vsel %vm370, %v6160, 0
        %v6186 = vsel %vm370, %v6161, 0
        %v6189 = vsel %vm370, %v6162, 0
        %v6192 = vsel %vm370, %v6163, 0
        %v6195 = vsel %vm370, %v6164, 0
        %v6198 = vsel %vm370, %v6165, 0
        %v6201 = vsel %vm370, %v6166, 0
        %v6204 = vsel %vm370, %v6167, 0
        %v6207 = vsel %vm370, %v6168, 0
        %v6210 = vsel %vm370, %v6169, 0
        %v6213 = vsel %vm370, %v6170, 0
        %v6216 = vsel %vm370, %v6171, 0
        %v6219 = vsel %vm370, %v6172, 0
        %6221 = vmatprep.subr.mxu0 0.0
        %6222 = vmatpush1.msra.mxu0 %v345
        %6223 = vmatprep.subr.mxu0 0.0
        %6224 = vmatpush1.msra.mxu0 %v346
        %6225 = vmatprep.subr.mxu0 0.0
        %6226 = vmatpush1.msra.mxu0 0.0
        %6227 = vmatprep.subr.mxu0 0.0
        %6228 = vmatpush1.msra.mxu0 0.0
        %6229 = vmatprep.subr.mxu0 0.0
        %6230 = vmatpush1.msra.mxu0 0.0
        %6231 = vmatprep.subr.mxu0 0.0
        %6232 = vmatpush1.msra.mxu0 0.0
        %6233 = vmatprep.subr.mxu0 0.0
        %6234 = vmatpush1.msra.mxu0 0.0
        %6235 = vmatprep.subr.mxu0 0.0
        %6236 = vmatpush1.msra.mxu0 0.0
        %6237 = vmatprep.subr.mxu0 0.0
        %6238 = vmatpush1.msra.mxu0 0.0
        %6239 = vmatprep.subr.mxu0 0.0
        %6240 = vmatpush1.msra.mxu0 0.0
        %6241 = vmatprep.subr.mxu0 0.0
        %6242 = vmatpush1.msra.mxu0 0.0
        %6243 = vmatprep.subr.mxu0 0.0
        %6244 = vmatpush1.msra.mxu0 0.0
        %6245 = vmatprep.subr.mxu0 0.0
        %6246 = vmatpush1.msra.mxu0 0.0
        %6247 = vmatprep.subr.mxu0 0.0
        %6248 = vmatpush1.msra.mxu0 0.0
        %6249 = vmatprep.subr.mxu0 0.0
        %6250 = vmatpush1.msra.mxu0 0.0
        %6251 = vmatprep.subr.mxu0 0.0
        %6252 = vmatpush1.msra.mxu0 0.0
        %6253 = vmatprep.subr.mxu0 0.0
        %6254 = vmatpush1.msra.mxu0 0.0
        %6255 = vmatprep.subr.mxu0 0.0
        %6256 = vmatpush1.msra.mxu0 0.0
        %6257 = vmatprep.subr.mxu0 0.0
        %6258 = vmatpush1.msra.mxu0 0.0
        %6259 = vmatprep.subr.mxu0 0.0
        %6260 = vmatpush1.msra.mxu0 0.0
        %6261 = vmatprep.subr.mxu0 0.0
        %6262 = vmatpush1.msra.mxu0 0.0
        %6263 = vmatprep.subr.mxu0 0.0
        %6264 = vmatpush1.msra.mxu0 0.0
        %6265 = vmatprep.subr.mxu0 0.0
        %6266 = vmatpush1.msra.mxu0 0.0
        %6267 = vmatprep.subr.mxu0 0.0
        %6268 = vmatpush1.msra.mxu0 0.0
        %6269 = vmatprep.subr.mxu0 0.0
        %6270 = vmatpush1.msra.mxu0 0.0
        %6271 = vmatprep.subr.mxu0 0.0
        %6272 = vmatpush1.msra.mxu0 0.0
        %6273 = vmatprep.subr.mxu0 0.0
        %6274 = vmatpush1.msra.mxu0 0.0
        %6275 = vmatprep.subr.mxu0 0.0
        %6276 = vmatpush1.msra.mxu0 0.0
        %6277 = vmatprep.subr.mxu0 0.0
        %6278 = vmatpush1.msra.mxu0 0.0
        %6279 = vmatprep.subr.mxu0 0.0
        %6280 = vmatpush1.msra.mxu0 0.0
        %6281 = vmatprep.subr.mxu0 0.0
        %6282 = vmatpush1.msra.mxu0 0.0
        %6283 = vmatprep.subr.mxu0 0.0
        %6284 = vmatpush1.msra.mxu0 0.0
        %6285 = vmatprep.mubr.f32.mxu0 0.0
        %6286 = vmatmul.mubr.f32.gmra.mrb[0].mxu0 %v6174
        %v6287 = vpop.f32.mrb[0].mxu0
        %v6288 = vadd.f32 0.0, %v6287
        %v6289 = vpop.f32.mrb[0].mxu0
        %6290 = vmatprep.mubr.f32.mxu0 0.0
        %6291 = vmatmul.mubr.f32.gmra.mrb[0].mxu0 %v6177
        %v6292 = vpop.f32.mrb[0].mxu0
        %v6293 = vadd.f32 0.0, %v6292
        %v6294 = vpop.f32.mrb[0].mxu0
        %6295 = vmatprep.mubr.f32.mxu0 0.0
        %6296 = vmatmul.mubr.f32.gmra.mrb[0].mxu0 %v6180
        %v6297 = vpop.f32.mrb[0].mxu0
        %v6298 = vadd.f32 0.0, %v6297
        %v6299 = vpop.f32.mrb[0].mxu0
        %6300 = vmatprep.mubr.f32.mxu0 0.0
        %6301 = vmatmul.mubr.f32.gmra.mrb[0].mxu0 %v6183
        %v6302 = vpop.f32.mrb[0].mxu0
        %v6303 = vadd.f32 0.0, %v6302
        %v6304 = vpop.f32.mrb[0].mxu0
        %6305 = vmatprep.mubr.f32.mxu0 0.0
        %6306 = vmatmul.mubr.f32.gmra.mrb[0].mxu0 %v6186
        %v6307 = vpop.f32.mrb[0].mxu0
        %v6308 = vadd.f32 0.0, %v6307
        %v6309 = vpop.f32.mrb[0].mxu0
        %6310 = vmatprep.mubr.f32.mxu0 0.0
        %6311 = vmatmul.mubr.f32.gmra.mrb[0].mxu0 %v6189
        %v6312 = vpop.f32.mrb[0].mxu0
        %v6313 = vadd.f32 0.0, %v6312
        %v6314 = vpop.f32.mrb[0].mxu0
        %6315 = vmatprep.mubr.f32.mxu0 0.0
        %6316 = vmatmul.mubr.f32.gmra.mrb[0].mxu0 %v6192
        %v6317 = vpop.f32.mrb[0].mxu0
        %v6318 = vadd.f32 0.0, %v6317
        %v6319 = vpop.f32.mrb[0].mxu0
        %6320 = vmatprep.mubr.f32.mxu0 0.0
        %6321 = vmatmul.mubr.f32.gmra.mrb[0].mxu0 %v6195
        %v6322 = vpop.f32.mrb[0].mxu0
        %v6323 = vadd.f32 0.0, %v6322
        %v6324 = vpop.f32.mrb[0].mxu0
        %6325 = vmatprep.mubr.f32.mxu0 0.0
        %6326 = vmatmul.mubr.f32.gmra.mrb[0].mxu0 %v6198
        %v6327 = vpop.f32.mrb[0].mxu0
        %v6328 = vadd.f32 0.0, %v6327
        %v6329 = vpop.f32.mrb[0].mxu0
        %6330 = vmatprep.mubr.f32.mxu0 0.0
        %6331 = vmatmul.mubr.f32.gmra.mrb[0].mxu0 %v6201
        %v6332 = vpop.f32.mrb[0].mxu0
        %v6333 = vadd.f32 0.0, %v6332
        %v6334 = vpop.f32.mrb[0].mxu0
        %6335 = vmatprep.mubr.f32.mxu0 0.0
        %6336 = vmatmul.mubr.f32.gmra.mrb[0].mxu0 %v6204
        %v6337 = vpop.f32.mrb[0].mxu0
        %v6338 = vadd.f32 0.0, %v6337
        %v6339 = vpop.f32.mrb[0].mxu0
        %6340 = vmatprep.mubr.f32.mxu0 0.0
        %6341 = vmatmul.mubr.f32.gmra.mrb[0].mxu0 %v6207
        %v6342 = vpop.f32.mrb[0].mxu0
        %v6343 = vadd.f32 0.0, %v6342
        %v6344 = vpop.f32.mrb[0].mxu0
        %6345 = vmatprep.mubr.f32.mxu0 0.0
        %6346 = vmatmul.mubr.f32.gmra.mrb[0].mxu0 %v6210
        %v6347 = vpop.f32.mrb[0].mxu0
        %v6348 = vadd.f32 0.0, %v6347
        %v6349 = vpop.f32.mrb[0].mxu0
        %6350 = vmatprep.mubr.f32.mxu0 0.0
        %6351 = vmatmul.mubr.f32.gmra.mrb[0].mxu0 %v6213
        %v6352 = vpop.f32.mrb[0].mxu0
        %v6353 = vadd.f32 0.0, %v6352
        %v6354 = vpop.f32.mrb[0].mxu0
        %6355 = vmatprep.mubr.f32.mxu0 0.0
        %6356 = vmatmul.mubr.f32.gmra.mrb[0].mxu0 %v6216
        %v6357 = vpop.f32.mrb[0].mxu0
        %v6358 = vadd.f32 0.0, %v6357
        %v6359 = vpop.f32.mrb[0].mxu0
        %6360 = vmatprep.mubr.f32.mxu0 0.0
        %6361 = vmatmul.mubr.f32.gmra.mrb[0].mxu0 %v6219
        %v6362 = vpop.f32.mrb[0].mxu0
        %v6363 = vadd.f32 0.0, %v6362
        %v6364 = vpop.f32.mrb[0].mxu0
        %6365 = vdwg.mxu0
        %v6366 = vsel %vm564, %v6288, 0.0
        %v6367 = vrot.slane %v6366, 4
        %v6368 = vadd.f32 %v6366, %v6367
        %v6369 = vrot.slane %v6368, 2
        %v6370 = vadd.f32 %v6368, %v6369
        %v6371 = vrot.slane %v6370, 1
        %v6372 = vadd.f32 %v6370, %v6371
        %v6373 = vsel %vm564, %v6298, 0.0
        %v6374 = vrot.slane %v6373, 4
        %v6375 = vadd.f32 %v6373, %v6374
        %v6376 = vrot.slane %v6375, 2
        %v6377 = vadd.f32 %v6375, %v6376
        %v6378 = vrot.slane %v6377, 1
        %v6379 = vadd.f32 %v6377, %v6378
        %v6380 = vsel %vm564, %v6308, 0.0
        %v6381 = vrot.slane %v6380, 4
        %v6382 = vadd.f32 %v6380, %v6381
        %v6383 = vrot.slane %v6382, 2
        %v6384 = vadd.f32 %v6382, %v6383
        %v6385 = vrot.slane %v6384, 1
        %v6386 = vadd.f32 %v6384, %v6385
        %v6387 = vsel %vm564, %v6318, 0.0
        %v6388 = vrot.slane %v6387, 4
        %v6389 = vadd.f32 %v6387, %v6388
        %v6390 = vrot.slane %v6389, 2
        %v6391 = vadd.f32 %v6389, %v6390
        %v6392 = vrot.slane %v6391, 1
        %v6393 = vadd.f32 %v6391, %v6392
        %v6394 = vsel %vm564, %v6328, 0.0
        %v6395 = vrot.slane %v6394, 4
        %v6396 = vadd.f32 %v6394, %v6395
        %v6397 = vrot.slane %v6396, 2
        %v6398 = vadd.f32 %v6396, %v6397
        %v6399 = vrot.slane %v6398, 1
        %v6400 = vadd.f32 %v6398, %v6399
        %v6401 = vsel %vm564, %v6338, 0.0
        %v6402 = vrot.slane %v6401, 4
        %v6403 = vadd.f32 %v6401, %v6402
        %v6404 = vrot.slane %v6403, 2
        %v6405 = vadd.f32 %v6403, %v6404
        %v6406 = vrot.slane %v6405, 1
        %v6407 = vadd.f32 %v6405, %v6406
        %v6408 = vsel %vm564, %v6348, 0.0
        %v6409 = vrot.slane %v6408, 4
        %v6410 = vadd.f32 %v6408, %v6409
        %v6411 = vrot.slane %v6410, 2
        %v6412 = vadd.f32 %v6410, %v6411
        %v6413 = vrot.slane %v6412, 1
        %v6414 = vadd.f32 %v6412, %v6413
        %v6415 = vsel %vm564, %v6358, 0.0
        %v6416 = vrot.slane %v6415, 4
        %v6417 = vadd.f32 %v6415, %v6416
        %v6418 = vrot.slane %v6417, 2
        %v6419 = vadd.f32 %v6417, %v6418
        %v6420 = vrot.slane %v6419, 1
        %v6421 = vadd.f32 %v6419, %v6420
        %v6422 = vmul.f32 %v6372, %v621
        %v6423 = vmul.f32 %v6379, %v621
        %v6424 = vmul.f32 %v6386, %v621
        %v6425 = vmul.f32 %v6393, %v621
        %v6426 = vmul.f32 %v6400, %v621
        %v6427 = vmul.f32 %v6407, %v621
        %v6428 = vmul.f32 %v6414, %v621
        %v6429 = vmul.f32 %v6421, %v621
        %v6438 = vsel %vm643, %v6423, %v6422
        %v6439 = vsel %vm645, %v6424, %v6438
        %v6440 = vsel %vm647, %v6425, %v6439
        %v6441 = vsel %vm649, %v6426, %v6440
        %v6442 = vsel %vm651, %v6427, %v6441
        %v6443 = vsel %vm653, %v6428, %v6442
        %v6444 = vsel %vm655, %v6429, %v6443
        %6446 = vmatprep.subr.mxu0 0.0
        %6447 = vmatpush1.msra.mxu0 %v6444
        %6448 = vmatprep.subr.mxu0 0.0
        %6449 = vmatpush1.msra.mxu0 0.0
        %6450 = vmatprep.subr.mxu0 0.0
        %6451 = vmatpush1.msra.mxu0 0.0
        %6452 = vmatprep.subr.mxu0 0.0
        %6453 = vmatpush1.msra.mxu0 0.0
        %6454 = vmatprep.subr.mxu0 0.0
        %6455 = vmatpush1.msra.mxu0 0.0
        %6456 = vmatprep.subr.mxu0 0.0
        %6457 = vmatpush1.msra.mxu0 0.0
        %6458 = vmatprep.subr.mxu0 0.0
        %6459 = vmatpush1.msra.mxu0 0.0
        %6460 = vmatprep.subr.mxu0 0.0
        %6461 = vmatpush1.msra.mxu0 0.0
        %6462 = vmatprep.subr.mxu0 0.0
        %6463 = vmatpush1.msra.mxu0 0.0
        %6464 = vmatprep.subr.mxu0 0.0
        %6465 = vmatpush1.msra.mxu0 0.0
        %6466 = vmatprep.subr.mxu0 0.0
        %6467 = vmatpush1.msra.mxu0 0.0
        %6468 = vmatprep.subr.mxu0 0.0
        %6469 = vmatpush1.msra.mxu0 0.0
        %6470 = vmatprep.subr.mxu0 0.0
        %6471 = vmatpush1.msra.mxu0 0.0
        %6472 = vmatprep.subr.mxu0 0.0
        %6473 = vmatpush1.msra.mxu0 0.0
        %6474 = vmatprep.subr.mxu0 0.0
        %6475 = vmatpush1.msra.mxu0 0.0
        %6476 = vmatprep.subr.mxu0 0.0
        %6477 = vmatpush1.msra.mxu0 0.0
        %6478 = vmatprep.subr.mxu0 0.0
        %6479 = vmatpush1.msra.mxu0 0.0
        %6480 = vmatprep.subr.mxu0 0.0
        %6481 = vmatpush1.msra.mxu0 0.0
        %6482 = vmatprep.subr.mxu0 0.0
        %6483 = vmatpush1.msra.mxu0 0.0
        %6484 = vmatprep.subr.mxu0 0.0
        %6485 = vmatpush1.msra.mxu0 0.0
        %6486 = vmatprep.subr.mxu0 0.0
        %6487 = vmatpush1.msra.mxu0 0.0
        %6488 = vmatprep.subr.mxu0 0.0
        %6489 = vmatpush1.msra.mxu0 0.0
        %6490 = vmatprep.subr.mxu0 0.0
        %6491 = vmatpush1.msra.mxu0 0.0
        %6492 = vmatprep.subr.mxu0 0.0
        %6493 = vmatpush1.msra.mxu0 0.0
        %6494 = vmatprep.subr.mxu0 0.0
        %6495 = vmatpush1.msra.mxu0 0.0
        %6496 = vmatprep.subr.mxu0 0.0
        %6497 = vmatpush1.msra.mxu0 0.0
        %6498 = vmatprep.subr.mxu0 0.0
        %6499 = vmatpush1.msra.mxu0 0.0
        %6500 = vmatprep.subr.mxu0 0.0
        %6501 = vmatpush1.msra.mxu0 0.0
        %6502 = vmatprep.subr.mxu0 0.0
        %6503 = vmatpush1.msra.mxu0 0.0
        %6504 = vmatprep.subr.mxu0 0.0
        %6505 = vmatpush1.msra.mxu0 0.0
        %6506 = vmatprep.subr.mxu0 0.0
        %6507 = vmatpush1.msra.mxu0 0.0
        %6508 = vmatprep.subr.mxu0 0.0
        %6509 = vmatpush1.msra.mxu0 0.0
        %6510 = vmatprep.mubr.f32.mxu0 0.0
        %6511 = vmatmul.mubr.f32.gmra.mrb[0].mxu0 %v660
        %v6512 = vpop.f32.mrb[0].mxu0
        %v6513 = vadd.f32 %v633, %v6512
        %v6514 = vpop.f32.mrb[0].mxu0
        %6515 = vdwg.mxu0
        %v6516 = vmax.f32 %v6513, 0.0
        %v6517 = vmin.f32 %v6513, 0.0
        %v6518 = vmul.f32 %v6517, 1.442695
        %v6519 = vpow.pop %v6518
        %v6520 = vsub.f32 %v6519, 1.0
        %v6521 = vadd.f32 %v6516, %v6520
        %v6523 = vsel %vm747, %v6521, 0
        %6525 = vmatprep.subr.mxu0 0.0
        %6526 = vmatpush1.msra.mxu0 %v6523
        %6527 = vmatprep.subr.mxu0 0.0
        %6528 = vmatpush1.msra.mxu0 0.0
        %6529 = vmatprep.subr.mxu0 0.0
        %6530 = vmatpush1.msra.mxu0 0.0
        %6531 = vmatprep.subr.mxu0 0.0
        %6532 = vmatpush1.msra.mxu0 0.0
        %6533 = vmatprep.subr.mxu0 0.0
        %6534 = vmatpush1.msra.mxu0 0.0
        %6535 = vmatprep.subr.mxu0 0.0
        %6536 = vmatpush1.msra.mxu0 0.0
        %6537 = vmatprep.subr.mxu0 0.0
        %6538 = vmatpush1.msra.mxu0 0.0
        %6539 = vmatprep.subr.mxu0 0.0
        %6540 = vmatpush1.msra.mxu0 0.0
        %6541 = vmatprep.subr.mxu0 0.0
        %6542 = vmatpush1.msra.mxu0 0.0
        %6543 = vmatprep.subr.mxu0 0.0
        %6544 = vmatpush1.msra.mxu0 0.0
        %6545 = vmatprep.subr.mxu0 0.0
        %6546 = vmatpush1.msra.mxu0 0.0
        %6547 = vmatprep.subr.mxu0 0.0
        %6548 = vmatpush1.msra.mxu0 0.0
        %6549 = vmatprep.subr.mxu0 0.0
        %6550 = vmatpush1.msra.mxu0 0.0
        %6551 = vmatprep.subr.mxu0 0.0
        %6552 = vmatpush1.msra.mxu0 0.0
        %6553 = vmatprep.subr.mxu0 0.0
        %6554 = vmatpush1.msra.mxu0 0.0
        %6555 = vmatprep.subr.mxu0 0.0
        %6556 = vmatpush1.msra.mxu0 0.0
        %6557 = vmatprep.subr.mxu0 0.0
        %6558 = vmatpush1.msra.mxu0 0.0
        %6559 = vmatprep.subr.mxu0 0.0
        %6560 = vmatpush1.msra.mxu0 0.0
        %6561 = vmatprep.subr.mxu0 0.0
        %6562 = vmatpush1.msra.mxu0 0.0
        %6563 = vmatprep.subr.mxu0 0.0
        %6564 = vmatpush1.msra.mxu0 0.0
        %6565 = vmatprep.subr.mxu0 0.0
        %6566 = vmatpush1.msra.mxu0 0.0
        %6567 = vmatprep.subr.mxu0 0.0
        %6568 = vmatpush1.msra.mxu0 0.0
        %6569 = vmatprep.subr.mxu0 0.0
        %6570 = vmatpush1.msra.mxu0 0.0
        %6571 = vmatprep.subr.mxu0 0.0
        %6572 = vmatpush1.msra.mxu0 0.0
        %6573 = vmatprep.subr.mxu0 0.0
        %6574 = vmatpush1.msra.mxu0 0.0
        %6575 = vmatprep.subr.mxu0 0.0
        %6576 = vmatpush1.msra.mxu0 0.0
        %6577 = vmatprep.subr.mxu0 0.0
        %6578 = vmatpush1.msra.mxu0 0.0
        %6579 = vmatprep.subr.mxu0 0.0
        %6580 = vmatpush1.msra.mxu0 0.0
        %6581 = vmatprep.subr.mxu0 0.0
        %6582 = vmatpush1.msra.mxu0 0.0
        %6583 = vmatprep.subr.mxu0 0.0
        %6584 = vmatpush1.msra.mxu0 0.0
        %6585 = vmatprep.subr.mxu0 0.0
        %6586 = vmatpush1.msra.mxu0 0.0
        %6587 = vmatprep.subr.mxu0 0.0
        %6588 = vmatpush1.msra.mxu0 0.0
        %6589 = vmatprep.mubr.f32.mxu0 0.0
        %6590 = vmatmul.mubr.f32.gmra.mrb[0].mxu0 %v745
        %v6591 = vpop.f32.mrb[0].mxu0
        %v6592 = vadd.f32 %v741, %v6591
        %v6593 = vpop.f32.mrb[0].mxu0
        %6594 = vdwg.mxu0
        %v6595 = vsub.f32 0.0, %v6592
        %v6596 = vmul.f32 %v6595, 1.442695
        %v6597 = vpow.pop %v6596
        %v6598 = vadd.f32 %v6597, 1.0
        %v6599 = vrcp.pop %v6598
        %v6600 = vmul.f32 1.0, %v6599
        %v6602 = vcombine.high %v6600, %v6600
        %v6604 = vunpack.c.l.s4 1966171168
        %v6605 = vunpack.c.0.s8 %v6604
        %v6606 = vlaneseq
        %v6607 = vshrl.u32 %v6606, 7
        %v6608 = vsub.s32 %v6605, %v6607
        %v6609 = vrot.slane %v6600, %v6608
        %v6611 = vunpack.c.l.s4 1966171168
        %v6612 = vunpack.c.0.s8 %v6611
        %v6613 = vlaneseq
        %v6614 = vshrl.u32 %v6613, 7
        %v6615 = vsub.s32 %v6612, %v6614
        %v6616 = vrot.slane %v6602, %v6615
        %v6617 = vcombine.high %v6609, %v6609
        %v6618 = vcombine.high %v6616, %v6616
        %v6620 = vunpack.c.l.s4 1966171168
        %v6621 = vunpack.c.0.s8 %v6620
        %v6622 = vlaneseq
        %v6623 = vshrl.u32 %v6622, 7
        %v6624 = vsub.s32 %v6621, %v6623
        %v6625 = vrot.slane %v6609, %v6624
        %v6627 = vunpack.c.l.s4 1966171168
        %v6628 = vunpack.c.0.s8 %v6627
        %v6629 = vlaneseq
        %v6630 = vshrl.u32 %v6629, 7
        %v6631 = vsub.s32 %v6628, %v6630
        %v6632 = vrot.slane %v6616, %v6631
        %v6634 = vunpack.c.l.s4 1966171168
        %v6635 = vunpack.c.0.s8 %v6634
        %v6636 = vlaneseq
        %v6637 = vshrl.u32 %v6636, 7
        %v6638 = vsub.s32 %v6635, %v6637
        %v6639 = vrot.slane %v6617, %v6638
        %v6641 = vunpack.c.l.s4 1966171168
        %v6642 = vunpack.c.0.s8 %v6641
        %v6643 = vlaneseq
        %v6644 = vshrl.u32 %v6643, 7
        %v6645 = vsub.s32 %v6642, %v6644
        %v6646 = vrot.slane %v6618, %v6645
        %v6647 = vcombine.high %v6625, %v6625
        %v6648 = vcombine.high %v6632, %v6632
        %v6649 = vcombine.high %v6639, %v6639
        %v6650 = vcombine.high %v6646, %v6646
        %v6651 = vlaneseq
        %v6652 = vshrl.u32 %v6651, 7
        %v6653 = vsub.s32 0, %v6652
        %v6654 = vrot.slane %v6625, %v6653
        %v6655 = vlaneseq
        %v6656 = vshrl.u32 %v6655, 7
        %v6657 = vsub.s32 0, %v6656
        %v6658 = vrot.slane %v6639, %v6657
        %v6659 = vlaneseq
        %v6660 = vshrl.u32 %v6659, 7
        %v6661 = vsub.s32 0, %v6660
        %v6662 = vrot.slane %v6647, %v6661
        %v6663 = vlaneseq
        %v6664 = vshrl.u32 %v6663, 7
        %v6665 = vsub.s32 0, %v6664
        %v6666 = vrot.slane %v6649, %v6665
        %v6667 = vlaneseq
        %v6668 = vshrl.u32 %v6667, 7
        %v6669 = vsub.s32 0, %v6668
        %v6670 = vrot.slane %v6632, %v6669
        %v6671 = vlaneseq
        %v6672 = vshrl.u32 %v6671, 7
        %v6673 = vsub.s32 0, %v6672
        %v6674 = vrot.slane %v6646, %v6673
        %v6675 = vlaneseq
        %v6676 = vshrl.u32 %v6675, 7
        %v6677 = vsub.s32 0, %v6676
        %v6678 = vrot.slane %v6648, %v6677
        %v6679 = vlaneseq
        %v6680 = vshrl.u32 %v6679, 7
        %v6681 = vsub.s32 0, %v6680
        %v6682 = vrot.slane %v6650, %v6681
        %v6691 = vmul.f32 %v880, %v6654
        %v6692 = vmul.f32 %v885, %v6654
        %v6693 = vmul.f32 %v880, %v6658
        %v6694 = vmul.f32 %v885, %v6658
        %v6695 = vmul.f32 %v880, %v6662
        %v6696 = vmul.f32 %v885, %v6662
        %v6697 = vmul.f32 %v880, %v6666
        %v6698 = vmul.f32 %v885, %v6666
        %v6699 = vmul.f32 %v880, %v6670
        %v6700 = vmul.f32 %v885, %v6670
        %v6701 = vmul.f32 %v880, %v6674
        %v6702 = vmul.f32 %v885, %v6674
        %v6703 = vmul.f32 %v880, %v6678
        %v6704 = vmul.f32 %v885, %v6678
        %v6705 = vmul.f32 %v880, %v6682
        %v6706 = vmul.f32 %v885, %v6682
        %v6707 = vadd.f32 %v6691, 0.0
        %v6708 = vadd.f32 %v6692, 0.0
        %v6709 = vadd.f32 %v6693, 0.0
        %v6710 = vadd.f32 %v6694, 0.0
        %v6711 = vadd.f32 %v6695, 0.0
        %v6712 = vadd.f32 %v6696, 0.0
        %v6713 = vadd.f32 %v6697, 0.0
        %v6714 = vadd.f32 %v6698, 0.0
        %v6715 = vadd.f32 %v6699, 0.0
        %v6716 = vadd.f32 %v6700, 0.0
        %v6717 = vadd.f32 %v6701, 0.0
        %v6718 = vadd.f32 %v6702, 0.0
        %v6719 = vadd.f32 %v6703, 0.0
        %v6720 = vadd.f32 %v6704, 0.0
        %v6721 = vadd.f32 %v6705, 0.0
        %v6722 = vadd.f32 %v6706, 0.0
        %v6731 = vrot.slane %v6288, 4
        %v6732 = vrot.slane %v6298, 4
        %v6733 = vrot.slane %v6308, 4
        %v6734 = vrot.slane %v6318, 4
        %v6735 = vrot.slane %v6328, 4
        %v6736 = vrot.slane %v6338, 4
        %v6737 = vrot.slane %v6348, 4
        %v6738 = vrot.slane %v6358, 4
        %v6747 = vsel %vm564, %v6731, 0.0
        %v6748 = vrot.slane %v6747, 4
        %v6749 = vadd.f32 %v6747, %v6748
        %v6750 = vrot.slane %v6749, 2
        %v6751 = vadd.f32 %v6749, %v6750
        %v6752 = vrot.slane %v6751, 1
        %v6753 = vadd.f32 %v6751, %v6752
        %v6754 = vsel %vm564, %v6732, 0.0
        %v6755 = vrot.slane %v6754, 4
        %v6756 = vadd.f32 %v6754, %v6755
        %v6757 = vrot.slane %v6756, 2
        %v6758 = vadd.f32 %v6756, %v6757
        %v6759 = vrot.slane %v6758, 1
        %v6760 = vadd.f32 %v6758, %v6759
        %v6761 = vsel %vm564, %v6733, 0.0
        %v6762 = vrot.slane %v6761, 4
        %v6763 = vadd.f32 %v6761, %v6762
        %v6764 = vrot.slane %v6763, 2
        %v6765 = vadd.f32 %v6763, %v6764
        %v6766 = vrot.slane %v6765, 1
        %v6767 = vadd.f32 %v6765, %v6766
        %v6768 = vsel %vm564, %v6734, 0.0
        %v6769 = vrot.slane %v6768, 4
        %v6770 = vadd.f32 %v6768, %v6769
        %v6771 = vrot.slane %v6770, 2
        %v6772 = vadd.f32 %v6770, %v6771
        %v6773 = vrot.slane %v6772, 1
        %v6774 = vadd.f32 %v6772, %v6773
        %v6775 = vsel %vm564, %v6735, 0.0
        %v6776 = vrot.slane %v6775, 4
        %v6777 = vadd.f32 %v6775, %v6776
        %v6778 = vrot.slane %v6777, 2
        %v6779 = vadd.f32 %v6777, %v6778
        %v6780 = vrot.slane %v6779, 1
        %v6781 = vadd.f32 %v6779, %v6780
        %v6782 = vsel %vm564, %v6736, 0.0
        %v6783 = vrot.slane %v6782, 4
        %v6784 = vadd.f32 %v6782, %v6783
        %v6785 = vrot.slane %v6784, 2
        %v6786 = vadd.f32 %v6784, %v6785
        %v6787 = vrot.slane %v6786, 1
        %v6788 = vadd.f32 %v6786, %v6787
        %v6789 = vsel %vm564, %v6737, 0.0
        %v6790 = vrot.slane %v6789, 4
        %v6791 = vadd.f32 %v6789, %v6790
        %v6792 = vrot.slane %v6791, 2
        %v6793 = vadd.f32 %v6791, %v6792
        %v6794 = vrot.slane %v6793, 1
        %v6795 = vadd.f32 %v6793, %v6794
        %v6796 = vsel %vm564, %v6738, 0.0
        %v6797 = vrot.slane %v6796, 4
        %v6798 = vadd.f32 %v6796, %v6797
        %v6799 = vrot.slane %v6798, 2
        %v6800 = vadd.f32 %v6798, %v6799
        %v6801 = vrot.slane %v6800, 1
        %v6802 = vadd.f32 %v6800, %v6801
        %v6803 = vmul.f32 %v6753, %v621
        %v6804 = vmul.f32 %v6760, %v621
        %v6805 = vmul.f32 %v6767, %v621
        %v6806 = vmul.f32 %v6774, %v621
        %v6807 = vmul.f32 %v6781, %v621
        %v6808 = vmul.f32 %v6788, %v621
        %v6809 = vmul.f32 %v6795, %v621
        %v6810 = vmul.f32 %v6802, %v621
        %v6819 = vsel %vm643, %v6804, %v6803
        %v6820 = vsel %vm645, %v6805, %v6819
        %v6821 = vsel %vm647, %v6806, %v6820
        %v6822 = vsel %vm649, %v6807, %v6821
        %v6823 = vsel %vm651, %v6808, %v6822
        %v6824 = vsel %vm653, %v6809, %v6823
        %v6825 = vsel %vm655, %v6810, %v6824
        %6827 = vmatprep.subr.mxu0 0.0
        %6828 = vmatpush1.msra.mxu0 %v6825
        %6829 = vmatprep.subr.mxu0 0.0
        %6830 = vmatpush1.msra.mxu0 0.0
        %6831 = vmatprep.subr.mxu0 0.0
        %6832 = vmatpush1.msra.mxu0 0.0
        %6833 = vmatprep.subr.mxu0 0.0
        %6834 = vmatpush1.msra.mxu0 0.0
        %6835 = vmatprep.subr.mxu0 0.0
        %6836 = vmatpush1.msra.mxu0 0.0
        %6837 = vmatprep.subr.mxu0 0.0
        %6838 = vmatpush1.msra.mxu0 0.0
        %6839 = vmatprep.subr.mxu0 0.0
        %6840 = vmatpush1.msra.mxu0 0.0
        %6841 = vmatprep.subr.mxu0 0.0
        %6842 = vmatpush1.msra.mxu0 0.0
        %6843 = vmatprep.subr.mxu0 0.0
        %6844 = vmatpush1.msra.mxu0 0.0
        %6845 = vmatprep.subr.mxu0 0.0
        %6846 = vmatpush1.msra.mxu0 0.0
        %6847 = vmatprep.subr.mxu0 0.0
        %6848 = vmatpush1.msra.mxu0 0.0
        %6849 = vmatprep.subr.mxu0 0.0
        %6850 = vmatpush1.msra.mxu0 0.0
        %6851 = vmatprep.subr.mxu0 0.0
        %6852 = vmatpush1.msra.mxu0 0.0
        %6853 = vmatprep.subr.mxu0 0.0
        %6854 = vmatpush1.msra.mxu0 0.0
        %6855 = vmatprep.subr.mxu0 0.0
        %6856 = vmatpush1.msra.mxu0 0.0
        %6857 = vmatprep.subr.mxu0 0.0
        %6858 = vmatpush1.msra.mxu0 0.0
        %6859 = vmatprep.subr.mxu0 0.0
        %6860 = vmatpush1.msra.mxu0 0.0
        %6861 = vmatprep.subr.mxu0 0.0
        %6862 = vmatpush1.msra.mxu0 0.0
        %6863 = vmatprep.subr.mxu0 0.0
        %6864 = vmatpush1.msra.mxu0 0.0
        %6865 = vmatprep.subr.mxu0 0.0
        %6866 = vmatpush1.msra.mxu0 0.0
        %6867 = vmatprep.subr.mxu0 0.0
        %6868 = vmatpush1.msra.mxu0 0.0
        %6869 = vmatprep.subr.mxu0 0.0
        %6870 = vmatpush1.msra.mxu0 0.0
        %6871 = vmatprep.subr.mxu0 0.0
        %6872 = vmatpush1.msra.mxu0 0.0
        %6873 = vmatprep.subr.mxu0 0.0
        %6874 = vmatpush1.msra.mxu0 0.0
        %6875 = vmatprep.subr.mxu0 0.0
        %6876 = vmatpush1.msra.mxu0 0.0
        %6877 = vmatprep.subr.mxu0 0.0
        %6878 = vmatpush1.msra.mxu0 0.0
        %6879 = vmatprep.subr.mxu0 0.0
        %6880 = vmatpush1.msra.mxu0 0.0
        %6881 = vmatprep.subr.mxu0 0.0
        %6882 = vmatpush1.msra.mxu0 0.0
        %6883 = vmatprep.subr.mxu0 0.0
        %6884 = vmatpush1.msra.mxu0 0.0
        %6885 = vmatprep.subr.mxu0 0.0
        %6886 = vmatpush1.msra.mxu0 0.0
        %6887 = vmatprep.subr.mxu0 0.0
        %6888 = vmatpush1.msra.mxu0 0.0
        %6889 = vmatprep.subr.mxu0 0.0
        %6890 = vmatpush1.msra.mxu0 0.0
        %6891 = vmatprep.mubr.f32.mxu0 0.0
        %6892 = vmatmul.mubr.f32.gmra.mrb[0].mxu0 %v660
        %v6893 = vpop.f32.mrb[0].mxu0
        %v6894 = vadd.f32 %v633, %v6893
        %v6895 = vpop.f32.mrb[0].mxu0
        %6896 = vdwg.mxu0
        %v6897 = vmax.f32 %v6894, 0.0
        %v6898 = vmin.f32 %v6894, 0.0
        %v6899 = vmul.f32 %v6898, 1.442695
        %v6900 = vpow.pop %v6899
        %v6901 = vsub.f32 %v6900, 1.0
        %v6902 = vadd.f32 %v6897, %v6901
        %v6904 = vsel %vm747, %v6902, 0
        %6906 = vmatprep.subr.mxu0 0.0
        %6907 = vmatpush1.msra.mxu0 %v6904
        %6908 = vmatprep.subr.mxu0 0.0
        %6909 = vmatpush1.msra.mxu0 0.0
        %6910 = vmatprep.subr.mxu0 0.0
        %6911 = vmatpush1.msra.mxu0 0.0
        %6912 = vmatprep.subr.mxu0 0.0
        %6913 = vmatpush1.msra.mxu0 0.0
        %6914 = vmatprep.subr.mxu0 0.0
        %6915 = vmatpush1.msra.mxu0 0.0
        %6916 = vmatprep.subr.mxu0 0.0
        %6917 = vmatpush1.msra.mxu0 0.0
        %6918 = vmatprep.subr.mxu0 0.0
        %6919 = vmatpush1.msra.mxu0 0.0
        %6920 = vmatprep.subr.mxu0 0.0
        %6921 = vmatpush1.msra.mxu0 0.0
        %6922 = vmatprep.subr.mxu0 0.0
        %6923 = vmatpush1.msra.mxu0 0.0
        %6924 = vmatprep.subr.mxu0 0.0
        %6925 = vmatpush1.msra.mxu0 0.0
        %6926 = vmatprep.subr.mxu0 0.0
        %6927 = vmatpush1.msra.mxu0 0.0
        %6928 = vmatprep.subr.mxu0 0.0
        %6929 = vmatpush1.msra.mxu0 0.0
        %6930 = vmatprep.subr.mxu0 0.0
        %6931 = vmatpush1.msra.mxu0 0.0
        %6932 = vmatprep.subr.mxu0 0.0
        %6933 = vmatpush1.msra.mxu0 0.0
        %6934 = vmatprep.subr.mxu0 0.0
        %6935 = vmatpush1.msra.mxu0 0.0
        %6936 = vmatprep.subr.mxu0 0.0
        %6937 = vmatpush1.msra.mxu0 0.0
        %6938 = vmatprep.subr.mxu0 0.0
        %6939 = vmatpush1.msra.mxu0 0.0
        %6940 = vmatprep.subr.mxu0 0.0
        %6941 = vmatpush1.msra.mxu0 0.0
        %6942 = vmatprep.subr.mxu0 0.0
        %6943 = vmatpush1.msra.mxu0 0.0
        %6944 = vmatprep.subr.mxu0 0.0
        %6945 = vmatpush1.msra.mxu0 0.0
        %6946 = vmatprep.subr.mxu0 0.0
        %6947 = vmatpush1.msra.mxu0 0.0
        %6948 = vmatprep.subr.mxu0 0.0
        %6949 = vmatpush1.msra.mxu0 0.0
        %6950 = vmatprep.subr.mxu0 0.0
        %6951 = vmatpush1.msra.mxu0 0.0
        %6952 = vmatprep.subr.mxu0 0.0
        %6953 = vmatpush1.msra.mxu0 0.0
        %6954 = vmatprep.subr.mxu0 0.0
        %6955 = vmatpush1.msra.mxu0 0.0
        %6956 = vmatprep.subr.mxu0 0.0
        %6957 = vmatpush1.msra.mxu0 0.0
        %6958 = vmatprep.subr.mxu0 0.0
        %6959 = vmatpush1.msra.mxu0 0.0
        %6960 = vmatprep.subr.mxu0 0.0
        %6961 = vmatpush1.msra.mxu0 0.0
        %6962 = vmatprep.subr.mxu0 0.0
        %6963 = vmatpush1.msra.mxu0 0.0
        %6964 = vmatprep.subr.mxu0 0.0
        %6965 = vmatpush1.msra.mxu0 0.0
        %6966 = vmatprep.subr.mxu0 0.0
        %6967 = vmatpush1.msra.mxu0 0.0
        %6968 = vmatprep.subr.mxu0 0.0
        %6969 = vmatpush1.msra.mxu0 0.0
        %6970 = vmatprep.mubr.f32.mxu0 0.0
        %6971 = vmatmul.mubr.f32.gmra.mrb[0].mxu0 %v745
        %v6972 = vpop.f32.mrb[0].mxu0
        %v6973 = vadd.f32 %v741, %v6972
        %v6974 = vpop.f32.mrb[0].mxu0
        %6975 = vdwg.mxu0
        %v6976 = vsub.f32 0.0, %v6973
        %v6977 = vmul.f32 %v6976, 1.442695
        %v6978 = vpow.pop %v6977
        %v6979 = vadd.f32 %v6978, 1.0
        %v6980 = vrcp.pop %v6979
        %v6981 = vmul.f32 1.0, %v6980
        %v6983 = vcombine.high %v6981, %v6981
        %v6985 = vunpack.c.l.s4 1966171168
        %v6986 = vunpack.c.0.s8 %v6985
        %v6987 = vlaneseq
        %v6988 = vshrl.u32 %v6987, 7
        %v6989 = vsub.s32 %v6986, %v6988
        %v6990 = vrot.slane %v6981, %v6989
        %v6992 = vunpack.c.l.s4 1966171168
        %v6993 = vunpack.c.0.s8 %v6992
        %v6994 = vlaneseq
        %v6995 = vshrl.u32 %v6994, 7
        %v6996 = vsub.s32 %v6993, %v6995
        %v6997 = vrot.slane %v6983, %v6996
        %v6998 = vcombine.high %v6990, %v6990
        %v6999 = vcombine.high %v6997, %v6997
        %v7001 = vunpack.c.l.s4 1966171168
        %v7002 = vunpack.c.0.s8 %v7001
        %v7003 = vlaneseq
        %v7004 = vshrl.u32 %v7003, 7
        %v7005 = vsub.s32 %v7002, %v7004
        %v7006 = vrot.slane %v6990, %v7005
        %v7008 = vunpack.c.l.s4 1966171168
        %v7009 = vunpack.c.0.s8 %v7008
        %v7010 = vlaneseq
        %v7011 = vshrl.u32 %v7010, 7
        %v7012 = vsub.s32 %v7009, %v7011
        %v7013 = vrot.slane %v6997, %v7012
        %v7015 = vunpack.c.l.s4 1966171168
        %v7016 = vunpack.c.0.s8 %v7015
        %v7017 = vlaneseq
        %v7018 = vshrl.u32 %v7017, 7
        %v7019 = vsub.s32 %v7016, %v7018
        %v7020 = vrot.slane %v6998, %v7019
        %v7022 = vunpack.c.l.s4 1966171168
        %v7023 = vunpack.c.0.s8 %v7022
        %v7024 = vlaneseq
        %v7025 = vshrl.u32 %v7024, 7
        %v7026 = vsub.s32 %v7023, %v7025
        %v7027 = vrot.slane %v6999, %v7026
        %v7028 = vcombine.high %v7006, %v7006
        %v7029 = vcombine.high %v7013, %v7013
        %v7030 = vcombine.high %v7020, %v7020
        %v7031 = vcombine.high %v7027, %v7027
        %v7032 = vlaneseq
        %v7033 = vshrl.u32 %v7032, 7
        %v7034 = vsub.s32 0, %v7033
        %v7035 = vrot.slane %v7006, %v7034
        %v7036 = vlaneseq
        %v7037 = vshrl.u32 %v7036, 7
        %v7038 = vsub.s32 0, %v7037
        %v7039 = vrot.slane %v7020, %v7038
        %v7040 = vlaneseq
        %v7041 = vshrl.u32 %v7040, 7
        %v7042 = vsub.s32 0, %v7041
        %v7043 = vrot.slane %v7028, %v7042
        %v7044 = vlaneseq
        %v7045 = vshrl.u32 %v7044, 7
        %v7046 = vsub.s32 0, %v7045
        %v7047 = vrot.slane %v7030, %v7046
        %v7048 = vlaneseq
        %v7049 = vshrl.u32 %v7048, 7
        %v7050 = vsub.s32 0, %v7049
        %v7051 = vrot.slane %v7013, %v7050
        %v7052 = vlaneseq
        %v7053 = vshrl.u32 %v7052, 7
        %v7054 = vsub.s32 0, %v7053
        %v7055 = vrot.slane %v7027, %v7054
        %v7056 = vlaneseq
        %v7057 = vshrl.u32 %v7056, 7
        %v7058 = vsub.s32 0, %v7057
        %v7059 = vrot.slane %v7029, %v7058
        %v7060 = vlaneseq
        %v7061 = vshrl.u32 %v7060, 7
        %v7062 = vsub.s32 0, %v7061
        %v7063 = vrot.slane %v7031, %v7062
        %v7072 = vmul.f32 %v1270, %v7035
        %v7073 = vmul.f32 %v1274, %v7035
        %v7074 = vmul.f32 %v1270, %v7039
        %v7075 = vmul.f32 %v1274, %v7039
        %v7076 = vmul.f32 %v1270, %v7043
        %v7077 = vmul.f32 %v1274, %v7043
        %v7078 = vmul.f32 %v1270, %v7047
        %v7079 = vmul.f32 %v1274, %v7047
        %v7080 = vmul.f32 %v1270, %v7051
        %v7081 = vmul.f32 %v1274, %v7051
        %v7082 = vmul.f32 %v1270, %v7055
        %v7083 = vmul.f32 %v1274, %v7055
        %v7084 = vmul.f32 %v1270, %v7059
        %v7085 = vmul.f32 %v1274, %v7059
        %v7086 = vmul.f32 %v1270, %v7063
        %v7087 = vmul.f32 %v1274, %v7063
        %v7088 = vadd.f32 %v6707, %v7072
        %v7089 = vadd.f32 %v6708, %v7073
        %v7090 = vadd.f32 %v6709, %v7074
        %v7091 = vadd.f32 %v6710, %v7075
        %v7092 = vadd.f32 %v6711, %v7076
        %v7093 = vadd.f32 %v6712, %v7077
        %v7094 = vadd.f32 %v6713, %v7078
        %v7095 = vadd.f32 %v6714, %v7079
        %v7096 = vadd.f32 %v6715, %v7080
        %v7097 = vadd.f32 %v6716, %v7081
        %v7098 = vadd.f32 %v6717, %v7082
        %v7099 = vadd.f32 %v6718, %v7083
        %v7100 = vadd.f32 %v6719, %v7084
        %v7101 = vadd.f32 %v6720, %v7085
        %v7102 = vadd.f32 %v6721, %v7086
        %v7103 = vadd.f32 %v6722, %v7087
        %v7104 = vsel %vm564, %v6293, 0.0
        %v7105 = vrot.slane %v7104, 4
        %v7106 = vadd.f32 %v7104, %v7105
        %v7107 = vrot.slane %v7106, 2
        %v7108 = vadd.f32 %v7106, %v7107
        %v7109 = vrot.slane %v7108, 1
        %v7110 = vadd.f32 %v7108, %v7109
        %v7111 = vsel %vm564, %v6303, 0.0
        %v7112 = vrot.slane %v7111, 4
        %v7113 = vadd.f32 %v7111, %v7112
        %v7114 = vrot.slane %v7113, 2
        %v7115 = vadd.f32 %v7113, %v7114
        %v7116 = vrot.slane %v7115, 1
        %v7117 = vadd.f32 %v7115, %v7116
        %v7118 = vsel %vm564, %v6313, 0.0
        %v7119 = vrot.slane %v7118, 4
        %v7120 = vadd.f32 %v7118, %v7119
        %v7121 = vrot.slane %v7120, 2
        %v7122 = vadd.f32 %v7120, %v7121
        %v7123 = vrot.slane %v7122, 1
        %v7124 = vadd.f32 %v7122, %v7123
        %v7125 = vsel %vm564, %v6323, 0.0
        %v7126 = vrot.slane %v7125, 4
        %v7127 = vadd.f32 %v7125, %v7126
        %v7128 = vrot.slane %v7127, 2
        %v7129 = vadd.f32 %v7127, %v7128
        %v7130 = vrot.slane %v7129, 1
        %v7131 = vadd.f32 %v7129, %v7130
        %v7132 = vsel %vm564, %v6333, 0.0
        %v7133 = vrot.slane %v7132, 4
        %v7134 = vadd.f32 %v7132, %v7133
        %v7135 = vrot.slane %v7134, 2
        %v7136 = vadd.f32 %v7134, %v7135
        %v7137 = vrot.slane %v7136, 1
        %v7138 = vadd.f32 %v7136, %v7137
        %v7139 = vsel %vm564, %v6343, 0.0
        %v7140 = vrot.slane %v7139, 4
        %v7141 = vadd.f32 %v7139, %v7140
        %v7142 = vrot.slane %v7141, 2
        %v7143 = vadd.f32 %v7141, %v7142
        %v7144 = vrot.slane %v7143, 1
        %v7145 = vadd.f32 %v7143, %v7144
        %v7146 = vsel %vm564, %v6353, 0.0
        %v7147 = vrot.slane %v7146, 4
        %v7148 = vadd.f32 %v7146, %v7147
        %v7149 = vrot.slane %v7148, 2
        %v7150 = vadd.f32 %v7148, %v7149
        %v7151 = vrot.slane %v7150, 1
        %v7152 = vadd.f32 %v7150, %v7151
        %v7153 = vsel %vm564, %v6363, 0.0
        %v7154 = vrot.slane %v7153, 4
        %v7155 = vadd.f32 %v7153, %v7154
        %v7156 = vrot.slane %v7155, 2
        %v7157 = vadd.f32 %v7155, %v7156
        %v7158 = vrot.slane %v7157, 1
        %v7159 = vadd.f32 %v7157, %v7158
        %v7160 = vmul.f32 %v7110, %v621
        %v7161 = vmul.f32 %v7117, %v621
        %v7162 = vmul.f32 %v7124, %v621
        %v7163 = vmul.f32 %v7131, %v621
        %v7164 = vmul.f32 %v7138, %v621
        %v7165 = vmul.f32 %v7145, %v621
        %v7166 = vmul.f32 %v7152, %v621
        %v7167 = vmul.f32 %v7159, %v621
        %v7176 = vsel %vm643, %v7161, %v7160
        %v7177 = vsel %vm645, %v7162, %v7176
        %v7178 = vsel %vm647, %v7163, %v7177
        %v7179 = vsel %vm649, %v7164, %v7178
        %v7180 = vsel %vm651, %v7165, %v7179
        %v7181 = vsel %vm653, %v7166, %v7180
        %v7182 = vsel %vm655, %v7167, %v7181
        %7184 = vmatprep.subr.mxu0 0.0
        %7185 = vmatpush1.msra.mxu0 %v7182
        %7186 = vmatprep.subr.mxu0 0.0
        %7187 = vmatpush1.msra.mxu0 0.0
        %7188 = vmatprep.subr.mxu0 0.0
        %7189 = vmatpush1.msra.mxu0 0.0
        %7190 = vmatprep.subr.mxu0 0.0
        %7191 = vmatpush1.msra.mxu0 0.0
        %7192 = vmatprep.subr.mxu0 0.0
        %7193 = vmatpush1.msra.mxu0 0.0
        %7194 = vmatprep.subr.mxu0 0.0
        %7195 = vmatpush1.msra.mxu0 0.0
        %7196 = vmatprep.subr.mxu0 0.0
        %7197 = vmatpush1.msra.mxu0 0.0
        %7198 = vmatprep.subr.mxu0 0.0
        %7199 = vmatpush1.msra.mxu0 0.0
        %7200 = vmatprep.subr.mxu0 0.0
        %7201 = vmatpush1.msra.mxu0 0.0
        %7202 = vmatprep.subr.mxu0 0.0
        %7203 = vmatpush1.msra.mxu0 0.0
        %7204 = vmatprep.subr.mxu0 0.0
        %7205 = vmatpush1.msra.mxu0 0.0
        %7206 = vmatprep.subr.mxu0 0.0
        %7207 = vmatpush1.msra.mxu0 0.0
        %7208 = vmatprep.subr.mxu0 0.0
        %7209 = vmatpush1.msra.mxu0 0.0
        %7210 = vmatprep.subr.mxu0 0.0
        %7211 = vmatpush1.msra.mxu0 0.0
        %7212 = vmatprep.subr.mxu0 0.0
        %7213 = vmatpush1.msra.mxu0 0.0
        %7214 = vmatprep.subr.mxu0 0.0
        %7215 = vmatpush1.msra.mxu0 0.0
        %7216 = vmatprep.subr.mxu0 0.0
        %7217 = vmatpush1.msra.mxu0 0.0
        %7218 = vmatprep.subr.mxu0 0.0
        %7219 = vmatpush1.msra.mxu0 0.0
        %7220 = vmatprep.subr.mxu0 0.0
        %7221 = vmatpush1.msra.mxu0 0.0
        %7222 = vmatprep.subr.mxu0 0.0
        %7223 = vmatpush1.msra.mxu0 0.0
        %7224 = vmatprep.subr.mxu0 0.0
        %7225 = vmatpush1.msra.mxu0 0.0
        %7226 = vmatprep.subr.mxu0 0.0
        %7227 = vmatpush1.msra.mxu0 0.0
        %7228 = vmatprep.subr.mxu0 0.0
        %7229 = vmatpush1.msra.mxu0 0.0
        %7230 = vmatprep.subr.mxu0 0.0
        %7231 = vmatpush1.msra.mxu0 0.0
        %7232 = vmatprep.subr.mxu0 0.0
        %7233 = vmatpush1.msra.mxu0 0.0
        %7234 = vmatprep.subr.mxu0 0.0
        %7235 = vmatpush1.msra.mxu0 0.0
        %7236 = vmatprep.subr.mxu0 0.0
        %7237 = vmatpush1.msra.mxu0 0.0
        %7238 = vmatprep.subr.mxu0 0.0
        %7239 = vmatpush1.msra.mxu0 0.0
        %7240 = vmatprep.subr.mxu0 0.0
        %7241 = vmatpush1.msra.mxu0 0.0
        %7242 = vmatprep.subr.mxu0 0.0
        %7243 = vmatpush1.msra.mxu0 0.0
        %7244 = vmatprep.subr.mxu0 0.0
        %7245 = vmatpush1.msra.mxu0 0.0
        %7246 = vmatprep.subr.mxu0 0.0
        %7247 = vmatpush1.msra.mxu0 0.0
        %7248 = vmatprep.mubr.f32.mxu0 0.0
        %7249 = vmatmul.mubr.f32.gmra.mrb[0].mxu0 %v660
        %v7250 = vpop.f32.mrb[0].mxu0
        %v7251 = vadd.f32 %v633, %v7250
        %v7252 = vpop.f32.mrb[0].mxu0
        %7253 = vdwg.mxu0
        %v7254 = vmax.f32 %v7251, 0.0
        %v7255 = vmin.f32 %v7251, 0.0
        %v7256 = vmul.f32 %v7255, 1.442695
        %v7257 = vpow.pop %v7256
        %v7258 = vsub.f32 %v7257, 1.0
        %v7259 = vadd.f32 %v7254, %v7258
        %v7261 = vsel %vm747, %v7259, 0
        %7263 = vmatprep.subr.mxu0 0.0
        %7264 = vmatpush1.msra.mxu0 %v7261
        %7265 = vmatprep.subr.mxu0 0.0
        %7266 = vmatpush1.msra.mxu0 0.0
        %7267 = vmatprep.subr.mxu0 0.0
        %7268 = vmatpush1.msra.mxu0 0.0
        %7269 = vmatprep.subr.mxu0 0.0
        %7270 = vmatpush1.msra.mxu0 0.0
        %7271 = vmatprep.subr.mxu0 0.0
        %7272 = vmatpush1.msra.mxu0 0.0
        %7273 = vmatprep.subr.mxu0 0.0
        %7274 = vmatpush1.msra.mxu0 0.0
        %7275 = vmatprep.subr.mxu0 0.0
        %7276 = vmatpush1.msra.mxu0 0.0
        %7277 = vmatprep.subr.mxu0 0.0
        %7278 = vmatpush1.msra.mxu0 0.0
        %7279 = vmatprep.subr.mxu0 0.0
        %7280 = vmatpush1.msra.mxu0 0.0
        %7281 = vmatprep.subr.mxu0 0.0
        %7282 = vmatpush1.msra.mxu0 0.0
        %7283 = vmatprep.subr.mxu0 0.0
        %7284 = vmatpush1.msra.mxu0 0.0
        %7285 = vmatprep.subr.mxu0 0.0
        %7286 = vmatpush1.msra.mxu0 0.0
        %7287 = vmatprep.subr.mxu0 0.0
        %7288 = vmatpush1.msra.mxu0 0.0
        %7289 = vmatprep.subr.mxu0 0.0
        %7290 = vmatpush1.msra.mxu0 0.0
        %7291 = vmatprep.subr.mxu0 0.0
        %7292 = vmatpush1.msra.mxu0 0.0
        %7293 = vmatprep.subr.mxu0 0.0
        %7294 = vmatpush1.msra.mxu0 0.0
        %7295 = vmatprep.subr.mxu0 0.0
        %7296 = vmatpush1.msra.mxu0 0.0
        %7297 = vmatprep.subr.mxu0 0.0
        %7298 = vmatpush1.msra.mxu0 0.0
        %7299 = vmatprep.subr.mxu0 0.0
        %7300 = vmatpush1.msra.mxu0 0.0
        %7301 = vmatprep.subr.mxu0 0.0
        %7302 = vmatpush1.msra.mxu0 0.0
        %7303 = vmatprep.subr.mxu0 0.0
        %7304 = vmatpush1.msra.mxu0 0.0
        %7305 = vmatprep.subr.mxu0 0.0
        %7306 = vmatpush1.msra.mxu0 0.0
        %7307 = vmatprep.subr.mxu0 0.0
        %7308 = vmatpush1.msra.mxu0 0.0
        %7309 = vmatprep.subr.mxu0 0.0
        %7310 = vmatpush1.msra.mxu0 0.0
        %7311 = vmatprep.subr.mxu0 0.0
        %7312 = vmatpush1.msra.mxu0 0.0
        %7313 = vmatprep.subr.mxu0 0.0
        %7314 = vmatpush1.msra.mxu0 0.0
        %7315 = vmatprep.subr.mxu0 0.0
        %7316 = vmatpush1.msra.mxu0 0.0
        %7317 = vmatprep.subr.mxu0 0.0
        %7318 = vmatpush1.msra.mxu0 0.0
        %7319 = vmatprep.subr.mxu0 0.0
        %7320 = vmatpush1.msra.mxu0 0.0
        %7321 = vmatprep.subr.mxu0 0.0
        %7322 = vmatpush1.msra.mxu0 0.0
        %7323 = vmatprep.subr.mxu0 0.0
        %7324 = vmatpush1.msra.mxu0 0.0
        %7325 = vmatprep.subr.mxu0 0.0
        %7326 = vmatpush1.msra.mxu0 0.0
        %7327 = vmatprep.mubr.f32.mxu0 0.0
        %7328 = vmatmul.mubr.f32.gmra.mrb[0].mxu0 %v745
        %v7329 = vpop.f32.mrb[0].mxu0
        %v7330 = vadd.f32 %v741, %v7329
        %v7331 = vpop.f32.mrb[0].mxu0
        %7332 = vdwg.mxu0
        %v7333 = vsub.f32 0.0, %v7330
        %v7334 = vmul.f32 %v7333, 1.442695
        %v7335 = vpow.pop %v7334
        %v7336 = vadd.f32 %v7335, 1.0
        %v7337 = vrcp.pop %v7336
        %v7338 = vmul.f32 1.0, %v7337
        %v7340 = vcombine.high %v7338, %v7338
        %v7342 = vunpack.c.l.s4 1966171168
        %v7343 = vunpack.c.0.s8 %v7342
        %v7344 = vlaneseq
        %v7345 = vshrl.u32 %v7344, 7
        %v7346 = vsub.s32 %v7343, %v7345
        %v7347 = vrot.slane %v7338, %v7346
        %v7349 = vunpack.c.l.s4 1966171168
        %v7350 = vunpack.c.0.s8 %v7349
        %v7351 = vlaneseq
        %v7352 = vshrl.u32 %v7351, 7
        %v7353 = vsub.s32 %v7350, %v7352
        %v7354 = vrot.slane %v7340, %v7353
        %v7355 = vcombine.high %v7347, %v7347
        %v7356 = vcombine.high %v7354, %v7354
        %v7358 = vunpack.c.l.s4 1966171168
        %v7359 = vunpack.c.0.s8 %v7358
        %v7360 = vlaneseq
        %v7361 = vshrl.u32 %v7360, 7
        %v7362 = vsub.s32 %v7359, %v7361
        %v7363 = vrot.slane %v7347, %v7362
        %v7365 = vunpack.c.l.s4 1966171168
        %v7366 = vunpack.c.0.s8 %v7365
        %v7367 = vlaneseq
        %v7368 = vshrl.u32 %v7367, 7
        %v7369 = vsub.s32 %v7366, %v7368
        %v7370 = vrot.slane %v7354, %v7369
        %v7372 = vunpack.c.l.s4 1966171168
        %v7373 = vunpack.c.0.s8 %v7372
        %v7374 = vlaneseq
        %v7375 = vshrl.u32 %v7374, 7
        %v7376 = vsub.s32 %v7373, %v7375
        %v7377 = vrot.slane %v7355, %v7376
        %v7379 = vunpack.c.l.s4 1966171168
        %v7380 = vunpack.c.0.s8 %v7379
        %v7381 = vlaneseq
        %v7382 = vshrl.u32 %v7381, 7
        %v7383 = vsub.s32 %v7380, %v7382
        %v7384 = vrot.slane %v7356, %v7383
        %v7385 = vcombine.high %v7363, %v7363
        %v7386 = vcombine.high %v7370, %v7370
        %v7387 = vcombine.high %v7377, %v7377
        %v7388 = vcombine.high %v7384, %v7384
        %v7389 = vlaneseq
        %v7390 = vshrl.u32 %v7389, 7
        %v7391 = vsub.s32 0, %v7390
        %v7392 = vrot.slane %v7363, %v7391
        %v7393 = vlaneseq
        %v7394 = vshrl.u32 %v7393, 7
        %v7395 = vsub.s32 0, %v7394
        %v7396 = vrot.slane %v7377, %v7395
        %v7397 = vlaneseq
        %v7398 = vshrl.u32 %v7397, 7
        %v7399 = vsub.s32 0, %v7398
        %v7400 = vrot.slane %v7385, %v7399
        %v7401 = vlaneseq
        %v7402 = vshrl.u32 %v7401, 7
        %v7403 = vsub.s32 0, %v7402
        %v7404 = vrot.slane %v7387, %v7403
        %v7405 = vlaneseq
        %v7406 = vshrl.u32 %v7405, 7
        %v7407 = vsub.s32 0, %v7406
        %v7408 = vrot.slane %v7370, %v7407
        %v7409 = vlaneseq
        %v7410 = vshrl.u32 %v7409, 7
        %v7411 = vsub.s32 0, %v7410
        %v7412 = vrot.slane %v7384, %v7411
        %v7413 = vlaneseq
        %v7414 = vshrl.u32 %v7413, 7
        %v7415 = vsub.s32 0, %v7414
        %v7416 = vrot.slane %v7386, %v7415
        %v7417 = vlaneseq
        %v7418 = vshrl.u32 %v7417, 7
        %v7419 = vsub.s32 0, %v7418
        %v7420 = vrot.slane %v7388, %v7419
        %v7429 = vmul.f32 %v1635, %v7392
        %v7430 = vmul.f32 %v1639, %v7392
        %v7431 = vmul.f32 %v1635, %v7396
        %v7432 = vmul.f32 %v1639, %v7396
        %v7433 = vmul.f32 %v1635, %v7400
        %v7434 = vmul.f32 %v1639, %v7400
        %v7435 = vmul.f32 %v1635, %v7404
        %v7436 = vmul.f32 %v1639, %v7404
        %v7437 = vmul.f32 %v1635, %v7408
        %v7438 = vmul.f32 %v1639, %v7408
        %v7439 = vmul.f32 %v1635, %v7412
        %v7440 = vmul.f32 %v1639, %v7412
        %v7441 = vmul.f32 %v1635, %v7416
        %v7442 = vmul.f32 %v1639, %v7416
        %v7443 = vmul.f32 %v1635, %v7420
        %v7444 = vmul.f32 %v1639, %v7420
        %v7445 = vadd.f32 %v7088, %v7429
        %v7446 = vadd.f32 %v7089, %v7430
        %v7447 = vadd.f32 %v7090, %v7431
        %v7448 = vadd.f32 %v7091, %v7432
        %v7449 = vadd.f32 %v7092, %v7433
        %v7450 = vadd.f32 %v7093, %v7434
        %v7451 = vadd.f32 %v7094, %v7435
        %v7452 = vadd.f32 %v7095, %v7436
        %v7453 = vadd.f32 %v7096, %v7437
        %v7454 = vadd.f32 %v7097, %v7438
        %v7455 = vadd.f32 %v7098, %v7439
        %v7456 = vadd.f32 %v7099, %v7440
        %v7457 = vadd.f32 %v7100, %v7441
        %v7458 = vadd.f32 %v7101, %v7442
        %v7459 = vadd.f32 %v7102, %v7443
        %v7460 = vadd.f32 %v7103, %v7444
        %v7469 = vrot.slane %v6293, 4
        %v7470 = vrot.slane %v6303, 4
        %v7471 = vrot.slane %v6313, 4
        %v7472 = vrot.slane %v6323, 4
        %v7473 = vrot.slane %v6333, 4
        %v7474 = vrot.slane %v6343, 4
        %v7475 = vrot.slane %v6353, 4
        %v7476 = vrot.slane %v6363, 4
        %v7485 = vsel %vm564, %v7469, 0.0
        %v7486 = vrot.slane %v7485, 4
        %v7487 = vadd.f32 %v7485, %v7486
        %v7488 = vrot.slane %v7487, 2
        %v7489 = vadd.f32 %v7487, %v7488
        %v7490 = vrot.slane %v7489, 1
        %v7491 = vadd.f32 %v7489, %v7490
        %v7492 = vsel %vm564, %v7470, 0.0
        %v7493 = vrot.slane %v7492, 4
        %v7494 = vadd.f32 %v7492, %v7493
        %v7495 = vrot.slane %v7494, 2
        %v7496 = vadd.f32 %v7494, %v7495
        %v7497 = vrot.slane %v7496, 1
        %v7498 = vadd.f32 %v7496, %v7497
        %v7499 = vsel %vm564, %v7471, 0.0
        %v7500 = vrot.slane %v7499, 4
        %v7501 = vadd.f32 %v7499, %v7500
        %v7502 = vrot.slane %v7501, 2
        %v7503 = vadd.f32 %v7501, %v7502
        %v7504 = vrot.slane %v7503, 1
        %v7505 = vadd.f32 %v7503, %v7504
        %v7506 = vsel %vm564, %v7472, 0.0
        %v7507 = vrot.slane %v7506, 4
        %v7508 = vadd.f32 %v7506, %v7507
        %v7509 = vrot.slane %v7508, 2
        %v7510 = vadd.f32 %v7508, %v7509
        %v7511 = vrot.slane %v7510, 1
        %v7512 = vadd.f32 %v7510, %v7511
        %v7513 = vsel %vm564, %v7473, 0.0
        %v7514 = vrot.slane %v7513, 4
        %v7515 = vadd.f32 %v7513, %v7514
        %v7516 = vrot.slane %v7515, 2
        %v7517 = vadd.f32 %v7515, %v7516
        %v7518 = vrot.slane %v7517, 1
        %v7519 = vadd.f32 %v7517, %v7518
        %v7520 = vsel %vm564, %v7474, 0.0
        %v7521 = vrot.slane %v7520, 4
        %v7522 = vadd.f32 %v7520, %v7521
        %v7523 = vrot.slane %v7522, 2
        %v7524 = vadd.f32 %v7522, %v7523
        %v7525 = vrot.slane %v7524, 1
        %v7526 = vadd.f32 %v7524, %v7525
        %v7527 = vsel %vm564, %v7475, 0.0
        %v7528 = vrot.slane %v7527, 4
        %v7529 = vadd.f32 %v7527, %v7528
        %v7530 = vrot.slane %v7529, 2
        %v7531 = vadd.f32 %v7529, %v7530
        %v7532 = vrot.slane %v7531, 1
        %v7533 = vadd.f32 %v7531, %v7532
        %v7534 = vsel %vm564, %v7476, 0.0
        %v7535 = vrot.slane %v7534, 4
        %v7536 = vadd.f32 %v7534, %v7535
        %v7537 = vrot.slane %v7536, 2
        %v7538 = vadd.f32 %v7536, %v7537
        %v7539 = vrot.slane %v7538, 1
        %v7540 = vadd.f32 %v7538, %v7539
        %v7541 = vmul.f32 %v7491, %v621
        %v7542 = vmul.f32 %v7498, %v621
        %v7543 = vmul.f32 %v7505, %v621
        %v7544 = vmul.f32 %v7512, %v621
        %v7545 = vmul.f32 %v7519, %v621
        %v7546 = vmul.f32 %v7526, %v621
        %v7547 = vmul.f32 %v7533, %v621
        %v7548 = vmul.f32 %v7540, %v621
        %v7557 = vsel %vm643, %v7542, %v7541
        %v7558 = vsel %vm645, %v7543, %v7557
        %v7559 = vsel %vm647, %v7544, %v7558
        %v7560 = vsel %vm649, %v7545, %v7559
        %v7561 = vsel %vm651, %v7546, %v7560
        %v7562 = vsel %vm653, %v7547, %v7561
        %v7563 = vsel %vm655, %v7548, %v7562
        %7565 = vmatprep.subr.mxu0 0.0
        %7566 = vmatpush1.msra.mxu0 %v7563
        %7567 = vmatprep.subr.mxu0 0.0
        %7568 = vmatpush1.msra.mxu0 0.0
        %7569 = vmatprep.subr.mxu0 0.0
        %7570 = vmatpush1.msra.mxu0 0.0
        %7571 = vmatprep.subr.mxu0 0.0
        %7572 = vmatpush1.msra.mxu0 0.0
        %7573 = vmatprep.subr.mxu0 0.0
        %7574 = vmatpush1.msra.mxu0 0.0
        %7575 = vmatprep.subr.mxu0 0.0
        %7576 = vmatpush1.msra.mxu0 0.0
        %7577 = vmatprep.subr.mxu0 0.0
        %7578 = vmatpush1.msra.mxu0 0.0
        %7579 = vmatprep.subr.mxu0 0.0
        %7580 = vmatpush1.msra.mxu0 0.0
        %7581 = vmatprep.subr.mxu0 0.0
        %7582 = vmatpush1.msra.mxu0 0.0
        %7583 = vmatprep.subr.mxu0 0.0
        %7584 = vmatpush1.msra.mxu0 0.0
        %7585 = vmatprep.subr.mxu0 0.0
        %7586 = vmatpush1.msra.mxu0 0.0
        %7587 = vmatprep.subr.mxu0 0.0
        %7588 = vmatpush1.msra.mxu0 0.0
        %7589 = vmatprep.subr.mxu0 0.0
        %7590 = vmatpush1.msra.mxu0 0.0
        %7591 = vmatprep.subr.mxu0 0.0
        %7592 = vmatpush1.msra.mxu0 0.0
        %7593 = vmatprep.subr.mxu0 0.0
        %7594 = vmatpush1.msra.mxu0 0.0
        %7595 = vmatprep.subr.mxu0 0.0
        %7596 = vmatpush1.msra.mxu0 0.0
        %7597 = vmatprep.subr.mxu0 0.0
        %7598 = vmatpush1.msra.mxu0 0.0
        %7599 = vmatprep.subr.mxu0 0.0
        %7600 = vmatpush1.msra.mxu0 0.0
        %7601 = vmatprep.subr.mxu0 0.0
        %7602 = vmatpush1.msra.mxu0 0.0
        %7603 = vmatprep.subr.mxu0 0.0
        %7604 = vmatpush1.msra.mxu0 0.0
        %7605 = vmatprep.subr.mxu0 0.0
        %7606 = vmatpush1.msra.mxu0 0.0
        %7607 = vmatprep.subr.mxu0 0.0
        %7608 = vmatpush1.msra.mxu0 0.0
        %7609 = vmatprep.subr.mxu0 0.0
        %7610 = vmatpush1.msra.mxu0 0.0
        %7611 = vmatprep.subr.mxu0 0.0
        %7612 = vmatpush1.msra.mxu0 0.0
        %7613 = vmatprep.subr.mxu0 0.0
        %7614 = vmatpush1.msra.mxu0 0.0
        %7615 = vmatprep.subr.mxu0 0.0
        %7616 = vmatpush1.msra.mxu0 0.0
        %7617 = vmatprep.subr.mxu0 0.0
        %7618 = vmatpush1.msra.mxu0 0.0
        %7619 = vmatprep.subr.mxu0 0.0
        %7620 = vmatpush1.msra.mxu0 0.0
        %7621 = vmatprep.subr.mxu0 0.0
        %7622 = vmatpush1.msra.mxu0 0.0
        %7623 = vmatprep.subr.mxu0 0.0
        %7624 = vmatpush1.msra.mxu0 0.0
        %7625 = vmatprep.subr.mxu0 0.0
        %7626 = vmatpush1.msra.mxu0 0.0
        %7627 = vmatprep.subr.mxu0 0.0
        %7628 = vmatpush1.msra.mxu0 0.0
        %7629 = vmatprep.mubr.f32.mxu0 0.0
        %7630 = vmatmul.mubr.f32.gmra.mrb[0].mxu0 %v660
        %v7631 = vpop.f32.mrb[0].mxu0
        %v7632 = vadd.f32 %v633, %v7631
        %v7633 = vpop.f32.mrb[0].mxu0
        %7634 = vdwg.mxu0
        %v7635 = vmax.f32 %v7632, 0.0
        %v7636 = vmin.f32 %v7632, 0.0
        %v7637 = vmul.f32 %v7636, 1.442695
        %v7638 = vpow.pop %v7637
        %v7639 = vsub.f32 %v7638, 1.0
        %v7640 = vadd.f32 %v7635, %v7639
        %v7642 = vsel %vm747, %v7640, 0
        %7644 = vmatprep.subr.mxu0 0.0
        %7645 = vmatpush1.msra.mxu0 %v7642
        %7646 = vmatprep.subr.mxu0 0.0
        %7647 = vmatpush1.msra.mxu0 0.0
        %7648 = vmatprep.subr.mxu0 0.0
        %7649 = vmatpush1.msra.mxu0 0.0
        %7650 = vmatprep.subr.mxu0 0.0
        %7651 = vmatpush1.msra.mxu0 0.0
        %7652 = vmatprep.subr.mxu0 0.0
        %7653 = vmatpush1.msra.mxu0 0.0
        %7654 = vmatprep.subr.mxu0 0.0
        %7655 = vmatpush1.msra.mxu0 0.0
        %7656 = vmatprep.subr.mxu0 0.0
        %7657 = vmatpush1.msra.mxu0 0.0
        %7658 = vmatprep.subr.mxu0 0.0
        %7659 = vmatpush1.msra.mxu0 0.0
        %7660 = vmatprep.subr.mxu0 0.0
        %7661 = vmatpush1.msra.mxu0 0.0
        %7662 = vmatprep.subr.mxu0 0.0
        %7663 = vmatpush1.msra.mxu0 0.0
        %7664 = vmatprep.subr.mxu0 0.0
        %7665 = vmatpush1.msra.mxu0 0.0
        %7666 = vmatprep.subr.mxu0 0.0
        %7667 = vmatpush1.msra.mxu0 0.0
        %7668 = vmatprep.subr.mxu0 0.0
        %7669 = vmatpush1.msra.mxu0 0.0
        %7670 = vmatprep.subr.mxu0 0.0
        %7671 = vmatpush1.msra.mxu0 0.0
        %7672 = vmatprep.subr.mxu0 0.0
        %7673 = vmatpush1.msra.mxu0 0.0
        %7674 = vmatprep.subr.mxu0 0.0
        %7675 = vmatpush1.msra.mxu0 0.0
        %7676 = vmatprep.subr.mxu0 0.0
        %7677 = vmatpush1.msra.mxu0 0.0
        %7678 = vmatprep.subr.mxu0 0.0
        %7679 = vmatpush1.msra.mxu0 0.0
        %7680 = vmatprep.subr.mxu0 0.0
        %7681 = vmatpush1.msra.mxu0 0.0
        %7682 = vmatprep.subr.mxu0 0.0
        %7683 = vmatpush1.msra.mxu0 0.0
        %7684 = vmatprep.subr.mxu0 0.0
        %7685 = vmatpush1.msra.mxu0 0.0
        %7686 = vmatprep.subr.mxu0 0.0
        %7687 = vmatpush1.msra.mxu0 0.0
        %7688 = vmatprep.subr.mxu0 0.0
        %7689 = vmatpush1.msra.mxu0 0.0
        %7690 = vmatprep.subr.mxu0 0.0
        %7691 = vmatpush1.msra.mxu0 0.0
        %7692 = vmatprep.subr.mxu0 0.0
        %7693 = vmatpush1.msra.mxu0 0.0
        %7694 = vmatprep.subr.mxu0 0.0
        %7695 = vmatpush1.msra.mxu0 0.0
        %7696 = vmatprep.subr.mxu0 0.0
        %7697 = vmatpush1.msra.mxu0 0.0
        %7698 = vmatprep.subr.mxu0 0.0
        %7699 = vmatpush1.msra.mxu0 0.0
        %7700 = vmatprep.subr.mxu0 0.0
        %7701 = vmatpush1.msra.mxu0 0.0
        %7702 = vmatprep.subr.mxu0 0.0
        %7703 = vmatpush1.msra.mxu0 0.0
        %7704 = vmatprep.subr.mxu0 0.0
        %7705 = vmatpush1.msra.mxu0 0.0
        %7706 = vmatprep.subr.mxu0 0.0
        %7707 = vmatpush1.msra.mxu0 0.0
        %7708 = vmatprep.mubr.f32.mxu0 0.0
        %7709 = vmatmul.mubr.f32.gmra.mrb[0].mxu0 %v745
        %v7710 = vpop.f32.mrb[0].mxu0
        %v7711 = vadd.f32 %v741, %v7710
        %v7712 = vpop.f32.mrb[0].mxu0
        %7713 = vdwg.mxu0
        %v7714 = vsub.f32 0.0, %v7711
        %v7715 = vmul.f32 %v7714, 1.442695
        %v7716 = vpow.pop %v7715
        %v7717 = vadd.f32 %v7716, 1.0
        %v7718 = vrcp.pop %v7717
        %v7719 = vmul.f32 1.0, %v7718
        %v7721 = vcombine.high %v7719, %v7719
        %v7723 = vunpack.c.l.s4 1966171168
        %v7724 = vunpack.c.0.s8 %v7723
        %v7725 = vlaneseq
        %v7726 = vshrl.u32 %v7725, 7
        %v7727 = vsub.s32 %v7724, %v7726
        %v7728 = vrot.slane %v7719, %v7727
        %v7730 = vunpack.c.l.s4 1966171168
        %v7731 = vunpack.c.0.s8 %v7730
        %v7732 = vlaneseq
        %v7733 = vshrl.u32 %v7732, 7
        %v7734 = vsub.s32 %v7731, %v7733
        %v7735 = vrot.slane %v7721, %v7734
        %v7736 = vcombine.high %v7728, %v7728
        %v7737 = vcombine.high %v7735, %v7735
        %v7739 = vunpack.c.l.s4 1966171168
        %v7740 = vunpack.c.0.s8 %v7739
        %v7741 = vlaneseq
        %v7742 = vshrl.u32 %v7741, 7
        %v7743 = vsub.s32 %v7740, %v7742
        %v7744 = vrot.slane %v7728, %v7743
        %v7746 = vunpack.c.l.s4 1966171168
        %v7747 = vunpack.c.0.s8 %v7746
        %v7748 = vlaneseq
        %v7749 = vshrl.u32 %v7748, 7
        %v7750 = vsub.s32 %v7747, %v7749
        %v7751 = vrot.slane %v7735, %v7750
        %v7753 = vunpack.c.l.s4 1966171168
        %v7754 = vunpack.c.0.s8 %v7753
        %v7755 = vlaneseq
        %v7756 = vshrl.u32 %v7755, 7
        %v7757 = vsub.s32 %v7754, %v7756
        %v7758 = vrot.slane %v7736, %v7757
        %v7760 = vunpack.c.l.s4 1966171168
        %v7761 = vunpack.c.0.s8 %v7760
        %v7762 = vlaneseq
        %v7763 = vshrl.u32 %v7762, 7
        %v7764 = vsub.s32 %v7761, %v7763
        %v7765 = vrot.slane %v7737, %v7764
        %v7766 = vcombine.high %v7744, %v7744
        %v7767 = vcombine.high %v7751, %v7751
        %v7768 = vcombine.high %v7758, %v7758
        %v7769 = vcombine.high %v7765, %v7765
        %v7770 = vlaneseq
        %v7771 = vshrl.u32 %v7770, 7
        %v7772 = vsub.s32 0, %v7771
        %v7773 = vrot.slane %v7744, %v7772
        %v7774 = vlaneseq
        %v7775 = vshrl.u32 %v7774, 7
        %v7776 = vsub.s32 0, %v7775
        %v7777 = vrot.slane %v7758, %v7776
        %v7778 = vlaneseq
        %v7779 = vshrl.u32 %v7778, 7
        %v7780 = vsub.s32 0, %v7779
        %v7781 = vrot.slane %v7766, %v7780
        %v7782 = vlaneseq
        %v7783 = vshrl.u32 %v7782, 7
        %v7784 = vsub.s32 0, %v7783
        %v7785 = vrot.slane %v7768, %v7784
        %v7786 = vlaneseq
        %v7787 = vshrl.u32 %v7786, 7
        %v7788 = vsub.s32 0, %v7787
        %v7789 = vrot.slane %v7751, %v7788
        %v7790 = vlaneseq
        %v7791 = vshrl.u32 %v7790, 7
        %v7792 = vsub.s32 0, %v7791
        %v7793 = vrot.slane %v7765, %v7792
        %v7794 = vlaneseq
        %v7795 = vshrl.u32 %v7794, 7
        %v7796 = vsub.s32 0, %v7795
        %v7797 = vrot.slane %v7767, %v7796
        %v7798 = vlaneseq
        %v7799 = vshrl.u32 %v7798, 7
        %v7800 = vsub.s32 0, %v7799
        %v7801 = vrot.slane %v7769, %v7800
        %v7810 = vmul.f32 %v2024, %v7773
        %v7811 = vmul.f32 %v2028, %v7773
        %v7812 = vmul.f32 %v2024, %v7777
        %v7813 = vmul.f32 %v2028, %v7777
        %v7814 = vmul.f32 %v2024, %v7781
        %v7815 = vmul.f32 %v2028, %v7781
        %v7816 = vmul.f32 %v2024, %v7785
        %v7817 = vmul.f32 %v2028, %v7785
        %v7818 = vmul.f32 %v2024, %v7789
        %v7819 = vmul.f32 %v2028, %v7789
        %v7820 = vmul.f32 %v2024, %v7793
        %v7821 = vmul.f32 %v2028, %v7793
        %v7822 = vmul.f32 %v2024, %v7797
        %v7823 = vmul.f32 %v2028, %v7797
        %v7824 = vmul.f32 %v2024, %v7801
        %v7825 = vmul.f32 %v2028, %v7801
        %v7826 = vadd.f32 %v7445, %v7810
        %v7827 = vadd.f32 %v7446, %v7811
        %v7828 = vadd.f32 %v7447, %v7812
        %v7829 = vadd.f32 %v7448, %v7813
        %v7830 = vadd.f32 %v7449, %v7814
        %v7831 = vadd.f32 %v7450, %v7815
        %v7832 = vadd.f32 %v7451, %v7816
        %v7833 = vadd.f32 %v7452, %v7817
        %v7834 = vadd.f32 %v7453, %v7818
        %v7835 = vadd.f32 %v7454, %v7819
        %v7836 = vadd.f32 %v7455, %v7820
        %v7837 = vadd.f32 %v7456, %v7821
        %v7838 = vadd.f32 %v7457, %v7822
        %v7839 = vadd.f32 %v7458, %v7823
        %v7840 = vadd.f32 %v7459, %v7824
        %v7841 = vadd.f32 %v7460, %v7825
        %v7843 = vsel %vm2102, %v7826, 0
        %v7846 = vsel %vm2102, %v7827, 0
        %v7849 = vsel %vm2102, %v7828, 0
        %v7852 = vsel %vm2102, %v7829, 0
        %v7855 = vsel %vm2102, %v7830, 0
        %v7858 = vsel %vm2102, %v7831, 0
        %v7861 = vsel %vm2102, %v7832, 0
        %v7864 = vsel %vm2102, %v7833, 0
        %v7867 = vsel %vm2102, %v7834, 0
        %v7870 = vsel %vm2102, %v7835, 0
        %v7873 = vsel %vm2102, %v7836, 0
        %v7876 = vsel %vm2102, %v7837, 0
        %v7879 = vsel %vm2102, %v7838, 0
        %v7882 = vsel %vm2102, %v7839, 0
        %v7885 = vsel %vm2102, %v7840, 0
        %v7888 = vsel %vm2102, %v7841, 0
        %7890 = vmatprep.subr.mxu0 0.0
        %7891 = vmatpush1.msra.mxu0 %v2153
        %7892 = vmatprep.subr.mxu0 0.0
        %7893 = vmatpush1.msra.mxu0 0.0
        %7894 = vmatprep.subr.mxu0 0.0
        %7895 = vmatpush1.msra.mxu0 0.0
        %7896 = vmatprep.subr.mxu0 0.0
        %7897 = vmatpush1.msra.mxu0 0.0
        %7898 = vmatprep.subr.mxu0 0.0
        %7899 = vmatpush1.msra.mxu0 0.0
        %7900 = vmatprep.subr.mxu0 0.0
        %7901 = vmatpush1.msra.mxu0 0.0
        %7902 = vmatprep.subr.mxu0 0.0
        %7903 = vmatpush1.msra.mxu0 0.0
        %7904 = vmatprep.subr.mxu0 0.0
        %7905 = vmatpush1.msra.mxu0 0.0
        %7906 = vmatprep.subr.mxu0 0.0
        %7907 = vmatpush1.msra.mxu0 0.0
        %7908 = vmatprep.subr.mxu0 0.0
        %7909 = vmatpush1.msra.mxu0 0.0
        %7910 = vmatprep.subr.mxu0 0.0
        %7911 = vmatpush1.msra.mxu0 0.0
        %7912 = vmatprep.subr.mxu0 0.0
        %7913 = vmatpush1.msra.mxu0 0.0
        %7914 = vmatprep.subr.mxu0 0.0
        %7915 = vmatpush1.msra.mxu0 0.0
        %7916 = vmatprep.subr.mxu0 0.0
        %7917 = vmatpush1.msra.mxu0 0.0
        %7918 = vmatprep.subr.mxu0 0.0
        %7919 = vmatpush1.msra.mxu0 0.0
        %7920 = vmatprep.subr.mxu0 0.0
        %7921 = vmatpush1.msra.mxu0 0.0
        %7922 = vmatprep.subr.mxu0 0.0
        %7923 = vmatpush1.msra.mxu0 0.0
        %7924 = vmatprep.subr.mxu0 0.0
        %7925 = vmatpush1.msra.mxu0 0.0
        %7926 = vmatprep.subr.mxu0 0.0
        %7927 = vmatpush1.msra.mxu0 0.0
        %7928 = vmatprep.subr.mxu0 0.0
        %7929 = vmatpush1.msra.mxu0 0.0
        %7930 = vmatprep.subr.mxu0 0.0
        %7931 = vmatpush1.msra.mxu0 0.0
        %7932 = vmatprep.subr.mxu0 0.0
        %7933 = vmatpush1.msra.mxu0 0.0
        %7934 = vmatprep.subr.mxu0 0.0
        %7935 = vmatpush1.msra.mxu0 0.0
        %7936 = vmatprep.subr.mxu0 0.0
        %7937 = vmatpush1.msra.mxu0 0.0
        %7938 = vmatprep.subr.mxu0 0.0
        %7939 = vmatpush1.msra.mxu0 0.0
        %7940 = vmatprep.subr.mxu0 0.0
        %7941 = vmatpush1.msra.mxu0 0.0
        %7942 = vmatprep.subr.mxu0 0.0
        %7943 = vmatpush1.msra.mxu0 0.0
        %7944 = vmatprep.subr.mxu0 0.0
        %7945 = vmatpush1.msra.mxu0 0.0
        %7946 = vmatprep.subr.mxu0 0.0
        %7947 = vmatpush1.msra.mxu0 0.0
        %7948 = vmatprep.subr.mxu0 0.0
        %7949 = vmatpush1.msra.mxu0 0.0
        %7950 = vmatprep.subr.mxu0 0.0
        %7951 = vmatpush1.msra.mxu0 0.0
        %7952 = vmatprep.subr.mxu0 0.0
        %7953 = vmatpush1.msra.mxu0 0.0
        %7954 = vmatprep.mubr.f32.mxu0 0.0
        %7955 = vmatmul.mubr.f32.gmra.mrb[0].mxu0 %v7843
        %v7956 = vpop.f32.mrb[0].mxu0
        %v7957 = vadd.f32 1.0, %v7956
        %v7958 = vpop.f32.mrb[0].mxu0
        %7959 = vmatprep.mubr.f32.mxu0 0.0
        %7960 = vmatmul.mubr.f32.gmra.mrb[0].mxu0 %v7846
        %v7961 = vpop.f32.mrb[0].mxu0
        %v7962 = vadd.f32 1.0, %v7961
        %v7963 = vpop.f32.mrb[0].mxu0
        %7964 = vmatprep.mubr.f32.mxu0 0.0
        %7965 = vmatmul.mubr.f32.gmra.mrb[0].mxu0 %v7849
        %v7966 = vpop.f32.mrb[0].mxu0
        %v7967 = vadd.f32 1.0, %v7966
        %v7968 = vpop.f32.mrb[0].mxu0
        %7969 = vmatprep.mubr.f32.mxu0 0.0
        %7970 = vmatmul.mubr.f32.gmra.mrb[0].mxu0 %v7852
        %v7971 = vpop.f32.mrb[0].mxu0
        %v7972 = vadd.f32 1.0, %v7971
        %v7973 = vpop.f32.mrb[0].mxu0
        %7974 = vmatprep.mubr.f32.mxu0 0.0
        %7975 = vmatmul.mubr.f32.gmra.mrb[0].mxu0 %v7855
        %v7976 = vpop.f32.mrb[0].mxu0
        %v7977 = vadd.f32 1.0, %v7976
        %v7978 = vpop.f32.mrb[0].mxu0
        %7979 = vmatprep.mubr.f32.mxu0 0.0
        %7980 = vmatmul.mubr.f32.gmra.mrb[0].mxu0 %v7858
        %v7981 = vpop.f32.mrb[0].mxu0
        %v7982 = vadd.f32 1.0, %v7981
        %v7983 = vpop.f32.mrb[0].mxu0
        %7984 = vmatprep.mubr.f32.mxu0 0.0
        %7985 = vmatmul.mubr.f32.gmra.mrb[0].mxu0 %v7861
        %v7986 = vpop.f32.mrb[0].mxu0
        %v7987 = vadd.f32 1.0, %v7986
        %v7988 = vpop.f32.mrb[0].mxu0
        %7989 = vmatprep.mubr.f32.mxu0 0.0
        %7990 = vmatmul.mubr.f32.gmra.mrb[0].mxu0 %v7864
        %v7991 = vpop.f32.mrb[0].mxu0
        %v7992 = vadd.f32 1.0, %v7991
        %v7993 = vpop.f32.mrb[0].mxu0
        %7994 = vmatprep.mubr.f32.mxu0 0.0
        %7995 = vmatmul.mubr.f32.gmra.mrb[0].mxu0 %v7867
        %v7996 = vpop.f32.mrb[0].mxu0
        %v7997 = vadd.f32 1.0, %v7996
        %v7998 = vpop.f32.mrb[0].mxu0
        %7999 = vmatprep.mubr.f32.mxu0 0.0
        %8000 = vmatmul.mubr.f32.gmra.mrb[0].mxu0 %v7870
        %v8001 = vpop.f32.mrb[0].mxu0
        %v8002 = vadd.f32 1.0, %v8001
        %v8003 = vpop.f32.mrb[0].mxu0
        %8004 = vmatprep.mubr.f32.mxu0 0.0
        %8005 = vmatmul.mubr.f32.gmra.mrb[0].mxu0 %v7873
        %v8006 = vpop.f32.mrb[0].mxu0
        %v8007 = vadd.f32 1.0, %v8006
        %v8008 = vpop.f32.mrb[0].mxu0
        %8009 = vmatprep.mubr.f32.mxu0 0.0
        %8010 = vmatmul.mubr.f32.gmra.mrb[0].mxu0 %v7876
        %v8011 = vpop.f32.mrb[0].mxu0
        %v8012 = vadd.f32 1.0, %v8011
        %v8013 = vpop.f32.mrb[0].mxu0
        %8014 = vmatprep.mubr.f32.mxu0 0.0
        %8015 = vmatmul.mubr.f32.gmra.mrb[0].mxu0 %v7879
        %v8016 = vpop.f32.mrb[0].mxu0
        %v8017 = vadd.f32 1.0, %v8016
        %v8018 = vpop.f32.mrb[0].mxu0
        %8019 = vmatprep.mubr.f32.mxu0 0.0
        %8020 = vmatmul.mubr.f32.gmra.mrb[0].mxu0 %v7882
        %v8021 = vpop.f32.mrb[0].mxu0
        %v8022 = vadd.f32 1.0, %v8021
        %v8023 = vpop.f32.mrb[0].mxu0
        %8024 = vmatprep.mubr.f32.mxu0 0.0
        %8025 = vmatmul.mubr.f32.gmra.mrb[0].mxu0 %v7885
        %v8026 = vpop.f32.mrb[0].mxu0
        %v8027 = vadd.f32 1.0, %v8026
        %v8028 = vpop.f32.mrb[0].mxu0
        %8029 = vmatprep.mubr.f32.mxu0 0.0
        %8030 = vmatmul.mubr.f32.gmra.mrb[0].mxu0 %v7888
        %v8031 = vpop.f32.mrb[0].mxu0
        %v8032 = vadd.f32 1.0, %v8031
        %v8033 = vpop.f32.mrb[0].mxu0
        %8034 = vdwg.mxu0
        %v8035 = vmul.f32 %v6157, %v7957
        %v8036 = vmul.f32 %v6158, %v7962
        %v8037 = vmul.f32 %v6159, %v7967
        %v8038 = vmul.f32 %v6160, %v7972
        %v8039 = vmul.f32 %v6161, %v7977
        %v8040 = vmul.f32 %v6162, %v7982
        %v8041 = vmul.f32 %v6163, %v7987
        %v8042 = vmul.f32 %v6164, %v7992
        %v8043 = vmul.f32 %v6165, %v7997
        %v8044 = vmul.f32 %v6166, %v8002
        %v8045 = vmul.f32 %v6167, %v8007
        %v8046 = vmul.f32 %v6168, %v8012
        %v8047 = vmul.f32 %v6169, %v8017
        %v8048 = vmul.f32 %v6170, %v8022
        %v8049 = vmul.f32 %v6171, %v8027
        %v8050 = vmul.f32 %v6172, %v8032
        %s8051 = scalar_lea.vmem %s342, 48 [#allocation5]
        %8052 = vst.msk [vmem:[%s8051] sm:$0xff] %vm370, %v8035
        %8053 = vst.msk [vmem:[%s8051 + $0x8] sm:$0xff] %vm370, %v8036
        %8054 = vst.msk [vmem:[%s8051 + $0x40] sm:$0xff] %vm370, %v8037
        %8055 = vst.msk [vmem:[%s8051 + $0x48] sm:$0xff] %vm370, %v8038
        %8056 = vst.msk [vmem:[%s8051 + $0x80] sm:$0xff] %vm370, %v8039
        %8057 = vst.msk [vmem:[%s8051 + $0x88] sm:$0xff] %vm370, %v8040
        %8058 = vst.msk [vmem:[%s8051 + $0xc0] sm:$0xff] %vm370, %v8041
        %8059 = vst.msk [vmem:[%s8051 + $0xc8] sm:$0xff] %vm370, %v8042
        %8060 = vst.msk [vmem:[%s8051 + $0x100] sm:$0xff] %vm370, %v8043
        %8061 = vst.msk [vmem:[%s8051 + $0x108] sm:$0xff] %vm370, %v8044
        %8062 = vst.msk [vmem:[%s8051 + $0x140] sm:$0xff] %vm370, %v8045
        %8063 = vst.msk [vmem:[%s8051 + $0x148] sm:$0xff] %vm370, %v8046
        %8064 = vst.msk [vmem:[%s8051 + $0x180] sm:$0xff] %vm370, %v8047
        %8065 = vst.msk [vmem:[%s8051 + $0x188] sm:$0xff] %vm370, %v8048
        %8066 = vst.msk [vmem:[%s8051 + $0x1c0] sm:$0xff] %vm370, %v8049
        %8067 = vst.msk [vmem:[%s8051 + $0x1c8] sm:$0xff] %vm370, %v8050
        %s8068 = sand.u32 %s222, 1
        %s8069 = scalar_lea.sflag [#allocation4], %s8068
        %s8070 = sand.u32 %s222, 1
        %s8071 = smul.addr %s8070, 512
        %s8072 = scalar_lea.vmem [#allocation5], %s8071
        // Predicated region
        $region57: #{tpu_custom_call.1} parent=51 // pred_check
          %p8073 = pneg %p232
        $region58: #{tpu_custom_call.1} parent=51 // pred_check_branch
          %8075 = sbr.rel (%p8073) target = $region60
        $region59: #{tpu_custom_call.1} parent=51 // pred_region
          %s8076 = smul.u32 4, %s30
          %s8078 = ssub.s32 8192, 8192
          %8079 = vsyncadd %s8069, %s8078
          %s8080 = smul.addr %s8076, 2
          %s8081 = smul.addr %s29, 64
          %s8082 = sadd.s32 %s8080, %s8081
          %s8083 = smul.addr %s8082, 128
          %s8084 = scalar_lea.hbm %s8, %s8083
          %s8085 = sshll.u32 %s8072, 4
          %s8086 = int_to_ptr.vmem [resolvable:$true] %s8085
          %8091 = dma.vmem_to_hbm [thread:$0]  %s8086, 8192, %s8084, %s8069, 128, 128, 8
        $region60: #{tpu_custom_call.1} parent=51 // pred_fallthru
          _
      $region52: #{tpu_custom_call.1} parent=5 // pred_fallthru
        _
      %p8092 = scmp.le.s32.totalorder 2, %s20
      // Predicated region
      $region61: #{tpu_custom_call.1} parent=5 // pred_check
        %p8093 = pneg %p8092
      $region62: #{tpu_custom_call.1} parent=5 // pred_check_branch
        %8095 = sbr.rel (%p8093) target = $region64
      $region63: #{tpu_custom_call.1} parent=5 // pred_region
        %s8096 = ssub.s32 %s20, 2
        // Predicated region
        $region65: #{tpu_custom_call.1} parent=63 // pred_check
          %p8097 = pneg %p238
        $region66: #{tpu_custom_call.1} parent=63 // pred_check_branch
          %8099 = sbr.rel (%p8097) target = $region68
        $region67: #{tpu_custom_call.1} parent=63 // pred_region
          %s8100 = sand.u32 %s223, 1
          %s8101 = scalar_lea.sflag [#allocation4], %s8100
          %s8102 = sand.u32 %s223, 1
          %s8103 = smul.addr %s8102, 512
          %s8104 = scalar_lea.vmem [#allocation5], %s8103
          %8105 = dma.done %s8101, 8192
        $region68: #{tpu_custom_call.1} parent=63 // pred_fallthru
          _
      $region64: #{tpu_custom_call.1} parent=5 // pred_fallthru
        _
    $region6: #{tpu_custom_call.1} parent=1 // loop_footer
      %s24 = sadd.s32 1, %s20
    $region7: #{tpu_custom_call.1} parent=1 // loop_footer_branch
      %19 = sbr.rel target = $region3
    $region8: #{tpu_custom_call.1} parent=1 // loop_exit
      _
    %8106 = vsyncpa [#allocation3], 1
    %s8107 = scalar_lea.sflag [#allocation3], 1
    %8108 = vsyncpa %s8107, 1
    %8109 = vsyncpa [#allocation4], 1
    %s8110 = scalar_lea.sflag [#allocation4], 1
    %8111 = vsyncpa %s8110, 1

</llo_original>
